<compile_context>
chip_gen: v7x
topology: tpu7x:2x2x1
jax: 0.10.0
libtpu: 0.0.40
codegen_flags: <defaults>
</compile_context>

<pallas_src>
import functools

import jax
import jax.numpy as jnp
from jax.experimental import pallas as pl
from jax.experimental.pallas import tpu as pltpu

_BN_EPS = 1e-5
_LRELU_SLOPE = 0.2


# --------------------------------------------------------------------------
# Pallas kernels
# --------------------------------------------------------------------------
def _fused_conv_bn_lrelu_kernel(a_ref, w_ref, g_ref, b_ref, o_ref,
                                sum_ref, ssq_ref, *,
                                rows_per_phase, tm, inv_count, eps,
                                ep_chunk, total_rows):
    """Conv-as-matmul (bf16 operands, f32 accumulation) + training-mode BN
    statistics + BN/LeakyReLU epilogue on the VMEM-resident output."""
    p = pl.program_id(0)
    m = pl.program_id(1)

    @pl.when((p == 0) & (m == 0))
    def _init():
        sum_ref[...] = jnp.zeros_like(sum_ref)
        ssq_ref[...] = jnp.zeros_like(ssq_ref)

    acc = jnp.dot(a_ref[0], w_ref[0], preferred_element_type=jnp.float32)
    row0 = pl.multiple_of(p * rows_per_phase + m * tm, tm)
    o_ref[pl.ds(row0, tm), :] = acc
    sum_ref[...] += jnp.sum(acc, axis=0, keepdims=True)
    ssq_ref[...] += jnp.sum(acc * acc, axis=0, keepdims=True)

    is_last = (p == pl.num_programs(0) - 1) & (m == pl.num_programs(1) - 1)

    @pl.when(is_last)
    def _finalize():
        mean = sum_ref[...] * inv_count
        var = jnp.maximum(ssq_ref[...] * inv_count - mean * mean, 0.0)
        scale = g_ref[...] * jax.lax.rsqrt(var + eps)
        shift = b_ref[...] - mean * scale
        # Static chunked epilogue over the resident output (few iterations,
        # keeps intermediates at vreg-friendly sizes).
        for t in range(total_rows // ep_chunk):
            blk = o_ref[t * ep_chunk:(t + 1) * ep_chunk, :]
            y = blk * scale + shift
            o_ref[t * ep_chunk:(t + 1) * ep_chunk, :] = jnp.where(
                y >= 0.0, y, _LRELU_SLOPE * y)


def _conv_bias_tanh_kernel(a_ref, w_ref, bias_ref, o_ref):
    """patches @ w + bias, then tanh (final generator layer)."""
    acc = jnp.dot(a_ref[0], w_ref[0], preferred_element_type=jnp.float32)
    o_ref[...] = jnp.tanh(acc + bias_ref[...])


# --------------------------------------------------------------------------
# Pallas wrappers
# --------------------------------------------------------------------------
def _pick_tm(m):
    for tm in (2048, 1024, 512, 256, 128, 64, 32, 16, 8):
        if m % tm == 0:
            return tm
    return m


def _round_up(x, mult):
    return ((x + mult - 1) // mult) * mult


def pallas_conv_bn_lrelu(patches, weights, gamma_row, beta_row, eps=_BN_EPS):
    """patches: (P, M, K) bf16, weights: (P, K, c_pad) bf16,
    gamma/beta: (1, c_pad) f32.  Returns (P*M, c_pad) f32."""
    num_phases, m_dim, k_dim = patches.shape
    c_pad = weights.shape[2]
    tm = _pick_tm(m_dim)
    nm = m_dim // tm
    total_rows = num_phases * m_dim
    ep_chunk = tm if tm <= 128 else 128  # tm > 128 is always a multiple of 128

    kernel = functools.partial(
        _fused_conv_bn_lrelu_kernel,
        rows_per_phase=m_dim, tm=tm, inv_count=1.0 / float(total_rows),
        eps=eps, ep_chunk=ep_chunk, total_rows=total_rows)

    return pl.pallas_call(
        kernel,
        out_shape=jax.ShapeDtypeStruct((total_rows, c_pad), jnp.float32),
        grid=(num_phases, nm),
        in_specs=[
            pl.BlockSpec((1, tm, k_dim), lambda p, m: (p, m, 0)),
            pl.BlockSpec((1, k_dim, c_pad), lambda p, m: (p, 0, 0)),
            pl.BlockSpec((1, c_pad), lambda p, m: (0, 0)),
            pl.BlockSpec((1, c_pad), lambda p, m: (0, 0)),
        ],
        # Whole output stays resident in VMEM across the grid (written back
        # once, after the BN/LeakyReLU epilogue).
        out_specs=pl.BlockSpec((total_rows, c_pad), lambda p, m: (0, 0)),
        scratch_shapes=[pltpu.VMEM((1, c_pad), jnp.float32),
                        pltpu.VMEM((1, c_pad), jnp.float32)],
        compiler_params=pltpu.CompilerParams(
            dimension_semantics=("arbitrary", "arbitrary")),
    )(patches, weights, gamma_row, beta_row)


def pallas_conv_bias_tanh(patches, weights, bias_row):
    """patches: (P, M, K) bf16, weights: (P, K, c_pad) bf16, bias: (1, c_pad).
    Returns (P*M, c_pad) f32 (streaming, fully parallel grid)."""
    num_phases, m_dim, k_dim = patches.shape
    c_pad = weights.shape[2]
    tm = _pick_tm(m_dim)
    nm = m_dim // tm
    return pl.pallas_call(
        _conv_bias_tanh_kernel,
        out_shape=jax.ShapeDtypeStruct((num_phases * m_dim, c_pad), jnp.float32),
        grid=(num_phases, nm),
        in_specs=[
            pl.BlockSpec((1, tm, k_dim), lambda p, m: (p, m, 0)),
            pl.BlockSpec((1, k_dim, c_pad), lambda p, m: (p, 0, 0)),
            pl.BlockSpec((1, c_pad), lambda p, m: (0, 0)),
        ],
        out_specs=pl.BlockSpec((tm, c_pad), lambda p, m, nm=nm: (p * nm + m, 0)),
        compiler_params=pltpu.CompilerParams(
            dimension_semantics=("parallel", "parallel")),
    )(patches, weights, bias_row)


# --------------------------------------------------------------------------
# ConvTranspose2d lowering glue (plain JAX, NHWC throughout)
# --------------------------------------------------------------------------
def _pad_last(x, c_pad):
    c = x.shape[-1]
    if c == c_pad:
        return x
    pads = [(0, 0)] * (x.ndim - 1) + [(0, c_pad - c)]
    return jnp.pad(x, pads)


def _im2col_stride1(x_nhwc, k, padding):
    """Transposed conv with stride 1 == stride-1 conv of input padded by
    k-1-padding with the flipped kernel.  Returns (1, N*Ho*Wo, k*k*C)."""
    n, h, w, c = x_nhwc.shape
    pad = k - 1 - padding
    xp = jnp.pad(x_nhwc, ((0, 0), (pad, pad), (pad, pad), (0, 0)))
    ho = h + 2 * pad - k + 1
    wo = w + 2 * pad - k + 1
    taps = [xp[:, kh:kh + ho, kw:kw + wo, :] for kh in range(k) for kw in range(k)]
    patches = jnp.stack(taps, axis=3).reshape(n * ho * wo, k * k * c)
    return patches[None], ho, wo


def _weight_mat_stride1(w_t):
    """(C_in, C_out, k, k) -> (k*k*C_in, C_out) with spatial flip, matching
    the (kh, kw, ci) patch column ordering."""
    c_in, c_out, k, _ = w_t.shape
    wf = w_t[:, :, ::-1, ::-1]
    return jnp.transpose(wf, (2, 3, 0, 1)).reshape(k * k * c_in, c_out)


def _subpixel_patches_weights(x_nhwc, w_t):
    """Sub-pixel decomposition of ConvTranspose2d(k=4, stride=2, pad=1):
    y[n, 2a+r, 2b+c, :] = sum_{dh,dw,ci} xp[n, a+r+dh, b+c+dw, ci]
                          * w_flipped[ci, :, r+2dh, c+2dw]
    with xp = x padded spatially by 1.  Returns patches (4, N*H*W, 4*C_in),
    weights (4, 4*C_in, C_out) and the output spatial dims (2H, 2W)."""
    n, h, w, c = x_nhwc.shape
    xp = jnp.pad(x_nhwc, ((0, 0), (1, 1), (1, 1), (0, 0)))
    wf = w_t[:, :, ::-1, ::-1]                       # flipped kernel
    patches, weights = [], []
    for r in range(2):
        for cph in range(2):
            taps = [xp[:, r + dh:r + dh + h, cph + dw:cph + dw + w, :]
                    for dh in range(2) for dw in range(2)]
            p = jnp.stack(taps, axis=3).reshape(n * h * w, 4 * c)
            ws = jnp.stack([wf[:, :, r + 2 * dh, cph + 2 * dw]
                            for dh in range(2) for dw in range(2)], axis=0)
            patches.append(p)
            weights.append(ws.reshape(4 * c, -1))
    return jnp.stack(patches), jnp.stack(weights), 2 * h, 2 * w


def _assemble_output(y_flat, num_phases, n, ho, wo, c_out):
    y = y_flat[:, :c_out]
    if num_phases == 1:
        return y.reshape(n, ho, wo, c_out)
    hh, wh = ho // 2, wo // 2
    y = y.reshape(2, 2, n, hh, wh, c_out)            # (r, c, n, a, b, ch)
    return y.transpose(2, 3, 0, 4, 1, 5).reshape(n, ho, wo, c_out)


def _lower_conv_transpose(x_nhwc, w_t, stride, padding):
    if stride == 2:
        patches, weights, ho, wo = _subpixel_patches_weights(x_nhwc, w_t)
    else:
        patches, ho, wo = _im2col_stride1(x_nhwc, w_t.shape[2], padding)
        weights = _weight_mat_stride1(w_t)[None]
    return patches, weights, ho, wo


def conv_transpose_bn_lrelu(x_nhwc, w_t, gamma, beta, stride, padding):
    n = x_nhwc.shape[0]
    c_out = w_t.shape[1]
    c_pad = _round_up(c_out, 128)
    patches, weights, ho, wo = _lower_conv_transpose(x_nhwc, w_t, stride, padding)
    patches = patches.astype(jnp.bfloat16)
    weights = _pad_last(weights, c_pad).astype(jnp.bfloat16)
    g = _pad_last(gamma[None, :], c_pad).astype(jnp.float32)
    b = _pad_last(beta[None, :], c_pad).astype(jnp.float32)
    y = pallas_conv_bn_lrelu(patches, weights, g, b)
    return _assemble_output(y, patches.shape[0], n, ho, wo, c_out)


def conv_transpose_bias_tanh(x_nhwc, w_t, bias, stride, padding):
    n = x_nhwc.shape[0]
    c_out = w_t.shape[1]
    c_pad = _round_up(c_out, 128)
    patches, weights, ho, wo = _lower_conv_transpose(x_nhwc, w_t, stride, padding)
    patches = patches.astype(jnp.bfloat16)
    weights = _pad_last(weights, c_pad).astype(jnp.bfloat16)
    bias_row = _pad_last(bias[None, :], c_pad).astype(jnp.float32)
    y = pallas_conv_bias_tanh(patches, weights, bias_row)
    return _assemble_output(y, patches.shape[0], n, ho, wo, c_out)


# --------------------------------------------------------------------------
# Generator forward + deterministic parameter init
# --------------------------------------------------------------------------
def init_params(key, z_dim, in_channels, ngf):
    ks = jax.random.split(key, 6)

    def w(k, cin, cout):
        return jax.random.normal(k, (cin, cout, 4, 4), jnp.float32) * 0.02

    return {
        "w1": w(ks[0], z_dim, ngf * 8),
        "g1": jnp.ones((ngf * 8,), jnp.float32), "b1": jnp.zeros((ngf * 8,), jnp.float32),
        "w2": w(ks[1], ngf * 8, ngf * 4),
        "g2": jnp.ones((ngf * 4,), jnp.float32), "b2": jnp.zeros((ngf * 4,), jnp.float32),
        "w3": w(ks[2], ngf * 4, ngf * 2),
        "g3": jnp.ones((ngf * 2,), jnp.float32), "b3": jnp.zeros((ngf * 2,), jnp.float32),
        "w4": w(ks[3], ngf * 2, ngf * 4),
        "g4": jnp.ones((ngf * 4,), jnp.float32), "b4": jnp.zeros((ngf * 4,), jnp.float32),
        # see TODO(synk) at top of file regarding the declared ngf input channels.
        "w5": w(ks[4], ngf * 4, in_channels),
        "bias5": jax.random.normal(ks[5], (in_channels,), jnp.float32) * 0.02,
    }


@jax.jit
def generator_forward(x_nchw, params):
    h = jnp.transpose(x_nchw, (0, 2, 3, 1))                         # -> NHWC once
    h = conv_transpose_bn_lrelu(h, params["w1"], params["g1"], params["b1"], 1, 0)
    h = conv_transpose_bn_lrelu(h, params["w2"], params["g2"], params["b2"], 2, 1)
    h = conv_transpose_bn_lrelu(h, params["w3"], params["g3"], params["b3"], 2, 1)
    h = conv_transpose_bn_lrelu(h, params["w4"], params["g4"], params["b4"], 2, 1)
    h = conv_transpose_bias_tanh(h, params["w5"], params["bias5"], 2, 1)
    return jnp.transpose(h, (0, 3, 1, 2))                           # -> NCHW once


# --------------------------------------------------------------------------
# Pure-JAX reference (f32) for a correctness cross-check
# --------------------------------------------------------------------------
@jax.jit
def reference_forward(x_nchw, params):
    def convt(x, w, stride, padding):
        k = w.shape[2]
        w_hwio = jnp.transpose(w[:, :, ::-1, ::-1], (2, 3, 0, 1))
        return jax.lax.conv_general_dilated(
            x, w_hwio, window_strides=(1, 1),
            padding=[(k - 1 - padding, k - 1 - padding)] * 2,
            lhs_dilation=(stride, stride),
            dimension_numbers=("NHWC", "HWIO", "NHWC"))

    def bn_lrelu(x, g, b):
        mean = x.mean(axis=(0, 1, 2))
        var = x.var(axis=(0, 1, 2))
        y = (x - mean) / jnp.sqrt(var + _BN_EPS) * g + b
        return jnp.where(y >= 0.0, y, _LRELU_SLOPE * y)

    h = jnp.transpose(x_nchw, (0, 2, 3, 1))
    h = bn_lrelu(convt(h, params["w1"], 1, 0), params["g1"], params["b1"])
    h = bn_lrelu(convt(h, params["w2"], 2, 1), params["g2"], params["b2"])
    h = bn_lrelu(convt(h, params["w3"], 2, 1), params["g3"], params["b3"])
    h = bn_lrelu(convt(h, params["w4"], 2, 1), params["g4"], params["b4"])
    h = jnp.tanh(convt(h, params["w5"], 2, 1) + params["bias5"])
    return jnp.transpose(h, (0, 3, 1, 2))


if __name__ == "__main__":
    z_dim, in_channels, ngf, batch = 32, 3, 8, 2
    key = jax.random.PRNGKey(0)
    k_params, k_x = jax.random.split(key)
    params = init_params(k_params, z_dim, in_channels, ngf)
    x = jax.random.normal(k_x, (batch, z_dim, 1, 1), jnp.float32)

    out = generator_forward(x, params)
    out = jax.block_until_ready(out)

    assert out.shape == (batch, in_channels, 64, 64), out.shape
    assert bool(jnp.all(jnp.isfinite(out)))
    assert bool(jnp.all(jnp.abs(out) <= 1.0 + 1e-6))        # tanh range

    # Cross-check against a pure-JAX f32 reference (generous tolerance for the
    # bf16 MXU operands used in the Pallas path).
    ref = jax.block_until_ready(reference_forward(x, params))
    max_diff = float(jnp.max(jnp.abs(out - ref)))
    assert max_diff < 0.15, f"max abs diff vs reference = {max_diff}"

    print("KERNEL_OK")
</pallas_src>

<mosaic_0001>
module attributes {stable_mosaic.version = 11 : i64} {
  func.func @_fused_conv_bn_lrelu_kernel(%arg0: i32, %arg1: i32, %arg2: memref<1x32x512xbf16, #tpu.memory_space<vmem>>, %arg3: memref<1x512x128xbf16, #tpu.memory_space<vmem>>, %arg4: memref<1x128xf32, #tpu.memory_space<vmem>>, %arg5: memref<1x128xf32, #tpu.memory_space<vmem>>, %arg6: memref<32x128xf32, #tpu.memory_space<vmem>>, %arg7: memref<1x128xf32, #tpu.memory_space<vmem>>, %arg8: memref<1x128xf32, #tpu.memory_space<vmem>>) attributes {dimension_semantics = [#tpu.dimension_semantics<arbitrary>, #tpu.dimension_semantics<arbitrary>], iteration_bounds = array<i64: 1, 1>, scalar_prefetch = 0 : i64, scratch_operands = 2 : i64, tpu.core_type = #tpu.core_type<tc>, window_params = [{transform_indices = @transform_0, window_bounds = array<i64: 1, 32, 512>}, {transform_indices = @transform_1, window_bounds = array<i64: 1, 512, 128>}, {pipeline_mode = #tpu.pipeline_mode<synchronous>, transform_indices = @transform_2, window_bounds = array<i64: 1, 128>}, {pipeline_mode = #tpu.pipeline_mode<synchronous>, transform_indices = @transform_3, window_bounds = array<i64: 1, 128>}, {pipeline_mode = #tpu.pipeline_mode<synchronous>, transform_indices = @transform_4, window_bounds = array<i64: 32, 128>}]} {
    %c0_i32 = arith.constant 0 : i32
    %0 = arith.cmpi eq, %arg0, %c0_i32 : i32
    %c0_i32_0 = arith.constant 0 : i32
    %1 = arith.cmpi eq, %arg1, %c0_i32_0 : i32
    %2 = arith.andi %0, %1 : i1
    %3 = arith.extui %2 : i1 to i32
    %c0_i32_1 = arith.constant 0 : i32
    %4 = arith.cmpi ne, %3, %c0_i32_1 : i32
    scf.if %4 {
      %cst_22 = arith.constant 0.000000e+00 : f32
      %32 = vector.broadcast %cst_22 : f32 to vector<1x128xf32>
      %c0_23 = arith.constant 0 : index
      %c0_24 = arith.constant 0 : index
      %33 = vector.load %arg7[%c0_23, %c0_24] : memref<1x128xf32, #tpu.memory_space<vmem>>, vector<1x128xf32>
      tpu.vector_store %arg7[%c0_23, %c0_24], %32 {strides = array<i32>} : memref<1x128xf32, #tpu.memory_space<vmem>>, vector<1x128xf32>,
      %cst_25 = arith.constant 0.000000e+00 : f32
      %34 = vector.broadcast %cst_25 : f32 to vector<1x128xf32>
      %c0_26 = arith.constant 0 : index
      %c0_27 = arith.constant 0 : index
      %35 = vector.load %arg8[%c0_26, %c0_27] : memref<1x128xf32, #tpu.memory_space<vmem>>, vector<1x128xf32>
      tpu.vector_store %arg8[%c0_26, %c0_27], %34 {strides = array<i32>} : memref<1x128xf32, #tpu.memory_space<vmem>>, vector<1x128xf32>,
    } else {
    }
    %c0 = arith.constant 0 : index
    %c0_2 = arith.constant 0 : index
    %c0_3 = arith.constant 0 : index
    %5 = vector.load %arg2[%c0, %c0_2, %c0_3] : memref<1x32x512xbf16, #tpu.memory_space<vmem>>, vector<1x32x512xbf16>
    %6 = vector.shape_cast %5 : vector<1x32x512xbf16> to vector<32x512xbf16>
    %c0_4 = arith.constant 0 : index
    %c0_5 = arith.constant 0 : index
    %c0_6 = arith.constant 0 : index
    %7 = vector.load %arg3[%c0_4, %c0_5, %c0_6] : memref<1x512x128xbf16, #tpu.memory_space<vmem>>, vector<1x512x128xbf16>
    %8 = vector.shape_cast %7 : vector<1x512x128xbf16> to vector<512x128xbf16>
    %cst = arith.constant dense<0.000000e+00> : vector<32x128xf32>
    %9 = tpu.matmul %6, %8, %cst {dimension_numbers = #tpu.dot_dimension_numbers<[1], [0], [0], [1], [0, 0, 1, 1], [], []>} : vector<32x512xbf16>, vector<512x128xbf16>, vector<32x128xf32> -> vector<32x128xf32>
    %c32_i32 = arith.constant 32 : i32
    %10 = arith.muli %arg0, %c32_i32 : i32
    %c32_i32_7 = arith.constant 32 : i32
    %11 = arith.muli %arg1, %c32_i32_7 : i32
    %12 = arith.addi %10, %11 : i32
    %13 = tpu.assume_multiple %12, 32 : i32
    %14 = arith.index_cast %13 : i32 to index
    %c0_8 = arith.constant 0 : index
    %15 = vector.load %arg6[%14, %c0_8] : memref<32x128xf32, #tpu.memory_space<vmem>>, vector<32x128xf32>
    tpu.vector_store %arg6[%14, %c0_8], %9 {strides = array<i32>} : memref<32x128xf32, #tpu.memory_space<vmem>>, vector<32x128xf32>,
    %c0_9 = arith.constant 0 : index
    %c0_10 = arith.constant 0 : index
    %16 = vector.load %arg7[%c0_9, %c0_10] : memref<1x128xf32, #tpu.memory_space<vmem>>, vector<1x128xf32>
    %cst_11 = arith.constant dense<0.000000e+00> : vector<128xf32>
    %17 = vector.multi_reduction <add>, %9, %cst_11 [0] : vector<32x128xf32> to vector<128xf32>
    %18 = vector.shape_cast %17 : vector<128xf32> to vector<1x128xf32>
    %19 = arith.addf %16, %18 : vector<1x128xf32>
    %c0_12 = arith.constant 0 : index
    %c0_13 = arith.constant 0 : index
    %20 = vector.load %arg7[%c0_12, %c0_13] : memref<1x128xf32, #tpu.memory_space<vmem>>, vector<1x128xf32>
    tpu.vector_store %arg7[%c0_12, %c0_13], %19 {strides = array<i32>} : memref<1x128xf32, #tpu.memory_space<vmem>>, vector<1x128xf32>,
    %c0_14 = arith.constant 0 : index
    %c0_15 = arith.constant 0 : index
    %21 = vector.load %arg8[%c0_14, %c0_15] : memref<1x128xf32, #tpu.memory_space<vmem>>, vector<1x128xf32>
    %22 = arith.mulf %9, %9 : vector<32x128xf32>
    %cst_16 = arith.constant dense<0.000000e+00> : vector<128xf32>
    %23 = vector.multi_reduction <add>, %22, %cst_16 [0] : vector<32x128xf32> to vector<128xf32>
    %24 = vector.shape_cast %23 : vector<128xf32> to vector<1x128xf32>
    %25 = arith.addf %21, %24 : vector<1x128xf32>
    %c0_17 = arith.constant 0 : index
    %c0_18 = arith.constant 0 : index
    %26 = vector.load %arg8[%c0_17, %c0_18] : memref<1x128xf32, #tpu.memory_space<vmem>>, vector<1x128xf32>
    tpu.vector_store %arg8[%c0_17, %c0_18], %25 {strides = array<i32>} : memref<1x128xf32, #tpu.memory_space<vmem>>, vector<1x128xf32>,
    %c0_i32_19 = arith.constant 0 : i32
    %27 = arith.cmpi eq, %arg0, %c0_i32_19 : i32
    %c0_i32_20 = arith.constant 0 : i32
    %28 = arith.cmpi eq, %arg1, %c0_i32_20 : i32
    %29 = arith.andi %27, %28 : i1
    %30 = arith.extui %29 : i1 to i32
    %c0_i32_21 = arith.constant 0 : i32
    %31 = arith.cmpi ne, %30, %c0_i32_21 : i32
    scf.if %31 {
      %c0_22 = arith.constant 0 : index
      %c0_23 = arith.constant 0 : index
      %32 = vector.load %arg7[%c0_22, %c0_23] : memref<1x128xf32, #tpu.memory_space<vmem>>, vector<1x128xf32>
      %cst_24 = arith.constant 3.125000e-02 : f32
      %33 = vector.broadcast %cst_24 : f32 to vector<1x128xf32>
      %34 = arith.mulf %32, %33 : vector<1x128xf32>
      %c0_25 = arith.constant 0 : index
      %c0_26 = arith.constant 0 : index
      %35 = vector.load %arg8[%c0_25, %c0_26] : memref<1x128xf32, #tpu.memory_space<vmem>>, vector<1x128xf32>
      %cst_27 = arith.constant 3.125000e-02 : f32
      %36 = vector.broadcast %cst_27 : f32 to vector<1x128xf32>
      %37 = arith.mulf %35, %36 : vector<1x128xf32>
      %38 = arith.mulf %34, %34 : vector<1x128xf32>
      %39 = arith.subf %37, %38 : vector<1x128xf32>
      %cst_28 = arith.constant 0.000000e+00 : f32
      %40 = vector.broadcast %cst_28 : f32 to vector<1x128xf32>
      %41 = arith.maximumf %39, %40 : vector<1x128xf32>
      %c0_29 = arith.constant 0 : index
      %c0_30 = arith.constant 0 : index
      %42 = vector.load %arg4[%c0_29, %c0_30] : memref<1x128xf32, #tpu.memory_space<vmem>>, vector<1x128xf32>
      %cst_31 = arith.constant 9.99999974E-6 : f32
      %43 = vector.broadcast %cst_31 : f32 to vector<1x128xf32>
      %44 = arith.addf %41, %43 : vector<1x128xf32>
      %45 = math.rsqrt %44 : vector<1x128xf32>
      %46 = arith.mulf %42, %45 : vector<1x128xf32>
      %c0_32 = arith.constant 0 : index
      %c0_33 = arith.constant 0 : index
      %47 = vector.load %arg5[%c0_32, %c0_33] : memref<1x128xf32, #tpu.memory_space<vmem>>, vector<1x128xf32>
      %48 = arith.mulf %34, %46 : vector<1x128xf32>
      %49 = arith.subf %47, %48 : vector<1x128xf32>
      %c0_34 = arith.constant 0 : index
      %c0_35 = arith.constant 0 : index
      %50 = vector.load %arg6[%c0_34, %c0_35] : memref<32x128xf32, #tpu.memory_space<vmem>>, vector<32x128xf32>
      %51 = vector.broadcast %46 : vector<1x128xf32> to vector<32x128xf32>
      %52 = arith.mulf %50, %51 : vector<32x128xf32>
      %53 = vector.broadcast %49 : vector<1x128xf32> to vector<32x128xf32>
      %54 = arith.addf %52, %53 : vector<32x128xf32>
      %cst_36 = arith.constant 0.000000e+00 : f32
      %55 = vector.broadcast %cst_36 : f32 to vector<32x128xf32>
      %56 = arith.cmpf oge, %54, %55 : vector<32x128xf32>
      %cst_37 = arith.constant 2.000000e-01 : f32
      %57 = vector.broadcast %cst_37 : f32 to vector<32x128xf32>
      %58 = arith.mulf %57, %54 : vector<32x128xf32>
      %59 = arith.select %56, %54, %58 : vector<32x128xi1>, vector<32x128xf32>
      %c0_38 = arith.constant 0 : index
      %c0_39 = arith.constant 0 : index
      %60 = vector.load %arg6[%c0_38, %c0_39] : memref<32x128xf32, #tpu.memory_space<vmem>>, vector<32x128xf32>
      tpu.vector_store %arg6[%c0_38, %c0_39], %59 {strides = array<i32>} : memref<32x128xf32, #tpu.memory_space<vmem>>, vector<32x128xf32>,
    } else {
    }
    return
  }
  func.func @transform_0(%arg0: i32, %arg1: i32) -> (i32, i32, i32) {
    %c0_i32 = arith.constant 0 : i32
    %c0_i32_0 = arith.constant 0 : i32
    return %arg0, %arg1, %c0_i32 : i32, i32, i32
  }
  func.func @transform_1(%arg0: i32, %arg1: i32) -> (i32, i32, i32) {
    %c0_i32 = arith.constant 0 : i32
    %c0_i32_0 = arith.constant 0 : i32
    %c0_i32_1 = arith.constant 0 : i32
    return %arg0, %c0_i32, %c0_i32_0 : i32, i32, i32
  }
  func.func @transform_2(%arg0: i32, %arg1: i32) -> (i32, i32) {
    %c0_i32 = arith.constant 0 : i32
    %c0_i32_0 = arith.constant 0 : i32
    %c0_i32_1 = arith.constant 0 : i32
    return %c0_i32, %c0_i32_0 : i32, i32
  }
  func.func @transform_3(%arg0: i32, %arg1: i32) -> (i32, i32) {
    %c0_i32 = arith.constant 0 : i32
    %c0_i32_0 = arith.constant 0 : i32
    %c0_i32_1 = arith.constant 0 : i32
    return %c0_i32, %c0_i32_0 : i32, i32
  }
  func.func @transform_4(%arg0: i32, %arg1: i32) -> (i32, i32) {
    %c0_i32 = arith.constant 0 : i32
    %c0_i32_0 = arith.constant 0 : i32
    %c0_i32_1 = arith.constant 0 : i32
    return %c0_i32, %c0_i32_0 : i32, i32
  }
}

module attributes {stable_mosaic.version = 11 : i64} {
  func.func @_fused_conv_bn_lrelu_kernel(%arg0: i32, %arg1: i32, %arg2: memref<1x32x256xbf16, #tpu.memory_space<vmem>>, %arg3: memref<1x256x128xbf16, #tpu.memory_space<vmem>>, %arg4: memref<1x128xf32, #tpu.memory_space<vmem>>, %arg5: memref<1x128xf32, #tpu.memory_space<vmem>>, %arg6: memref<128x128xf32, #tpu.memory_space<vmem>>, %arg7: memref<1x128xf32, #tpu.memory_space<vmem>>, %arg8: memref<1x128xf32, #tpu.memory_space<vmem>>) attributes {dimension_semantics = [#tpu.dimension_semantics<arbitrary>, #tpu.dimension_semantics<arbitrary>], iteration_bounds = array<i64: 4, 1>, scalar_prefetch = 0 : i64, scratch_operands = 2 : i64, tpu.core_type = #tpu.core_type<tc>, window_params = [{transform_indices = @transform_0, window_bounds = array<i64: 1, 32, 256>}, {transform_indices = @transform_1, window_bounds = array<i64: 1, 256, 128>}, {pipeline_mode = #tpu.pipeline_mode<synchronous>, transform_indices = @transform_2, window_bounds = array<i64: 1, 128>}, {pipeline_mode = #tpu.pipeline_mode<synchronous>, transform_indices = @transform_3, window_bounds = array<i64: 1, 128>}, {pipeline_mode = #tpu.pipeline_mode<synchronous>, transform_indices = @transform_4, window_bounds = array<i64: 128, 128>}]} {
    %c0_i32 = arith.constant 0 : i32
    %0 = arith.cmpi eq, %arg0, %c0_i32 : i32
    %c0_i32_0 = arith.constant 0 : i32
    %1 = arith.cmpi eq, %arg1, %c0_i32_0 : i32
    %2 = arith.andi %0, %1 : i1
    %3 = arith.extui %2 : i1 to i32
    %c0_i32_1 = arith.constant 0 : i32
    %4 = arith.cmpi ne, %3, %c0_i32_1 : i32
    scf.if %4 {
      %cst_21 = arith.constant 0.000000e+00 : f32
      %32 = vector.broadcast %cst_21 : f32 to vector<1x128xf32>
      %c0_22 = arith.constant 0 : index
      %c0_23 = arith.constant 0 : index
      %33 = vector.load %arg7[%c0_22, %c0_23] : memref<1x128xf32, #tpu.memory_space<vmem>>, vector<1x128xf32>
      tpu.vector_store %arg7[%c0_22, %c0_23], %32 {strides = array<i32>} : memref<1x128xf32, #tpu.memory_space<vmem>>, vector<1x128xf32>,
      %cst_24 = arith.constant 0.000000e+00 : f32
      %34 = vector.broadcast %cst_24 : f32 to vector<1x128xf32>
      %c0_25 = arith.constant 0 : index
      %c0_26 = arith.constant 0 : index
      %35 = vector.load %arg8[%c0_25, %c0_26] : memref<1x128xf32, #tpu.memory_space<vmem>>, vector<1x128xf32>
      tpu.vector_store %arg8[%c0_25, %c0_26], %34 {strides = array<i32>} : memref<1x128xf32, #tpu.memory_space<vmem>>, vector<1x128xf32>,
    } else {
    }
    %c0 = arith.constant 0 : index
    %c0_2 = arith.constant 0 : index
    %c0_3 = arith.constant 0 : index
    %5 = vector.load %arg2[%c0, %c0_2, %c0_3] : memref<1x32x256xbf16, #tpu.memory_space<vmem>>, vector<1x32x256xbf16>
    %6 = vector.shape_cast %5 : vector<1x32x256xbf16> to vector<32x256xbf16>
    %c0_4 = arith.constant 0 : index
    %c0_5 = arith.constant 0 : index
    %c0_6 = arith.constant 0 : index
    %7 = vector.load %arg3[%c0_4, %c0_5, %c0_6] : memref<1x256x128xbf16, #tpu.memory_space<vmem>>, vector<1x256x128xbf16>
    %8 = vector.shape_cast %7 : vector<1x256x128xbf16> to vector<256x128xbf16>
    %cst = arith.constant dense<0.000000e+00> : vector<32x128xf32>
    %9 = tpu.matmul %6, %8, %cst {dimension_numbers = #tpu.dot_dimension_numbers<[1], [0], [0], [1], [0, 0, 1, 1], [], []>} : vector<32x256xbf16>, vector<256x128xbf16>, vector<32x128xf32> -> vector<32x128xf32>
    %c32_i32 = arith.constant 32 : i32
    %10 = arith.muli %arg0, %c32_i32 : i32
    %c32_i32_7 = arith.constant 32 : i32
    %11 = arith.muli %arg1, %c32_i32_7 : i32
    %12 = arith.addi %10, %11 : i32
    %13 = tpu.assume_multiple %12, 32 : i32
    %14 = arith.index_cast %13 : i32 to index
    %c0_8 = arith.constant 0 : index
    %15 = vector.load %arg6[%14, %c0_8] : memref<128x128xf32, #tpu.memory_space<vmem>>, vector<32x128xf32>
    tpu.vector_store %arg6[%14, %c0_8], %9 {strides = array<i32>} : memref<128x128xf32, #tpu.memory_space<vmem>>, vector<32x128xf32>,
    %c0_9 = arith.constant 0 : index
    %c0_10 = arith.constant 0 : index
    %16 = vector.load %arg7[%c0_9, %c0_10] : memref<1x128xf32, #tpu.memory_space<vmem>>, vector<1x128xf32>
    %cst_11 = arith.constant dense<0.000000e+00> : vector<128xf32>
    %17 = vector.multi_reduction <add>, %9, %cst_11 [0] : vector<32x128xf32> to vector<128xf32>
    %18 = vector.shape_cast %17 : vector<128xf32> to vector<1x128xf32>
    %19 = arith.addf %16, %18 : vector<1x128xf32>
    %c0_12 = arith.constant 0 : index
    %c0_13 = arith.constant 0 : index
    %20 = vector.load %arg7[%c0_12, %c0_13] : memref<1x128xf32, #tpu.memory_space<vmem>>, vector<1x128xf32>
    tpu.vector_store %arg7[%c0_12, %c0_13], %19 {strides = array<i32>} : memref<1x128xf32, #tpu.memory_space<vmem>>, vector<1x128xf32>,
    %c0_14 = arith.constant 0 : index
    %c0_15 = arith.constant 0 : index
    %21 = vector.load %arg8[%c0_14, %c0_15] : memref<1x128xf32, #tpu.memory_space<vmem>>, vector<1x128xf32>
    %22 = arith.mulf %9, %9 : vector<32x128xf32>
    %cst_16 = arith.constant dense<0.000000e+00> : vector<128xf32>
    %23 = vector.multi_reduction <add>, %22, %cst_16 [0] : vector<32x128xf32> to vector<128xf32>
    %24 = vector.shape_cast %23 : vector<128xf32> to vector<1x128xf32>
    %25 = arith.addf %21, %24 : vector<1x128xf32>
    %c0_17 = arith.constant 0 : index
    %c0_18 = arith.constant 0 : index
    %26 = vector.load %arg8[%c0_17, %c0_18] : memref<1x128xf32, #tpu.memory_space<vmem>>, vector<1x128xf32>
    tpu.vector_store %arg8[%c0_17, %c0_18], %25 {strides = array<i32>} : memref<1x128xf32, #tpu.memory_space<vmem>>, vector<1x128xf32>,
    %c3_i32 = arith.constant 3 : i32
    %27 = arith.cmpi eq, %arg0, %c3_i32 : i32
    %c0_i32_19 = arith.constant 0 : i32
    %28 = arith.cmpi eq, %arg1, %c0_i32_19 : i32
    %29 = arith.andi %27, %28 : i1
    %30 = arith.extui %29 : i1 to i32
    %c0_i32_20 = arith.constant 0 : i32
    %31 = arith.cmpi ne, %30, %c0_i32_20 : i32
    scf.if %31 {
      %c0_21 = arith.constant 0 : index
      %c0_22 = arith.constant 0 : index
      %32 = vector.load %arg7[%c0_21, %c0_22] : memref<1x128xf32, #tpu.memory_space<vmem>>, vector<1x128xf32>
      %cst_23 = arith.constant 7.812500e-03 : f32
      %33 = vector.broadcast %cst_23 : f32 to vector<1x128xf32>
      %34 = arith.mulf %32, %33 : vector<1x128xf32>
      %c0_24 = arith.constant 0 : index
      %c0_25 = arith.constant 0 : index
      %35 = vector.load %arg8[%c0_24, %c0_25] : memref<1x128xf32, #tpu.memory_space<vmem>>, vector<1x128xf32>
      %cst_26 = arith.constant 7.812500e-03 : f32
      %36 = vector.broadcast %cst_26 : f32 to vector<1x128xf32>
      %37 = arith.mulf %35, %36 : vector<1x128xf32>
      %38 = arith.mulf %34, %34 : vector<1x128xf32>
      %39 = arith.subf %37, %38 : vector<1x128xf32>
      %cst_27 = arith.constant 0.000000e+00 : f32
      %40 = vector.broadcast %cst_27 : f32 to vector<1x128xf32>
      %41 = arith.maximumf %39, %40 : vector<1x128xf32>
      %c0_28 = arith.constant 0 : index
      %c0_29 = arith.constant 0 : index
      %42 = vector.load %arg4[%c0_28, %c0_29] : memref<1x128xf32, #tpu.memory_space<vmem>>, vector<1x128xf32>
      %cst_30 = arith.constant 9.99999974E-6 : f32
      %43 = vector.broadcast %cst_30 : f32 to vector<1x128xf32>
      %44 = arith.addf %41, %43 : vector<1x128xf32>
      %45 = math.rsqrt %44 : vector<1x128xf32>
      %46 = arith.mulf %42, %45 : vector<1x128xf32>
      %c0_31 = arith.constant 0 : index
      %c0_32 = arith.constant 0 : index
      %47 = vector.load %arg5[%c0_31, %c0_32] : memref<1x128xf32, #tpu.memory_space<vmem>>, vector<1x128xf32>
      %48 = arith.mulf %34, %46 : vector<1x128xf32>
      %49 = arith.subf %47, %48 : vector<1x128xf32>
      %c0_33 = arith.constant 0 : index
      %c0_34 = arith.constant 0 : index
      %50 = vector.load %arg6[%c0_33, %c0_34] : memref<128x128xf32, #tpu.memory_space<vmem>>, vector<32x128xf32>
      %51 = vector.broadcast %46 : vector<1x128xf32> to vector<32x128xf32>
      %52 = arith.mulf %50, %51 : vector<32x128xf32>
      %53 = vector.broadcast %49 : vector<1x128xf32> to vector<32x128xf32>
      %54 = arith.addf %52, %53 : vector<32x128xf32>
      %cst_35 = arith.constant 0.000000e+00 : f32
      %55 = vector.broadcast %cst_35 : f32 to vector<32x128xf32>
      %56 = arith.cmpf oge, %54, %55 : vector<32x128xf32>
      %cst_36 = arith.constant 2.000000e-01 : f32
      %57 = vector.broadcast %cst_36 : f32 to vector<32x128xf32>
      %58 = arith.mulf %57, %54 : vector<32x128xf32>
      %59 = arith.select %56, %54, %58 : vector<32x128xi1>, vector<32x128xf32>
      %c0_37 = arith.constant 0 : index
      %c0_38 = arith.constant 0 : index
      %60 = vector.load %arg6[%c0_37, %c0_38] : memref<128x128xf32, #tpu.memory_space<vmem>>, vector<32x128xf32>
      tpu.vector_store %arg6[%c0_37, %c0_38], %59 {strides = array<i32>} : memref<128x128xf32, #tpu.memory_space<vmem>>, vector<32x128xf32>,
      %c32 = arith.constant 32 : index
      %c0_39 = arith.constant 0 : index
      %61 = vector.load %arg6[%c32, %c0_39] : memref<128x128xf32, #tpu.memory_space<vmem>>, vector<32x128xf32>
      %62 = vector.broadcast %46 : vector<1x128xf32> to vector<32x128xf32>
      %63 = arith.mulf %61, %62 : vector<32x128xf32>
      %64 = vector.broadcast %49 : vector<1x128xf32> to vector<32x128xf32>
      %65 = arith.addf %63, %64 : vector<32x128xf32>
      %cst_40 = arith.constant 0.000000e+00 : f32
      %66 = vector.broadcast %cst_40 : f32 to vector<32x128xf32>
      %67 = arith.cmpf oge, %65, %66 : vector<32x128xf32>
      %cst_41 = arith.constant 2.000000e-01 : f32
      %68 = vector.broadcast %cst_41 : f32 to vector<32x128xf32>
      %69 = arith.mulf %68, %65 : vector<32x128xf32>
      %70 = arith.select %67, %65, %69 : vector<32x128xi1>, vector<32x128xf32>
      %c32_42 = arith.constant 32 : index
      %c0_43 = arith.constant 0 : index
      %71 = vector.load %arg6[%c32_42, %c0_43] : memref<128x128xf32, #tpu.memory_space<vmem>>, vector<32x128xf32>
      tpu.vector_store %arg6[%c32_42, %c0_43], %70 {strides = array<i32>} : memref<128x128xf32, #tpu.memory_space<vmem>>, vector<32x128xf32>,
      %c64 = arith.constant 64 : index
      %c0_44 = arith.constant 0 : index
      %72 = vector.load %arg6[%c64, %c0_44] : memref<128x128xf32, #tpu.memory_space<vmem>>, vector<32x128xf32>
      %73 = vector.broadcast %46 : vector<1x128xf32> to vector<32x128xf32>
      %74 = arith.mulf %72, %73 : vector<32x128xf32>
      %75 = vector.broadcast %49 : vector<1x128xf32> to vector<32x128xf32>
      %76 = arith.addf %74, %75 : vector<32x128xf32>
      %cst_45 = arith.constant 0.000000e+00 : f32
      %77 = vector.broadcast %cst_45 : f32 to vector<32x128xf32>
      %78 = arith.cmpf oge, %76, %77 : vector<32x128xf32>
      %cst_46 = arith.constant 2.000000e-01 : f32
      %79 = vector.broadcast %cst_46 : f32 to vector<32x128xf32>
      %80 = arith.mulf %79, %76 : vector<32x128xf32>
      %81 = arith.select %78, %76, %80 : vector<32x128xi1>, vector<32x128xf32>
      %c64_47 = arith.constant 64 : index
      %c0_48 = arith.constant 0 : index
      %82 = vector.load %arg6[%c64_47, %c0_48] : memref<128x128xf32, #tpu.memory_space<vmem>>, vector<32x128xf32>
      tpu.vector_store %arg6[%c64_47, %c0_48], %81 {strides = array<i32>} : memref<128x128xf32, #tpu.memory_space<vmem>>, vector<32x128xf32>,
      %c96 = arith.constant 96 : index
      %c0_49 = arith.constant 0 : index
      %83 = vector.load %arg6[%c96, %c0_49] : memref<128x128xf32, #tpu.memory_space<vmem>>, vector<32x128xf32>
      %84 = vector.broadcast %46 : vector<1x128xf32> to vector<32x128xf32>
      %85 = arith.mulf %83, %84 : vector<32x128xf32>
      %86 = vector.broadcast %49 : vector<1x128xf32> to vector<32x128xf32>
      %87 = arith.addf %85, %86 : vector<32x128xf32>
      %cst_50 = arith.constant 0.000000e+00 : f32
      %88 = vector.broadcast %cst_50 : f32 to vector<32x128xf32>
      %89 = arith.cmpf oge, %87, %88 : vector<32x128xf32>
      %cst_51 = arith.constant 2.000000e-01 : f32
      %90 = vector.broadcast %cst_51 : f32 to vector<32x128xf32>
      %91 = arith.mulf %90, %87 : vector<32x128xf32>
      %92 = arith.select %89, %87, %91 : vector<32x128xi1>, vector<32x128xf32>
      %c96_52 = arith.constant 96 : index
      %c0_53 = arith.constant 0 : index
      %93 = vector.load %arg6[%c96_52, %c0_53] : memref<128x128xf32, #tpu.memory_space<vmem>>, vector<32x128xf32>
      tpu.vector_store %arg6[%c96_52, %c0_53], %92 {strides = array<i32>} : memref<128x128xf32, #tpu.memory_space<vmem>>, vector<32x128xf32>,
    } else {
    }
    return
  }
  func.func @transform_0(%arg0: i32, %arg1: i32) -> (i32, i32, i32) {
    %c0_i32 = arith.constant 0 : i32
    %c0_i32_0 = arith.constant 0 : i32
    return %arg0, %arg1, %c0_i32 : i32, i32, i32
  }
  func.func @transform_1(%arg0: i32, %arg1: i32) -> (i32, i32, i32) {
    %c0_i32 = arith.constant 0 : i32
    %c0_i32_0 = arith.constant 0 : i32
    %c0_i32_1 = arith.constant 0 : i32
    return %arg0, %c0_i32, %c0_i32_0 : i32, i32, i32
  }
  func.func @transform_2(%arg0: i32, %arg1: i32) -> (i32, i32) {
    %c0_i32 = arith.constant 0 : i32
    %c0_i32_0 = arith.constant 0 : i32
    %c0_i32_1 = arith.constant 0 : i32
    return %c0_i32, %c0_i32_0 : i32, i32
  }
  func.func @transform_3(%arg0: i32, %arg1: i32) -> (i32, i32) {
    %c0_i32 = arith.constant 0 : i32
    %c0_i32_0 = arith.constant 0 : i32
    %c0_i32_1 = arith.constant 0 : i32
    return %c0_i32, %c0_i32_0 : i32, i32
  }
  func.func @transform_4(%arg0: i32, %arg1: i32) -> (i32, i32) {
    %c0_i32 = arith.constant 0 : i32
    %c0_i32_0 = arith.constant 0 : i32
    %c0_i32_1 = arith.constant 0 : i32
    return %c0_i32, %c0_i32_0 : i32, i32
  }
}

module attributes {stable_mosaic.version = 11 : i64} {
  func.func @_fused_conv_bn_lrelu_kernel(%arg0: i32, %arg1: i32, %arg2: memref<1x128x128xbf16, #tpu.memory_space<vmem>>, %arg3: memref<1x128x128xbf16, #tpu.memory_space<vmem>>, %arg4: memref<1x128xf32, #tpu.memory_space<vmem>>, %arg5: memref<1x128xf32, #tpu.memory_space<vmem>>, %arg6: memref<512x128xf32, #tpu.memory_space<vmem>>, %arg7: memref<1x128xf32, #tpu.memory_space<vmem>>, %arg8: memref<1x128xf32, #tpu.memory_space<vmem>>) attributes {dimension_semantics = [#tpu.dimension_semantics<arbitrary>, #tpu.dimension_semantics<arbitrary>], iteration_bounds = array<i64: 4, 1>, scalar_prefetch = 0 : i64, scratch_operands = 2 : i64, tpu.core_type = #tpu.core_type<tc>, window_params = [{transform_indices = @transform_0, window_bounds = array<i64: 1, 128, 128>}, {transform_indices = @transform_1, window_bounds = array<i64: 1, 128, 128>}, {pipeline_mode = #tpu.pipeline_mode<synchronous>, transform_indices = @transform_2, window_bounds = array<i64: 1, 128>}, {pipeline_mode = #tpu.pipeline_mode<synchronous>, transform_indices = @transform_3, window_bounds = array<i64: 1, 128>}, {pipeline_mode = #tpu.pipeline_mode<synchronous>, transform_indices = @transform_4, window_bounds = array<i64: 512, 128>}]} {
    %c0_i32 = arith.constant 0 : i32
    %0 = arith.cmpi eq, %arg0, %c0_i32 : i32
    %c0_i32_0 = arith.constant 0 : i32
    %1 = arith.cmpi eq, %arg1, %c0_i32_0 : i32
    %2 = arith.andi %0, %1 : i1
    %3 = arith.extui %2 : i1 to i32
    %c0_i32_1 = arith.constant 0 : i32
    %4 = arith.cmpi ne, %3, %c0_i32_1 : i32
    scf.if %4 {
      %cst_21 = arith.constant 0.000000e+00 : f32
      %32 = vector.broadcast %cst_21 : f32 to vector<1x128xf32>
      %c0_22 = arith.constant 0 : index
      %c0_23 = arith.constant 0 : index
      %33 = vector.load %arg7[%c0_22, %c0_23] : memref<1x128xf32, #tpu.memory_space<vmem>>, vector<1x128xf32>
      tpu.vector_store %arg7[%c0_22, %c0_23], %32 {strides = array<i32>} : memref<1x128xf32, #tpu.memory_space<vmem>>, vector<1x128xf32>,
      %cst_24 = arith.constant 0.000000e+00 : f32
      %34 = vector.broadcast %cst_24 : f32 to vector<1x128xf32>
      %c0_25 = arith.constant 0 : index
      %c0_26 = arith.constant 0 : index
      %35 = vector.load %arg8[%c0_25, %c0_26] : memref<1x128xf32, #tpu.memory_space<vmem>>, vector<1x128xf32>
      tpu.vector_store %arg8[%c0_25, %c0_26], %34 {strides = array<i32>} : memref<1x128xf32, #tpu.memory_space<vmem>>, vector<1x128xf32>,
    } else {
    }
    %c0 = arith.constant 0 : index
    %c0_2 = arith.constant 0 : index
    %c0_3 = arith.constant 0 : index
    %5 = vector.load %arg2[%c0, %c0_2, %c0_3] : memref<1x128x128xbf16, #tpu.memory_space<vmem>>, vector<1x128x128xbf16>
    %6 = vector.shape_cast %5 : vector<1x128x128xbf16> to vector<128x128xbf16>
    %c0_4 = arith.constant 0 : index
    %c0_5 = arith.constant 0 : index
    %c0_6 = arith.constant 0 : index
    %7 = vector.load %arg3[%c0_4, %c0_5, %c0_6] : memref<1x128x128xbf16, #tpu.memory_space<vmem>>, vector<1x128x128xbf16>
    %8 = vector.shape_cast %7 : vector<1x128x128xbf16> to vector<128x128xbf16>
    %cst = arith.constant dense<0.000000e+00> : vector<128x128xf32>
    %9 = tpu.matmul %6, %8, %cst {dimension_numbers = #tpu.dot_dimension_numbers<[1], [0], [0], [1], [0, 0, 1, 1], [], []>} : vector<128x128xbf16>, vector<128x128xbf16>, vector<128x128xf32> -> vector<128x128xf32>
    %c128_i32 = arith.constant 128 : i32
    %10 = arith.muli %arg0, %c128_i32 : i32
    %c128_i32_7 = arith.constant 128 : i32
    %11 = arith.muli %arg1, %c128_i32_7 : i32
    %12 = arith.addi %10, %11 : i32
    %13 = tpu.assume_multiple %12, 128 : i32
    %14 = arith.index_cast %13 : i32 to index
    %c0_8 = arith.constant 0 : index
    %15 = vector.load %arg6[%14, %c0_8] : memref<512x128xf32, #tpu.memory_space<vmem>>, vector<128x128xf32>
    tpu.vector_store %arg6[%14, %c0_8], %9 {strides = array<i32>} : memref<512x128xf32, #tpu.memory_space<vmem>>, vector<128x128xf32>,
    %c0_9 = arith.constant 0 : index
    %c0_10 = arith.constant 0 : index
    %16 = vector.load %arg7[%c0_9, %c0_10] : memref<1x128xf32, #tpu.memory_space<vmem>>, vector<1x128xf32>
    %cst_11 = arith.constant dense<0.000000e+00> : vector<128xf32>
    %17 = vector.multi_reduction <add>, %9, %cst_11 [0] : vector<128x128xf32> to vector<128xf32>
    %18 = vector.shape_cast %17 : vector<128xf32> to vector<1x128xf32>
    %19 = arith.addf %16, %18 : vector<1x128xf32>
    %c0_12 = arith.constant 0 : index
    %c0_13 = arith.constant 0 : index
    %20 = vector.load %arg7[%c0_12, %c0_13] : memref<1x128xf32, #tpu.memory_space<vmem>>, vector<1x128xf32>
    tpu.vector_store %arg7[%c0_12, %c0_13], %19 {strides = array<i32>} : memref<1x128xf32, #tpu.memory_space<vmem>>, vector<1x128xf32>,
    %c0_14 = arith.constant 0 : index
    %c0_15 = arith.constant 0 : index
    %21 = vector.load %arg8[%c0_14, %c0_15] : memref<1x128xf32, #tpu.memory_space<vmem>>, vector<1x128xf32>
    %22 = arith.mulf %9, %9 : vector<128x128xf32>
    %cst_16 = arith.constant dense<0.000000e+00> : vector<128xf32>
    %23 = vector.multi_reduction <add>, %22, %cst_16 [0] : vector<128x128xf32> to vector<128xf32>
    %24 = vector.shape_cast %23 : vector<128xf32> to vector<1x128xf32>
    %25 = arith.addf %21, %24 : vector<1x128xf32>
    %c0_17 = arith.constant 0 : index
    %c0_18 = arith.constant 0 : index
    %26 = vector.load %arg8[%c0_17, %c0_18] : memref<1x128xf32, #tpu.memory_space<vmem>>, vector<1x128xf32>
    tpu.vector_store %arg8[%c0_17, %c0_18], %25 {strides = array<i32>} : memref<1x128xf32, #tpu.memory_space<vmem>>, vector<1x128xf32>,
    %c3_i32 = arith.constant 3 : i32
    %27 = arith.cmpi eq, %arg0, %c3_i32 : i32
    %c0_i32_19 = arith.constant 0 : i32
    %28 = arith.cmpi eq, %arg1, %c0_i32_19 : i32
    %29 = arith.andi %27, %28 : i1
    %30 = arith.extui %29 : i1 to i32
    %c0_i32_20 = arith.constant 0 : i32
    %31 = arith.cmpi ne, %30, %c0_i32_20 : i32
    scf.if %31 {
      %c0_21 = arith.constant 0 : index
      %c0_22 = arith.constant 0 : index
      %32 = vector.load %arg7[%c0_21, %c0_22] : memref<1x128xf32, #tpu.memory_space<vmem>>, vector<1x128xf32>
      %cst_23 = arith.constant 0.001953125 : f32
      %33 = vector.broadcast %cst_23 : f32 to vector<1x128xf32>
      %34 = arith.mulf %32, %33 : vector<1x128xf32>
      %c0_24 = arith.constant 0 : index
      %c0_25 = arith.constant 0 : index
      %35 = vector.load %arg8[%c0_24, %c0_25] : memref<1x128xf32, #tpu.memory_space<vmem>>, vector<1x128xf32>
      %cst_26 = arith.constant 0.001953125 : f32
      %36 = vector.broadcast %cst_26 : f32 to vector<1x128xf32>
      %37 = arith.mulf %35, %36 : vector<1x128xf32>
      %38 = arith.mulf %34, %34 : vector<1x128xf32>
      %39 = arith.subf %37, %38 : vector<1x128xf32>
      %cst_27 = arith.constant 0.000000e+00 : f32
      %40 = vector.broadcast %cst_27 : f32 to vector<1x128xf32>
      %41 = arith.maximumf %39, %40 : vector<1x128xf32>
      %c0_28 = arith.constant 0 : index
      %c0_29 = arith.constant 0 : index
      %42 = vector.load %arg4[%c0_28, %c0_29] : memref<1x128xf32, #tpu.memory_space<vmem>>, vector<1x128xf32>
      %cst_30 = arith.constant 9.99999974E-6 : f32
      %43 = vector.broadcast %cst_30 : f32 to vector<1x128xf32>
      %44 = arith.addf %41, %43 : vector<1x128xf32>
      %45 = math.rsqrt %44 : vector<1x128xf32>
      %46 = arith.mulf %42, %45 : vector<1x128xf32>
      %c0_31 = arith.constant 0 : index
      %c0_32 = arith.constant 0 : index
      %47 = vector.load %arg5[%c0_31, %c0_32] : memref<1x128xf32, #tpu.memory_space<vmem>>, vector<1x128xf32>
      %48 = arith.mulf %34, %46 : vector<1x128xf32>
      %49 = arith.subf %47, %48 : vector<1x128xf32>
      %c0_33 = arith.constant 0 : index
      %c0_34 = arith.constant 0 : index
      %50 = vector.load %arg6[%c0_33, %c0_34] : memref<512x128xf32, #tpu.memory_space<vmem>>, vector<128x128xf32>
      %51 = vector.broadcast %46 : vector<1x128xf32> to vector<128x128xf32>
      %52 = arith.mulf %50, %51 : vector<128x128xf32>
      %53 = vector.broadcast %49 : vector<1x128xf32> to vector<128x128xf32>
      %54 = arith.addf %52, %53 : vector<128x128xf32>
      %cst_35 = arith.constant 0.000000e+00 : f32
      %55 = vector.broadcast %cst_35 : f32 to vector<128x128xf32>
      %56 = arith.cmpf oge, %54, %55 : vector<128x128xf32>
      %cst_36 = arith.constant 2.000000e-01 : f32
      %57 = vector.broadcast %cst_36 : f32 to vector<128x128xf32>
      %58 = arith.mulf %57, %54 : vector<128x128xf32>
      %59 = arith.select %56, %54, %58 : vector<128x128xi1>, vector<128x128xf32>
      %c0_37 = arith.constant 0 : index
      %c0_38 = arith.constant 0 : index
      %60 = vector.load %arg6[%c0_37, %c0_38] : memref<512x128xf32, #tpu.memory_space<vmem>>, vector<128x128xf32>
      tpu.vector_store %arg6[%c0_37, %c0_38], %59 {strides = array<i32>} : memref<512x128xf32, #tpu.memory_space<vmem>>, vector<128x128xf32>,
      %c128 = arith.constant 128 : index
      %c0_39 = arith.constant 0 : index
      %61 = vector.load %arg6[%c128, %c0_39] : memref<512x128xf32, #tpu.memory_space<vmem>>, vector<128x128xf32>
      %62 = vector.broadcast %46 : vector<1x128xf32> to vector<128x128xf32>
      %63 = arith.mulf %61, %62 : vector<128x128xf32>
      %64 = vector.broadcast %49 : vector<1x128xf32> to vector<128x128xf32>
      %65 = arith.addf %63, %64 : vector<128x128xf32>
      %cst_40 = arith.constant 0.000000e+00 : f32
      %66 = vector.broadcast %cst_40 : f32 to vector<128x128xf32>
      %67 = arith.cmpf oge, %65, %66 : vector<128x128xf32>
      %cst_41 = arith.constant 2.000000e-01 : f32
      %68 = vector.broadcast %cst_41 : f32 to vector<128x128xf32>
      %69 = arith.mulf %68, %65 : vector<128x128xf32>
      %70 = arith.select %67, %65, %69 : vector<128x128xi1>, vector<128x128xf32>
      %c128_42 = arith.constant 128 : index
      %c0_43 = arith.constant 0 : index
      %71 = vector.load %arg6[%c128_42, %c0_43] : memref<512x128xf32, #tpu.memory_space<vmem>>, vector<128x128xf32>
      tpu.vector_store %arg6[%c128_42, %c0_43], %70 {strides = array<i32>} : memref<512x128xf32, #tpu.memory_space<vmem>>, vector<128x128xf32>,
      %c256 = arith.constant 256 : index
      %c0_44 = arith.constant 0 : index
      %72 = vector.load %arg6[%c256, %c0_44] : memref<512x128xf32, #tpu.memory_space<vmem>>, vector<128x128xf32>
      %73 = vector.broadcast %46 : vector<1x128xf32> to vector<128x128xf32>
      %74 = arith.mulf %72, %73 : vector<128x128xf32>
      %75 = vector.broadcast %49 : vector<1x128xf32> to vector<128x128xf32>
      %76 = arith.addf %74, %75 : vector<128x128xf32>
      %cst_45 = arith.constant 0.000000e+00 : f32
      %77 = vector.broadcast %cst_45 : f32 to vector<128x128xf32>
      %78 = arith.cmpf oge, %76, %77 : vector<128x128xf32>
      %cst_46 = arith.constant 2.000000e-01 : f32
      %79 = vector.broadcast %cst_46 : f32 to vector<128x128xf32>
      %80 = arith.mulf %79, %76 : vector<128x128xf32>
      %81 = arith.select %78, %76, %80 : vector<128x128xi1>, vector<128x128xf32>
      %c256_47 = arith.constant 256 : index
      %c0_48 = arith.constant 0 : index
      %82 = vector.load %arg6[%c256_47, %c0_48] : memref<512x128xf32, #tpu.memory_space<vmem>>, vector<128x128xf32>
      tpu.vector_store %arg6[%c256_47, %c0_48], %81 {strides = array<i32>} : memref<512x128xf32, #tpu.memory_space<vmem>>, vector<128x128xf32>,
      %c384 = arith.constant 384 : index
      %c0_49 = arith.constant 0 : index
      %83 = vector.load %arg6[%c384, %c0_49] : memref<512x128xf32, #tpu.memory_space<vmem>>, vector<128x128xf32>
      %84 = vector.broadcast %46 : vector<1x128xf32> to vector<128x128xf32>
      %85 = arith.mulf %83, %84 : vector<128x128xf32>
      %86 = vector.broadcast %49 : vector<1x128xf32> to vector<128x128xf32>
      %87 = arith.addf %85, %86 : vector<128x128xf32>
      %cst_50 = arith.constant 0.000000e+00 : f32
      %88 = vector.broadcast %cst_50 : f32 to vector<128x128xf32>
      %89 = arith.cmpf oge, %87, %88 : vector<128x128xf32>
      %cst_51 = arith.constant 2.000000e-01 : f32
      %90 = vector.broadcast %cst_51 : f32 to vector<128x128xf32>
      %91 = arith.mulf %90, %87 : vector<128x128xf32>
      %92 = arith.select %89, %87, %91 : vector<128x128xi1>, vector<128x128xf32>
      %c384_52 = arith.constant 384 : index
      %c0_53 = arith.constant 0 : index
      %93 = vector.load %arg6[%c384_52, %c0_53] : memref<512x128xf32, #tpu.memory_space<vmem>>, vector<128x128xf32>
      tpu.vector_store %arg6[%c384_52, %c0_53], %92 {strides = array<i32>} : memref<512x128xf32, #tpu.memory_space<vmem>>, vector<128x128xf32>,
    } else {
    }
    return
  }
  func.func @transform_0(%arg0: i32, %arg1: i32) -> (i32, i32, i32) {
    %c0_i32 = arith.constant 0 : i32
    %c0_i32_0 = arith.constant 0 : i32
    return %arg0, %arg1, %c0_i32 : i32, i32, i32
  }
  func.func @transform_1(%arg0: i32, %arg1: i32) -> (i32, i32, i32) {
    %c0_i32 = arith.constant 0 : i32
    %c0_i32_0 = arith.constant 0 : i32
    %c0_i32_1 = arith.constant 0 : i32
    return %arg0, %c0_i32, %c0_i32_0 : i32, i32, i32
  }
  func.func @transform_2(%arg0: i32, %arg1: i32) -> (i32, i32) {
    %c0_i32 = arith.constant 0 : i32
    %c0_i32_0 = arith.constant 0 : i32
    %c0_i32_1 = arith.constant 0 : i32
    return %c0_i32, %c0_i32_0 : i32, i32
  }
  func.func @transform_3(%arg0: i32, %arg1: i32) -> (i32, i32) {
    %c0_i32 = arith.constant 0 : i32
    %c0_i32_0 = arith.constant 0 : i32
    %c0_i32_1 = arith.constant 0 : i32
    return %c0_i32, %c0_i32_0 : i32, i32
  }
  func.func @transform_4(%arg0: i32, %arg1: i32) -> (i32, i32) {
    %c0_i32 = arith.constant 0 : i32
    %c0_i32_0 = arith.constant 0 : i32
    %c0_i32_1 = arith.constant 0 : i32
    return %c0_i32, %c0_i32_0 : i32, i32
  }
}

module attributes {stable_mosaic.version = 11 : i64} {
  func.func @_fused_conv_bn_lrelu_kernel(%arg0: i32, %arg1: i32, %arg2: memref<1x512x64xbf16, #tpu.memory_space<vmem>>, %arg3: memref<1x64x128xbf16, #tpu.memory_space<vmem>>, %arg4: memref<1x128xf32, #tpu.memory_space<vmem>>, %arg5: memref<1x128xf32, #tpu.memory_space<vmem>>, %arg6: memref<2048x128xf32, #tpu.memory_space<vmem>>, %arg7: memref<1x128xf32, #tpu.memory_space<vmem>>, %arg8: memref<1x128xf32, #tpu.memory_space<vmem>>) attributes {dimension_semantics = [#tpu.dimension_semantics<arbitrary>, #tpu.dimension_semantics<arbitrary>], iteration_bounds = array<i64: 4, 1>, scalar_prefetch = 0 : i64, scratch_operands = 2 : i64, tpu.core_type = #tpu.core_type<tc>, window_params = [{transform_indices = @transform_0, window_bounds = array<i64: 1, 512, 64>}, {transform_indices = @transform_1, window_bounds = array<i64: 1, 64, 128>}, {pipeline_mode = #tpu.pipeline_mode<synchronous>, transform_indices = @transform_2, window_bounds = array<i64: 1, 128>}, {pipeline_mode = #tpu.pipeline_mode<synchronous>, transform_indices = @transform_3, window_bounds = array<i64: 1, 128>}, {pipeline_mode = #tpu.pipeline_mode<synchronous>, transform_indices = @transform_4, window_bounds = array<i64: 2048, 128>}]} {
    %c0_i32 = arith.constant 0 : i32
    %0 = arith.cmpi eq, %arg0, %c0_i32 : i32
    %c0_i32_0 = arith.constant 0 : i32
    %1 = arith.cmpi eq, %arg1, %c0_i32_0 : i32
    %2 = arith.andi %0, %1 : i1
    %3 = arith.extui %2 : i1 to i32
    %c0_i32_1 = arith.constant 0 : i32
    %4 = arith.cmpi ne, %3, %c0_i32_1 : i32
    scf.if %4 {
      %cst_21 = arith.constant 0.000000e+00 : f32
      %32 = vector.broadcast %cst_21 : f32 to vector<1x128xf32>
      %c0_22 = arith.constant 0 : index
      %c0_23 = arith.constant 0 : index
      %33 = vector.load %arg7[%c0_22, %c0_23] : memref<1x128xf32, #tpu.memory_space<vmem>>, vector<1x128xf32>
      tpu.vector_store %arg7[%c0_22, %c0_23], %32 {strides = array<i32>} : memref<1x128xf32, #tpu.memory_space<vmem>>, vector<1x128xf32>,
      %cst_24 = arith.constant 0.000000e+00 : f32
      %34 = vector.broadcast %cst_24 : f32 to vector<1x128xf32>
      %c0_25 = arith.constant 0 : index
      %c0_26 = arith.constant 0 : index
      %35 = vector.load %arg8[%c0_25, %c0_26] : memref<1x128xf32, #tpu.memory_space<vmem>>, vector<1x128xf32>
      tpu.vector_store %arg8[%c0_25, %c0_26], %34 {strides = array<i32>} : memref<1x128xf32, #tpu.memory_space<vmem>>, vector<1x128xf32>,
    } else {
    }
    %c0 = arith.constant 0 : index
    %c0_2 = arith.constant 0 : index
    %c0_3 = arith.constant 0 : index
    %5 = vector.load %arg2[%c0, %c0_2, %c0_3] : memref<1x512x64xbf16, #tpu.memory_space<vmem>>, vector<1x512x64xbf16>
    %6 = vector.shape_cast %5 : vector<1x512x64xbf16> to vector<512x64xbf16>
    %c0_4 = arith.constant 0 : index
    %c0_5 = arith.constant 0 : index
    %c0_6 = arith.constant 0 : index
    %7 = vector.load %arg3[%c0_4, %c0_5, %c0_6] : memref<1x64x128xbf16, #tpu.memory_space<vmem>>, vector<1x64x128xbf16>
    %8 = vector.shape_cast %7 : vector<1x64x128xbf16> to vector<64x128xbf16>
    %cst = arith.constant dense<0.000000e+00> : vector<512x128xf32>
    %9 = tpu.matmul %6, %8, %cst {dimension_numbers = #tpu.dot_dimension_numbers<[1], [0], [0], [1], [0, 0, 1, 1], [], []>} : vector<512x64xbf16>, vector<64x128xbf16>, vector<512x128xf32> -> vector<512x128xf32>
    %c512_i32 = arith.constant 512 : i32
    %10 = arith.muli %arg0, %c512_i32 : i32
    %c512_i32_7 = arith.constant 512 : i32
    %11 = arith.muli %arg1, %c512_i32_7 : i32
    %12 = arith.addi %10, %11 : i32
    %13 = tpu.assume_multiple %12, 512 : i32
    %14 = arith.index_cast %13 : i32 to index
    %c0_8 = arith.constant 0 : index
    %15 = vector.load %arg6[%14, %c0_8] : memref<2048x128xf32, #tpu.memory_space<vmem>>, vector<512x128xf32>
    tpu.vector_store %arg6[%14, %c0_8], %9 {strides = array<i32>} : memref<2048x128xf32, #tpu.memory_space<vmem>>, vector<512x128xf32>,
    %c0_9 = arith.constant 0 : index
    %c0_10 = arith.constant 0 : index
    %16 = vector.load %arg7[%c0_9, %c0_10] : memref<1x128xf32, #tpu.memory_space<vmem>>, vector<1x128xf32>
    %cst_11 = arith.constant dense<0.000000e+00> : vector<128xf32>
    %17 = vector.multi_reduction <add>, %9, %cst_11 [0] : vector<512x128xf32> to vector<128xf32>
    %18 = vector.shape_cast %17 : vector<128xf32> to vector<1x128xf32>
    %19 = arith.addf %16, %18 : vector<1x128xf32>
    %c0_12 = arith.constant 0 : index
    %c0_13 = arith.constant 0 : index
    %20 = vector.load %arg7[%c0_12, %c0_13] : memref<1x128xf32, #tpu.memory_space<vmem>>, vector<1x128xf32>
    tpu.vector_store %arg7[%c0_12, %c0_13], %19 {strides = array<i32>} : memref<1x128xf32, #tpu.memory_space<vmem>>, vector<1x128xf32>,
    %c0_14 = arith.constant 0 : index
    %c0_15 = arith.constant 0 : index
    %21 = vector.load %arg8[%c0_14, %c0_15] : memref<1x128xf32, #tpu.memory_space<vmem>>, vector<1x128xf32>
    %22 = arith.mulf %9, %9 : vector<512x128xf32>
    %cst_16 = arith.constant dense<0.000000e+00> : vector<128xf32>
    %23 = vector.multi_reduction <add>, %22, %cst_16 [0] : vector<512x128xf32> to vector<128xf32>
    %24 = vector.shape_cast %23 : vector<128xf32> to vector<1x128xf32>
    %25 = arith.addf %21, %24 : vector<1x128xf32>
    %c0_17 = arith.constant 0 : index
    %c0_18 = arith.constant 0 : index
    %26 = vector.load %arg8[%c0_17, %c0_18] : memref<1x128xf32, #tpu.memory_space<vmem>>, vector<1x128xf32>
    tpu.vector_store %arg8[%c0_17, %c0_18], %25 {strides = array<i32>} : memref<1x128xf32, #tpu.memory_space<vmem>>, vector<1x128xf32>,
    %c3_i32 = arith.constant 3 : i32
    %27 = arith.cmpi eq, %arg0, %c3_i32 : i32
    %c0_i32_19 = arith.constant 0 : i32
    %28 = arith.cmpi eq, %arg1, %c0_i32_19 : i32
    %29 = arith.andi %27, %28 : i1
    %30 = arith.extui %29 : i1 to i32
    %c0_i32_20 = arith.constant 0 : i32
    %31 = arith.cmpi ne, %30, %c0_i32_20 : i32
    scf.if %31 {
      %c0_21 = arith.constant 0 : index
      %c0_22 = arith.constant 0 : index
      %32 = vector.load %arg7[%c0_21, %c0_22] : memref<1x128xf32, #tpu.memory_space<vmem>>, vector<1x128xf32>
      %cst_23 = arith.constant 4.8828125E-4 : f32
      %33 = vector.broadcast %cst_23 : f32 to vector<1x128xf32>
      %34 = arith.mulf %32, %33 : vector<1x128xf32>
      %c0_24 = arith.constant 0 : index
      %c0_25 = arith.constant 0 : index
      %35 = vector.load %arg8[%c0_24, %c0_25] : memref<1x128xf32, #tpu.memory_space<vmem>>, vector<1x128xf32>
      %cst_26 = arith.constant 4.8828125E-4 : f32
      %36 = vector.broadcast %cst_26 : f32 to vector<1x128xf32>
      %37 = arith.mulf %35, %36 : vector<1x128xf32>
      %38 = arith.mulf %34, %34 : vector<1x128xf32>
      %39 = arith.subf %37, %38 : vector<1x128xf32>
      %cst_27 = arith.constant 0.000000e+00 : f32
      %40 = vector.broadcast %cst_27 : f32 to vector<1x128xf32>
      %41 = arith.maximumf %39, %40 : vector<1x128xf32>
      %c0_28 = arith.constant 0 : index
      %c0_29 = arith.constant 0 : index
      %42 = vector.load %arg4[%c0_28, %c0_29] : memref<1x128xf32, #tpu.memory_space<vmem>>, vector<1x128xf32>
      %cst_30 = arith.constant 9.99999974E-6 : f32
      %43 = vector.broadcast %cst_30 : f32 to vector<1x128xf32>
      %44 = arith.addf %41, %43 : vector<1x128xf32>
      %45 = math.rsqrt %44 : vector<1x128xf32>
      %46 = arith.mulf %42, %45 : vector<1x128xf32>
      %c0_31 = arith.constant 0 : index
      %c0_32 = arith.constant 0 : index
      %47 = vector.load %arg5[%c0_31, %c0_32] : memref<1x128xf32, #tpu.memory_space<vmem>>, vector<1x128xf32>
      %48 = arith.mulf %34, %46 : vector<1x128xf32>
      %49 = arith.subf %47, %48 : vector<1x128xf32>
      %c0_33 = arith.constant 0 : index
      %c0_34 = arith.constant 0 : index
      %50 = vector.load %arg6[%c0_33, %c0_34] : memref<2048x128xf32, #tpu.memory_space<vmem>>, vector<128x128xf32>
      %51 = vector.broadcast %46 : vector<1x128xf32> to vector<128x128xf32>
      %52 = arith.mulf %50, %51 : vector<128x128xf32>
      %53 = vector.broadcast %49 : vector<1x128xf32> to vector<128x128xf32>
      %54 = arith.addf %52, %53 : vector<128x128xf32>
      %cst_35 = arith.constant 0.000000e+00 : f32
      %55 = vector.broadcast %cst_35 : f32 to vector<128x128xf32>
      %56 = arith.cmpf oge, %54, %55 : vector<128x128xf32>
      %cst_36 = arith.constant 2.000000e-01 : f32
      %57 = vector.broadcast %cst_36 : f32 to vector<128x128xf32>
      %58 = arith.mulf %57, %54 : vector<128x128xf32>
      %59 = arith.select %56, %54, %58 : vector<128x128xi1>, vector<128x128xf32>
      %c0_37 = arith.constant 0 : index
      %c0_38 = arith.constant 0 : index
      %60 = vector.load %arg6[%c0_37, %c0_38] : memref<2048x128xf32, #tpu.memory_space<vmem>>, vector<128x128xf32>
      tpu.vector_store %arg6[%c0_37, %c0_38], %59 {strides = array<i32>} : memref<2048x128xf32, #tpu.memory_space<vmem>>, vector<128x128xf32>,
      %c128 = arith.constant 128 : index
      %c0_39 = arith.constant 0 : index
      %61 = vector.load %arg6[%c128, %c0_39] : memref<2048x128xf32, #tpu.memory_space<vmem>>, vector<128x128xf32>
      %62 = vector.broadcast %46 : vector<1x128xf32> to vector<128x128xf32>
      %63 = arith.mulf %61, %62 : vector<128x128xf32>
      %64 = vector.broadcast %49 : vector<1x128xf32> to vector<128x128xf32>
      %65 = arith.addf %63, %64 : vector<128x128xf32>
      %cst_40 = arith.constant 0.000000e+00 : f32
      %66 = vector.broadcast %cst_40 : f32 to vector<128x128xf32>
      %67 = arith.cmpf oge, %65, %66 : vector<128x128xf32>
      %cst_41 = arith.constant 2.000000e-01 : f32
      %68 = vector.broadcast %cst_41 : f32 to vector<128x128xf32>
      %69 = arith.mulf %68, %65 : vector<128x128xf32>
      %70 = arith.select %67, %65, %69 : vector<128x128xi1>, vector<128x128xf32>
      %c128_42 = arith.constant 128 : index
      %c0_43 = arith.constant 0 : index
      %71 = vector.load %arg6[%c128_42, %c0_43] : memref<2048x128xf32, #tpu.memory_space<vmem>>, vector<128x128xf32>
      tpu.vector_store %arg6[%c128_42, %c0_43], %70 {strides = array<i32>} : memref<2048x128xf32, #tpu.memory_space<vmem>>, vector<128x128xf32>,
      %c256 = arith.constant 256 : index
      %c0_44 = arith.constant 0 : index
      %72 = vector.load %arg6[%c256, %c0_44] : memref<2048x128xf32, #tpu.memory_space<vmem>>, vector<128x128xf32>
      %73 = vector.broadcast %46 : vector<1x128xf32> to vector<128x128xf32>
      %74 = arith.mulf %72, %73 : vector<128x128xf32>
      %75 = vector.broadcast %49 : vector<1x128xf32> to vector<128x128xf32>
      %76 = arith.addf %74, %75 : vector<128x128xf32>
      %cst_45 = arith.constant 0.000000e+00 : f32
      %77 = vector.broadcast %cst_45 : f32 to vector<128x128xf32>
      %78 = arith.cmpf oge, %76, %77 : vector<128x128xf32>
      %cst_46 = arith.constant 2.000000e-01 : f32
      %79 = vector.broadcast %cst_46 : f32 to vector<128x128xf32>
      %80 = arith.mulf %79, %76 : vector<128x128xf32>
      %81 = arith.select %78, %76, %80 : vector<128x128xi1>, vector<128x128xf32>
      %c256_47 = arith.constant 256 : index
      %c0_48 = arith.constant 0 : index
      %82 = vector.load %arg6[%c256_47, %c0_48] : memref<2048x128xf32, #tpu.memory_space<vmem>>, vector<128x128xf32>
      tpu.vector_store %arg6[%c256_47, %c0_48], %81 {strides = array<i32>} : memref<2048x128xf32, #tpu.memory_space<vmem>>, vector<128x128xf32>,
      %c384 = arith.constant 384 : index
      %c0_49 = arith.constant 0 : index
      %83 = vector.load %arg6[%c384, %c0_49] : memref<2048x128xf32, #tpu.memory_space<vmem>>, vector<128x128xf32>
      %84 = vector.broadcast %46 : vector<1x128xf32> to vector<128x128xf32>
      %85 = arith.mulf %83, %84 : vector<128x128xf32>
      %86 = vector.broadcast %49 : vector<1x128xf32> to vector<128x128xf32>
      %87 = arith.addf %85, %86 : vector<128x128xf32>
      %cst_50 = arith.constant 0.000000e+00 : f32
      %88 = vector.broadcast %cst_50 : f32 to vector<128x128xf32>
      %89 = arith.cmpf oge, %87, %88 : vector<128x128xf32>
      %cst_51 = arith.constant 2.000000e-01 : f32
      %90 = vector.broadcast %cst_51 : f32 to vector<128x128xf32>
      %91 = arith.mulf %90, %87 : vector<128x128xf32>
      %92 = arith.select %89, %87, %91 : vector<128x128xi1>, vector<128x128xf32>
      %c384_52 = arith.constant 384 : index
      %c0_53 = arith.constant 0 : index
      %93 = vector.load %arg6[%c384_52, %c0_53] : memref<2048x128xf32, #tpu.memory_space<vmem>>, vector<128x128xf32>
      tpu.vector_store %arg6[%c384_52, %c0_53], %92 {strides = array<i32>} : memref<2048x128xf32, #tpu.memory_space<vmem>>, vector<128x128xf32>,
      %c512 = arith.constant 512 : index
      %c0_54 = arith.constant 0 : index
      %94 = vector.load %arg6[%c512, %c0_54] : memref<2048x128xf32, #tpu.memory_space<vmem>>, vector<128x128xf32>
      %95 = vector.broadcast %46 : vector<1x128xf32> to vector<128x128xf32>
      %96 = arith.mulf %94, %95 : vector<128x128xf32>
      %97 = vector.broadcast %49 : vector<1x128xf32> to vector<128x128xf32>
      %98 = arith.addf %96, %97 : vector<128x128xf32>
      %cst_55 = arith.constant 0.000000e+00 : f32
      %99 = vector.broadcast %cst_55 : f32 to vector<128x128xf32>
      %100 = arith.cmpf oge, %98, %99 : vector<128x128xf32>
      %cst_56 = arith.constant 2.000000e-01 : f32
      %101 = vector.broadcast %cst_56 : f32 to vector<128x128xf32>
      %102 = arith.mulf %101, %98 : vector<128x128xf32>
      %103 = arith.select %100, %98, %102 : vector<128x128xi1>, vector<128x128xf32>
      %c512_57 = arith.constant 512 : index
      %c0_58 = arith.constant 0 : index
      %104 = vector.load %arg6[%c512_57, %c0_58] : memref<2048x128xf32, #tpu.memory_space<vmem>>, vector<128x128xf32>
      tpu.vector_store %arg6[%c512_57, %c0_58], %103 {strides = array<i32>} : memref<2048x128xf32, #tpu.memory_space<vmem>>, vector<128x128xf32>,
      %c640 = arith.constant 640 : index
      %c0_59 = arith.constant 0 : index
      %105 = vector.load %arg6[%c640, %c0_59] : memref<2048x128xf32, #tpu.memory_space<vmem>>, vector<128x128xf32>
      %106 = vector.broadcast %46 : vector<1x128xf32> to vector<128x128xf32>
      %107 = arith.mulf %105, %106 : vector<128x128xf32>
      %108 = vector.broadcast %49 : vector<1x128xf32> to vector<128x128xf32>
      %109 = arith.addf %107, %108 : vector<128x128xf32>
      %cst_60 = arith.constant 0.000000e+00 : f32
      %110 = vector.broadcast %cst_60 : f32 to vector<128x128xf32>
      %111 = arith.cmpf oge, %109, %110 : vector<128x128xf32>
      %cst_61 = arith.constant 2.000000e-01 : f32
      %112 = vector.broadcast %cst_61 : f32 to vector<128x128xf32>
      %113 = arith.mulf %112, %109 : vector<128x128xf32>
      %114 = arith.select %111, %109, %113 : vector<128x128xi1>, vector<128x128xf32>
      %c640_62 = arith.constant 640 : index
      %c0_63 = arith.constant 0 : index
      %115 = vector.load %arg6[%c640_62, %c0_63] : memref<2048x128xf32, #tpu.memory_space<vmem>>, vector<128x128xf32>
      tpu.vector_store %arg6[%c640_62, %c0_63], %114 {strides = array<i32>} : memref<2048x128xf32, #tpu.memory_space<vmem>>, vector<128x128xf32>,
      %c768 = arith.constant 768 : index
      %c0_64 = arith.constant 0 : index
      %116 = vector.load %arg6[%c768, %c0_64] : memref<2048x128xf32, #tpu.memory_space<vmem>>, vector<128x128xf32>
      %117 = vector.broadcast %46 : vector<1x128xf32> to vector<128x128xf32>
      %118 = arith.mulf %116, %117 : vector<128x128xf32>
      %119 = vector.broadcast %49 : vector<1x128xf32> to vector<128x128xf32>
      %120 = arith.addf %118, %119 : vector<128x128xf32>
      %cst_65 = arith.constant 0.000000e+00 : f32
      %121 = vector.broadcast %cst_65 : f32 to vector<128x128xf32>
      %122 = arith.cmpf oge, %120, %121 : vector<128x128xf32>
      %cst_66 = arith.constant 2.000000e-01 : f32
      %123 = vector.broadcast %cst_66 : f32 to vector<128x128xf32>
      %124 = arith.mulf %123, %120 : vector<128x128xf32>
      %125 = arith.select %122, %120, %124 : vector<128x128xi1>, vector<128x128xf32>
      %c768_67 = arith.constant 768 : index
      %c0_68 = arith.constant 0 : index
      %126 = vector.load %arg6[%c768_67, %c0_68] : memref<2048x128xf32, #tpu.memory_space<vmem>>, vector<128x128xf32>
      tpu.vector_store %arg6[%c768_67, %c0_68], %125 {strides = array<i32>} : memref<2048x128xf32, #tpu.memory_space<vmem>>, vector<128x128xf32>,
      %c896 = arith.constant 896 : index
      %c0_69 = arith.constant 0 : index
      %127 = vector.load %arg6[%c896, %c0_69] : memref<2048x128xf32, #tpu.memory_space<vmem>>, vector<128x128xf32>
      %128 = vector.broadcast %46 : vector<1x128xf32> to vector<128x128xf32>
      %129 = arith.mulf %127, %128 : vector<128x128xf32>
      %130 = vector.broadcast %49 : vector<1x128xf32> to vector<128x128xf32>
      %131 = arith.addf %129, %130 : vector<128x128xf32>
      %cst_70 = arith.constant 0.000000e+00 : f32
      %132 = vector.broadcast %cst_70 : f32 to vector<128x128xf32>
      %133 = arith.cmpf oge, %131, %132 : vector<128x128xf32>
      %cst_71 = arith.constant 2.000000e-01 : f32
      %134 = vector.broadcast %cst_71 : f32 to vector<128x128xf32>
      %135 = arith.mulf %134, %131 : vector<128x128xf32>
      %136 = arith.select %133, %131, %135 : vector<128x128xi1>, vector<128x128xf32>
      %c896_72 = arith.constant 896 : index
      %c0_73 = arith.constant 0 : index
      %137 = vector.load %arg6[%c896_72, %c0_73] : memref<2048x128xf32, #tpu.memory_space<vmem>>, vector<128x128xf32>
      tpu.vector_store %arg6[%c896_72, %c0_73], %136 {strides = array<i32>} : memref<2048x128xf32, #tpu.memory_space<vmem>>, vector<128x128xf32>,
      %c1024 = arith.constant 1024 : index
      %c0_74 = arith.constant 0 : index
      %138 = vector.load %arg6[%c1024, %c0_74] : memref<2048x128xf32, #tpu.memory_space<vmem>>, vector<128x128xf32>
      %139 = vector.broadcast %46 : vector<1x128xf32> to vector<128x128xf32>
      %140 = arith.mulf %138, %139 : vector<128x128xf32>
      %141 = vector.broadcast %49 : vector<1x128xf32> to vector<128x128xf32>
      %142 = arith.addf %140, %141 : vector<128x128xf32>
      %cst_75 = arith.constant 0.000000e+00 : f32
      %143 = vector.broadcast %cst_75 : f32 to vector<128x128xf32>
      %144 = arith.cmpf oge, %142, %143 : vector<128x128xf32>
      %cst_76 = arith.constant 2.000000e-01 : f32
      %145 = vector.broadcast %cst_76 : f32 to vector<128x128xf32>
      %146 = arith.mulf %145, %142 : vector<128x128xf32>
      %147 = arith.select %144, %142, %146 : vector<128x128xi1>, vector<128x128xf32>
      %c1024_77 = arith.constant 1024 : index
      %c0_78 = arith.constant 0 : index
      %148 = vector.load %arg6[%c1024_77, %c0_78] : memref<2048x128xf32, #tpu.memory_space<vmem>>, vector<128x128xf32>
      tpu.vector_store %arg6[%c1024_77, %c0_78], %147 {strides = array<i32>} : memref<2048x128xf32, #tpu.memory_space<vmem>>, vector<128x128xf32>,
      %c1152 = arith.constant 1152 : index
      %c0_79 = arith.constant 0 : index
      %149 = vector.load %arg6[%c1152, %c0_79] : memref<2048x128xf32, #tpu.memory_space<vmem>>, vector<128x128xf32>
      %150 = vector.broadcast %46 : vector<1x128xf32> to vector<128x128xf32>
      %151 = arith.mulf %149, %150 : vector<128x128xf32>
      %152 = vector.broadcast %49 : vector<1x128xf32> to vector<128x128xf32>
      %153 = arith.addf %151, %152 : vector<128x128xf32>
      %cst_80 = arith.constant 0.000000e+00 : f32
      %154 = vector.broadcast %cst_80 : f32 to vector<128x128xf32>
      %155 = arith.cmpf oge, %153, %154 : vector<128x128xf32>
      %cst_81 = arith.constant 2.000000e-01 : f32
      %156 = vector.broadcast %cst_81 : f32 to vector<128x128xf32>
      %157 = arith.mulf %156, %153 : vector<128x128xf32>
      %158 = arith.select %155, %153, %157 : vector<128x128xi1>, vector<128x128xf32>
      %c1152_82 = arith.constant 1152 : index
      %c0_83 = arith.constant 0 : index
      %159 = vector.load %arg6[%c1152_82, %c0_83] : memref<2048x128xf32, #tpu.memory_space<vmem>>, vector<128x128xf32>
      tpu.vector_store %arg6[%c1152_82, %c0_83], %158 {strides = array<i32>} : memref<2048x128xf32, #tpu.memory_space<vmem>>, vector<128x128xf32>,
      %c1280 = arith.constant 1280 : index
      %c0_84 = arith.constant 0 : index
      %160 = vector.load %arg6[%c1280, %c0_84] : memref<2048x128xf32, #tpu.memory_space<vmem>>, vector<128x128xf32>
      %161 = vector.broadcast %46 : vector<1x128xf32> to vector<128x128xf32>
      %162 = arith.mulf %160, %161 : vector<128x128xf32>
      %163 = vector.broadcast %49 : vector<1x128xf32> to vector<128x128xf32>
      %164 = arith.addf %162, %163 : vector<128x128xf32>
      %cst_85 = arith.constant 0.000000e+00 : f32
      %165 = vector.broadcast %cst_85 : f32 to vector<128x128xf32>
      %166 = arith.cmpf oge, %164, %165 : vector<128x128xf32>
      %cst_86 = arith.constant 2.000000e-01 : f32
      %167 = vector.broadcast %cst_86 : f32 to vector<128x128xf32>
      %168 = arith.mulf %167, %164 : vector<128x128xf32>
      %169 = arith.select %166, %164, %168 : vector<128x128xi1>, vector<128x128xf32>
      %c1280_87 = arith.constant 1280 : index
      %c0_88 = arith.constant 0 : index
      %170 = vector.load %arg6[%c1280_87, %c0_88] : memref<2048x128xf32, #tpu.memory_space<vmem>>, vector<128x128xf32>
      tpu.vector_store %arg6[%c1280_87, %c0_88], %169 {strides = array<i32>} : memref<2048x128xf32, #tpu.memory_space<vmem>>, vector<128x128xf32>,
      %c1408 = arith.constant 1408 : index
      %c0_89 = arith.constant 0 : index
      %171 = vector.load %arg6[%c1408, %c0_89] : memref<2048x128xf32, #tpu.memory_space<vmem>>, vector<128x128xf32>
      %172 = vector.broadcast %46 : vector<1x128xf32> to vector<128x128xf32>
      %173 = arith.mulf %171, %172 : vector<128x128xf32>
      %174 = vector.broadcast %49 : vector<1x128xf32> to vector<128x128xf32>
      %175 = arith.addf %173, %174 : vector<128x128xf32>
      %cst_90 = arith.constant 0.000000e+00 : f32
      %176 = vector.broadcast %cst_90 : f32 to vector<128x128xf32>
      %177 = arith.cmpf oge, %175, %176 : vector<128x128xf32>
      %cst_91 = arith.constant 2.000000e-01 : f32
      %178 = vector.broadcast %cst_91 : f32 to vector<128x128xf32>
      %179 = arith.mulf %178, %175 : vector<128x128xf32>
      %180 = arith.select %177, %175, %179 : vector<128x128xi1>, vector<128x128xf32>
      %c1408_92 = arith.constant 1408 : index
      %c0_93 = arith.constant 0 : index
      %181 = vector.load %arg6[%c1408_92, %c0_93] : memref<2048x128xf32, #tpu.memory_space<vmem>>, vector<128x128xf32>
      tpu.vector_store %arg6[%c1408_92, %c0_93], %180 {strides = array<i32>} : memref<2048x128xf32, #tpu.memory_space<vmem>>, vector<128x128xf32>,
      %c1536 = arith.constant 1536 : index
      %c0_94 = arith.constant 0 : index
      %182 = vector.load %arg6[%c1536, %c0_94] : memref<2048x128xf32, #tpu.memory_space<vmem>>, vector<128x128xf32>
      %183 = vector.broadcast %46 : vector<1x128xf32> to vector<128x128xf32>
      %184 = arith.mulf %182, %183 : vector<128x128xf32>
      %185 = vector.broadcast %49 : vector<1x128xf32> to vector<128x128xf32>
      %186 = arith.addf %184, %185 : vector<128x128xf32>
      %cst_95 = arith.constant 0.000000e+00 : f32
      %187 = vector.broadcast %cst_95 : f32 to vector<128x128xf32>
      %188 = arith.cmpf oge, %186, %187 : vector<128x128xf32>
      %cst_96 = arith.constant 2.000000e-01 : f32
      %189 = vector.broadcast %cst_96 : f32 to vector<128x128xf32>
      %190 = arith.mulf %189, %186 : vector<128x128xf32>
      %191 = arith.select %188, %186, %190 : vector<128x128xi1>, vector<128x128xf32>
      %c1536_97 = arith.constant 1536 : index
      %c0_98 = arith.constant 0 : index
      %192 = vector.load %arg6[%c1536_97, %c0_98] : memref<2048x128xf32, #tpu.memory_space<vmem>>, vector<128x128xf32>
      tpu.vector_store %arg6[%c1536_97, %c0_98], %191 {strides = array<i32>} : memref<2048x128xf32, #tpu.memory_space<vmem>>, vector<128x128xf32>,
      %c1664 = arith.constant 1664 : index
      %c0_99 = arith.constant 0 : index
      %193 = vector.load %arg6[%c1664, %c0_99] : memref<2048x128xf32, #tpu.memory_space<vmem>>, vector<128x128xf32>
      %194 = vector.broadcast %46 : vector<1x128xf32> to vector<128x128xf32>
      %195 = arith.mulf %193, %194 : vector<128x128xf32>
      %196 = vector.broadcast %49 : vector<1x128xf32> to vector<128x128xf32>
      %197 = arith.addf %195, %196 : vector<128x128xf32>
      %cst_100 = arith.constant 0.000000e+00 : f32
      %198 = vector.broadcast %cst_100 : f32 to vector<128x128xf32>
      %199 = arith.cmpf oge, %197, %198 : vector<128x128xf32>
      %cst_101 = arith.constant 2.000000e-01 : f32
      %200 = vector.broadcast %cst_101 : f32 to vector<128x128xf32>
      %201 = arith.mulf %200, %197 : vector<128x128xf32>
      %202 = arith.select %199, %197, %201 : vector<128x128xi1>, vector<128x128xf32>
      %c1664_102 = arith.constant 1664 : index
      %c0_103 = arith.constant 0 : index
      %203 = vector.load %arg6[%c1664_102, %c0_103] : memref<2048x128xf32, #tpu.memory_space<vmem>>, vector<128x128xf32>
      tpu.vector_store %arg6[%c1664_102, %c0_103], %202 {strides = array<i32>} : memref<2048x128xf32, #tpu.memory_space<vmem>>, vector<128x128xf32>,
      %c1792 = arith.constant 1792 : index
      %c0_104 = arith.constant 0 : index
      %204 = vector.load %arg6[%c1792, %c0_104] : memref<2048x128xf32, #tpu.memory_space<vmem>>, vector<128x128xf32>
      %205 = vector.broadcast %46 : vector<1x128xf32> to vector<128x128xf32>
      %206 = arith.mulf %204, %205 : vector<128x128xf32>
      %207 = vector.broadcast %49 : vector<1x128xf32> to vector<128x128xf32>
      %208 = arith.addf %206, %207 : vector<128x128xf32>
      %cst_105 = arith.constant 0.000000e+00 : f32
      %209 = vector.broadcast %cst_105 : f32 to vector<128x128xf32>
      %210 = arith.cmpf oge, %208, %209 : vector<128x128xf32>
      %cst_106 = arith.constant 2.000000e-01 : f32
      %211 = vector.broadcast %cst_106 : f32 to vector<128x128xf32>
      %212 = arith.mulf %211, %208 : vector<128x128xf32>
      %213 = arith.select %210, %208, %212 : vector<128x128xi1>, vector<128x128xf32>
      %c1792_107 = arith.constant 1792 : index
      %c0_108 = arith.constant 0 : index
      %214 = vector.load %arg6[%c1792_107, %c0_108] : memref<2048x128xf32, #tpu.memory_space<vmem>>, vector<128x128xf32>
      tpu.vector_store %arg6[%c1792_107, %c0_108], %213 {strides = array<i32>} : memref<2048x128xf32, #tpu.memory_space<vmem>>, vector<128x128xf32>,
      %c1920 = arith.constant 1920 : index
      %c0_109 = arith.constant 0 : index
      %215 = vector.load %arg6[%c1920, %c0_109] : memref<2048x128xf32, #tpu.memory_space<vmem>>, vector<128x128xf32>
      %216 = vector.broadcast %46 : vector<1x128xf32> to vector<128x128xf32>
      %217 = arith.mulf %215, %216 : vector<128x128xf32>
      %218 = vector.broadcast %49 : vector<1x128xf32> to vector<128x128xf32>
      %219 = arith.addf %217, %218 : vector<128x128xf32>
      %cst_110 = arith.constant 0.000000e+00 : f32
      %220 = vector.broadcast %cst_110 : f32 to vector<128x128xf32>
      %221 = arith.cmpf oge, %219, %220 : vector<128x128xf32>
      %cst_111 = arith.constant 2.000000e-01 : f32
      %222 = vector.broadcast %cst_111 : f32 to vector<128x128xf32>
      %223 = arith.mulf %222, %219 : vector<128x128xf32>
      %224 = arith.select %221, %219, %223 : vector<128x128xi1>, vector<128x128xf32>
      %c1920_112 = arith.constant 1920 : index
      %c0_113 = arith.constant 0 : index
      %225 = vector.load %arg6[%c1920_112, %c0_113] : memref<2048x128xf32, #tpu.memory_space<vmem>>, vector<128x128xf32>
      tpu.vector_store %arg6[%c1920_112, %c0_113], %224 {strides = array<i32>} : memref<2048x128xf32, #tpu.memory_space<vmem>>, vector<128x128xf32>,
    } else {
    }
    return
  }
  func.func @transform_0(%arg0: i32, %arg1: i32) -> (i32, i32, i32) {
    %c0_i32 = arith.constant 0 : i32
    %c0_i32_0 = arith.constant 0 : i32
    return %arg0, %arg1, %c0_i32 : i32, i32, i32
  }
  func.func @transform_1(%arg0: i32, %arg1: i32) -> (i32, i32, i32) {
    %c0_i32 = arith.constant 0 : i32
    %c0_i32_0 = arith.constant 0 : i32
    %c0_i32_1 = arith.constant 0 : i32
    return %arg0, %c0_i32, %c0_i32_0 : i32, i32, i32
  }
  func.func @transform_2(%arg0: i32, %arg1: i32) -> (i32, i32) {
    %c0_i32 = arith.constant 0 : i32
    %c0_i32_0 = arith.constant 0 : i32
    %c0_i32_1 = arith.constant 0 : i32
    return %c0_i32, %c0_i32_0 : i32, i32
  }
  func.func @transform_3(%arg0: i32, %arg1: i32) -> (i32, i32) {
    %c0_i32 = arith.constant 0 : i32
    %c0_i32_0 = arith.constant 0 : i32
    %c0_i32_1 = arith.constant 0 : i32
    return %c0_i32, %c0_i32_0 : i32, i32
  }
  func.func @transform_4(%arg0: i32, %arg1: i32) -> (i32, i32) {
    %c0_i32 = arith.constant 0 : i32
    %c0_i32_0 = arith.constant 0 : i32
    %c0_i32_1 = arith.constant 0 : i32
    return %c0_i32, %c0_i32_0 : i32, i32
  }
}

module attributes {stable_mosaic.version = 11 : i64} {
  func.func @_conv_bias_tanh_kernel(%arg0: i32, %arg1: i32, %arg2: memref<1x2048x128xbf16, #tpu.memory_space<vmem>>, %arg3: memref<1x128x128xbf16, #tpu.memory_space<vmem>>, %arg4: memref<1x128xf32, #tpu.memory_space<vmem>>, %arg5: memref<2048x128xf32, #tpu.memory_space<vmem>>) attributes {dimension_semantics = [#tpu.dimension_semantics<parallel>, #tpu.dimension_semantics<parallel>], iteration_bounds = array<i64: 4, 1>, scalar_prefetch = 0 : i64, scratch_operands = 0 : i64, tpu.core_type = #tpu.core_type<tc>, window_params = [{transform_indices = @transform_0, window_bounds = array<i64: 1, 2048, 128>}, {transform_indices = @transform_1, window_bounds = array<i64: 1, 128, 128>}, {pipeline_mode = #tpu.pipeline_mode<synchronous>, transform_indices = @transform_2, window_bounds = array<i64: 1, 128>}, {transform_indices = @transform_3, window_bounds = array<i64: 2048, 128>}]} {
    %c0 = arith.constant 0 : index
    %c0_0 = arith.constant 0 : index
    %c0_1 = arith.constant 0 : index
    %0 = vector.load %arg2[%c0, %c0_0, %c0_1] : memref<1x2048x128xbf16, #tpu.memory_space<vmem>>, vector<1x2048x128xbf16>
    %1 = vector.shape_cast %0 : vector<1x2048x128xbf16> to vector<2048x128xbf16>
    %c0_2 = arith.constant 0 : index
    %c0_3 = arith.constant 0 : index
    %c0_4 = arith.constant 0 : index
    %2 = vector.load %arg3[%c0_2, %c0_3, %c0_4] : memref<1x128x128xbf16, #tpu.memory_space<vmem>>, vector<1x128x128xbf16>
    %3 = vector.shape_cast %2 : vector<1x128x128xbf16> to vector<128x128xbf16>
    %cst = arith.constant dense<0.000000e+00> : vector<2048x128xf32>
    %4 = tpu.matmul %1, %3, %cst {dimension_numbers = #tpu.dot_dimension_numbers<[1], [0], [0], [1], [0, 0, 1, 1], [], []>} : vector<2048x128xbf16>, vector<128x128xbf16>, vector<2048x128xf32> -> vector<2048x128xf32>
    %c0_5 = arith.constant 0 : index
    %c0_6 = arith.constant 0 : index
    %5 = vector.load %arg4[%c0_5, %c0_6] : memref<1x128xf32, #tpu.memory_space<vmem>>, vector<1x128xf32>
    %6 = vector.broadcast %5 : vector<1x128xf32> to vector<2048x128xf32>
    %7 = arith.addf %4, %6 : vector<2048x128xf32>
    %8 = math.tanh %7 : vector<2048x128xf32>
    %c0_7 = arith.constant 0 : index
    %c0_8 = arith.constant 0 : index
    %9 = vector.load %arg5[%c0_7, %c0_8] : memref<2048x128xf32, #tpu.memory_space<vmem>>, vector<2048x128xf32>
    tpu.vector_store %arg5[%c0_7, %c0_8], %8 {strides = array<i32>} : memref<2048x128xf32, #tpu.memory_space<vmem>>, vector<2048x128xf32>,
    return
  }
  func.func @transform_0(%arg0: i32, %arg1: i32) -> (i32, i32, i32) {
    %c0_i32 = arith.constant 0 : i32
    %c0_i32_0 = arith.constant 0 : i32
    return %arg0, %arg1, %c0_i32 : i32, i32, i32
  }
  func.func @transform_1(%arg0: i32, %arg1: i32) -> (i32, i32, i32) {
    %c0_i32 = arith.constant 0 : i32
    %c0_i32_0 = arith.constant 0 : i32
    %c0_i32_1 = arith.constant 0 : i32
    return %arg0, %c0_i32, %c0_i32_0 : i32, i32, i32
  }
  func.func @transform_2(%arg0: i32, %arg1: i32) -> (i32, i32) {
    %c0_i32 = arith.constant 0 : i32
    %c0_i32_0 = arith.constant 0 : i32
    %c0_i32_1 = arith.constant 0 : i32
    return %c0_i32, %c0_i32_0 : i32, i32
  }
  func.func @transform_3(%arg0: i32, %arg1: i32) -> (i32, i32) {
    %c1_i32 = arith.constant 1 : i32
    %0 = arith.muli %arg0, %c1_i32 : i32
    %1 = arith.addi %0, %arg1 : i32
    %c0_i32 = arith.constant 0 : i32
    %c0_i32_0 = arith.constant 0 : i32
    return %1, %c0_i32 : i32, i32
  }
}

</mosaic_0001>

<llo_original>
// kernel: generator_forward.5
$region0: #{generator_forward.5}
  #allocation0 [shape = 'u32[]', space=smem, size = 0x4, offset = 0x4, fixed_abs, tag = 'smem constant byte address 0x4 - core index']
  #allocation1 [shape = 'u32[144,128]{1,0:T(1,128)}', space=vmem, size = 0x12000, scoped, tag = 'internal scratch']
  #allocation2 [shape = 'f32[1,128]{1,0:T(1,128)}', space=vmem, size = 0x200, scoped, tag = 'scratch operand']
  #allocation3 [shape = 'f32[1,128]{1,0:T(1,128)}', space=vmem, size = 0x200, scoped, tag = 'scratch operand']
  %s0 = inlined_call_operand.vmem [shape: bf16[1,32,512], index: 0, kind: input, shape index: {}]
  %s1 = inlined_call_operand.vmem [shape: bf16[1,512,128], index: 1, kind: input, shape index: {}]
  %s2 = inlined_call_operand.vmem [shape: f32[1,128], index: 2, kind: input, shape index: {}]
  %s3 = inlined_call_operand.vmem [shape: f32[1,128], index: 3, kind: input, shape index: {}]
  %s4 = inlined_call_operand.vmem [shape: f32[32,128], index: 4, kind: output, shape index: {}]
  %s5 = sld [smem:[#allocation0]]
  $region34: #{generator_forward.5} parent=0
    _
  %s7 = ssub.s32 1, %s5
  %s8 = scalar_select 0, %s7, %s5
  // Predicated region
  $region2: #{generator_forward.5} parent=0 // pred_check
    _
  $region3: #{generator_forward.5} parent=0 // pred_check_branch
    %10 = sbr.rel (0) target = $region5
  $region4: #{generator_forward.5} parent=0 // pred_region
    _
  $region5: #{generator_forward.5} parent=0 // pred_fallthru
    _
  // Predicated region
  $region6: #{generator_forward.5} parent=0 // pred_check
    _
  $region7: #{generator_forward.5} parent=0 // pred_check_branch
    %12 = sbr.rel (0) target = $region9
  $region8: #{generator_forward.5} parent=0 // pred_region
    _
  $region9: #{generator_forward.5} parent=0 // pred_fallthru
    _
  // Predicated region
  $region10: #{generator_forward.5} parent=0 // pred_check
    _
  $region11: #{generator_forward.5} parent=0 // pred_check_branch
    %14 = sbr.rel (0) target = $region13
  $region12: #{generator_forward.5} parent=0 // pred_region
    _
  $region13: #{generator_forward.5} parent=0 // pred_fallthru
    _
  // Predicated region
  $region14: #{generator_forward.5} parent=0 // pred_check
    _
  $region15: #{generator_forward.5} parent=0 // pred_check_branch
    %16 = sbr.rel (0) target = $region17
  $region16: #{generator_forward.5} parent=0 // pred_region
    _
  $region17: #{generator_forward.5} parent=0 // pred_fallthru
    _
  %p18 = scmp.eq.s32.totalorder 0, 0
  %p19 = scmp.eq.s32.totalorder 0, 0
  %p20 = pnand %p18, %p19
  %p21 = pneg %p20
  // Predicated region
  $region18: #{generator_forward.5} parent=0 // pred_check
    _
  $region19: #{generator_forward.5} parent=0 // pred_check_branch
    %23 = sbr.rel (%p20) target = $region21
  $region20: #{generator_forward.5} parent=0 // pred_region
    %24 = vst [vmem:[#allocation2] sm:$0x1] 0.0
    %25 = vst [vmem:[#allocation3] sm:$0x1] 0.0
  $region21: #{generator_forward.5} parent=0 // pred_fallthru
    _
  %v26 = vld [vmem:[%s0] sm:$0xff]
  %v27 = vld [vmem:[%s0 + $0x8] sm:$0xff]
  %v28 = vld [vmem:[%s0 + $0x10] sm:$0xff]
  %v29 = vld [vmem:[%s0 + $0x18] sm:$0xff]
  %v30 = vld [vmem:[%s0 + $0x20] sm:$0xff]
  %v31 = vld [vmem:[%s0 + $0x28] sm:$0xff]
  %v32 = vld [vmem:[%s0 + $0x30] sm:$0xff]
  %v33 = vld [vmem:[%s0 + $0x38] sm:$0xff]
  %v34 = vld [vmem:[%s1] sm:$0xf]
  %v35 = vld [vmem:[%s1 + $0x4] sm:$0xf]
  %v36 = vld [vmem:[%s1 + $0x8] sm:$0xf]
  %v37 = vld [vmem:[%s1 + $0xc] sm:$0xf]
  %v38 = vld [vmem:[%s1 + $0x10] sm:$0xf]
  %v39 = vld [vmem:[%s1 + $0x14] sm:$0xf]
  %v40 = vld [vmem:[%s1 + $0x18] sm:$0xf]
  %v41 = vld [vmem:[%s1 + $0x1c] sm:$0xf]
  %v42 = vld [vmem:[%s1 + $0x20] sm:$0xf]
  %v43 = vld [vmem:[%s1 + $0x24] sm:$0xf]
  %v44 = vld [vmem:[%s1 + $0x28] sm:$0xf]
  %v45 = vld [vmem:[%s1 + $0x2c] sm:$0xf]
  %v46 = vld [vmem:[%s1 + $0x30] sm:$0xf]
  %v47 = vld [vmem:[%s1 + $0x34] sm:$0xf]
  %v48 = vld [vmem:[%s1 + $0x38] sm:$0xf]
  %v49 = vld [vmem:[%s1 + $0x3c] sm:$0xf]
  %v50 = vld [vmem:[%s1 + $0x40] sm:$0xf]
  %v51 = vld [vmem:[%s1 + $0x44] sm:$0xf]
  %v52 = vld [vmem:[%s1 + $0x48] sm:$0xf]
  %v53 = vld [vmem:[%s1 + $0x4c] sm:$0xf]
  %v54 = vld [vmem:[%s1 + $0x50] sm:$0xf]
  %v55 = vld [vmem:[%s1 + $0x54] sm:$0xf]
  %v56 = vld [vmem:[%s1 + $0x58] sm:$0xf]
  %v57 = vld [vmem:[%s1 + $0x5c] sm:$0xf]
  %v58 = vld [vmem:[%s1 + $0x60] sm:$0xf]
  %v59 = vld [vmem:[%s1 + $0x64] sm:$0xf]
  %v60 = vld [vmem:[%s1 + $0x68] sm:$0xf]
  %v61 = vld [vmem:[%s1 + $0x6c] sm:$0xf]
  %v62 = vld [vmem:[%s1 + $0x70] sm:$0xf]
  %v63 = vld [vmem:[%s1 + $0x74] sm:$0xf]
  %v64 = vld [vmem:[%s1 + $0x78] sm:$0xf]
  %v65 = vld [vmem:[%s1 + $0x7c] sm:$0xf]
  %v66 = vld [vmem:[%s1 + $0x80] sm:$0xf]
  %v67 = vld [vmem:[%s1 + $0x84] sm:$0xf]
  %v68 = vld [vmem:[%s1 + $0x88] sm:$0xf]
  %v69 = vld [vmem:[%s1 + $0x8c] sm:$0xf]
  %v70 = vld [vmem:[%s1 + $0x90] sm:$0xf]
  %v71 = vld [vmem:[%s1 + $0x94] sm:$0xf]
  %v72 = vld [vmem:[%s1 + $0x98] sm:$0xf]
  %v73 = vld [vmem:[%s1 + $0x9c] sm:$0xf]
  %v74 = vld [vmem:[%s1 + $0xa0] sm:$0xf]
  %v75 = vld [vmem:[%s1 + $0xa4] sm:$0xf]
  %v76 = vld [vmem:[%s1 + $0xa8] sm:$0xf]
  %v77 = vld [vmem:[%s1 + $0xac] sm:$0xf]
  %v78 = vld [vmem:[%s1 + $0xb0] sm:$0xf]
  %v79 = vld [vmem:[%s1 + $0xb4] sm:$0xf]
  %v80 = vld [vmem:[%s1 + $0xb8] sm:$0xf]
  %v81 = vld [vmem:[%s1 + $0xbc] sm:$0xf]
  %v82 = vld [vmem:[%s1 + $0xc0] sm:$0xf]
  %v83 = vld [vmem:[%s1 + $0xc4] sm:$0xf]
  %v84 = vld [vmem:[%s1 + $0xc8] sm:$0xf]
  %v85 = vld [vmem:[%s1 + $0xcc] sm:$0xf]
  %v86 = vld [vmem:[%s1 + $0xd0] sm:$0xf]
  %v87 = vld [vmem:[%s1 + $0xd4] sm:$0xf]
  %v88 = vld [vmem:[%s1 + $0xd8] sm:$0xf]
  %v89 = vld [vmem:[%s1 + $0xdc] sm:$0xf]
  %v90 = vld [vmem:[%s1 + $0xe0] sm:$0xf]
  %v91 = vld [vmem:[%s1 + $0xe4] sm:$0xf]
  %v92 = vld [vmem:[%s1 + $0xe8] sm:$0xf]
  %v93 = vld [vmem:[%s1 + $0xec] sm:$0xf]
  %v94 = vld [vmem:[%s1 + $0xf0] sm:$0xf]
  %v95 = vld [vmem:[%s1 + $0xf4] sm:$0xf]
  %v96 = vld [vmem:[%s1 + $0xf8] sm:$0xf]
  %v97 = vld [vmem:[%s1 + $0xfc] sm:$0xf]
  %v106 = vunpack.c.l.b16 %v26
  %v107 = vunpack.c.h.b16 %v26
  %v108 = vunpack.c.l.b16 %v27
  %v109 = vunpack.c.h.b16 %v27
  %v110 = vunpack.c.l.b16 %v28
  %v111 = vunpack.c.h.b16 %v28
  %v112 = vunpack.c.l.b16 %v29
  %v113 = vunpack.c.h.b16 %v29
  %v114 = vunpack.c.l.b16 %v30
  %v115 = vunpack.c.h.b16 %v30
  %v116 = vunpack.c.l.b16 %v31
  %v117 = vunpack.c.h.b16 %v31
  %v118 = vunpack.c.l.b16 %v32
  %v119 = vunpack.c.h.b16 %v32
  %v120 = vunpack.c.l.b16 %v33
  %v121 = vunpack.c.h.b16 %v33
  %v122 = vpack.c.b16 %v110, %v106
  %v123 = vpack.c.b16 %v111, %v107
  %v124 = vpack.c.b16 %v112, %v108
  %v125 = vpack.c.b16 %v113, %v109
  %v126 = vpack.c.b16 %v118, %v114
  %v127 = vpack.c.b16 %v119, %v115
  %v128 = vpack.c.b16 %v120, %v116
  %v129 = vpack.c.b16 %v121, %v117
  %v202 = vunpack.c.l.b16 %v34
  %v203 = vunpack.c.l.b16 %v35
  %v204 = vunpack.c.l.b16 %v36
  %v205 = vunpack.c.l.b16 %v37
  %v206 = vunpack.c.l.b16 %v38
  %v207 = vunpack.c.l.b16 %v39
  %v208 = vunpack.c.l.b16 %v40
  %v209 = vunpack.c.l.b16 %v41
  %v210 = vunpack.c.l.b16 %v42
  %v211 = vunpack.c.l.b16 %v43
  %v212 = vunpack.c.l.b16 %v44
  %v213 = vunpack.c.l.b16 %v45
  %v214 = vunpack.c.l.b16 %v46
  %v215 = vunpack.c.l.b16 %v47
  %v216 = vunpack.c.l.b16 %v48
  %v217 = vunpack.c.l.b16 %v49
  %v218 = vunpack.c.l.b16 %v50
  %v219 = vunpack.c.l.b16 %v51
  %v220 = vunpack.c.l.b16 %v52
  %v221 = vunpack.c.l.b16 %v53
  %v222 = vunpack.c.l.b16 %v54
  %v223 = vunpack.c.l.b16 %v55
  %v224 = vunpack.c.l.b16 %v56
  %v225 = vunpack.c.l.b16 %v57
  %v226 = vunpack.c.l.b16 %v58
  %v227 = vunpack.c.l.b16 %v59
  %v228 = vunpack.c.l.b16 %v60
  %v229 = vunpack.c.l.b16 %v61
  %v230 = vunpack.c.l.b16 %v62
  %v231 = vunpack.c.l.b16 %v63
  %v232 = vunpack.c.l.b16 %v64
  %v233 = vunpack.c.l.b16 %v65
  %v234 = vunpack.c.l.b16 %v66
  %v235 = vunpack.c.l.b16 %v67
  %v236 = vunpack.c.l.b16 %v68
  %v237 = vunpack.c.l.b16 %v69
  %v238 = vunpack.c.l.b16 %v70
  %v239 = vunpack.c.l.b16 %v71
  %v240 = vunpack.c.l.b16 %v72
  %v241 = vunpack.c.l.b16 %v73
  %v242 = vunpack.c.l.b16 %v74
  %v243 = vunpack.c.l.b16 %v75
  %v244 = vunpack.c.l.b16 %v76
  %v245 = vunpack.c.l.b16 %v77
  %v246 = vunpack.c.l.b16 %v78
  %v247 = vunpack.c.l.b16 %v79
  %v248 = vunpack.c.l.b16 %v80
  %v249 = vunpack.c.l.b16 %v81
  %v250 = vunpack.c.l.b16 %v82
  %v251 = vunpack.c.l.b16 %v83
  %v252 = vunpack.c.l.b16 %v84
  %v253 = vunpack.c.l.b16 %v85
  %v254 = vunpack.c.l.b16 %v86
  %v255 = vunpack.c.l.b16 %v87
  %v256 = vunpack.c.l.b16 %v88
  %v257 = vunpack.c.l.b16 %v89
  %v258 = vunpack.c.l.b16 %v90
  %v259 = vunpack.c.l.b16 %v91
  %v260 = vunpack.c.l.b16 %v92
  %v261 = vunpack.c.l.b16 %v93
  %v262 = vunpack.c.l.b16 %v94
  %v263 = vunpack.c.l.b16 %v95
  %v264 = vunpack.c.l.b16 %v96
  %v265 = vunpack.c.l.b16 %v97
  %v266 = vpack.c.b16 %v203, %v202
  %v267 = vpack.c.b16 %v205, %v204
  %v268 = vpack.c.b16 %v207, %v206
  %v269 = vpack.c.b16 %v209, %v208
  %v270 = vpack.c.b16 %v211, %v210
  %v271 = vpack.c.b16 %v213, %v212
  %v272 = vpack.c.b16 %v215, %v214
  %v273 = vpack.c.b16 %v217, %v216
  %v274 = vpack.c.b16 %v219, %v218
  %v275 = vpack.c.b16 %v221, %v220
  %v276 = vpack.c.b16 %v223, %v222
  %v277 = vpack.c.b16 %v225, %v224
  %v278 = vpack.c.b16 %v227, %v226
  %v279 = vpack.c.b16 %v229, %v228
  %v280 = vpack.c.b16 %v231, %v230
  %v281 = vpack.c.b16 %v233, %v232
  %v282 = vpack.c.b16 %v235, %v234
  %v283 = vpack.c.b16 %v237, %v236
  %v284 = vpack.c.b16 %v239, %v238
  %v285 = vpack.c.b16 %v241, %v240
  %v286 = vpack.c.b16 %v243, %v242
  %v287 = vpack.c.b16 %v245, %v244
  %v288 = vpack.c.b16 %v247, %v246
  %v289 = vpack.c.b16 %v249, %v248
  %v290 = vpack.c.b16 %v251, %v250
  %v291 = vpack.c.b16 %v253, %v252
  %v292 = vpack.c.b16 %v255, %v254
  %v293 = vpack.c.b16 %v257, %v256
  %v294 = vpack.c.b16 %v259, %v258
  %v295 = vpack.c.b16 %v261, %v260
  %v296 = vpack.c.b16 %v263, %v262
  %v297 = vpack.c.b16 %v265, %v264
  %330 = vmatprep.subr.bf16.mxu0 0
  %331 = vmatpush1.bf16.msra.mxu0 %v266
  %332 = vmatprep.subr.bf16.mxu0 0
  %333 = vmatpush1.bf16.msra.mxu0 %v267
  %334 = vmatprep.subr.bf16.mxu0 0
  %335 = vmatpush1.bf16.msra.mxu0 %v268
  %336 = vmatprep.subr.bf16.mxu0 0
  %337 = vmatpush1.bf16.msra.mxu0 %v269
  %338 = vmatprep.subr.bf16.mxu0 0
  %339 = vmatpush1.bf16.msra.mxu0 %v270
  %340 = vmatprep.subr.bf16.mxu0 0
  %341 = vmatpush1.bf16.msra.mxu0 %v271
  %342 = vmatprep.subr.bf16.mxu0 0
  %343 = vmatpush1.bf16.msra.mxu0 %v272
  %344 = vmatprep.subr.bf16.mxu0 0
  %345 = vmatpush1.bf16.msra.mxu0 %v273
  %346 = vmatprep.subr.bf16.mxu0 0
  %347 = vmatpush1.bf16.msra.mxu0 %v274
  %348 = vmatprep.subr.bf16.mxu0 0
  %349 = vmatpush1.bf16.msra.mxu0 %v275
  %350 = vmatprep.subr.bf16.mxu0 0
  %351 = vmatpush1.bf16.msra.mxu0 %v276
  %352 = vmatprep.subr.bf16.mxu0 0
  %353 = vmatpush1.bf16.msra.mxu0 %v277
  %354 = vmatprep.subr.bf16.mxu0 0
  %355 = vmatpush1.bf16.msra.mxu0 %v278
  %356 = vmatprep.subr.bf16.mxu0 0
  %357 = vmatpush1.bf16.msra.mxu0 %v279
  %358 = vmatprep.subr.bf16.mxu0 0
  %359 = vmatpush1.bf16.msra.mxu0 %v280
  %360 = vmatprep.subr.bf16.mxu0 0
  %361 = vmatpush1.bf16.msra.mxu0 %v281
  %362 = vmatprep.mubr.bf16.mxu0 %v123
  %363 = vmatmul.mubr.bf16.gmra.mrb[0].mxu0 %v122
  %v364 = vpop.f32.mrb[0].mxu0
  %v365 = vadd.f32 0.0, %v364
  %v366 = vpop.f32.mrb[0].mxu0
  %v367 = vpop.f32.mrb[0].mxu0
  %v368 = vadd.f32 0.0, %v367
  %v369 = vpop.f32.mrb[0].mxu0
  %370 = vmatprep.mubr.bf16.mxu0 %v127
  %371 = vmatmul.mubr.bf16.gmra.mrb[0].mxu0 %v126
  %v372 = vpop.f32.mrb[0].mxu0
  %v373 = vadd.f32 0.0, %v372
  %v374 = vpop.f32.mrb[0].mxu0
  %v375 = vpop.f32.mrb[0].mxu0
  %v376 = vadd.f32 0.0, %v375
  %v377 = vpop.f32.mrb[0].mxu0
  %378 = vdwg.mxu0
  %379 = vmatprep.subr.bf16.mxu0 0
  %380 = vmatpush1.bf16.msra.mxu0 %v282
  %381 = vmatprep.subr.bf16.mxu0 0
  %382 = vmatpush1.bf16.msra.mxu0 %v283
  %383 = vmatprep.subr.bf16.mxu0 0
  %384 = vmatpush1.bf16.msra.mxu0 %v284
  %385 = vmatprep.subr.bf16.mxu0 0
  %386 = vmatpush1.bf16.msra.mxu0 %v285
  %387 = vmatprep.subr.bf16.mxu0 0
  %388 = vmatpush1.bf16.msra.mxu0 %v286
  %389 = vmatprep.subr.bf16.mxu0 0
  %390 = vmatpush1.bf16.msra.mxu0 %v287
  %391 = vmatprep.subr.bf16.mxu0 0
  %392 = vmatpush1.bf16.msra.mxu0 %v288
  %393 = vmatprep.subr.bf16.mxu0 0
  %394 = vmatpush1.bf16.msra.mxu0 %v289
  %395 = vmatprep.subr.bf16.mxu0 0
  %396 = vmatpush1.bf16.msra.mxu0 %v290
  %397 = vmatprep.subr.bf16.mxu0 0
  %398 = vmatpush1.bf16.msra.mxu0 %v291
  %399 = vmatprep.subr.bf16.mxu0 0
  %400 = vmatpush1.bf16.msra.mxu0 %v292
  %401 = vmatprep.subr.bf16.mxu0 0
  %402 = vmatpush1.bf16.msra.mxu0 %v293
  %403 = vmatprep.subr.bf16.mxu0 0
  %404 = vmatpush1.bf16.msra.mxu0 %v294
  %405 = vmatprep.subr.bf16.mxu0 0
  %406 = vmatpush1.bf16.msra.mxu0 %v295
  %407 = vmatprep.subr.bf16.mxu0 0
  %408 = vmatpush1.bf16.msra.mxu0 %v296
  %409 = vmatprep.subr.bf16.mxu0 0
  %410 = vmatpush1.bf16.msra.mxu0 %v297
  %411 = vmatprep.mubr.bf16.mxu0 %v125
  %412 = vmatmul.mubr.bf16.gmra.mrb[0].mxu0 %v124
  %v413 = vpop.f32.mrb[0].mxu0
  %v414 = vadd.f32 %v365, %v413
  %v415 = vpop.f32.mrb[0].mxu0
  %v416 = vpop.f32.mrb[0].mxu0
  %v417 = vadd.f32 %v368, %v416
  %v418 = vpop.f32.mrb[0].mxu0
  %419 = vmatprep.mubr.bf16.mxu0 %v129
  %420 = vmatmul.mubr.bf16.gmra.mrb[0].mxu0 %v128
  %v421 = vpop.f32.mrb[0].mxu0
  %v422 = vadd.f32 %v373, %v421
  %v423 = vpop.f32.mrb[0].mxu0
  %v424 = vpop.f32.mrb[0].mxu0
  %v425 = vadd.f32 %v376, %v424
  %v426 = vpop.f32.mrb[0].mxu0
  %427 = vdwg.mxu0
  %s428 = smul.u32 0, 32
  %s429 = smul.u32 0, 32
  %s430 = sadd.s32 %s428, %s429
  %s431 = scalar_lea.vmem %s4, %s430
  %432 = vst [vmem:[%s431] sm:$0xff] %v414
  %433 = vst [vmem:[%s431 + $0x8] sm:$0xff] %v417
  %434 = vst [vmem:[%s431 + $0x10] sm:$0xff] %v422
  %435 = vst [vmem:[%s431 + $0x18] sm:$0xff] %v425
  %v436 = vld [vmem:[#allocation2] sm:$0x1]
  %v437 = vadd.f32 %v414, %v417
  %v438 = vadd.f32 %v437, %v422
  %v439 = vadd.f32 %v438, %v425
  %v440 = vrot.slane %v439, 4
  %v441 = vadd.f32 %v439, %v440
  %v442 = vrot.slane %v441, 2
  %v443 = vadd.f32 %v441, %v442
  %v444 = vrot.slane %v443, 1
  %v445 = vadd.f32 %v443, %v444
  %v446 = vadd.f32 %v436, %v445
  %447 = vst [vmem:[#allocation2] sm:$0x1] %v446
  %v448 = vld [vmem:[#allocation3] sm:$0x1]
  %v449 = vmul.f32 %v414, %v414
  %v450 = vmul.f32 %v417, %v417
  %v451 = vmul.f32 %v422, %v422
  %v452 = vmul.f32 %v425, %v425
  %v453 = vadd.f32 %v449, %v450
  %v454 = vadd.f32 %v453, %v451
  %v455 = vadd.f32 %v454, %v452
  %v456 = vrot.slane %v455, 4
  %v457 = vadd.f32 %v455, %v456
  %v458 = vrot.slane %v457, 2
  %v459 = vadd.f32 %v457, %v458
  %v460 = vrot.slane %v459, 1
  %v461 = vadd.f32 %v459, %v460
  %v462 = vadd.f32 %v448, %v461
  %463 = vst [vmem:[#allocation3] sm:$0x1] %v462
  // Predicated region
  $region22: #{generator_forward.5} parent=0 // pred_check
    _
  $region23: #{generator_forward.5} parent=0 // pred_check_branch
    %465 = sbr.rel (%p20) target = $region25
  $region24: #{generator_forward.5} parent=0 // pred_region
    %v466 = vld [vmem:[#allocation2] sm:$0x1]
    %v467 = vmul.f32 %v466, 0.03125
    %v468 = vld [vmem:[#allocation3] sm:$0x1]
    %v469 = vmul.f32 %v468, 0.03125
    %v470 = vmul.f32 %v467, %v467
    %v471 = vsub.f32 %v469, %v470
    %v472 = vmax.f32 %v471, 0.0
    %v473 = vld [vmem:[%s2] sm:$0x1]
    %v474 = vadd.f32 %v472, 1e-05
    %v475 = vrsqrt.pop %v474
    %v476 = vmul.f32 %v473, %v475
    %v477 = vld [vmem:[%s3] sm:$0x1]
    %v478 = vmul.f32 %v467, %v476
    %v479 = vsub.f32 %v477, %v478
    %v480 = vld [vmem:[%s4] sm:$0xff]
    %v481 = vld [vmem:[%s4 + $0x8] sm:$0xff]
    %v482 = vld [vmem:[%s4 + $0x10] sm:$0xff]
    %v483 = vld [vmem:[%s4 + $0x18] sm:$0xff]
    %v485 = vlaneseq
    %v486 = vshrl.u32 %v485, 7
    %v487 = vsub.s32 0, %v486
    %v488 = vrot.slane %v476, %v487
    %v490 = vmul.f32 %v480, %v488
    %v491 = vmul.f32 %v481, %v488
    %v492 = vmul.f32 %v482, %v488
    %v493 = vmul.f32 %v483, %v488
    %v495 = vlaneseq
    %v496 = vshrl.u32 %v495, 7
    %v497 = vsub.s32 0, %v496
    %v498 = vrot.slane %v479, %v497
    %v500 = vadd.f32 %v490, %v498
    %v501 = vadd.f32 %v491, %v498
    %v502 = vadd.f32 %v492, %v498
    %v503 = vadd.f32 %v493, %v498
    %vm504 = vcmp.ge.f32.partialorder %v500, 0.0
    %vm505 = vcmp.ge.f32.partialorder %v501, 0.0
    %vm506 = vcmp.ge.f32.partialorder %v502, 0.0
    %vm507 = vcmp.ge.f32.partialorder %v503, 0.0
    %v508 = vmul.f32 %v500, 0.2
    %v509 = vmul.f32 %v501, 0.2
    %v510 = vmul.f32 %v502, 0.2
    %v511 = vmul.f32 %v503, 0.2
    %v512 = vsel %vm504, %v500, %v508
    %v513 = vsel %vm505, %v501, %v509
    %v514 = vsel %vm506, %v502, %v510
    %v515 = vsel %vm507, %v503, %v511
    %516 = vst [vmem:[%s4] sm:$0xff] %v512
    %517 = vst [vmem:[%s4 + $0x8] sm:$0xff] %v513
    %518 = vst [vmem:[%s4 + $0x10] sm:$0xff] %v514
    %519 = vst [vmem:[%s4 + $0x18] sm:$0xff] %v515
  $region25: #{generator_forward.5} parent=0 // pred_fallthru
    _
  // Predicated region
  $region26: #{generator_forward.5} parent=0 // pred_check
    _
  $region27: #{generator_forward.5} parent=0 // pred_check_branch
    %521 = sbr.rel (0) target = $region29
  $region28: #{generator_forward.5} parent=0 // pred_region
    _
  $region29: #{generator_forward.5} parent=0 // pred_fallthru
    _
  // Predicated region
  $region30: #{generator_forward.5} parent=0 // pred_check
    _
  $region31: #{generator_forward.5} parent=0 // pred_check_branch
    %523 = sbr.rel (0) target = $region33
  $region32: #{generator_forward.5} parent=0 // pred_region
    _
  $region33: #{generator_forward.5} parent=0 // pred_fallthru
    _

// kernel: generator_forward.6
$region0: #{generator_forward.6}
  #allocation0 [shape = 'u32[]', space=smem, size = 0x4, offset = 0x4, fixed_abs, tag = 'smem constant byte address 0x4 - core index']
  #allocation1 [shape = 'u32[144,128]{1,0:T(1,128)}', space=vmem, size = 0x12000, scoped, tag = 'internal scratch']
  #allocation2 [shape = 'f32[1,128]{1,0:T(1,128)}', space=vmem, size = 0x200, scoped, tag = 'scratch operand']
  #allocation3 [shape = 'f32[1,128]{1,0:T(1,128)}', space=vmem, size = 0x200, scoped, tag = 'scratch operand']
  %s0 = inlined_call_operand.vmem [shape: bf16[4,32,256], index: 0, kind: input, shape index: {}]
  %s1 = inlined_call_operand.vmem [shape: bf16[4,256,128], index: 1, kind: input, shape index: {}]
  %s2 = inlined_call_operand.vmem [shape: f32[1,128], index: 2, kind: input, shape index: {}]
  %s3 = inlined_call_operand.vmem [shape: f32[1,128], index: 3, kind: input, shape index: {}]
  %s4 = inlined_call_operand.vmem [shape: f32[128,128], index: 4, kind: output, shape index: {}]
  %s5 = sld [smem:[#allocation0]]
  $region57: #{generator_forward.6} parent=0
    _
  %s7 = ssub.s32 1, %s5
  %s8 = scalar_select 0, %s7, %s5
  loop: start=0, step=1, limit=6
  $region2: #{generator_forward.6} parent=0 // loop_pre_header
    _
  $region3: #{generator_forward.6} parent=0 // loop_header
    %s10 = sphi 0, %s14
    %p11 = scmp.ge.s32.totalorder %s10, 6
    %s17 = sphi 0, %s29
    %s18 = sphi 0, %s25
    %s19 = sphi 0, %s17
    %s20 = sphi 0, %s18
    %s21 = sphi 0, %s19
    %s22 = sphi 0, %s20
    %s34 = sphi 0, %s36
    %s37 = sphi 0, %s34
    %s38 = sphi 0, %s37
    %s54 = sphi 0, %s38
    %s60 = sphi 0, %s62
    %s63 = sphi 0, %s60
    %s64 = sphi 0, %s63
    %s80 = sphi 0, %s64
    %s84 = sphi 0, %s84
    %s86 = sphi 0, %s84
    %s87 = sphi 0, %s86
    %s101 = sphi 0, %s87
    %s105 = sphi 0, %s105
    %s107 = sphi 0, %s105
    %s108 = sphi 0, %s107
    %s122 = sphi 0, %s108
    %s126 = sphi 0, %s126
    %s128 = sphi 0, %s126
    %s129 = sphi 0, %s128
    %s143 = sphi 0, %s129
  $region4: #{generator_forward.6} parent=0 // loop_header_branch
    %13 = sbr.rel (%p11) target = $region8
  $region5: #{generator_forward.6} parent=0 // loop_body
    %s15 = ssub.s32 %s10, 1
    %s16 = ssub.s32 %s10, 2
    %s23 = sadd.s32 1, %s18
    %p24 = scmp.ge.s32.totalorder %s23, 1
    %s25 = scalar_select %p24, 0, %s23
    %s26 = sadd.s32 1, %s17
    %s27 = scalar_select %p24, %s26, %s17
    %p28 = scmp.ge.s32.totalorder %s27, 4
    %s29 = scalar_select %p28, 0, %s27
    %s30 = ssub.s32 %s17, %s29
    %s31 = ssub.s32 %s18, %s25
    %s32 = sor.u32 %s30, %s31
    %p33 = scmp.eq.s32.totalorder %s32, 0
    %s35 = sadd.s32 %s34, 1
    %s36 = scalar_select %p33, %s34, %s35
    %p39 = pneg %p33
    %p40 = scmp.eq.s32.totalorder %s10, 3
    %p41 = por %p39, %p40
    %p42 = scmp.ne.s32.totalorder %s34, %s37
    %p43 = scmp.eq.s32.totalorder %s10, 0
    %p44 = por %p42, %p43
    %p45 = scmp.ne.s32.totalorder %s34, %s37
    %p46 = scmp.eq.s32.totalorder %s15, 3
    %p47 = por %p45, %p46
    %p48 = scmp.ne.s32.totalorder %s37, %s38
    %p49 = scmp.eq.s32.totalorder %s15, 0
    %p50 = por %p48, %p49
    %p51 = scmp.ne.s32.totalorder %s37, %s38
    %p52 = scmp.eq.s32.totalorder %s16, 3
    %p53 = por %p51, %p52
    %p55 = scmp.ne.s32.totalorder %s38, %s54
    %p56 = scmp.eq.s32.totalorder %s16, 0
    %p57 = por %p55, %p56
    %s58 = ssub.s32 %s17, %s29
    %p59 = scmp.eq.s32.totalorder %s58, 0
    %s61 = sadd.s32 %s60, 1
    %s62 = scalar_select %p59, %s60, %s61
    %p65 = pneg %p59
    %p66 = scmp.eq.s32.totalorder %s10, 3
    %p67 = por %p65, %p66
    %p68 = scmp.ne.s32.totalorder %s60, %s63
    %p69 = scmp.eq.s32.totalorder %s10, 0
    %p70 = por %p68, %p69
    %p71 = scmp.ne.s32.totalorder %s60, %s63
    %p72 = scmp.eq.s32.totalorder %s15, 3
    %p73 = por %p71, %p72
    %p74 = scmp.ne.s32.totalorder %s63, %s64
    %p75 = scmp.eq.s32.totalorder %s15, 0
    %p76 = por %p74, %p75
    %p77 = scmp.ne.s32.totalorder %s63, %s64
    %p78 = scmp.eq.s32.totalorder %s16, 3
    %p79 = por %p77, %p78
    %p81 = scmp.ne.s32.totalorder %s64, %s80
    %p82 = scmp.eq.s32.totalorder %s16, 0
    %p83 = por %p81, %p82
    %s85 = sadd.s32 %s84, 1
    %p88 = scmp.eq.s32.totalorder %s10, 3
    %p89 = scmp.ne.s32.totalorder %s84, %s86
    %p90 = scmp.eq.s32.totalorder %s10, 0
    %p91 = por %p89, %p90
    %p92 = scmp.ne.s32.totalorder %s84, %s86
    %p93 = scmp.eq.s32.totalorder %s15, 3
    %p94 = por %p92, %p93
    %p95 = scmp.ne.s32.totalorder %s86, %s87
    %p96 = scmp.eq.s32.totalorder %s15, 0
    %p97 = por %p95, %p96
    %p98 = scmp.ne.s32.totalorder %s86, %s87
    %p99 = scmp.eq.s32.totalorder %s16, 3
    %p100 = por %p98, %p99
    %p102 = scmp.ne.s32.totalorder %s87, %s101
    %p103 = scmp.eq.s32.totalorder %s16, 0
    %p104 = por %p102, %p103
    %s106 = sadd.s32 %s105, 1
    %p109 = scmp.eq.s32.totalorder %s10, 3
    %p110 = scmp.ne.s32.totalorder %s105, %s107
    %p111 = scmp.eq.s32.totalorder %s10, 0
    %p112 = por %p110, %p111
    %p113 = scmp.ne.s32.totalorder %s105, %s107
    %p114 = scmp.eq.s32.totalorder %s15, 3
    %p115 = por %p113, %p114
    %p116 = scmp.ne.s32.totalorder %s107, %s108
    %p117 = scmp.eq.s32.totalorder %s15, 0
    %p118 = por %p116, %p117
    %p119 = scmp.ne.s32.totalorder %s107, %s108
    %p120 = scmp.eq.s32.totalorder %s16, 3
    %p121 = por %p119, %p120
    %p123 = scmp.ne.s32.totalorder %s108, %s122
    %p124 = scmp.eq.s32.totalorder %s16, 0
    %p125 = por %p123, %p124
    %s127 = sadd.s32 %s126, 1
    %p130 = scmp.eq.s32.totalorder %s10, 3
    %p131 = scmp.ne.s32.totalorder %s126, %s128
    %p132 = scmp.eq.s32.totalorder %s10, 0
    %p133 = por %p131, %p132
    %p134 = scmp.ne.s32.totalorder %s126, %s128
    %p135 = scmp.eq.s32.totalorder %s15, 3
    %p136 = por %p134, %p135
    %p137 = scmp.ne.s32.totalorder %s128, %s129
    %p138 = scmp.eq.s32.totalorder %s15, 0
    %p139 = por %p137, %p138
    %p140 = scmp.ne.s32.totalorder %s128, %s129
    %p141 = scmp.eq.s32.totalorder %s16, 3
    %p142 = por %p140, %p141
    %p144 = scmp.ne.s32.totalorder %s129, %s143
    %p145 = scmp.eq.s32.totalorder %s16, 0
    %p146 = por %p144, %p145
    %p147 = scmp.le.s32.totalorder 1, %s10
    %p148 = scmp.lt.s32.totalorder %s10, 5
    %p149 = pnand %p147, %p148
    %p150 = pneg %p149
    // Predicated region
    $region9: #{generator_forward.6} parent=5 // pred_check
      _
    $region10: #{generator_forward.6} parent=5 // pred_check_branch
      %152 = sbr.rel (%p149) target = $region12
    $region11: #{generator_forward.6} parent=5 // pred_region
      %s153 = ssub.s32 %s10, 1
      // Predicated region
      $region13: #{generator_forward.6} parent=11 // pred_check
        %p154 = pneg %p97
      $region14: #{generator_forward.6} parent=11 // pred_check_branch
        %156 = sbr.rel (%p154) target = $region16
      $region15: #{generator_forward.6} parent=11 // pred_region
        _
      $region16: #{generator_forward.6} parent=11 // pred_fallthru
        _
      // Predicated region
      $region17: #{generator_forward.6} parent=11 // pred_check
        %p157 = pneg %p118
      $region18: #{generator_forward.6} parent=11 // pred_check_branch
        %159 = sbr.rel (%p157) target = $region20
      $region19: #{generator_forward.6} parent=11 // pred_region
        _
      $region20: #{generator_forward.6} parent=11 // pred_fallthru
        _
    $region12: #{generator_forward.6} parent=5 // pred_fallthru
      _
    %p160 = scmp.lt.s32.totalorder %s10, 4
    // Predicated region
    $region21: #{generator_forward.6} parent=5 // pred_check
      %p161 = pneg %p160
    $region22: #{generator_forward.6} parent=5 // pred_check_branch
      %163 = sbr.rel (%p161) target = $region24
    $region23: #{generator_forward.6} parent=5 // pred_region
      // Predicated region
      $region25: #{generator_forward.6} parent=23 // pred_check
        %p164 = pneg %p44
      $region26: #{generator_forward.6} parent=23 // pred_check_branch
        %166 = sbr.rel (%p164) target = $region28
      $region27: #{generator_forward.6} parent=23 // pred_region
        %s167 = smul.u32 4, %s18
        %p168 = scmp.lt.s32.totalorder %s17, 3
        %s169 = scalar_select %p168, %s17, 3
        %p170 = scmp.lt.s32.totalorder %s167, 3
        %s171 = scalar_select %p170, %s167, 3
        %s172 = smul.addr %s171, 2
        %s173 = smul.addr %s169, 8
        %s174 = sadd.s32 %s172, %s173
        %s175 = smul.addr %s174, 4
        %s176 = scalar_lea.vmem %s0, %s175
        %s177 = smul.u32 4, %s18
      $region28: #{generator_forward.6} parent=23 // pred_fallthru
        _
      // Predicated region
      $region29: #{generator_forward.6} parent=23 // pred_check
        %p178 = pneg %p70
      $region30: #{generator_forward.6} parent=23 // pred_check_branch
        %180 = sbr.rel (%p178) target = $region32
      $region31: #{generator_forward.6} parent=23 // pred_region
        %p181 = scmp.lt.s32.totalorder %s17, 3
        %s182 = scalar_select %p181, %s17, 3
        %s183 = smul.addr %s182, 32
        %s184 = smul.addr %s183, 4
        %s185 = scalar_lea.vmem %s1, %s184
      $region32: #{generator_forward.6} parent=23 // pred_fallthru
        _
    $region24: #{generator_forward.6} parent=5 // pred_fallthru
      _
    %p186 = scmp.le.s32.totalorder 1, %s10
    %p187 = scmp.lt.s32.totalorder %s10, 5
    %p188 = pnand %p186, %p187
    %p189 = pneg %p188
    // Predicated region
    $region33: #{generator_forward.6} parent=5 // pred_check
      _
    $region34: #{generator_forward.6} parent=5 // pred_check_branch
      %191 = sbr.rel (%p188) target = $region36
    $region35: #{generator_forward.6} parent=5 // pred_region
      %s192 = ssub.s32 %s10, 1
      %s193 = smul.u32 4, %s20
      %p194 = scmp.lt.s32.totalorder %s19, 3
      %s195 = scalar_select %p194, %s19, 3
      %p196 = scmp.lt.s32.totalorder %s193, 3
      %s197 = scalar_select %p196, %s193, 3
      %s198 = smul.addr %s197, 2
      %s199 = smul.addr %s195, 8
      %s200 = sadd.s32 %s198, %s199
      %s201 = smul.addr %s200, 4
      %s202 = scalar_lea.vmem %s0, %s201
      %p203 = pneg %p50
      %p204 = pneg %p47
      %p205 = scmp.lt.s32.totalorder %s19, 3
      %s206 = scalar_select %p205, %s19, 3
      %s207 = smul.addr %s206, 32
      %s208 = smul.addr %s207, 4
      %s209 = scalar_lea.vmem %s1, %s208
      %p210 = pneg %p76
      %p211 = pneg %p73
      %p212 = pneg %p97
      %p213 = pneg %p94
      %p214 = pneg %p118
      %p215 = pneg %p115
      %p216 = pneg %p139
      %p217 = pneg %p136
      %s218 = smul.u32 4, %s20
      %p219 = scmp.lt.s32.totalorder %s19, 3
      %s220 = scalar_select %p219, %s19, 3
      %p221 = scmp.lt.s32.totalorder %s218, 3
      %s222 = scalar_select %p221, %s218, 3
      %s223 = smul.addr %s222, 2
      %s224 = smul.addr %s220, 8
      %s225 = sadd.s32 %s223, %s224
      %s226 = smul.addr %s225, 4
      %s227 = scalar_lea.vmem %s0, %s226
      %s228 = smul.u32 4, %s20
      %p229 = scmp.lt.s32.totalorder %s19, 3
      %s230 = scalar_select %p229, %s19, 3
      %s231 = smul.addr %s230, 32
      %s232 = smul.addr %s231, 4
      %s233 = scalar_lea.vmem %s1, %s232
      %p235 = scmp.eq.s32.totalorder %s19, 0
      %p236 = scmp.eq.s32.totalorder %s20, 0
      %p237 = pnand %p235, %p236
      %p238 = pneg %p237
      // Predicated region
      $region37: #{generator_forward.6} parent=35 // pred_check
        _
      $region38: #{generator_forward.6} parent=35 // pred_check_branch
        %240 = sbr.rel (%p237) target = $region40
      $region39: #{generator_forward.6} parent=35 // pred_region
        %241 = vst [vmem:[#allocation2] sm:$0x1] 0.0
        %242 = vst [vmem:[#allocation3] sm:$0x1] 0.0
      $region40: #{generator_forward.6} parent=35 // pred_fallthru
        _
      %v243 = vld [vmem:[%s227] sm:$0xff]
      %v244 = vld [vmem:[%s227 + $0x8] sm:$0xff]
      %v245 = vld [vmem:[%s227 + $0x10] sm:$0xff]
      %v246 = vld [vmem:[%s227 + $0x18] sm:$0xff]
      %v247 = vld [vmem:[%s233] sm:$0xf]
      %v248 = vld [vmem:[%s233 + $0x4] sm:$0xf]
      %v249 = vld [vmem:[%s233 + $0x8] sm:$0xf]
      %v250 = vld [vmem:[%s233 + $0xc] sm:$0xf]
      %v251 = vld [vmem:[%s233 + $0x10] sm:$0xf]
      %v252 = vld [vmem:[%s233 + $0x14] sm:$0xf]
      %v253 = vld [vmem:[%s233 + $0x18] sm:$0xf]
      %v254 = vld [vmem:[%s233 + $0x1c] sm:$0xf]
      %v255 = vld [vmem:[%s233 + $0x20] sm:$0xf]
      %v256 = vld [vmem:[%s233 + $0x24] sm:$0xf]
      %v257 = vld [vmem:[%s233 + $0x28] sm:$0xf]
      %v258 = vld [vmem:[%s233 + $0x2c] sm:$0xf]
      %v259 = vld [vmem:[%s233 + $0x30] sm:$0xf]
      %v260 = vld [vmem:[%s233 + $0x34] sm:$0xf]
      %v261 = vld [vmem:[%s233 + $0x38] sm:$0xf]
      %v262 = vld [vmem:[%s233 + $0x3c] sm:$0xf]
      %v263 = vld [vmem:[%s233 + $0x40] sm:$0xf]
      %v264 = vld [vmem:[%s233 + $0x44] sm:$0xf]
      %v265 = vld [vmem:[%s233 + $0x48] sm:$0xf]
      %v266 = vld [vmem:[%s233 + $0x4c] sm:$0xf]
      %v267 = vld [vmem:[%s233 + $0x50] sm:$0xf]
      %v268 = vld [vmem:[%s233 + $0x54] sm:$0xf]
      %v269 = vld [vmem:[%s233 + $0x58] sm:$0xf]
      %v270 = vld [vmem:[%s233 + $0x5c] sm:$0xf]
      %v271 = vld [vmem:[%s233 + $0x60] sm:$0xf]
      %v272 = vld [vmem:[%s233 + $0x64] sm:$0xf]
      %v273 = vld [vmem:[%s233 + $0x68] sm:$0xf]
      %v274 = vld [vmem:[%s233 + $0x6c] sm:$0xf]
      %v275 = vld [vmem:[%s233 + $0x70] sm:$0xf]
      %v276 = vld [vmem:[%s233 + $0x74] sm:$0xf]
      %v277 = vld [vmem:[%s233 + $0x78] sm:$0xf]
      %v278 = vld [vmem:[%s233 + $0x7c] sm:$0xf]
      %v283 = vunpack.c.l.b16 %v243
      %v284 = vunpack.c.h.b16 %v243
      %v285 = vunpack.c.l.b16 %v244
      %v286 = vunpack.c.h.b16 %v244
      %v287 = vunpack.c.l.b16 %v245
      %v288 = vunpack.c.h.b16 %v245
      %v289 = vunpack.c.l.b16 %v246
      %v290 = vunpack.c.h.b16 %v246
      %v291 = vpack.c.b16 %v285, %v283
      %v292 = vpack.c.b16 %v286, %v284
      %v293 = vpack.c.b16 %v289, %v287
      %v294 = vpack.c.b16 %v290, %v288
      %v331 = vunpack.c.l.b16 %v247
      %v332 = vunpack.c.l.b16 %v248
      %v333 = vunpack.c.l.b16 %v249
      %v334 = vunpack.c.l.b16 %v250
      %v335 = vunpack.c.l.b16 %v251
      %v336 = vunpack.c.l.b16 %v252
      %v337 = vunpack.c.l.b16 %v253
      %v338 = vunpack.c.l.b16 %v254
      %v339 = vunpack.c.l.b16 %v255
      %v340 = vunpack.c.l.b16 %v256
      %v341 = vunpack.c.l.b16 %v257
      %v342 = vunpack.c.l.b16 %v258
      %v343 = vunpack.c.l.b16 %v259
      %v344 = vunpack.c.l.b16 %v260
      %v345 = vunpack.c.l.b16 %v261
      %v346 = vunpack.c.l.b16 %v262
      %v347 = vunpack.c.l.b16 %v263
      %v348 = vunpack.c.l.b16 %v264
      %v349 = vunpack.c.l.b16 %v265
      %v350 = vunpack.c.l.b16 %v266
      %v351 = vunpack.c.l.b16 %v267
      %v352 = vunpack.c.l.b16 %v268
      %v353 = vunpack.c.l.b16 %v269
      %v354 = vunpack.c.l.b16 %v270
      %v355 = vunpack.c.l.b16 %v271
      %v356 = vunpack.c.l.b16 %v272
      %v357 = vunpack.c.l.b16 %v273
      %v358 = vunpack.c.l.b16 %v274
      %v359 = vunpack.c.l.b16 %v275
      %v360 = vunpack.c.l.b16 %v276
      %v361 = vunpack.c.l.b16 %v277
      %v362 = vunpack.c.l.b16 %v278
      %v363 = vpack.c.b16 %v332, %v331
      %v364 = vpack.c.b16 %v334, %v333
      %v365 = vpack.c.b16 %v336, %v335
      %v366 = vpack.c.b16 %v338, %v337
      %v367 = vpack.c.b16 %v340, %v339
      %v368 = vpack.c.b16 %v342, %v341
      %v369 = vpack.c.b16 %v344, %v343
      %v370 = vpack.c.b16 %v346, %v345
      %v371 = vpack.c.b16 %v348, %v347
      %v372 = vpack.c.b16 %v350, %v349
      %v373 = vpack.c.b16 %v352, %v351
      %v374 = vpack.c.b16 %v354, %v353
      %v375 = vpack.c.b16 %v356, %v355
      %v376 = vpack.c.b16 %v358, %v357
      %v377 = vpack.c.b16 %v360, %v359
      %v378 = vpack.c.b16 %v362, %v361
      %395 = vmatprep.subr.bf16.mxu0 0
      %396 = vmatpush1.bf16.msra.mxu0 %v363
      %397 = vmatprep.subr.bf16.mxu0 0
      %398 = vmatpush1.bf16.msra.mxu0 %v364
      %399 = vmatprep.subr.bf16.mxu0 0
      %400 = vmatpush1.bf16.msra.mxu0 %v365
      %401 = vmatprep.subr.bf16.mxu0 0
      %402 = vmatpush1.bf16.msra.mxu0 %v366
      %403 = vmatprep.subr.bf16.mxu0 0
      %404 = vmatpush1.bf16.msra.mxu0 %v367
      %405 = vmatprep.subr.bf16.mxu0 0
      %406 = vmatpush1.bf16.msra.mxu0 %v368
      %407 = vmatprep.subr.bf16.mxu0 0
      %408 = vmatpush1.bf16.msra.mxu0 %v369
      %409 = vmatprep.subr.bf16.mxu0 0
      %410 = vmatpush1.bf16.msra.mxu0 %v370
      %411 = vmatprep.subr.bf16.mxu0 0
      %412 = vmatpush1.bf16.msra.mxu0 %v371
      %413 = vmatprep.subr.bf16.mxu0 0
      %414 = vmatpush1.bf16.msra.mxu0 %v372
      %415 = vmatprep.subr.bf16.mxu0 0
      %416 = vmatpush1.bf16.msra.mxu0 %v373
      %417 = vmatprep.subr.bf16.mxu0 0
      %418 = vmatpush1.bf16.msra.mxu0 %v374
      %419 = vmatprep.subr.bf16.mxu0 0
      %420 = vmatpush1.bf16.msra.mxu0 %v375
      %421 = vmatprep.subr.bf16.mxu0 0
      %422 = vmatpush1.bf16.msra.mxu0 %v376
      %423 = vmatprep.subr.bf16.mxu0 0
      %424 = vmatpush1.bf16.msra.mxu0 %v377
      %425 = vmatprep.subr.bf16.mxu0 0
      %426 = vmatpush1.bf16.msra.mxu0 %v378
      %427 = vmatprep.mubr.bf16.mxu0 %v292
      %428 = vmatmul.mubr.bf16.gmra.mrb[0].mxu0 %v291
      %v429 = vpop.f32.mrb[0].mxu0
      %v430 = vadd.f32 0.0, %v429
      %v431 = vpop.f32.mrb[0].mxu0
      %v432 = vpop.f32.mrb[0].mxu0
      %v433 = vadd.f32 0.0, %v432
      %v434 = vpop.f32.mrb[0].mxu0
      %435 = vmatprep.mubr.bf16.mxu0 %v294
      %436 = vmatmul.mubr.bf16.gmra.mrb[0].mxu0 %v293
      %v437 = vpop.f32.mrb[0].mxu0
      %v438 = vadd.f32 0.0, %v437
      %v439 = vpop.f32.mrb[0].mxu0
      %v440 = vpop.f32.mrb[0].mxu0
      %v441 = vadd.f32 0.0, %v440
      %v442 = vpop.f32.mrb[0].mxu0
      %443 = vdwg.mxu0
      %s444 = smul.u32 %s19, 32
      %s445 = smul.u32 %s20, 32
      %s446 = sadd.s32 %s444, %s445
      %s447 = scalar_lea.vmem %s4, %s446
      %448 = vst [vmem:[%s447] sm:$0xff] %v430
      %449 = vst [vmem:[%s447 + $0x8] sm:$0xff] %v433
      %450 = vst [vmem:[%s447 + $0x10] sm:$0xff] %v438
      %451 = vst [vmem:[%s447 + $0x18] sm:$0xff] %v441
      %v452 = vld [vmem:[#allocation2] sm:$0x1]
      %v453 = vadd.f32 %v430, %v433
      %v454 = vadd.f32 %v453, %v438
      %v455 = vadd.f32 %v454, %v441
      %v456 = vrot.slane %v455, 4
      %v457 = vadd.f32 %v455, %v456
      %v458 = vrot.slane %v457, 2
      %v459 = vadd.f32 %v457, %v458
      %v460 = vrot.slane %v459, 1
      %v461 = vadd.f32 %v459, %v460
      %v462 = vadd.f32 %v452, %v461
      %463 = vst [vmem:[#allocation2] sm:$0x1] %v462
      %v464 = vld [vmem:[#allocation3] sm:$0x1]
      %v465 = vmul.f32 %v430, %v430
      %v466 = vmul.f32 %v433, %v433
      %v467 = vmul.f32 %v438, %v438
      %v468 = vmul.f32 %v441, %v441
      %v469 = vadd.f32 %v465, %v466
      %v470 = vadd.f32 %v469, %v467
      %v471 = vadd.f32 %v470, %v468
      %v472 = vrot.slane %v471, 4
      %v473 = vadd.f32 %v471, %v472
      %v474 = vrot.slane %v473, 2
      %v475 = vadd.f32 %v473, %v474
      %v476 = vrot.slane %v475, 1
      %v477 = vadd.f32 %v475, %v476
      %v478 = vadd.f32 %v464, %v477
      %479 = vst [vmem:[#allocation3] sm:$0x1] %v478
      %p480 = scmp.eq.s32.totalorder %s19, 3
      %p481 = pnand %p480, %p236
      %p482 = pneg %p481
      // Predicated region
      $region41: #{generator_forward.6} parent=35 // pred_check
        _
      $region42: #{generator_forward.6} parent=35 // pred_check_branch
        %484 = sbr.rel (%p481) target = $region44
      $region43: #{generator_forward.6} parent=35 // pred_region
        %v485 = vld [vmem:[#allocation2] sm:$0x1]
        %v486 = vmul.f32 %v485, 0.0078125
        %v487 = vld [vmem:[#allocation3] sm:$0x1]
        %v488 = vmul.f32 %v487, 0.0078125
        %v489 = vmul.f32 %v486, %v486
        %v490 = vsub.f32 %v488, %v489
        %v491 = vmax.f32 %v490, 0.0
        %v492 = vld [vmem:[%s2] sm:$0x1]
        %v493 = vadd.f32 %v491, 1e-05
        %v494 = vrsqrt.pop %v493
        %v495 = vmul.f32 %v492, %v494
        %v496 = vld [vmem:[%s3] sm:$0x1]
        %v497 = vmul.f32 %v486, %v495
        %v498 = vsub.f32 %v496, %v497
        %v499 = vld [vmem:[%s4] sm:$0xff]
        %v500 = vld [vmem:[%s4 + $0x8] sm:$0xff]
        %v501 = vld [vmem:[%s4 + $0x10] sm:$0xff]
        %v502 = vld [vmem:[%s4 + $0x18] sm:$0xff]
        %v504 = vlaneseq
        %v505 = vshrl.u32 %v504, 7
        %v506 = vsub.s32 0, %v505
        %v507 = vrot.slane %v495, %v506
        %v509 = vmul.f32 %v499, %v507
        %v510 = vmul.f32 %v500, %v507
        %v511 = vmul.f32 %v501, %v507
        %v512 = vmul.f32 %v502, %v507
        %v514 = vlaneseq
        %v515 = vshrl.u32 %v514, 7
        %v516 = vsub.s32 0, %v515
        %v517 = vrot.slane %v498, %v516
        %v519 = vadd.f32 %v509, %v517
        %v520 = vadd.f32 %v510, %v517
        %v521 = vadd.f32 %v511, %v517
        %v522 = vadd.f32 %v512, %v517
        %vm523 = vcmp.ge.f32.partialorder %v519, 0.0
        %vm524 = vcmp.ge.f32.partialorder %v520, 0.0
        %vm525 = vcmp.ge.f32.partialorder %v521, 0.0
        %vm526 = vcmp.ge.f32.partialorder %v522, 0.0
        %v527 = vmul.f32 %v519, 0.2
        %v528 = vmul.f32 %v520, 0.2
        %v529 = vmul.f32 %v521, 0.2
        %v530 = vmul.f32 %v522, 0.2
        %v531 = vsel %vm523, %v519, %v527
        %v532 = vsel %vm524, %v520, %v528
        %v533 = vsel %vm525, %v521, %v529
        %v534 = vsel %vm526, %v522, %v530
        %535 = vst [vmem:[%s4] sm:$0xff] %v531
        %536 = vst [vmem:[%s4 + $0x8] sm:$0xff] %v532
        %537 = vst [vmem:[%s4 + $0x10] sm:$0xff] %v533
        %538 = vst [vmem:[%s4 + $0x18] sm:$0xff] %v534
        %v539 = vld [vmem:[%s4 + $0x20] sm:$0xff]
        %v540 = vld [vmem:[%s4 + $0x28] sm:$0xff]
        %v541 = vld [vmem:[%s4 + $0x30] sm:$0xff]
        %v542 = vld [vmem:[%s4 + $0x38] sm:$0xff]
        %v543 = vmul.f32 %v539, %v507
        %v544 = vmul.f32 %v540, %v507
        %v545 = vmul.f32 %v541, %v507
        %v546 = vmul.f32 %v542, %v507
        %v547 = vadd.f32 %v543, %v517
        %v548 = vadd.f32 %v544, %v517
        %v549 = vadd.f32 %v545, %v517
        %v550 = vadd.f32 %v546, %v517
        %vm551 = vcmp.ge.f32.partialorder %v547, 0.0
        %vm552 = vcmp.ge.f32.partialorder %v548, 0.0
        %vm553 = vcmp.ge.f32.partialorder %v549, 0.0
        %vm554 = vcmp.ge.f32.partialorder %v550, 0.0
        %v555 = vmul.f32 %v547, 0.2
        %v556 = vmul.f32 %v548, 0.2
        %v557 = vmul.f32 %v549, 0.2
        %v558 = vmul.f32 %v550, 0.2
        %v559 = vsel %vm551, %v547, %v555
        %v560 = vsel %vm552, %v548, %v556
        %v561 = vsel %vm553, %v549, %v557
        %v562 = vsel %vm554, %v550, %v558
        %563 = vst [vmem:[%s4 + $0x20] sm:$0xff] %v559
        %564 = vst [vmem:[%s4 + $0x28] sm:$0xff] %v560
        %565 = vst [vmem:[%s4 + $0x30] sm:$0xff] %v561
        %566 = vst [vmem:[%s4 + $0x38] sm:$0xff] %v562
        %v567 = vld [vmem:[%s4 + $0x40] sm:$0xff]
        %v568 = vld [vmem:[%s4 + $0x48] sm:$0xff]
        %v569 = vld [vmem:[%s4 + $0x50] sm:$0xff]
        %v570 = vld [vmem:[%s4 + $0x58] sm:$0xff]
        %v571 = vmul.f32 %v567, %v507
        %v572 = vmul.f32 %v568, %v507
        %v573 = vmul.f32 %v569, %v507
        %v574 = vmul.f32 %v570, %v507
        %v575 = vadd.f32 %v571, %v517
        %v576 = vadd.f32 %v572, %v517
        %v577 = vadd.f32 %v573, %v517
        %v578 = vadd.f32 %v574, %v517
        %vm579 = vcmp.ge.f32.partialorder %v575, 0.0
        %vm580 = vcmp.ge.f32.partialorder %v576, 0.0
        %vm581 = vcmp.ge.f32.partialorder %v577, 0.0
        %vm582 = vcmp.ge.f32.partialorder %v578, 0.0
        %v583 = vmul.f32 %v575, 0.2
        %v584 = vmul.f32 %v576, 0.2
        %v585 = vmul.f32 %v577, 0.2
        %v586 = vmul.f32 %v578, 0.2
        %v587 = vsel %vm579, %v575, %v583
        %v588 = vsel %vm580, %v576, %v584
        %v589 = vsel %vm581, %v577, %v585
        %v590 = vsel %vm582, %v578, %v586
        %591 = vst [vmem:[%s4 + $0x40] sm:$0xff] %v587
        %592 = vst [vmem:[%s4 + $0x48] sm:$0xff] %v588
        %593 = vst [vmem:[%s4 + $0x50] sm:$0xff] %v589
        %594 = vst [vmem:[%s4 + $0x58] sm:$0xff] %v590
        %v595 = vld [vmem:[%s4 + $0x60] sm:$0xff]
        %v596 = vld [vmem:[%s4 + $0x68] sm:$0xff]
        %v597 = vld [vmem:[%s4 + $0x70] sm:$0xff]
        %v598 = vld [vmem:[%s4 + $0x78] sm:$0xff]
        %v599 = vmul.f32 %v595, %v507
        %v600 = vmul.f32 %v596, %v507
        %v601 = vmul.f32 %v597, %v507
        %v602 = vmul.f32 %v598, %v507
        %v603 = vadd.f32 %v599, %v517
        %v604 = vadd.f32 %v600, %v517
        %v605 = vadd.f32 %v601, %v517
        %v606 = vadd.f32 %v602, %v517
        %vm607 = vcmp.ge.f32.partialorder %v603, 0.0
        %vm608 = vcmp.ge.f32.partialorder %v604, 0.0
        %vm609 = vcmp.ge.f32.partialorder %v605, 0.0
        %vm610 = vcmp.ge.f32.partialorder %v606, 0.0
        %v611 = vmul.f32 %v603, 0.2
        %v612 = vmul.f32 %v604, 0.2
        %v613 = vmul.f32 %v605, 0.2
        %v614 = vmul.f32 %v606, 0.2
        %v615 = vsel %vm607, %v603, %v611
        %v616 = vsel %vm608, %v604, %v612
        %v617 = vsel %vm609, %v605, %v613
        %v618 = vsel %vm610, %v606, %v614
        %619 = vst [vmem:[%s4 + $0x60] sm:$0xff] %v615
        %620 = vst [vmem:[%s4 + $0x68] sm:$0xff] %v616
        %621 = vst [vmem:[%s4 + $0x70] sm:$0xff] %v617
        %622 = vst [vmem:[%s4 + $0x78] sm:$0xff] %v618
      $region44: #{generator_forward.6} parent=35 // pred_fallthru
        _
      // Predicated region
      $region45: #{generator_forward.6} parent=35 // pred_check
        %p623 = pneg %p136
      $region46: #{generator_forward.6} parent=35 // pred_check_branch
        %625 = sbr.rel (%p623) target = $region48
      $region47: #{generator_forward.6} parent=35 // pred_region
        _
      $region48: #{generator_forward.6} parent=35 // pred_fallthru
        _
      // Predicated region
      $region49: #{generator_forward.6} parent=35 // pred_check
        %p626 = pneg %p136
      $region50: #{generator_forward.6} parent=35 // pred_check_branch
        %628 = sbr.rel (%p626) target = $region52
      $region51: #{generator_forward.6} parent=35 // pred_region
        _
      $region52: #{generator_forward.6} parent=35 // pred_fallthru
        _
    $region36: #{generator_forward.6} parent=5 // pred_fallthru
      _
    %p629 = scmp.le.s32.totalorder 2, %s10
    // Predicated region
    $region53: #{generator_forward.6} parent=5 // pred_check
      %p630 = pneg %p629
    $region54: #{generator_forward.6} parent=5 // pred_check_branch
      %632 = sbr.rel (%p630) target = $region56
    $region55: #{generator_forward.6} parent=5 // pred_region
      %s633 = ssub.s32 %s10, 2
    $region56: #{generator_forward.6} parent=5 // pred_fallthru
      _
  $region6: #{generator_forward.6} parent=0 // loop_footer
    %s14 = sadd.s32 1, %s10
  $region7: #{generator_forward.6} parent=0 // loop_footer_branch
    %9 = sbr.rel target = $region3
  $region8: #{generator_forward.6} parent=0 // loop_exit
    _

// kernel: generator_forward.7
$region0: #{generator_forward.7}
  #allocation0 [shape = 'u32[]', space=smem, size = 0x4, offset = 0x4, fixed_abs, tag = 'smem constant byte address 0x4 - core index']
  #allocation1 [shape = 'u32[144,128]{1,0:T(1,128)}', space=vmem, size = 0x12000, scoped, tag = 'internal scratch']
  #allocation2 [shape = 'f32[1,128]{1,0:T(1,128)}', space=vmem, size = 0x200, scoped, tag = 'scratch operand']
  #allocation3 [shape = 'f32[1,128]{1,0:T(1,128)}', space=vmem, size = 0x200, scoped, tag = 'scratch operand']
  %s0 = inlined_call_operand.vmem [shape: bf16[4,128,128], index: 0, kind: input, shape index: {}]
  %s1 = inlined_call_operand.vmem [shape: bf16[4,128,128], index: 1, kind: input, shape index: {}]
  %s2 = inlined_call_operand.vmem [shape: f32[1,128], index: 2, kind: input, shape index: {}]
  %s3 = inlined_call_operand.vmem [shape: f32[1,128], index: 3, kind: input, shape index: {}]
  %s4 = inlined_call_operand.vmem [shape: f32[512,128], index: 4, kind: output, shape index: {}]
  %s5 = sld [smem:[#allocation0]]
  $region57: #{generator_forward.7} parent=0
    _
  %s7 = ssub.s32 1, %s5
  %s8 = scalar_select 0, %s7, %s5
  loop: start=0, step=1, limit=6
  $region2: #{generator_forward.7} parent=0 // loop_pre_header
    _
  $region3: #{generator_forward.7} parent=0 // loop_header
    %s10 = sphi 0, %s14
    %p11 = scmp.ge.s32.totalorder %s10, 6
    %s17 = sphi 0, %s29
    %s18 = sphi 0, %s25
    %s19 = sphi 0, %s17
    %s20 = sphi 0, %s18
    %s21 = sphi 0, %s19
    %s22 = sphi 0, %s20
    %s34 = sphi 0, %s36
    %s37 = sphi 0, %s34
    %s38 = sphi 0, %s37
    %s54 = sphi 0, %s38
    %s60 = sphi 0, %s62
    %s63 = sphi 0, %s60
    %s64 = sphi 0, %s63
    %s80 = sphi 0, %s64
    %s84 = sphi 0, %s84
    %s86 = sphi 0, %s84
    %s87 = sphi 0, %s86
    %s101 = sphi 0, %s87
    %s105 = sphi 0, %s105
    %s107 = sphi 0, %s105
    %s108 = sphi 0, %s107
    %s122 = sphi 0, %s108
    %s126 = sphi 0, %s126
    %s128 = sphi 0, %s126
    %s129 = sphi 0, %s128
    %s143 = sphi 0, %s129
  $region4: #{generator_forward.7} parent=0 // loop_header_branch
    %13 = sbr.rel (%p11) target = $region8
  $region5: #{generator_forward.7} parent=0 // loop_body
    %s15 = ssub.s32 %s10, 1
    %s16 = ssub.s32 %s10, 2
    %s23 = sadd.s32 1, %s18
    %p24 = scmp.ge.s32.totalorder %s23, 1
    %s25 = scalar_select %p24, 0, %s23
    %s26 = sadd.s32 1, %s17
    %s27 = scalar_select %p24, %s26, %s17
    %p28 = scmp.ge.s32.totalorder %s27, 4
    %s29 = scalar_select %p28, 0, %s27
    %s30 = ssub.s32 %s17, %s29
    %s31 = ssub.s32 %s18, %s25
    %s32 = sor.u32 %s30, %s31
    %p33 = scmp.eq.s32.totalorder %s32, 0
    %s35 = sadd.s32 %s34, 1
    %s36 = scalar_select %p33, %s34, %s35
    %p39 = pneg %p33
    %p40 = scmp.eq.s32.totalorder %s10, 3
    %p41 = por %p39, %p40
    %p42 = scmp.ne.s32.totalorder %s34, %s37
    %p43 = scmp.eq.s32.totalorder %s10, 0
    %p44 = por %p42, %p43
    %p45 = scmp.ne.s32.totalorder %s34, %s37
    %p46 = scmp.eq.s32.totalorder %s15, 3
    %p47 = por %p45, %p46
    %p48 = scmp.ne.s32.totalorder %s37, %s38
    %p49 = scmp.eq.s32.totalorder %s15, 0
    %p50 = por %p48, %p49
    %p51 = scmp.ne.s32.totalorder %s37, %s38
    %p52 = scmp.eq.s32.totalorder %s16, 3
    %p53 = por %p51, %p52
    %p55 = scmp.ne.s32.totalorder %s38, %s54
    %p56 = scmp.eq.s32.totalorder %s16, 0
    %p57 = por %p55, %p56
    %s58 = ssub.s32 %s17, %s29
    %p59 = scmp.eq.s32.totalorder %s58, 0
    %s61 = sadd.s32 %s60, 1
    %s62 = scalar_select %p59, %s60, %s61
    %p65 = pneg %p59
    %p66 = scmp.eq.s32.totalorder %s10, 3
    %p67 = por %p65, %p66
    %p68 = scmp.ne.s32.totalorder %s60, %s63
    %p69 = scmp.eq.s32.totalorder %s10, 0
    %p70 = por %p68, %p69
    %p71 = scmp.ne.s32.totalorder %s60, %s63
    %p72 = scmp.eq.s32.totalorder %s15, 3
    %p73 = por %p71, %p72
    %p74 = scmp.ne.s32.totalorder %s63, %s64
    %p75 = scmp.eq.s32.totalorder %s15, 0
    %p76 = por %p74, %p75
    %p77 = scmp.ne.s32.totalorder %s63, %s64
    %p78 = scmp.eq.s32.totalorder %s16, 3
    %p79 = por %p77, %p78
    %p81 = scmp.ne.s32.totalorder %s64, %s80
    %p82 = scmp.eq.s32.totalorder %s16, 0
    %p83 = por %p81, %p82
    %s85 = sadd.s32 %s84, 1
    %p88 = scmp.eq.s32.totalorder %s10, 3
    %p89 = scmp.ne.s32.totalorder %s84, %s86
    %p90 = scmp.eq.s32.totalorder %s10, 0
    %p91 = por %p89, %p90
    %p92 = scmp.ne.s32.totalorder %s84, %s86
    %p93 = scmp.eq.s32.totalorder %s15, 3
    %p94 = por %p92, %p93
    %p95 = scmp.ne.s32.totalorder %s86, %s87
    %p96 = scmp.eq.s32.totalorder %s15, 0
    %p97 = por %p95, %p96
    %p98 = scmp.ne.s32.totalorder %s86, %s87
    %p99 = scmp.eq.s32.totalorder %s16, 3
    %p100 = por %p98, %p99
    %p102 = scmp.ne.s32.totalorder %s87, %s101
    %p103 = scmp.eq.s32.totalorder %s16, 0
    %p104 = por %p102, %p103
    %s106 = sadd.s32 %s105, 1
    %p109 = scmp.eq.s32.totalorder %s10, 3
    %p110 = scmp.ne.s32.totalorder %s105, %s107
    %p111 = scmp.eq.s32.totalorder %s10, 0
    %p112 = por %p110, %p111
    %p113 = scmp.ne.s32.totalorder %s105, %s107
    %p114 = scmp.eq.s32.totalorder %s15, 3
    %p115 = por %p113, %p114
    %p116 = scmp.ne.s32.totalorder %s107, %s108
    %p117 = scmp.eq.s32.totalorder %s15, 0
    %p118 = por %p116, %p117
    %p119 = scmp.ne.s32.totalorder %s107, %s108
    %p120 = scmp.eq.s32.totalorder %s16, 3
    %p121 = por %p119, %p120
    %p123 = scmp.ne.s32.totalorder %s108, %s122
    %p124 = scmp.eq.s32.totalorder %s16, 0
    %p125 = por %p123, %p124
    %s127 = sadd.s32 %s126, 1
    %p130 = scmp.eq.s32.totalorder %s10, 3
    %p131 = scmp.ne.s32.totalorder %s126, %s128
    %p132 = scmp.eq.s32.totalorder %s10, 0
    %p133 = por %p131, %p132
    %p134 = scmp.ne.s32.totalorder %s126, %s128
    %p135 = scmp.eq.s32.totalorder %s15, 3
    %p136 = por %p134, %p135
    %p137 = scmp.ne.s32.totalorder %s128, %s129
    %p138 = scmp.eq.s32.totalorder %s15, 0
    %p139 = por %p137, %p138
    %p140 = scmp.ne.s32.totalorder %s128, %s129
    %p141 = scmp.eq.s32.totalorder %s16, 3
    %p142 = por %p140, %p141
    %p144 = scmp.ne.s32.totalorder %s129, %s143
    %p145 = scmp.eq.s32.totalorder %s16, 0
    %p146 = por %p144, %p145
    %p147 = scmp.le.s32.totalorder 1, %s10
    %p148 = scmp.lt.s32.totalorder %s10, 5
    %p149 = pnand %p147, %p148
    %p150 = pneg %p149
    // Predicated region
    $region9: #{generator_forward.7} parent=5 // pred_check
      _
    $region10: #{generator_forward.7} parent=5 // pred_check_branch
      %152 = sbr.rel (%p149) target = $region12
    $region11: #{generator_forward.7} parent=5 // pred_region
      %s153 = ssub.s32 %s10, 1
      // Predicated region
      $region13: #{generator_forward.7} parent=11 // pred_check
        %p154 = pneg %p97
      $region14: #{generator_forward.7} parent=11 // pred_check_branch
        %156 = sbr.rel (%p154) target = $region16
      $region15: #{generator_forward.7} parent=11 // pred_region
        _
      $region16: #{generator_forward.7} parent=11 // pred_fallthru
        _
      // Predicated region
      $region17: #{generator_forward.7} parent=11 // pred_check
        %p157 = pneg %p118
      $region18: #{generator_forward.7} parent=11 // pred_check_branch
        %159 = sbr.rel (%p157) target = $region20
      $region19: #{generator_forward.7} parent=11 // pred_region
        _
      $region20: #{generator_forward.7} parent=11 // pred_fallthru
        _
    $region12: #{generator_forward.7} parent=5 // pred_fallthru
      _
    %p160 = scmp.lt.s32.totalorder %s10, 4
    // Predicated region
    $region21: #{generator_forward.7} parent=5 // pred_check
      %p161 = pneg %p160
    $region22: #{generator_forward.7} parent=5 // pred_check_branch
      %163 = sbr.rel (%p161) target = $region24
    $region23: #{generator_forward.7} parent=5 // pred_region
      // Predicated region
      $region25: #{generator_forward.7} parent=23 // pred_check
        %p164 = pneg %p44
      $region26: #{generator_forward.7} parent=23 // pred_check_branch
        %166 = sbr.rel (%p164) target = $region28
      $region27: #{generator_forward.7} parent=23 // pred_region
        %s167 = smul.u32 16, %s18
        %p168 = scmp.lt.s32.totalorder %s17, 3
        %s169 = scalar_select %p168, %s17, 3
        %p170 = scmp.lt.s32.totalorder %s167, 15
        %s171 = scalar_select %p170, %s167, 15
        %s172 = smul.addr %s169, 16
        %s173 = sadd.s32 %s171, %s172
        %s174 = smul.addr %s173, 4
        %s175 = scalar_lea.vmem %s0, %s174
        %s176 = smul.u32 16, %s18
      $region28: #{generator_forward.7} parent=23 // pred_fallthru
        _
      // Predicated region
      $region29: #{generator_forward.7} parent=23 // pred_check
        %p177 = pneg %p70
      $region30: #{generator_forward.7} parent=23 // pred_check_branch
        %179 = sbr.rel (%p177) target = $region32
      $region31: #{generator_forward.7} parent=23 // pred_region
        %p180 = scmp.lt.s32.totalorder %s17, 3
        %s181 = scalar_select %p180, %s17, 3
        %s182 = smul.addr %s181, 16
        %s183 = smul.addr %s182, 4
        %s184 = scalar_lea.vmem %s1, %s183
      $region32: #{generator_forward.7} parent=23 // pred_fallthru
        _
    $region24: #{generator_forward.7} parent=5 // pred_fallthru
      _
    %p185 = scmp.le.s32.totalorder 1, %s10
    %p186 = scmp.lt.s32.totalorder %s10, 5
    %p187 = pnand %p185, %p186
    %p188 = pneg %p187
    // Predicated region
    $region33: #{generator_forward.7} parent=5 // pred_check
      _
    $region34: #{generator_forward.7} parent=5 // pred_check_branch
      %190 = sbr.rel (%p187) target = $region36
    $region35: #{generator_forward.7} parent=5 // pred_region
      %s191 = ssub.s32 %s10, 1
      %s192 = smul.u32 16, %s20
      %p193 = scmp.lt.s32.totalorder %s19, 3
      %s194 = scalar_select %p193, %s19, 3
      %p195 = scmp.lt.s32.totalorder %s192, 15
      %s196 = scalar_select %p195, %s192, 15
      %s197 = smul.addr %s194, 16
      %s198 = sadd.s32 %s196, %s197
      %s199 = smul.addr %s198, 4
      %s200 = scalar_lea.vmem %s0, %s199
      %p201 = pneg %p50
      %p202 = pneg %p47
      %p203 = scmp.lt.s32.totalorder %s19, 3
      %s204 = scalar_select %p203, %s19, 3
      %s205 = smul.addr %s204, 16
      %s206 = smul.addr %s205, 4
      %s207 = scalar_lea.vmem %s1, %s206
      %p208 = pneg %p76
      %p209 = pneg %p73
      %p210 = pneg %p97
      %p211 = pneg %p94
      %p212 = pneg %p118
      %p213 = pneg %p115
      %p214 = pneg %p139
      %p215 = pneg %p136
      %s216 = smul.u32 16, %s20
      %p217 = scmp.lt.s32.totalorder %s19, 3
      %s218 = scalar_select %p217, %s19, 3
      %p219 = scmp.lt.s32.totalorder %s216, 15
      %s220 = scalar_select %p219, %s216, 15
      %s221 = smul.addr %s218, 16
      %s222 = sadd.s32 %s220, %s221
      %s223 = smul.addr %s222, 4
      %s224 = scalar_lea.vmem %s0, %s223
      %s225 = smul.u32 16, %s20
      %p226 = scmp.lt.s32.totalorder %s19, 3
      %s227 = scalar_select %p226, %s19, 3
      %s228 = smul.addr %s227, 16
      %s229 = smul.addr %s228, 4
      %s230 = scalar_lea.vmem %s1, %s229
      %p232 = scmp.eq.s32.totalorder %s19, 0
      %p233 = scmp.eq.s32.totalorder %s20, 0
      %p234 = pnand %p232, %p233
      %p235 = pneg %p234
      // Predicated region
      $region37: #{generator_forward.7} parent=35 // pred_check
        _
      $region38: #{generator_forward.7} parent=35 // pred_check_branch
        %237 = sbr.rel (%p234) target = $region40
      $region39: #{generator_forward.7} parent=35 // pred_region
        %238 = vst [vmem:[#allocation2] sm:$0x1] 0.0
        %239 = vst [vmem:[#allocation3] sm:$0x1] 0.0
      $region40: #{generator_forward.7} parent=35 // pred_fallthru
        _
      %v240 = vld [vmem:[%s224] sm:$0xf]
      %v241 = vld [vmem:[%s224 + $0x4] sm:$0xf]
      %v242 = vld [vmem:[%s224 + $0x8] sm:$0xf]
      %v243 = vld [vmem:[%s224 + $0xc] sm:$0xf]
      %v244 = vld [vmem:[%s224 + $0x10] sm:$0xf]
      %v245 = vld [vmem:[%s224 + $0x14] sm:$0xf]
      %v246 = vld [vmem:[%s224 + $0x18] sm:$0xf]
      %v247 = vld [vmem:[%s224 + $0x1c] sm:$0xf]
      %v248 = vld [vmem:[%s224 + $0x20] sm:$0xf]
      %v249 = vld [vmem:[%s224 + $0x24] sm:$0xf]
      %v250 = vld [vmem:[%s224 + $0x28] sm:$0xf]
      %v251 = vld [vmem:[%s224 + $0x2c] sm:$0xf]
      %v252 = vld [vmem:[%s224 + $0x30] sm:$0xf]
      %v253 = vld [vmem:[%s224 + $0x34] sm:$0xf]
      %v254 = vld [vmem:[%s224 + $0x38] sm:$0xf]
      %v255 = vld [vmem:[%s224 + $0x3c] sm:$0xf]
      %v256 = vld [vmem:[%s230] sm:$0xf]
      %v257 = vld [vmem:[%s230 + $0x4] sm:$0xf]
      %v258 = vld [vmem:[%s230 + $0x8] sm:$0xf]
      %v259 = vld [vmem:[%s230 + $0xc] sm:$0xf]
      %v260 = vld [vmem:[%s230 + $0x10] sm:$0xf]
      %v261 = vld [vmem:[%s230 + $0x14] sm:$0xf]
      %v262 = vld [vmem:[%s230 + $0x18] sm:$0xf]
      %v263 = vld [vmem:[%s230 + $0x1c] sm:$0xf]
      %v264 = vld [vmem:[%s230 + $0x20] sm:$0xf]
      %v265 = vld [vmem:[%s230 + $0x24] sm:$0xf]
      %v266 = vld [vmem:[%s230 + $0x28] sm:$0xf]
      %v267 = vld [vmem:[%s230 + $0x2c] sm:$0xf]
      %v268 = vld [vmem:[%s230 + $0x30] sm:$0xf]
      %v269 = vld [vmem:[%s230 + $0x34] sm:$0xf]
      %v270 = vld [vmem:[%s230 + $0x38] sm:$0xf]
      %v271 = vld [vmem:[%s230 + $0x3c] sm:$0xf]
      %v288 = vunpack.c.l.b16 %v240
      %v289 = vunpack.c.l.b16 %v241
      %v290 = vunpack.c.l.b16 %v242
      %v291 = vunpack.c.l.b16 %v243
      %v292 = vunpack.c.l.b16 %v244
      %v293 = vunpack.c.l.b16 %v245
      %v294 = vunpack.c.l.b16 %v246
      %v295 = vunpack.c.l.b16 %v247
      %v296 = vunpack.c.l.b16 %v248
      %v297 = vunpack.c.l.b16 %v249
      %v298 = vunpack.c.l.b16 %v250
      %v299 = vunpack.c.l.b16 %v251
      %v300 = vunpack.c.l.b16 %v252
      %v301 = vunpack.c.l.b16 %v253
      %v302 = vunpack.c.l.b16 %v254
      %v303 = vunpack.c.l.b16 %v255
      %v304 = vpack.c.b16 %v289, %v288
      %v305 = vpack.c.b16 %v291, %v290
      %v306 = vpack.c.b16 %v293, %v292
      %v307 = vpack.c.b16 %v295, %v294
      %v308 = vpack.c.b16 %v297, %v296
      %v309 = vpack.c.b16 %v299, %v298
      %v310 = vpack.c.b16 %v301, %v300
      %v311 = vpack.c.b16 %v303, %v302
      %v336 = vunpack.c.l.b16 %v256
      %v337 = vunpack.c.l.b16 %v257
      %v338 = vunpack.c.l.b16 %v258
      %v339 = vunpack.c.l.b16 %v259
      %v340 = vunpack.c.l.b16 %v260
      %v341 = vunpack.c.l.b16 %v261
      %v342 = vunpack.c.l.b16 %v262
      %v343 = vunpack.c.l.b16 %v263
      %v344 = vunpack.c.l.b16 %v264
      %v345 = vunpack.c.l.b16 %v265
      %v346 = vunpack.c.l.b16 %v266
      %v347 = vunpack.c.l.b16 %v267
      %v348 = vunpack.c.l.b16 %v268
      %v349 = vunpack.c.l.b16 %v269
      %v350 = vunpack.c.l.b16 %v270
      %v351 = vunpack.c.l.b16 %v271
      %v352 = vpack.c.b16 %v337, %v336
      %v353 = vpack.c.b16 %v339, %v338
      %v354 = vpack.c.b16 %v341, %v340
      %v355 = vpack.c.b16 %v343, %v342
      %v356 = vpack.c.b16 %v345, %v344
      %v357 = vpack.c.b16 %v347, %v346
      %v358 = vpack.c.b16 %v349, %v348
      %v359 = vpack.c.b16 %v351, %v350
      %368 = vmatprep.subr.bf16.mxu0 0
      %369 = vmatpush1.bf16.msra.mxu0 %v352
      %370 = vmatprep.subr.bf16.mxu0 0
      %371 = vmatpush1.bf16.msra.mxu0 %v353
      %372 = vmatprep.subr.bf16.mxu0 0
      %373 = vmatpush1.bf16.msra.mxu0 %v354
      %374 = vmatprep.subr.bf16.mxu0 0
      %375 = vmatpush1.bf16.msra.mxu0 %v355
      %376 = vmatprep.subr.bf16.mxu0 0
      %377 = vmatpush1.bf16.msra.mxu0 %v356
      %378 = vmatprep.subr.bf16.mxu0 0
      %379 = vmatpush1.bf16.msra.mxu0 %v357
      %380 = vmatprep.subr.bf16.mxu0 0
      %381 = vmatpush1.bf16.msra.mxu0 %v358
      %382 = vmatprep.subr.bf16.mxu0 0
      %383 = vmatpush1.bf16.msra.mxu0 %v359
      %384 = vmatprep.subr.bf16.mxu0 0
      %385 = vmatpush1.bf16.msra.mxu0 0
      %386 = vmatprep.subr.bf16.mxu0 0
      %387 = vmatpush1.bf16.msra.mxu0 0
      %388 = vmatprep.subr.bf16.mxu0 0
      %389 = vmatpush1.bf16.msra.mxu0 0
      %390 = vmatprep.subr.bf16.mxu0 0
      %391 = vmatpush1.bf16.msra.mxu0 0
      %392 = vmatprep.subr.bf16.mxu0 0
      %393 = vmatpush1.bf16.msra.mxu0 0
      %394 = vmatprep.subr.bf16.mxu0 0
      %395 = vmatpush1.bf16.msra.mxu0 0
      %396 = vmatprep.subr.bf16.mxu0 0
      %397 = vmatpush1.bf16.msra.mxu0 0
      %398 = vmatprep.subr.bf16.mxu0 0
      %399 = vmatpush1.bf16.msra.mxu0 0
      %400 = vmatprep.mubr.bf16.mxu0 0
      %401 = vmatmul.mubr.bf16.gmra.mrb[0].mxu0 %v304
      %v402 = vpop.f32.mrb[0].mxu0
      %v403 = vadd.f32 0.0, %v402
      %v404 = vpop.f32.mrb[0].mxu0
      %v405 = vpop.f32.mrb[0].mxu0
      %v406 = vadd.f32 0.0, %v405
      %v407 = vpop.f32.mrb[0].mxu0
      %408 = vmatprep.mubr.bf16.mxu0 0
      %409 = vmatmul.mubr.bf16.gmra.mrb[0].mxu0 %v305
      %v410 = vpop.f32.mrb[0].mxu0
      %v411 = vadd.f32 0.0, %v410
      %v412 = vpop.f32.mrb[0].mxu0
      %v413 = vpop.f32.mrb[0].mxu0
      %v414 = vadd.f32 0.0, %v413
      %v415 = vpop.f32.mrb[0].mxu0
      %416 = vmatprep.mubr.bf16.mxu0 0
      %417 = vmatmul.mubr.bf16.gmra.mrb[0].mxu0 %v306
      %v418 = vpop.f32.mrb[0].mxu0
      %v419 = vadd.f32 0.0, %v418
      %v420 = vpop.f32.mrb[0].mxu0
      %v421 = vpop.f32.mrb[0].mxu0
      %v422 = vadd.f32 0.0, %v421
      %v423 = vpop.f32.mrb[0].mxu0
      %424 = vmatprep.mubr.bf16.mxu0 0
      %425 = vmatmul.mubr.bf16.gmra.mrb[0].mxu0 %v307
      %v426 = vpop.f32.mrb[0].mxu0
      %v427 = vadd.f32 0.0, %v426
      %v428 = vpop.f32.mrb[0].mxu0
      %v429 = vpop.f32.mrb[0].mxu0
      %v430 = vadd.f32 0.0, %v429
      %v431 = vpop.f32.mrb[0].mxu0
      %432 = vmatprep.mubr.bf16.mxu0 0
      %433 = vmatmul.mubr.bf16.gmra.mrb[0].mxu0 %v308
      %v434 = vpop.f32.mrb[0].mxu0
      %v435 = vadd.f32 0.0, %v434
      %v436 = vpop.f32.mrb[0].mxu0
      %v437 = vpop.f32.mrb[0].mxu0
      %v438 = vadd.f32 0.0, %v437
      %v439 = vpop.f32.mrb[0].mxu0
      %440 = vmatprep.mubr.bf16.mxu0 0
      %441 = vmatmul.mubr.bf16.gmra.mrb[0].mxu0 %v309
      %v442 = vpop.f32.mrb[0].mxu0
      %v443 = vadd.f32 0.0, %v442
      %v444 = vpop.f32.mrb[0].mxu0
      %v445 = vpop.f32.mrb[0].mxu0
      %v446 = vadd.f32 0.0, %v445
      %v447 = vpop.f32.mrb[0].mxu0
      %448 = vmatprep.mubr.bf16.mxu0 0
      %449 = vmatmul.mubr.bf16.gmra.mrb[0].mxu0 %v310
      %v450 = vpop.f32.mrb[0].mxu0
      %v451 = vadd.f32 0.0, %v450
      %v452 = vpop.f32.mrb[0].mxu0
      %v453 = vpop.f32.mrb[0].mxu0
      %v454 = vadd.f32 0.0, %v453
      %v455 = vpop.f32.mrb[0].mxu0
      %456 = vmatprep.mubr.bf16.mxu0 0
      %457 = vmatmul.mubr.bf16.gmra.mrb[0].mxu0 %v311
      %v458 = vpop.f32.mrb[0].mxu0
      %v459 = vadd.f32 0.0, %v458
      %v460 = vpop.f32.mrb[0].mxu0
      %v461 = vpop.f32.mrb[0].mxu0
      %v462 = vadd.f32 0.0, %v461
      %v463 = vpop.f32.mrb[0].mxu0
      %464 = vdwg.mxu0
      %s465 = smul.u32 %s19, 128
      %s466 = smul.u32 %s20, 128
      %s467 = sadd.s32 %s465, %s466
      %s468 = scalar_lea.vmem %s4, %s467
      %469 = vst [vmem:[%s468] sm:$0xff] %v403
      %470 = vst [vmem:[%s468 + $0x8] sm:$0xff] %v406
      %471 = vst [vmem:[%s468 + $0x10] sm:$0xff] %v411
      %472 = vst [vmem:[%s468 + $0x18] sm:$0xff] %v414
      %473 = vst [vmem:[%s468 + $0x20] sm:$0xff] %v419
      %474 = vst [vmem:[%s468 + $0x28] sm:$0xff] %v422
      %475 = vst [vmem:[%s468 + $0x30] sm:$0xff] %v427
      %476 = vst [vmem:[%s468 + $0x38] sm:$0xff] %v430
      %477 = vst [vmem:[%s468 + $0x40] sm:$0xff] %v435
      %478 = vst [vmem:[%s468 + $0x48] sm:$0xff] %v438
      %479 = vst [vmem:[%s468 + $0x50] sm:$0xff] %v443
      %480 = vst [vmem:[%s468 + $0x58] sm:$0xff] %v446
      %481 = vst [vmem:[%s468 + $0x60] sm:$0xff] %v451
      %482 = vst [vmem:[%s468 + $0x68] sm:$0xff] %v454
      %483 = vst [vmem:[%s468 + $0x70] sm:$0xff] %v459
      %484 = vst [vmem:[%s468 + $0x78] sm:$0xff] %v462
      %v485 = vld [vmem:[#allocation2] sm:$0x1]
      %v486 = vadd.f32 %v403, %v406
      %v487 = vadd.f32 %v486, %v411
      %v488 = vadd.f32 %v487, %v414
      %v489 = vadd.f32 %v488, %v419
      %v490 = vadd.f32 %v489, %v422
      %v491 = vadd.f32 %v490, %v427
      %v492 = vadd.f32 %v491, %v430
      %v493 = vadd.f32 %v492, %v435
      %v494 = vadd.f32 %v493, %v438
      %v495 = vadd.f32 %v494, %v443
      %v496 = vadd.f32 %v495, %v446
      %v497 = vadd.f32 %v496, %v451
      %v498 = vadd.f32 %v497, %v454
      %v499 = vadd.f32 %v498, %v459
      %v500 = vadd.f32 %v499, %v462
      %v501 = vrot.slane %v500, 4
      %v502 = vadd.f32 %v500, %v501
      %v503 = vrot.slane %v502, 2
      %v504 = vadd.f32 %v502, %v503
      %v505 = vrot.slane %v504, 1
      %v506 = vadd.f32 %v504, %v505
      %v507 = vadd.f32 %v485, %v506
      %508 = vst [vmem:[#allocation2] sm:$0x1] %v507
      %v509 = vld [vmem:[#allocation3] sm:$0x1]
      %v510 = vmul.f32 %v403, %v403
      %v511 = vmul.f32 %v406, %v406
      %v512 = vmul.f32 %v411, %v411
      %v513 = vmul.f32 %v414, %v414
      %v514 = vmul.f32 %v419, %v419
      %v515 = vmul.f32 %v422, %v422
      %v516 = vmul.f32 %v427, %v427
      %v517 = vmul.f32 %v430, %v430
      %v518 = vmul.f32 %v435, %v435
      %v519 = vmul.f32 %v438, %v438
      %v520 = vmul.f32 %v443, %v443
      %v521 = vmul.f32 %v446, %v446
      %v522 = vmul.f32 %v451, %v451
      %v523 = vmul.f32 %v454, %v454
      %v524 = vmul.f32 %v459, %v459
      %v525 = vmul.f32 %v462, %v462
      %v526 = vadd.f32 %v510, %v511
      %v527 = vadd.f32 %v526, %v512
      %v528 = vadd.f32 %v527, %v513
      %v529 = vadd.f32 %v528, %v514
      %v530 = vadd.f32 %v529, %v515
      %v531 = vadd.f32 %v530, %v516
      %v532 = vadd.f32 %v531, %v517
      %v533 = vadd.f32 %v532, %v518
      %v534 = vadd.f32 %v533, %v519
      %v535 = vadd.f32 %v534, %v520
      %v536 = vadd.f32 %v535, %v521
      %v537 = vadd.f32 %v536, %v522
      %v538 = vadd.f32 %v537, %v523
      %v539 = vadd.f32 %v538, %v524
      %v540 = vadd.f32 %v539, %v525
      %v541 = vrot.slane %v540, 4
      %v542 = vadd.f32 %v540, %v541
      %v543 = vrot.slane %v542, 2
      %v544 = vadd.f32 %v542, %v543
      %v545 = vrot.slane %v544, 1
      %v546 = vadd.f32 %v544, %v545
      %v547 = vadd.f32 %v509, %v546
      %548 = vst [vmem:[#allocation3] sm:$0x1] %v547
      %p549 = scmp.eq.s32.totalorder %s19, 3
      %p550 = pnand %p549, %p233
      %p551 = pneg %p550
      // Predicated region
      $region41: #{generator_forward.7} parent=35 // pred_check
        _
      $region42: #{generator_forward.7} parent=35 // pred_check_branch
        %553 = sbr.rel (%p550) target = $region44
      $region43: #{generator_forward.7} parent=35 // pred_region
        %v554 = vld [vmem:[#allocation2] sm:$0x1]
        %v555 = vmul.f32 %v554, 0.001953125
        %v556 = vld [vmem:[#allocation3] sm:$0x1]
        %v557 = vmul.f32 %v556, 0.001953125
        %v558 = vmul.f32 %v555, %v555
        %v559 = vsub.f32 %v557, %v558
        %v560 = vmax.f32 %v559, 0.0
        %v561 = vld [vmem:[%s2] sm:$0x1]
        %v562 = vadd.f32 %v560, 1e-05
        %v563 = vrsqrt.pop %v562
        %v564 = vmul.f32 %v561, %v563
        %v565 = vld [vmem:[%s3] sm:$0x1]
        %v566 = vmul.f32 %v555, %v564
        %v567 = vsub.f32 %v565, %v566
        %v568 = vld [vmem:[%s4] sm:$0xff]
        %v569 = vld [vmem:[%s4 + $0x8] sm:$0xff]
        %v570 = vld [vmem:[%s4 + $0x10] sm:$0xff]
        %v571 = vld [vmem:[%s4 + $0x18] sm:$0xff]
        %v572 = vld [vmem:[%s4 + $0x20] sm:$0xff]
        %v573 = vld [vmem:[%s4 + $0x28] sm:$0xff]
        %v574 = vld [vmem:[%s4 + $0x30] sm:$0xff]
        %v575 = vld [vmem:[%s4 + $0x38] sm:$0xff]
        %v576 = vld [vmem:[%s4 + $0x40] sm:$0xff]
        %v577 = vld [vmem:[%s4 + $0x48] sm:$0xff]
        %v578 = vld [vmem:[%s4 + $0x50] sm:$0xff]
        %v579 = vld [vmem:[%s4 + $0x58] sm:$0xff]
        %v580 = vld [vmem:[%s4 + $0x60] sm:$0xff]
        %v581 = vld [vmem:[%s4 + $0x68] sm:$0xff]
        %v582 = vld [vmem:[%s4 + $0x70] sm:$0xff]
        %v583 = vld [vmem:[%s4 + $0x78] sm:$0xff]
        %v585 = vlaneseq
        %v586 = vshrl.u32 %v585, 7
        %v587 = vsub.s32 0, %v586
        %v588 = vrot.slane %v564, %v587
        %v590 = vmul.f32 %v568, %v588
        %v591 = vmul.f32 %v569, %v588
        %v592 = vmul.f32 %v570, %v588
        %v593 = vmul.f32 %v571, %v588
        %v594 = vmul.f32 %v572, %v588
        %v595 = vmul.f32 %v573, %v588
        %v596 = vmul.f32 %v574, %v588
        %v597 = vmul.f32 %v575, %v588
        %v598 = vmul.f32 %v576, %v588
        %v599 = vmul.f32 %v577, %v588
        %v600 = vmul.f32 %v578, %v588
        %v601 = vmul.f32 %v579, %v588
        %v602 = vmul.f32 %v580, %v588
        %v603 = vmul.f32 %v581, %v588
        %v604 = vmul.f32 %v582, %v588
        %v605 = vmul.f32 %v583, %v588
        %v607 = vlaneseq
        %v608 = vshrl.u32 %v607, 7
        %v609 = vsub.s32 0, %v608
        %v610 = vrot.slane %v567, %v609
        %v612 = vadd.f32 %v590, %v610
        %v613 = vadd.f32 %v591, %v610
        %v614 = vadd.f32 %v592, %v610
        %v615 = vadd.f32 %v593, %v610
        %v616 = vadd.f32 %v594, %v610
        %v617 = vadd.f32 %v595, %v610
        %v618 = vadd.f32 %v596, %v610
        %v619 = vadd.f32 %v597, %v610
        %v620 = vadd.f32 %v598, %v610
        %v621 = vadd.f32 %v599, %v610
        %v622 = vadd.f32 %v600, %v610
        %v623 = vadd.f32 %v601, %v610
        %v624 = vadd.f32 %v602, %v610
        %v625 = vadd.f32 %v603, %v610
        %v626 = vadd.f32 %v604, %v610
        %v627 = vadd.f32 %v605, %v610
        %vm628 = vcmp.ge.f32.partialorder %v612, 0.0
        %vm629 = vcmp.ge.f32.partialorder %v613, 0.0
        %vm630 = vcmp.ge.f32.partialorder %v614, 0.0
        %vm631 = vcmp.ge.f32.partialorder %v615, 0.0
        %vm632 = vcmp.ge.f32.partialorder %v616, 0.0
        %vm633 = vcmp.ge.f32.partialorder %v617, 0.0
        %vm634 = vcmp.ge.f32.partialorder %v618, 0.0
        %vm635 = vcmp.ge.f32.partialorder %v619, 0.0
        %vm636 = vcmp.ge.f32.partialorder %v620, 0.0
        %vm637 = vcmp.ge.f32.partialorder %v621, 0.0
        %vm638 = vcmp.ge.f32.partialorder %v622, 0.0
        %vm639 = vcmp.ge.f32.partialorder %v623, 0.0
        %vm640 = vcmp.ge.f32.partialorder %v624, 0.0
        %vm641 = vcmp.ge.f32.partialorder %v625, 0.0
        %vm642 = vcmp.ge.f32.partialorder %v626, 0.0
        %vm643 = vcmp.ge.f32.partialorder %v627, 0.0
        %v644 = vmul.f32 %v612, 0.2
        %v645 = vmul.f32 %v613, 0.2
        %v646 = vmul.f32 %v614, 0.2
        %v647 = vmul.f32 %v615, 0.2
        %v648 = vmul.f32 %v616, 0.2
        %v649 = vmul.f32 %v617, 0.2
        %v650 = vmul.f32 %v618, 0.2
        %v651 = vmul.f32 %v619, 0.2
        %v652 = vmul.f32 %v620, 0.2
        %v653 = vmul.f32 %v621, 0.2
        %v654 = vmul.f32 %v622, 0.2
        %v655 = vmul.f32 %v623, 0.2
        %v656 = vmul.f32 %v624, 0.2
        %v657 = vmul.f32 %v625, 0.2
        %v658 = vmul.f32 %v626, 0.2
        %v659 = vmul.f32 %v627, 0.2
        %v660 = vsel %vm628, %v612, %v644
        %v661 = vsel %vm629, %v613, %v645
        %v662 = vsel %vm630, %v614, %v646
        %v663 = vsel %vm631, %v615, %v647
        %v664 = vsel %vm632, %v616, %v648
        %v665 = vsel %vm633, %v617, %v649
        %v666 = vsel %vm634, %v618, %v650
        %v667 = vsel %vm635, %v619, %v651
        %v668 = vsel %vm636, %v620, %v652
        %v669 = vsel %vm637, %v621, %v653
        %v670 = vsel %vm638, %v622, %v654
        %v671 = vsel %vm639, %v623, %v655
        %v672 = vsel %vm640, %v624, %v656
        %v673 = vsel %vm641, %v625, %v657
        %v674 = vsel %vm642, %v626, %v658
        %v675 = vsel %vm643, %v627, %v659
        %676 = vst [vmem:[%s4] sm:$0xff] %v660
        %677 = vst [vmem:[%s4 + $0x8] sm:$0xff] %v661
        %678 = vst [vmem:[%s4 + $0x10] sm:$0xff] %v662
        %679 = vst [vmem:[%s4 + $0x18] sm:$0xff] %v663
        %680 = vst [vmem:[%s4 + $0x20] sm:$0xff] %v664
        %681 = vst [vmem:[%s4 + $0x28] sm:$0xff] %v665
        %682 = vst [vmem:[%s4 + $0x30] sm:$0xff] %v666
        %683 = vst [vmem:[%s4 + $0x38] sm:$0xff] %v667
        %684 = vst [vmem:[%s4 + $0x40] sm:$0xff] %v668
        %685 = vst [vmem:[%s4 + $0x48] sm:$0xff] %v669
        %686 = vst [vmem:[%s4 + $0x50] sm:$0xff] %v670
        %687 = vst [vmem:[%s4 + $0x58] sm:$0xff] %v671
        %688 = vst [vmem:[%s4 + $0x60] sm:$0xff] %v672
        %689 = vst [vmem:[%s4 + $0x68] sm:$0xff] %v673
        %690 = vst [vmem:[%s4 + $0x70] sm:$0xff] %v674
        %691 = vst [vmem:[%s4 + $0x78] sm:$0xff] %v675
        %v692 = vld [vmem:[%s4 + $0x80] sm:$0xff]
        %v693 = vld [vmem:[%s4 + $0x88] sm:$0xff]
        %v694 = vld [vmem:[%s4 + $0x90] sm:$0xff]
        %v695 = vld [vmem:[%s4 + $0x98] sm:$0xff]
        %v696 = vld [vmem:[%s4 + $0xa0] sm:$0xff]
        %v697 = vld [vmem:[%s4 + $0xa8] sm:$0xff]
        %v698 = vld [vmem:[%s4 + $0xb0] sm:$0xff]
        %v699 = vld [vmem:[%s4 + $0xb8] sm:$0xff]
        %v700 = vld [vmem:[%s4 + $0xc0] sm:$0xff]
        %v701 = vld [vmem:[%s4 + $0xc8] sm:$0xff]
        %v702 = vld [vmem:[%s4 + $0xd0] sm:$0xff]
        %v703 = vld [vmem:[%s4 + $0xd8] sm:$0xff]
        %v704 = vld [vmem:[%s4 + $0xe0] sm:$0xff]
        %v705 = vld [vmem:[%s4 + $0xe8] sm:$0xff]
        %v706 = vld [vmem:[%s4 + $0xf0] sm:$0xff]
        %v707 = vld [vmem:[%s4 + $0xf8] sm:$0xff]
        %v708 = vmul.f32 %v692, %v588
        %v709 = vmul.f32 %v693, %v588
        %v710 = vmul.f32 %v694, %v588
        %v711 = vmul.f32 %v695, %v588
        %v712 = vmul.f32 %v696, %v588
        %v713 = vmul.f32 %v697, %v588
        %v714 = vmul.f32 %v698, %v588
        %v715 = vmul.f32 %v699, %v588
        %v716 = vmul.f32 %v700, %v588
        %v717 = vmul.f32 %v701, %v588
        %v718 = vmul.f32 %v702, %v588
        %v719 = vmul.f32 %v703, %v588
        %v720 = vmul.f32 %v704, %v588
        %v721 = vmul.f32 %v705, %v588
        %v722 = vmul.f32 %v706, %v588
        %v723 = vmul.f32 %v707, %v588
        %v724 = vadd.f32 %v708, %v610
        %v725 = vadd.f32 %v709, %v610
        %v726 = vadd.f32 %v710, %v610
        %v727 = vadd.f32 %v711, %v610
        %v728 = vadd.f32 %v712, %v610
        %v729 = vadd.f32 %v713, %v610
        %v730 = vadd.f32 %v714, %v610
        %v731 = vadd.f32 %v715, %v610
        %v732 = vadd.f32 %v716, %v610
        %v733 = vadd.f32 %v717, %v610
        %v734 = vadd.f32 %v718, %v610
        %v735 = vadd.f32 %v719, %v610
        %v736 = vadd.f32 %v720, %v610
        %v737 = vadd.f32 %v721, %v610
        %v738 = vadd.f32 %v722, %v610
        %v739 = vadd.f32 %v723, %v610
        %vm740 = vcmp.ge.f32.partialorder %v724, 0.0
        %vm741 = vcmp.ge.f32.partialorder %v725, 0.0
        %vm742 = vcmp.ge.f32.partialorder %v726, 0.0
        %vm743 = vcmp.ge.f32.partialorder %v727, 0.0
        %vm744 = vcmp.ge.f32.partialorder %v728, 0.0
        %vm745 = vcmp.ge.f32.partialorder %v729, 0.0
        %vm746 = vcmp.ge.f32.partialorder %v730, 0.0
        %vm747 = vcmp.ge.f32.partialorder %v731, 0.0
        %vm748 = vcmp.ge.f32.partialorder %v732, 0.0
        %vm749 = vcmp.ge.f32.partialorder %v733, 0.0
        %vm750 = vcmp.ge.f32.partialorder %v734, 0.0
        %vm751 = vcmp.ge.f32.partialorder %v735, 0.0
        %vm752 = vcmp.ge.f32.partialorder %v736, 0.0
        %vm753 = vcmp.ge.f32.partialorder %v737, 0.0
        %vm754 = vcmp.ge.f32.partialorder %v738, 0.0
        %vm755 = vcmp.ge.f32.partialorder %v739, 0.0
        %v756 = vmul.f32 %v724, 0.2
        %v757 = vmul.f32 %v725, 0.2
        %v758 = vmul.f32 %v726, 0.2
        %v759 = vmul.f32 %v727, 0.2
        %v760 = vmul.f32 %v728, 0.2
        %v761 = vmul.f32 %v729, 0.2
        %v762 = vmul.f32 %v730, 0.2
        %v763 = vmul.f32 %v731, 0.2
        %v764 = vmul.f32 %v732, 0.2
        %v765 = vmul.f32 %v733, 0.2
        %v766 = vmul.f32 %v734, 0.2
        %v767 = vmul.f32 %v735, 0.2
        %v768 = vmul.f32 %v736, 0.2
        %v769 = vmul.f32 %v737, 0.2
        %v770 = vmul.f32 %v738, 0.2
        %v771 = vmul.f32 %v739, 0.2
        %v772 = vsel %vm740, %v724, %v756
        %v773 = vsel %vm741, %v725, %v757
        %v774 = vsel %vm742, %v726, %v758
        %v775 = vsel %vm743, %v727, %v759
        %v776 = vsel %vm744, %v728, %v760
        %v777 = vsel %vm745, %v729, %v761
        %v778 = vsel %vm746, %v730, %v762
        %v779 = vsel %vm747, %v731, %v763
        %v780 = vsel %vm748, %v732, %v764
        %v781 = vsel %vm749, %v733, %v765
        %v782 = vsel %vm750, %v734, %v766
        %v783 = vsel %vm751, %v735, %v767
        %v784 = vsel %vm752, %v736, %v768
        %v785 = vsel %vm753, %v737, %v769
        %v786 = vsel %vm754, %v738, %v770
        %v787 = vsel %vm755, %v739, %v771
        %788 = vst [vmem:[%s4 + $0x80] sm:$0xff] %v772
        %789 = vst [vmem:[%s4 + $0x88] sm:$0xff] %v773
        %790 = vst [vmem:[%s4 + $0x90] sm:$0xff] %v774
        %791 = vst [vmem:[%s4 + $0x98] sm:$0xff] %v775
        %792 = vst [vmem:[%s4 + $0xa0] sm:$0xff] %v776
        %793 = vst [vmem:[%s4 + $0xa8] sm:$0xff] %v777
        %794 = vst [vmem:[%s4 + $0xb0] sm:$0xff] %v778
        %795 = vst [vmem:[%s4 + $0xb8] sm:$0xff] %v779
        %796 = vst [vmem:[%s4 + $0xc0] sm:$0xff] %v780
        %797 = vst [vmem:[%s4 + $0xc8] sm:$0xff] %v781
        %798 = vst [vmem:[%s4 + $0xd0] sm:$0xff] %v782
        %799 = vst [vmem:[%s4 + $0xd8] sm:$0xff] %v783
        %800 = vst [vmem:[%s4 + $0xe0] sm:$0xff] %v784
        %801 = vst [vmem:[%s4 + $0xe8] sm:$0xff] %v785
        %802 = vst [vmem:[%s4 + $0xf0] sm:$0xff] %v786
        %803 = vst [vmem:[%s4 + $0xf8] sm:$0xff] %v787
        %v804 = vld [vmem:[%s4 + $0x100] sm:$0xff]
        %v805 = vld [vmem:[%s4 + $0x108] sm:$0xff]
        %v806 = vld [vmem:[%s4 + $0x110] sm:$0xff]
        %v807 = vld [vmem:[%s4 + $0x118] sm:$0xff]
        %v808 = vld [vmem:[%s4 + $0x120] sm:$0xff]
        %v809 = vld [vmem:[%s4 + $0x128] sm:$0xff]
        %v810 = vld [vmem:[%s4 + $0x130] sm:$0xff]
        %v811 = vld [vmem:[%s4 + $0x138] sm:$0xff]
        %v812 = vld [vmem:[%s4 + $0x140] sm:$0xff]
        %v813 = vld [vmem:[%s4 + $0x148] sm:$0xff]
        %v814 = vld [vmem:[%s4 + $0x150] sm:$0xff]
        %v815 = vld [vmem:[%s4 + $0x158] sm:$0xff]
        %v816 = vld [vmem:[%s4 + $0x160] sm:$0xff]
        %v817 = vld [vmem:[%s4 + $0x168] sm:$0xff]
        %v818 = vld [vmem:[%s4 + $0x170] sm:$0xff]
        %v819 = vld [vmem:[%s4 + $0x178] sm:$0xff]
        %v820 = vmul.f32 %v804, %v588
        %v821 = vmul.f32 %v805, %v588
        %v822 = vmul.f32 %v806, %v588
        %v823 = vmul.f32 %v807, %v588
        %v824 = vmul.f32 %v808, %v588
        %v825 = vmul.f32 %v809, %v588
        %v826 = vmul.f32 %v810, %v588
        %v827 = vmul.f32 %v811, %v588
        %v828 = vmul.f32 %v812, %v588
        %v829 = vmul.f32 %v813, %v588
        %v830 = vmul.f32 %v814, %v588
        %v831 = vmul.f32 %v815, %v588
        %v832 = vmul.f32 %v816, %v588
        %v833 = vmul.f32 %v817, %v588
        %v834 = vmul.f32 %v818, %v588
        %v835 = vmul.f32 %v819, %v588
        %v836 = vadd.f32 %v820, %v610
        %v837 = vadd.f32 %v821, %v610
        %v838 = vadd.f32 %v822, %v610
        %v839 = vadd.f32 %v823, %v610
        %v840 = vadd.f32 %v824, %v610
        %v841 = vadd.f32 %v825, %v610
        %v842 = vadd.f32 %v826, %v610
        %v843 = vadd.f32 %v827, %v610
        %v844 = vadd.f32 %v828, %v610
        %v845 = vadd.f32 %v829, %v610
        %v846 = vadd.f32 %v830, %v610
        %v847 = vadd.f32 %v831, %v610
        %v848 = vadd.f32 %v832, %v610
        %v849 = vadd.f32 %v833, %v610
        %v850 = vadd.f32 %v834, %v610
        %v851 = vadd.f32 %v835, %v610
        %vm852 = vcmp.ge.f32.partialorder %v836, 0.0
        %vm853 = vcmp.ge.f32.partialorder %v837, 0.0
        %vm854 = vcmp.ge.f32.partialorder %v838, 0.0
        %vm855 = vcmp.ge.f32.partialorder %v839, 0.0
        %vm856 = vcmp.ge.f32.partialorder %v840, 0.0
        %vm857 = vcmp.ge.f32.partialorder %v841, 0.0
        %vm858 = vcmp.ge.f32.partialorder %v842, 0.0
        %vm859 = vcmp.ge.f32.partialorder %v843, 0.0
        %vm860 = vcmp.ge.f32.partialorder %v844, 0.0
        %vm861 = vcmp.ge.f32.partialorder %v845, 0.0
        %vm862 = vcmp.ge.f32.partialorder %v846, 0.0
        %vm863 = vcmp.ge.f32.partialorder %v847, 0.0
        %vm864 = vcmp.ge.f32.partialorder %v848, 0.0
        %vm865 = vcmp.ge.f32.partialorder %v849, 0.0
        %vm866 = vcmp.ge.f32.partialorder %v850, 0.0
        %vm867 = vcmp.ge.f32.partialorder %v851, 0.0
        %v868 = vmul.f32 %v836, 0.2
        %v869 = vmul.f32 %v837, 0.2
        %v870 = vmul.f32 %v838, 0.2
        %v871 = vmul.f32 %v839, 0.2
        %v872 = vmul.f32 %v840, 0.2
        %v873 = vmul.f32 %v841, 0.2
        %v874 = vmul.f32 %v842, 0.2
        %v875 = vmul.f32 %v843, 0.2
        %v876 = vmul.f32 %v844, 0.2
        %v877 = vmul.f32 %v845, 0.2
        %v878 = vmul.f32 %v846, 0.2
        %v879 = vmul.f32 %v847, 0.2
        %v880 = vmul.f32 %v848, 0.2
        %v881 = vmul.f32 %v849, 0.2
        %v882 = vmul.f32 %v850, 0.2
        %v883 = vmul.f32 %v851, 0.2
        %v884 = vsel %vm852, %v836, %v868
        %v885 = vsel %vm853, %v837, %v869
        %v886 = vsel %vm854, %v838, %v870
        %v887 = vsel %vm855, %v839, %v871
        %v888 = vsel %vm856, %v840, %v872
        %v889 = vsel %vm857, %v841, %v873
        %v890 = vsel %vm858, %v842, %v874
        %v891 = vsel %vm859, %v843, %v875
        %v892 = vsel %vm860, %v844, %v876
        %v893 = vsel %vm861, %v845, %v877
        %v894 = vsel %vm862, %v846, %v878
        %v895 = vsel %vm863, %v847, %v879
        %v896 = vsel %vm864, %v848, %v880
        %v897 = vsel %vm865, %v849, %v881
        %v898 = vsel %vm866, %v850, %v882
        %v899 = vsel %vm867, %v851, %v883
        %900 = vst [vmem:[%s4 + $0x100] sm:$0xff] %v884
        %901 = vst [vmem:[%s4 + $0x108] sm:$0xff] %v885
        %902 = vst [vmem:[%s4 + $0x110] sm:$0xff] %v886
        %903 = vst [vmem:[%s4 + $0x118] sm:$0xff] %v887
        %904 = vst [vmem:[%s4 + $0x120] sm:$0xff] %v888
        %905 = vst [vmem:[%s4 + $0x128] sm:$0xff] %v889
        %906 = vst [vmem:[%s4 + $0x130] sm:$0xff] %v890
        %907 = vst [vmem:[%s4 + $0x138] sm:$0xff] %v891
        %908 = vst [vmem:[%s4 + $0x140] sm:$0xff] %v892
        %909 = vst [vmem:[%s4 + $0x148] sm:$0xff] %v893
        %910 = vst [vmem:[%s4 + $0x150] sm:$0xff] %v894
        %911 = vst [vmem:[%s4 + $0x158] sm:$0xff] %v895
        %912 = vst [vmem:[%s4 + $0x160] sm:$0xff] %v896
        %913 = vst [vmem:[%s4 + $0x168] sm:$0xff] %v897
        %914 = vst [vmem:[%s4 + $0x170] sm:$0xff] %v898
        %915 = vst [vmem:[%s4 + $0x178] sm:$0xff] %v899
        %v916 = vld [vmem:[%s4 + $0x180] sm:$0xff]
        %v917 = vld [vmem:[%s4 + $0x188] sm:$0xff]
        %v918 = vld [vmem:[%s4 + $0x190] sm:$0xff]
        %v919 = vld [vmem:[%s4 + $0x198] sm:$0xff]
        %v920 = vld [vmem:[%s4 + $0x1a0] sm:$0xff]
        %v921 = vld [vmem:[%s4 + $0x1a8] sm:$0xff]
        %v922 = vld [vmem:[%s4 + $0x1b0] sm:$0xff]
        %v923 = vld [vmem:[%s4 + $0x1b8] sm:$0xff]
        %v924 = vld [vmem:[%s4 + $0x1c0] sm:$0xff]
        %v925 = vld [vmem:[%s4 + $0x1c8] sm:$0xff]
        %v926 = vld [vmem:[%s4 + $0x1d0] sm:$0xff]
        %v927 = vld [vmem:[%s4 + $0x1d8] sm:$0xff]
        %v928 = vld [vmem:[%s4 + $0x1e0] sm:$0xff]
        %v929 = vld [vmem:[%s4 + $0x1e8] sm:$0xff]
        %v930 = vld [vmem:[%s4 + $0x1f0] sm:$0xff]
        %v931 = vld [vmem:[%s4 + $0x1f8] sm:$0xff]
        %v932 = vmul.f32 %v916, %v588
        %v933 = vmul.f32 %v917, %v588
        %v934 = vmul.f32 %v918, %v588
        %v935 = vmul.f32 %v919, %v588
        %v936 = vmul.f32 %v920, %v588
        %v937 = vmul.f32 %v921, %v588
        %v938 = vmul.f32 %v922, %v588
        %v939 = vmul.f32 %v923, %v588
        %v940 = vmul.f32 %v924, %v588
        %v941 = vmul.f32 %v925, %v588
        %v942 = vmul.f32 %v926, %v588
        %v943 = vmul.f32 %v927, %v588
        %v944 = vmul.f32 %v928, %v588
        %v945 = vmul.f32 %v929, %v588
        %v946 = vmul.f32 %v930, %v588
        %v947 = vmul.f32 %v931, %v588
        %v948 = vadd.f32 %v932, %v610
        %v949 = vadd.f32 %v933, %v610
        %v950 = vadd.f32 %v934, %v610
        %v951 = vadd.f32 %v935, %v610
        %v952 = vadd.f32 %v936, %v610
        %v953 = vadd.f32 %v937, %v610
        %v954 = vadd.f32 %v938, %v610
        %v955 = vadd.f32 %v939, %v610
        %v956 = vadd.f32 %v940, %v610
        %v957 = vadd.f32 %v941, %v610
        %v958 = vadd.f32 %v942, %v610
        %v959 = vadd.f32 %v943, %v610
        %v960 = vadd.f32 %v944, %v610
        %v961 = vadd.f32 %v945, %v610
        %v962 = vadd.f32 %v946, %v610
        %v963 = vadd.f32 %v947, %v610
        %vm964 = vcmp.ge.f32.partialorder %v948, 0.0
        %vm965 = vcmp.ge.f32.partialorder %v949, 0.0
        %vm966 = vcmp.ge.f32.partialorder %v950, 0.0
        %vm967 = vcmp.ge.f32.partialorder %v951, 0.0
        %vm968 = vcmp.ge.f32.partialorder %v952, 0.0
        %vm969 = vcmp.ge.f32.partialorder %v953, 0.0
        %vm970 = vcmp.ge.f32.partialorder %v954, 0.0
        %vm971 = vcmp.ge.f32.partialorder %v955, 0.0
        %vm972 = vcmp.ge.f32.partialorder %v956, 0.0
        %vm973 = vcmp.ge.f32.partialorder %v957, 0.0
        %vm974 = vcmp.ge.f32.partialorder %v958, 0.0
        %vm975 = vcmp.ge.f32.partialorder %v959, 0.0
        %vm976 = vcmp.ge.f32.partialorder %v960, 0.0
        %vm977 = vcmp.ge.f32.partialorder %v961, 0.0
        %vm978 = vcmp.ge.f32.partialorder %v962, 0.0
        %vm979 = vcmp.ge.f32.partialorder %v963, 0.0
        %v980 = vmul.f32 %v948, 0.2
        %v981 = vmul.f32 %v949, 0.2
        %v982 = vmul.f32 %v950, 0.2
        %v983 = vmul.f32 %v951, 0.2
        %v984 = vmul.f32 %v952, 0.2
        %v985 = vmul.f32 %v953, 0.2
        %v986 = vmul.f32 %v954, 0.2
        %v987 = vmul.f32 %v955, 0.2
        %v988 = vmul.f32 %v956, 0.2
        %v989 = vmul.f32 %v957, 0.2
        %v990 = vmul.f32 %v958, 0.2
        %v991 = vmul.f32 %v959, 0.2
        %v992 = vmul.f32 %v960, 0.2
        %v993 = vmul.f32 %v961, 0.2
        %v994 = vmul.f32 %v962, 0.2
        %v995 = vmul.f32 %v963, 0.2
        %v996 = vsel %vm964, %v948, %v980
        %v997 = vsel %vm965, %v949, %v981
        %v998 = vsel %vm966, %v950, %v982
        %v999 = vsel %vm967, %v951, %v983
        %v1000 = vsel %vm968, %v952, %v984
        %v1001 = vsel %vm969, %v953, %v985
        %v1002 = vsel %vm970, %v954, %v986
        %v1003 = vsel %vm971, %v955, %v987
        %v1004 = vsel %vm972, %v956, %v988
        %v1005 = vsel %vm973, %v957, %v989
        %v1006 = vsel %vm974, %v958, %v990
        %v1007 = vsel %vm975, %v959, %v991
        %v1008 = vsel %vm976, %v960, %v992
        %v1009 = vsel %vm977, %v961, %v993
        %v1010 = vsel %vm978, %v962, %v994
        %v1011 = vsel %vm979, %v963, %v995
        %1012 = vst [vmem:[%s4 + $0x180] sm:$0xff] %v996
        %1013 = vst [vmem:[%s4 + $0x188] sm:$0xff] %v997
        %1014 = vst [vmem:[%s4 + $0x190] sm:$0xff] %v998
        %1015 = vst [vmem:[%s4 + $0x198] sm:$0xff] %v999
        %1016 = vst [vmem:[%s4 + $0x1a0] sm:$0xff] %v1000
        %1017 = vst [vmem:[%s4 + $0x1a8] sm:$0xff] %v1001
        %1018 = vst [vmem:[%s4 + $0x1b0] sm:$0xff] %v1002
        %1019 = vst [vmem:[%s4 + $0x1b8] sm:$0xff] %v1003
        %1020 = vst [vmem:[%s4 + $0x1c0] sm:$0xff] %v1004
        %1021 = vst [vmem:[%s4 + $0x1c8] sm:$0xff] %v1005
        %1022 = vst [vmem:[%s4 + $0x1d0] sm:$0xff] %v1006
        %1023 = vst [vmem:[%s4 + $0x1d8] sm:$0xff] %v1007
        %1024 = vst [vmem:[%s4 + $0x1e0] sm:$0xff] %v1008
        %1025 = vst [vmem:[%s4 + $0x1e8] sm:$0xff] %v1009
        %1026 = vst [vmem:[%s4 + $0x1f0] sm:$0xff] %v1010
        %1027 = vst [vmem:[%s4 + $0x1f8] sm:$0xff] %v1011
      $region44: #{generator_forward.7} parent=35 // pred_fallthru
        _
      // Predicated region
      $region45: #{generator_forward.7} parent=35 // pred_check
        %p1028 = pneg %p136
      $region46: #{generator_forward.7} parent=35 // pred_check_branch
        %1030 = sbr.rel (%p1028) target = $region48
      $region47: #{generator_forward.7} parent=35 // pred_region
        _
      $region48: #{generator_forward.7} parent=35 // pred_fallthru
        _
      // Predicated region
      $region49: #{generator_forward.7} parent=35 // pred_check
        %p1031 = pneg %p136
      $region50: #{generator_forward.7} parent=35 // pred_check_branch
        %1033 = sbr.rel (%p1031) target = $region52
      $region51: #{generator_forward.7} parent=35 // pred_region
        _
      $region52: #{generator_forward.7} parent=35 // pred_fallthru
        _
    $region36: #{generator_forward.7} parent=5 // pred_fallthru
      _
    %p1034 = scmp.le.s32.totalorder 2, %s10
    // Predicated region
    $region53: #{generator_forward.7} parent=5 // pred_check
      %p1035 = pneg %p1034
    $region54: #{generator_forward.7} parent=5 // pred_check_branch
      %1037 = sbr.rel (%p1035) target = $region56
    $region55: #{generator_forward.7} parent=5 // pred_region
      %s1038 = ssub.s32 %s10, 2
    $region56: #{generator_forward.7} parent=5 // pred_fallthru
      _
  $region6: #{generator_forward.7} parent=0 // loop_footer
    %s14 = sadd.s32 1, %s10
  $region7: #{generator_forward.7} parent=0 // loop_footer_branch
    %9 = sbr.rel target = $region3
  $region8: #{generator_forward.7} parent=0 // loop_exit
    _

// kernel: generator_forward.8
$region0: #{generator_forward.8}
  #allocation0 [shape = 'u32[]', space=smem, size = 0x4, offset = 0x4, fixed_abs, tag = 'smem constant byte address 0x4 - core index']
  #allocation1 [shape = 'u32[144,128]{1,0:T(1,128)}', space=vmem, size = 0x12000, scoped, tag = 'internal scratch']
  #allocation2 [shape = 'f32[1,128]{1,0:T(1,128)}', space=vmem, size = 0x200, scoped, tag = 'scratch operand']
  #allocation3 [shape = 'f32[1,128]{1,0:T(1,128)}', space=vmem, size = 0x200, scoped, tag = 'scratch operand']
  %s0 = inlined_call_operand.vmem [shape: bf16[4,512,64], index: 0, kind: input, shape index: {}]
  %s1 = inlined_call_operand.vmem [shape: bf16[4,64,128], index: 1, kind: input, shape index: {}]
  %s2 = inlined_call_operand.vmem [shape: f32[1,128], index: 2, kind: input, shape index: {}]
  %s3 = inlined_call_operand.vmem [shape: f32[1,128], index: 3, kind: input, shape index: {}]
  %s4 = inlined_call_operand.vmem [shape: f32[2048,128], index: 4, kind: output, shape index: {}]
  %s5 = sld [smem:[#allocation0]]
  $region57: #{generator_forward.8} parent=0
    _
  %s7 = ssub.s32 1, %s5
  %s8 = scalar_select 0, %s7, %s5
  loop: start=0, step=1, limit=6
  $region2: #{generator_forward.8} parent=0 // loop_pre_header
    _
  $region3: #{generator_forward.8} parent=0 // loop_header
    %s10 = sphi 0, %s14
    %p11 = scmp.ge.s32.totalorder %s10, 6
    %s17 = sphi 0, %s29
    %s18 = sphi 0, %s25
    %s19 = sphi 0, %s17
    %s20 = sphi 0, %s18
    %s21 = sphi 0, %s19
    %s22 = sphi 0, %s20
    %s34 = sphi 0, %s36
    %s37 = sphi 0, %s34
    %s38 = sphi 0, %s37
    %s54 = sphi 0, %s38
    %s60 = sphi 0, %s62
    %s63 = sphi 0, %s60
    %s64 = sphi 0, %s63
    %s80 = sphi 0, %s64
    %s84 = sphi 0, %s84
    %s86 = sphi 0, %s84
    %s87 = sphi 0, %s86
    %s101 = sphi 0, %s87
    %s105 = sphi 0, %s105
    %s107 = sphi 0, %s105
    %s108 = sphi 0, %s107
    %s122 = sphi 0, %s108
    %s126 = sphi 0, %s126
    %s128 = sphi 0, %s126
    %s129 = sphi 0, %s128
    %s143 = sphi 0, %s129
  $region4: #{generator_forward.8} parent=0 // loop_header_branch
    %13 = sbr.rel (%p11) target = $region8
  $region5: #{generator_forward.8} parent=0 // loop_body
    %s15 = ssub.s32 %s10, 1
    %s16 = ssub.s32 %s10, 2
    %s23 = sadd.s32 1, %s18
    %p24 = scmp.ge.s32.totalorder %s23, 1
    %s25 = scalar_select %p24, 0, %s23
    %s26 = sadd.s32 1, %s17
    %s27 = scalar_select %p24, %s26, %s17
    %p28 = scmp.ge.s32.totalorder %s27, 4
    %s29 = scalar_select %p28, 0, %s27
    %s30 = ssub.s32 %s17, %s29
    %s31 = ssub.s32 %s18, %s25
    %s32 = sor.u32 %s30, %s31
    %p33 = scmp.eq.s32.totalorder %s32, 0
    %s35 = sadd.s32 %s34, 1
    %s36 = scalar_select %p33, %s34, %s35
    %p39 = pneg %p33
    %p40 = scmp.eq.s32.totalorder %s10, 3
    %p41 = por %p39, %p40
    %p42 = scmp.ne.s32.totalorder %s34, %s37
    %p43 = scmp.eq.s32.totalorder %s10, 0
    %p44 = por %p42, %p43
    %p45 = scmp.ne.s32.totalorder %s34, %s37
    %p46 = scmp.eq.s32.totalorder %s15, 3
    %p47 = por %p45, %p46
    %p48 = scmp.ne.s32.totalorder %s37, %s38
    %p49 = scmp.eq.s32.totalorder %s15, 0
    %p50 = por %p48, %p49
    %p51 = scmp.ne.s32.totalorder %s37, %s38
    %p52 = scmp.eq.s32.totalorder %s16, 3
    %p53 = por %p51, %p52
    %p55 = scmp.ne.s32.totalorder %s38, %s54
    %p56 = scmp.eq.s32.totalorder %s16, 0
    %p57 = por %p55, %p56
    %s58 = ssub.s32 %s17, %s29
    %p59 = scmp.eq.s32.totalorder %s58, 0
    %s61 = sadd.s32 %s60, 1
    %s62 = scalar_select %p59, %s60, %s61
    %p65 = pneg %p59
    %p66 = scmp.eq.s32.totalorder %s10, 3
    %p67 = por %p65, %p66
    %p68 = scmp.ne.s32.totalorder %s60, %s63
    %p69 = scmp.eq.s32.totalorder %s10, 0
    %p70 = por %p68, %p69
    %p71 = scmp.ne.s32.totalorder %s60, %s63
    %p72 = scmp.eq.s32.totalorder %s15, 3
    %p73 = por %p71, %p72
    %p74 = scmp.ne.s32.totalorder %s63, %s64
    %p75 = scmp.eq.s32.totalorder %s15, 0
    %p76 = por %p74, %p75
    %p77 = scmp.ne.s32.totalorder %s63, %s64
    %p78 = scmp.eq.s32.totalorder %s16, 3
    %p79 = por %p77, %p78
    %p81 = scmp.ne.s32.totalorder %s64, %s80
    %p82 = scmp.eq.s32.totalorder %s16, 0
    %p83 = por %p81, %p82
    %s85 = sadd.s32 %s84, 1
    %p88 = scmp.eq.s32.totalorder %s10, 3
    %p89 = scmp.ne.s32.totalorder %s84, %s86
    %p90 = scmp.eq.s32.totalorder %s10, 0
    %p91 = por %p89, %p90
    %p92 = scmp.ne.s32.totalorder %s84, %s86
    %p93 = scmp.eq.s32.totalorder %s15, 3
    %p94 = por %p92, %p93
    %p95 = scmp.ne.s32.totalorder %s86, %s87
    %p96 = scmp.eq.s32.totalorder %s15, 0
    %p97 = por %p95, %p96
    %p98 = scmp.ne.s32.totalorder %s86, %s87
    %p99 = scmp.eq.s32.totalorder %s16, 3
    %p100 = por %p98, %p99
    %p102 = scmp.ne.s32.totalorder %s87, %s101
    %p103 = scmp.eq.s32.totalorder %s16, 0
    %p104 = por %p102, %p103
    %s106 = sadd.s32 %s105, 1
    %p109 = scmp.eq.s32.totalorder %s10, 3
    %p110 = scmp.ne.s32.totalorder %s105, %s107
    %p111 = scmp.eq.s32.totalorder %s10, 0
    %p112 = por %p110, %p111
    %p113 = scmp.ne.s32.totalorder %s105, %s107
    %p114 = scmp.eq.s32.totalorder %s15, 3
    %p115 = por %p113, %p114
    %p116 = scmp.ne.s32.totalorder %s107, %s108
    %p117 = scmp.eq.s32.totalorder %s15, 0
    %p118 = por %p116, %p117
    %p119 = scmp.ne.s32.totalorder %s107, %s108
    %p120 = scmp.eq.s32.totalorder %s16, 3
    %p121 = por %p119, %p120
    %p123 = scmp.ne.s32.totalorder %s108, %s122
    %p124 = scmp.eq.s32.totalorder %s16, 0
    %p125 = por %p123, %p124
    %s127 = sadd.s32 %s126, 1
    %p130 = scmp.eq.s32.totalorder %s10, 3
    %p131 = scmp.ne.s32.totalorder %s126, %s128
    %p132 = scmp.eq.s32.totalorder %s10, 0
    %p133 = por %p131, %p132
    %p134 = scmp.ne.s32.totalorder %s126, %s128
    %p135 = scmp.eq.s32.totalorder %s15, 3
    %p136 = por %p134, %p135
    %p137 = scmp.ne.s32.totalorder %s128, %s129
    %p138 = scmp.eq.s32.totalorder %s15, 0
    %p139 = por %p137, %p138
    %p140 = scmp.ne.s32.totalorder %s128, %s129
    %p141 = scmp.eq.s32.totalorder %s16, 3
    %p142 = por %p140, %p141
    %p144 = scmp.ne.s32.totalorder %s129, %s143
    %p145 = scmp.eq.s32.totalorder %s16, 0
    %p146 = por %p144, %p145
    %p147 = scmp.le.s32.totalorder 1, %s10
    %p148 = scmp.lt.s32.totalorder %s10, 5
    %p149 = pnand %p147, %p148
    %p150 = pneg %p149
    // Predicated region
    $region9: #{generator_forward.8} parent=5 // pred_check
      _
    $region10: #{generator_forward.8} parent=5 // pred_check_branch
      %152 = sbr.rel (%p149) target = $region12
    $region11: #{generator_forward.8} parent=5 // pred_region
      %s153 = ssub.s32 %s10, 1
      // Predicated region
      $region13: #{generator_forward.8} parent=11 // pred_check
        %p154 = pneg %p97
      $region14: #{generator_forward.8} parent=11 // pred_check_branch
        %156 = sbr.rel (%p154) target = $region16
      $region15: #{generator_forward.8} parent=11 // pred_region
        _
      $region16: #{generator_forward.8} parent=11 // pred_fallthru
        _
      // Predicated region
      $region17: #{generator_forward.8} parent=11 // pred_check
        %p157 = pneg %p118
      $region18: #{generator_forward.8} parent=11 // pred_check_branch
        %159 = sbr.rel (%p157) target = $region20
      $region19: #{generator_forward.8} parent=11 // pred_region
        _
      $region20: #{generator_forward.8} parent=11 // pred_fallthru
        _
    $region12: #{generator_forward.8} parent=5 // pred_fallthru
      _
    %p160 = scmp.lt.s32.totalorder %s10, 4
    // Predicated region
    $region21: #{generator_forward.8} parent=5 // pred_check
      %p161 = pneg %p160
    $region22: #{generator_forward.8} parent=5 // pred_check_branch
      %163 = sbr.rel (%p161) target = $region24
    $region23: #{generator_forward.8} parent=5 // pred_region
      // Predicated region
      $region25: #{generator_forward.8} parent=23 // pred_check
        %p164 = pneg %p44
      $region26: #{generator_forward.8} parent=23 // pred_check_branch
        %166 = sbr.rel (%p164) target = $region28
      $region27: #{generator_forward.8} parent=23 // pred_region
        %s167 = smul.u32 64, %s18
        %p168 = scmp.lt.s32.totalorder %s17, 3
        %s169 = scalar_select %p168, %s17, 3
        %p170 = scmp.lt.s32.totalorder %s167, 63
        %s171 = scalar_select %p170, %s167, 63
        %s172 = smul.addr %s169, 64
        %s173 = sadd.s32 %s171, %s172
        %s174 = smul.addr %s173, 4
        %s175 = scalar_lea.vmem %s0, %s174
        %s176 = smul.u32 64, %s18
      $region28: #{generator_forward.8} parent=23 // pred_fallthru
        _
      // Predicated region
      $region29: #{generator_forward.8} parent=23 // pred_check
        %p177 = pneg %p70
      $region30: #{generator_forward.8} parent=23 // pred_check_branch
        %179 = sbr.rel (%p177) target = $region32
      $region31: #{generator_forward.8} parent=23 // pred_region
        %p180 = scmp.lt.s32.totalorder %s17, 3
        %s181 = scalar_select %p180, %s17, 3
        %s182 = smul.addr %s181, 8
        %s183 = smul.addr %s182, 4
        %s184 = scalar_lea.vmem %s1, %s183
      $region32: #{generator_forward.8} parent=23 // pred_fallthru
        _
    $region24: #{generator_forward.8} parent=5 // pred_fallthru
      _
    %p185 = scmp.le.s32.totalorder 1, %s10
    %p186 = scmp.lt.s32.totalorder %s10, 5
    %p187 = pnand %p185, %p186
    %p188 = pneg %p187
    // Predicated region
    $region33: #{generator_forward.8} parent=5 // pred_check
      _
    $region34: #{generator_forward.8} parent=5 // pred_check_branch
      %190 = sbr.rel (%p187) target = $region36
    $region35: #{generator_forward.8} parent=5 // pred_region
      %s191 = ssub.s32 %s10, 1
      %s192 = smul.u32 64, %s20
      %p193 = scmp.lt.s32.totalorder %s19, 3
      %s194 = scalar_select %p193, %s19, 3
      %p195 = scmp.lt.s32.totalorder %s192, 63
      %s196 = scalar_select %p195, %s192, 63
      %s197 = smul.addr %s194, 64
      %s198 = sadd.s32 %s196, %s197
      %s199 = smul.addr %s198, 4
      %s200 = scalar_lea.vmem %s0, %s199
      %p201 = pneg %p50
      %p202 = pneg %p47
      %p203 = scmp.lt.s32.totalorder %s19, 3
      %s204 = scalar_select %p203, %s19, 3
      %s205 = smul.addr %s204, 8
      %s206 = smul.addr %s205, 4
      %s207 = scalar_lea.vmem %s1, %s206
      %p208 = pneg %p76
      %p209 = pneg %p73
      %p210 = pneg %p97
      %p211 = pneg %p94
      %p212 = pneg %p118
      %p213 = pneg %p115
      %p214 = pneg %p139
      %p215 = pneg %p136
      %s216 = smul.u32 64, %s20
      %p217 = scmp.lt.s32.totalorder %s19, 3
      %s218 = scalar_select %p217, %s19, 3
      %p219 = scmp.lt.s32.totalorder %s216, 63
      %s220 = scalar_select %p219, %s216, 63
      %s221 = smul.addr %s218, 64
      %s222 = sadd.s32 %s220, %s221
      %s223 = smul.addr %s222, 4
      %s224 = scalar_lea.vmem %s0, %s223
      %s225 = smul.u32 64, %s20
      %p226 = scmp.lt.s32.totalorder %s19, 3
      %s227 = scalar_select %p226, %s19, 3
      %s228 = smul.addr %s227, 8
      %s229 = smul.addr %s228, 4
      %s230 = scalar_lea.vmem %s1, %s229
      %p232 = scmp.eq.s32.totalorder %s19, 0
      %p233 = scmp.eq.s32.totalorder %s20, 0
      %p234 = pnand %p232, %p233
      %p235 = pneg %p234
      // Predicated region
      $region37: #{generator_forward.8} parent=35 // pred_check
        _
      $region38: #{generator_forward.8} parent=35 // pred_check_branch
        %237 = sbr.rel (%p234) target = $region40
      $region39: #{generator_forward.8} parent=35 // pred_region
        %238 = vst [vmem:[#allocation2] sm:$0x1] 0.0
        %239 = vst [vmem:[#allocation3] sm:$0x1] 0.0
      $region40: #{generator_forward.8} parent=35 // pred_fallthru
        _
      %v240 = vld [vmem:[%s224] sm:$0xf]
      %v241 = vld [vmem:[%s224 + $0x4] sm:$0xf]
      %v242 = vld [vmem:[%s224 + $0x8] sm:$0xf]
      %v243 = vld [vmem:[%s224 + $0xc] sm:$0xf]
      %v244 = vld [vmem:[%s224 + $0x10] sm:$0xf]
      %v245 = vld [vmem:[%s224 + $0x14] sm:$0xf]
      %v246 = vld [vmem:[%s224 + $0x18] sm:$0xf]
      %v247 = vld [vmem:[%s224 + $0x1c] sm:$0xf]
      %v248 = vld [vmem:[%s224 + $0x20] sm:$0xf]
      %v249 = vld [vmem:[%s224 + $0x24] sm:$0xf]
      %v250 = vld [vmem:[%s224 + $0x28] sm:$0xf]
      %v251 = vld [vmem:[%s224 + $0x2c] sm:$0xf]
      %v252 = vld [vmem:[%s224 + $0x30] sm:$0xf]
      %v253 = vld [vmem:[%s224 + $0x34] sm:$0xf]
      %v254 = vld [vmem:[%s224 + $0x38] sm:$0xf]
      %v255 = vld [vmem:[%s224 + $0x3c] sm:$0xf]
      %v256 = vld [vmem:[%s224 + $0x40] sm:$0xf]
      %v257 = vld [vmem:[%s224 + $0x44] sm:$0xf]
      %v258 = vld [vmem:[%s224 + $0x48] sm:$0xf]
      %v259 = vld [vmem:[%s224 + $0x4c] sm:$0xf]
      %v260 = vld [vmem:[%s224 + $0x50] sm:$0xf]
      %v261 = vld [vmem:[%s224 + $0x54] sm:$0xf]
      %v262 = vld [vmem:[%s224 + $0x58] sm:$0xf]
      %v263 = vld [vmem:[%s224 + $0x5c] sm:$0xf]
      %v264 = vld [vmem:[%s224 + $0x60] sm:$0xf]
      %v265 = vld [vmem:[%s224 + $0x64] sm:$0xf]
      %v266 = vld [vmem:[%s224 + $0x68] sm:$0xf]
      %v267 = vld [vmem:[%s224 + $0x6c] sm:$0xf]
      %v268 = vld [vmem:[%s224 + $0x70] sm:$0xf]
      %v269 = vld [vmem:[%s224 + $0x74] sm:$0xf]
      %v270 = vld [vmem:[%s224 + $0x78] sm:$0xf]
      %v271 = vld [vmem:[%s224 + $0x7c] sm:$0xf]
      %v272 = vld [vmem:[%s224 + $0x80] sm:$0xf]
      %v273 = vld [vmem:[%s224 + $0x84] sm:$0xf]
      %v274 = vld [vmem:[%s224 + $0x88] sm:$0xf]
      %v275 = vld [vmem:[%s224 + $0x8c] sm:$0xf]
      %v276 = vld [vmem:[%s224 + $0x90] sm:$0xf]
      %v277 = vld [vmem:[%s224 + $0x94] sm:$0xf]
      %v278 = vld [vmem:[%s224 + $0x98] sm:$0xf]
      %v279 = vld [vmem:[%s224 + $0x9c] sm:$0xf]
      %v280 = vld [vmem:[%s224 + $0xa0] sm:$0xf]
      %v281 = vld [vmem:[%s224 + $0xa4] sm:$0xf]
      %v282 = vld [vmem:[%s224 + $0xa8] sm:$0xf]
      %v283 = vld [vmem:[%s224 + $0xac] sm:$0xf]
      %v284 = vld [vmem:[%s224 + $0xb0] sm:$0xf]
      %v285 = vld [vmem:[%s224 + $0xb4] sm:$0xf]
      %v286 = vld [vmem:[%s224 + $0xb8] sm:$0xf]
      %v287 = vld [vmem:[%s224 + $0xbc] sm:$0xf]
      %v288 = vld [vmem:[%s224 + $0xc0] sm:$0xf]
      %v289 = vld [vmem:[%s224 + $0xc4] sm:$0xf]
      %v290 = vld [vmem:[%s224 + $0xc8] sm:$0xf]
      %v291 = vld [vmem:[%s224 + $0xcc] sm:$0xf]
      %v292 = vld [vmem:[%s224 + $0xd0] sm:$0xf]
      %v293 = vld [vmem:[%s224 + $0xd4] sm:$0xf]
      %v294 = vld [vmem:[%s224 + $0xd8] sm:$0xf]
      %v295 = vld [vmem:[%s224 + $0xdc] sm:$0xf]
      %v296 = vld [vmem:[%s224 + $0xe0] sm:$0xf]
      %v297 = vld [vmem:[%s224 + $0xe4] sm:$0xf]
      %v298 = vld [vmem:[%s224 + $0xe8] sm:$0xf]
      %v299 = vld [vmem:[%s224 + $0xec] sm:$0xf]
      %v300 = vld [vmem:[%s224 + $0xf0] sm:$0xf]
      %v301 = vld [vmem:[%s224 + $0xf4] sm:$0xf]
      %v302 = vld [vmem:[%s224 + $0xf8] sm:$0xf]
      %v303 = vld [vmem:[%s224 + $0xfc] sm:$0xf]
      %v304 = vld [vmem:[%s230] sm:$0xf]
      %v305 = vld [vmem:[%s230 + $0x4] sm:$0xf]
      %v306 = vld [vmem:[%s230 + $0x8] sm:$0xf]
      %v307 = vld [vmem:[%s230 + $0xc] sm:$0xf]
      %v308 = vld [vmem:[%s230 + $0x10] sm:$0xf]
      %v309 = vld [vmem:[%s230 + $0x14] sm:$0xf]
      %v310 = vld [vmem:[%s230 + $0x18] sm:$0xf]
      %v311 = vld [vmem:[%s230 + $0x1c] sm:$0xf]
      %v376 = vunpack.c.l.b16 %v240
      %v377 = vunpack.c.l.b16 %v241
      %v378 = vunpack.c.l.b16 %v242
      %v379 = vunpack.c.l.b16 %v243
      %v380 = vunpack.c.l.b16 %v244
      %v381 = vunpack.c.l.b16 %v245
      %v382 = vunpack.c.l.b16 %v246
      %v383 = vunpack.c.l.b16 %v247
      %v384 = vunpack.c.l.b16 %v248
      %v385 = vunpack.c.l.b16 %v249
      %v386 = vunpack.c.l.b16 %v250
      %v387 = vunpack.c.l.b16 %v251
      %v388 = vunpack.c.l.b16 %v252
      %v389 = vunpack.c.l.b16 %v253
      %v390 = vunpack.c.l.b16 %v254
      %v391 = vunpack.c.l.b16 %v255
      %v392 = vunpack.c.l.b16 %v256
      %v393 = vunpack.c.l.b16 %v257
      %v394 = vunpack.c.l.b16 %v258
      %v395 = vunpack.c.l.b16 %v259
      %v396 = vunpack.c.l.b16 %v260
      %v397 = vunpack.c.l.b16 %v261
      %v398 = vunpack.c.l.b16 %v262
      %v399 = vunpack.c.l.b16 %v263
      %v400 = vunpack.c.l.b16 %v264
      %v401 = vunpack.c.l.b16 %v265
      %v402 = vunpack.c.l.b16 %v266
      %v403 = vunpack.c.l.b16 %v267
      %v404 = vunpack.c.l.b16 %v268
      %v405 = vunpack.c.l.b16 %v269
      %v406 = vunpack.c.l.b16 %v270
      %v407 = vunpack.c.l.b16 %v271
      %v408 = vunpack.c.l.b16 %v272
      %v409 = vunpack.c.l.b16 %v273
      %v410 = vunpack.c.l.b16 %v274
      %v411 = vunpack.c.l.b16 %v275
      %v412 = vunpack.c.l.b16 %v276
      %v413 = vunpack.c.l.b16 %v277
      %v414 = vunpack.c.l.b16 %v278
      %v415 = vunpack.c.l.b16 %v279
      %v416 = vunpack.c.l.b16 %v280
      %v417 = vunpack.c.l.b16 %v281
      %v418 = vunpack.c.l.b16 %v282
      %v419 = vunpack.c.l.b16 %v283
      %v420 = vunpack.c.l.b16 %v284
      %v421 = vunpack.c.l.b16 %v285
      %v422 = vunpack.c.l.b16 %v286
      %v423 = vunpack.c.l.b16 %v287
      %v424 = vunpack.c.l.b16 %v288
      %v425 = vunpack.c.l.b16 %v289
      %v426 = vunpack.c.l.b16 %v290
      %v427 = vunpack.c.l.b16 %v291
      %v428 = vunpack.c.l.b16 %v292
      %v429 = vunpack.c.l.b16 %v293
      %v430 = vunpack.c.l.b16 %v294
      %v431 = vunpack.c.l.b16 %v295
      %v432 = vunpack.c.l.b16 %v296
      %v433 = vunpack.c.l.b16 %v297
      %v434 = vunpack.c.l.b16 %v298
      %v435 = vunpack.c.l.b16 %v299
      %v436 = vunpack.c.l.b16 %v300
      %v437 = vunpack.c.l.b16 %v301
      %v438 = vunpack.c.l.b16 %v302
      %v439 = vunpack.c.l.b16 %v303
      %v440 = vpack.c.b16 %v377, %v376
      %v441 = vpack.c.b16 %v379, %v378
      %v442 = vpack.c.b16 %v381, %v380
      %v443 = vpack.c.b16 %v383, %v382
      %v444 = vpack.c.b16 %v385, %v384
      %v445 = vpack.c.b16 %v387, %v386
      %v446 = vpack.c.b16 %v389, %v388
      %v447 = vpack.c.b16 %v391, %v390
      %v448 = vpack.c.b16 %v393, %v392
      %v449 = vpack.c.b16 %v395, %v394
      %v450 = vpack.c.b16 %v397, %v396
      %v451 = vpack.c.b16 %v399, %v398
      %v452 = vpack.c.b16 %v401, %v400
      %v453 = vpack.c.b16 %v403, %v402
      %v454 = vpack.c.b16 %v405, %v404
      %v455 = vpack.c.b16 %v407, %v406
      %v456 = vpack.c.b16 %v409, %v408
      %v457 = vpack.c.b16 %v411, %v410
      %v458 = vpack.c.b16 %v413, %v412
      %v459 = vpack.c.b16 %v415, %v414
      %v460 = vpack.c.b16 %v417, %v416
      %v461 = vpack.c.b16 %v419, %v418
      %v462 = vpack.c.b16 %v421, %v420
      %v463 = vpack.c.b16 %v423, %v422
      %v464 = vpack.c.b16 %v425, %v424
      %v465 = vpack.c.b16 %v427, %v426
      %v466 = vpack.c.b16 %v429, %v428
      %v467 = vpack.c.b16 %v431, %v430
      %v468 = vpack.c.b16 %v433, %v432
      %v469 = vpack.c.b16 %v435, %v434
      %v470 = vpack.c.b16 %v437, %v436
      %v471 = vpack.c.b16 %v439, %v438
      %v480 = vunpack.c.l.b16 %v304
      %v481 = vunpack.c.l.b16 %v305
      %v482 = vunpack.c.l.b16 %v306
      %v483 = vunpack.c.l.b16 %v307
      %v484 = vunpack.c.l.b16 %v308
      %v485 = vunpack.c.l.b16 %v309
      %v486 = vunpack.c.l.b16 %v310
      %v487 = vunpack.c.l.b16 %v311
      %v488 = vpack.c.b16 %v481, %v480
      %v489 = vpack.c.b16 %v483, %v482
      %v490 = vpack.c.b16 %v485, %v484
      %v491 = vpack.c.b16 %v487, %v486
      %vm496 = vcmask 523264
      %v498 = vsel %vm496, %v440, 0
      %v501 = vsel %vm496, %v441, 0
      %v504 = vsel %vm496, %v442, 0
      %v507 = vsel %vm496, %v443, 0
      %v510 = vsel %vm496, %v444, 0
      %v513 = vsel %vm496, %v445, 0
      %v516 = vsel %vm496, %v446, 0
      %v519 = vsel %vm496, %v447, 0
      %v522 = vsel %vm496, %v448, 0
      %v525 = vsel %vm496, %v449, 0
      %v528 = vsel %vm496, %v450, 0
      %v531 = vsel %vm496, %v451, 0
      %v534 = vsel %vm496, %v452, 0
      %v537 = vsel %vm496, %v453, 0
      %v540 = vsel %vm496, %v454, 0
      %v543 = vsel %vm496, %v455, 0
      %v546 = vsel %vm496, %v456, 0
      %v549 = vsel %vm496, %v457, 0
      %v552 = vsel %vm496, %v458, 0
      %v555 = vsel %vm496, %v459, 0
      %v558 = vsel %vm496, %v460, 0
      %v561 = vsel %vm496, %v461, 0
      %v564 = vsel %vm496, %v462, 0
      %v567 = vsel %vm496, %v463, 0
      %v570 = vsel %vm496, %v464, 0
      %v573 = vsel %vm496, %v465, 0
      %v576 = vsel %vm496, %v466, 0
      %v579 = vsel %vm496, %v467, 0
      %v582 = vsel %vm496, %v468, 0
      %v585 = vsel %vm496, %v469, 0
      %v588 = vsel %vm496, %v470, 0
      %v591 = vsel %vm496, %v471, 0
      %593 = vmatprep.subr.bf16.mxu0 0
      %594 = vmatpush1.bf16.msra.mxu0 %v488
      %595 = vmatprep.subr.bf16.mxu0 0
      %596 = vmatpush1.bf16.msra.mxu0 %v489
      %597 = vmatprep.subr.bf16.mxu0 0
      %598 = vmatpush1.bf16.msra.mxu0 %v490
      %599 = vmatprep.subr.bf16.mxu0 0
      %600 = vmatpush1.bf16.msra.mxu0 %v491
      %601 = vmatprep.subr.bf16.mxu0 0
      %602 = vmatpush1.bf16.msra.mxu0 0
      %603 = vmatprep.subr.bf16.mxu0 0
      %604 = vmatpush1.bf16.msra.mxu0 0
      %605 = vmatprep.subr.bf16.mxu0 0
      %606 = vmatpush1.bf16.msra.mxu0 0
      %607 = vmatprep.subr.bf16.mxu0 0
      %608 = vmatpush1.bf16.msra.mxu0 0
      %609 = vmatprep.subr.bf16.mxu0 0
      %610 = vmatpush1.bf16.msra.mxu0 0
      %611 = vmatprep.subr.bf16.mxu0 0
      %612 = vmatpush1.bf16.msra.mxu0 0
      %613 = vmatprep.subr.bf16.mxu0 0
      %614 = vmatpush1.bf16.msra.mxu0 0
      %615 = vmatprep.subr.bf16.mxu0 0
      %616 = vmatpush1.bf16.msra.mxu0 0
      %617 = vmatprep.subr.bf16.mxu0 0
      %618 = vmatpush1.bf16.msra.mxu0 0
      %619 = vmatprep.subr.bf16.mxu0 0
      %620 = vmatpush1.bf16.msra.mxu0 0
      %621 = vmatprep.subr.bf16.mxu0 0
      %622 = vmatpush1.bf16.msra.mxu0 0
      %623 = vmatprep.subr.bf16.mxu0 0
      %624 = vmatpush1.bf16.msra.mxu0 0
      %625 = vmatprep.mubr.bf16.mxu0 0
      %626 = vmatmul.mubr.bf16.gmra.mrb[0].mxu0 %v498
      %v627 = vpop.f32.mrb[0].mxu0
      %v628 = vadd.f32 0.0, %v627
      %v629 = vpop.f32.mrb[0].mxu0
      %v630 = vpop.f32.mrb[0].mxu0
      %v631 = vadd.f32 0.0, %v630
      %v632 = vpop.f32.mrb[0].mxu0
      %633 = vmatprep.mubr.bf16.mxu0 0
      %634 = vmatmul.mubr.bf16.gmra.mrb[0].mxu0 %v501
      %v635 = vpop.f32.mrb[0].mxu0
      %v636 = vadd.f32 0.0, %v635
      %v637 = vpop.f32.mrb[0].mxu0
      %v638 = vpop.f32.mrb[0].mxu0
      %v639 = vadd.f32 0.0, %v638
      %v640 = vpop.f32.mrb[0].mxu0
      %641 = vmatprep.mubr.bf16.mxu0 0
      %642 = vmatmul.mubr.bf16.gmra.mrb[0].mxu0 %v504
      %v643 = vpop.f32.mrb[0].mxu0
      %v644 = vadd.f32 0.0, %v643
      %v645 = vpop.f32.mrb[0].mxu0
      %v646 = vpop.f32.mrb[0].mxu0
      %v647 = vadd.f32 0.0, %v646
      %v648 = vpop.f32.mrb[0].mxu0
      %649 = vmatprep.mubr.bf16.mxu0 0
      %650 = vmatmul.mubr.bf16.gmra.mrb[0].mxu0 %v507
      %v651 = vpop.f32.mrb[0].mxu0
      %v652 = vadd.f32 0.0, %v651
      %v653 = vpop.f32.mrb[0].mxu0
      %v654 = vpop.f32.mrb[0].mxu0
      %v655 = vadd.f32 0.0, %v654
      %v656 = vpop.f32.mrb[0].mxu0
      %657 = vmatprep.mubr.bf16.mxu0 0
      %658 = vmatmul.mubr.bf16.gmra.mrb[0].mxu0 %v510
      %v659 = vpop.f32.mrb[0].mxu0
      %v660 = vadd.f32 0.0, %v659
      %v661 = vpop.f32.mrb[0].mxu0
      %v662 = vpop.f32.mrb[0].mxu0
      %v663 = vadd.f32 0.0, %v662
      %v664 = vpop.f32.mrb[0].mxu0
      %665 = vmatprep.mubr.bf16.mxu0 0
      %666 = vmatmul.mubr.bf16.gmra.mrb[0].mxu0 %v513
      %v667 = vpop.f32.mrb[0].mxu0
      %v668 = vadd.f32 0.0, %v667
      %v669 = vpop.f32.mrb[0].mxu0
      %v670 = vpop.f32.mrb[0].mxu0
      %v671 = vadd.f32 0.0, %v670
      %v672 = vpop.f32.mrb[0].mxu0
      %673 = vmatprep.mubr.bf16.mxu0 0
      %674 = vmatmul.mubr.bf16.gmra.mrb[0].mxu0 %v516
      %v675 = vpop.f32.mrb[0].mxu0
      %v676 = vadd.f32 0.0, %v675
      %v677 = vpop.f32.mrb[0].mxu0
      %v678 = vpop.f32.mrb[0].mxu0
      %v679 = vadd.f32 0.0, %v678
      %v680 = vpop.f32.mrb[0].mxu0
      %681 = vmatprep.mubr.bf16.mxu0 0
      %682 = vmatmul.mubr.bf16.gmra.mrb[0].mxu0 %v519
      %v683 = vpop.f32.mrb[0].mxu0
      %v684 = vadd.f32 0.0, %v683
      %v685 = vpop.f32.mrb[0].mxu0
      %v686 = vpop.f32.mrb[0].mxu0
      %v687 = vadd.f32 0.0, %v686
      %v688 = vpop.f32.mrb[0].mxu0
      %689 = vmatprep.mubr.bf16.mxu0 0
      %690 = vmatmul.mubr.bf16.gmra.mrb[0].mxu0 %v522
      %v691 = vpop.f32.mrb[0].mxu0
      %v692 = vadd.f32 0.0, %v691
      %v693 = vpop.f32.mrb[0].mxu0
      %v694 = vpop.f32.mrb[0].mxu0
      %v695 = vadd.f32 0.0, %v694
      %v696 = vpop.f32.mrb[0].mxu0
      %697 = vmatprep.mubr.bf16.mxu0 0
      %698 = vmatmul.mubr.bf16.gmra.mrb[0].mxu0 %v525
      %v699 = vpop.f32.mrb[0].mxu0
      %v700 = vadd.f32 0.0, %v699
      %v701 = vpop.f32.mrb[0].mxu0
      %v702 = vpop.f32.mrb[0].mxu0
      %v703 = vadd.f32 0.0, %v702
      %v704 = vpop.f32.mrb[0].mxu0
      %705 = vmatprep.mubr.bf16.mxu0 0
      %706 = vmatmul.mubr.bf16.gmra.mrb[0].mxu0 %v528
      %v707 = vpop.f32.mrb[0].mxu0
      %v708 = vadd.f32 0.0, %v707
      %v709 = vpop.f32.mrb[0].mxu0
      %v710 = vpop.f32.mrb[0].mxu0
      %v711 = vadd.f32 0.0, %v710
      %v712 = vpop.f32.mrb[0].mxu0
      %713 = vmatprep.mubr.bf16.mxu0 0
      %714 = vmatmul.mubr.bf16.gmra.mrb[0].mxu0 %v531
      %v715 = vpop.f32.mrb[0].mxu0
      %v716 = vadd.f32 0.0, %v715
      %v717 = vpop.f32.mrb[0].mxu0
      %v718 = vpop.f32.mrb[0].mxu0
      %v719 = vadd.f32 0.0, %v718
      %v720 = vpop.f32.mrb[0].mxu0
      %721 = vmatprep.mubr.bf16.mxu0 0
      %722 = vmatmul.mubr.bf16.gmra.mrb[0].mxu0 %v534
      %v723 = vpop.f32.mrb[0].mxu0
      %v724 = vadd.f32 0.0, %v723
      %v725 = vpop.f32.mrb[0].mxu0
      %v726 = vpop.f32.mrb[0].mxu0
      %v727 = vadd.f32 0.0, %v726
      %v728 = vpop.f32.mrb[0].mxu0
      %729 = vmatprep.mubr.bf16.mxu0 0
      %730 = vmatmul.mubr.bf16.gmra.mrb[0].mxu0 %v537
      %v731 = vpop.f32.mrb[0].mxu0
      %v732 = vadd.f32 0.0, %v731
      %v733 = vpop.f32.mrb[0].mxu0
      %v734 = vpop.f32.mrb[0].mxu0
      %v735 = vadd.f32 0.0, %v734
      %v736 = vpop.f32.mrb[0].mxu0
      %737 = vmatprep.mubr.bf16.mxu0 0
      %738 = vmatmul.mubr.bf16.gmra.mrb[0].mxu0 %v540
      %v739 = vpop.f32.mrb[0].mxu0
      %v740 = vadd.f32 0.0, %v739
      %v741 = vpop.f32.mrb[0].mxu0
      %v742 = vpop.f32.mrb[0].mxu0
      %v743 = vadd.f32 0.0, %v742
      %v744 = vpop.f32.mrb[0].mxu0
      %745 = vmatprep.mubr.bf16.mxu0 0
      %746 = vmatmul.mubr.bf16.gmra.mrb[0].mxu0 %v543
      %v747 = vpop.f32.mrb[0].mxu0
      %v748 = vadd.f32 0.0, %v747
      %v749 = vpop.f32.mrb[0].mxu0
      %v750 = vpop.f32.mrb[0].mxu0
      %v751 = vadd.f32 0.0, %v750
      %v752 = vpop.f32.mrb[0].mxu0
      %753 = vmatprep.mubr.bf16.mxu0 0
      %754 = vmatmul.mubr.bf16.gmra.mrb[0].mxu0 %v546
      %v755 = vpop.f32.mrb[0].mxu0
      %v756 = vadd.f32 0.0, %v755
      %v757 = vpop.f32.mrb[0].mxu0
      %v758 = vpop.f32.mrb[0].mxu0
      %v759 = vadd.f32 0.0, %v758
      %v760 = vpop.f32.mrb[0].mxu0
      %761 = vmatprep.mubr.bf16.mxu0 0
      %762 = vmatmul.mubr.bf16.gmra.mrb[0].mxu0 %v549
      %v763 = vpop.f32.mrb[0].mxu0
      %v764 = vadd.f32 0.0, %v763
      %v765 = vpop.f32.mrb[0].mxu0
      %v766 = vpop.f32.mrb[0].mxu0
      %v767 = vadd.f32 0.0, %v766
      %v768 = vpop.f32.mrb[0].mxu0
      %769 = vmatprep.mubr.bf16.mxu0 0
      %770 = vmatmul.mubr.bf16.gmra.mrb[0].mxu0 %v552
      %v771 = vpop.f32.mrb[0].mxu0
      %v772 = vadd.f32 0.0, %v771
      %v773 = vpop.f32.mrb[0].mxu0
      %v774 = vpop.f32.mrb[0].mxu0
      %v775 = vadd.f32 0.0, %v774
      %v776 = vpop.f32.mrb[0].mxu0
      %777 = vmatprep.mubr.bf16.mxu0 0
      %778 = vmatmul.mubr.bf16.gmra.mrb[0].mxu0 %v555
      %v779 = vpop.f32.mrb[0].mxu0
      %v780 = vadd.f32 0.0, %v779
      %v781 = vpop.f32.mrb[0].mxu0
      %v782 = vpop.f32.mrb[0].mxu0
      %v783 = vadd.f32 0.0, %v782
      %v784 = vpop.f32.mrb[0].mxu0
      %785 = vmatprep.mubr.bf16.mxu0 0
      %786 = vmatmul.mubr.bf16.gmra.mrb[0].mxu0 %v558
      %v787 = vpop.f32.mrb[0].mxu0
      %v788 = vadd.f32 0.0, %v787
      %v789 = vpop.f32.mrb[0].mxu0
      %v790 = vpop.f32.mrb[0].mxu0
      %v791 = vadd.f32 0.0, %v790
      %v792 = vpop.f32.mrb[0].mxu0
      %793 = vmatprep.mubr.bf16.mxu0 0
      %794 = vmatmul.mubr.bf16.gmra.mrb[0].mxu0 %v561
      %v795 = vpop.f32.mrb[0].mxu0
      %v796 = vadd.f32 0.0, %v795
      %v797 = vpop.f32.mrb[0].mxu0
      %v798 = vpop.f32.mrb[0].mxu0
      %v799 = vadd.f32 0.0, %v798
      %v800 = vpop.f32.mrb[0].mxu0
      %801 = vmatprep.mubr.bf16.mxu0 0
      %802 = vmatmul.mubr.bf16.gmra.mrb[0].mxu0 %v564
      %v803 = vpop.f32.mrb[0].mxu0
      %v804 = vadd.f32 0.0, %v803
      %v805 = vpop.f32.mrb[0].mxu0
      %v806 = vpop.f32.mrb[0].mxu0
      %v807 = vadd.f32 0.0, %v806
      %v808 = vpop.f32.mrb[0].mxu0
      %809 = vmatprep.mubr.bf16.mxu0 0
      %810 = vmatmul.mubr.bf16.gmra.mrb[0].mxu0 %v567
      %v811 = vpop.f32.mrb[0].mxu0
      %v812 = vadd.f32 0.0, %v811
      %v813 = vpop.f32.mrb[0].mxu0
      %v814 = vpop.f32.mrb[0].mxu0
      %v815 = vadd.f32 0.0, %v814
      %v816 = vpop.f32.mrb[0].mxu0
      %817 = vmatprep.mubr.bf16.mxu0 0
      %818 = vmatmul.mubr.bf16.gmra.mrb[0].mxu0 %v570
      %v819 = vpop.f32.mrb[0].mxu0
      %v820 = vadd.f32 0.0, %v819
      %v821 = vpop.f32.mrb[0].mxu0
      %v822 = vpop.f32.mrb[0].mxu0
      %v823 = vadd.f32 0.0, %v822
      %v824 = vpop.f32.mrb[0].mxu0
      %825 = vmatprep.mubr.bf16.mxu0 0
      %826 = vmatmul.mubr.bf16.gmra.mrb[0].mxu0 %v573
      %v827 = vpop.f32.mrb[0].mxu0
      %v828 = vadd.f32 0.0, %v827
      %v829 = vpop.f32.mrb[0].mxu0
      %v830 = vpop.f32.mrb[0].mxu0
      %v831 = vadd.f32 0.0, %v830
      %v832 = vpop.f32.mrb[0].mxu0
      %833 = vmatprep.mubr.bf16.mxu0 0
      %834 = vmatmul.mubr.bf16.gmra.mrb[0].mxu0 %v576
      %v835 = vpop.f32.mrb[0].mxu0
      %v836 = vadd.f32 0.0, %v835
      %v837 = vpop.f32.mrb[0].mxu0
      %v838 = vpop.f32.mrb[0].mxu0
      %v839 = vadd.f32 0.0, %v838
      %v840 = vpop.f32.mrb[0].mxu0
      %841 = vmatprep.mubr.bf16.mxu0 0
      %842 = vmatmul.mubr.bf16.gmra.mrb[0].mxu0 %v579
      %v843 = vpop.f32.mrb[0].mxu0
      %v844 = vadd.f32 0.0, %v843
      %v845 = vpop.f32.mrb[0].mxu0
      %v846 = vpop.f32.mrb[0].mxu0
      %v847 = vadd.f32 0.0, %v846
      %v848 = vpop.f32.mrb[0].mxu0
      %849 = vmatprep.mubr.bf16.mxu0 0
      %850 = vmatmul.mubr.bf16.gmra.mrb[0].mxu0 %v582
      %v851 = vpop.f32.mrb[0].mxu0
      %v852 = vadd.f32 0.0, %v851
      %v853 = vpop.f32.mrb[0].mxu0
      %v854 = vpop.f32.mrb[0].mxu0
      %v855 = vadd.f32 0.0, %v854
      %v856 = vpop.f32.mrb[0].mxu0
      %857 = vmatprep.mubr.bf16.mxu0 0
      %858 = vmatmul.mubr.bf16.gmra.mrb[0].mxu0 %v585
      %v859 = vpop.f32.mrb[0].mxu0
      %v860 = vadd.f32 0.0, %v859
      %v861 = vpop.f32.mrb[0].mxu0
      %v862 = vpop.f32.mrb[0].mxu0
      %v863 = vadd.f32 0.0, %v862
      %v864 = vpop.f32.mrb[0].mxu0
      %865 = vmatprep.mubr.bf16.mxu0 0
      %866 = vmatmul.mubr.bf16.gmra.mrb[0].mxu0 %v588
      %v867 = vpop.f32.mrb[0].mxu0
      %v868 = vadd.f32 0.0, %v867
      %v869 = vpop.f32.mrb[0].mxu0
      %v870 = vpop.f32.mrb[0].mxu0
      %v871 = vadd.f32 0.0, %v870
      %v872 = vpop.f32.mrb[0].mxu0
      %873 = vmatprep.mubr.bf16.mxu0 0
      %874 = vmatmul.mubr.bf16.gmra.mrb[0].mxu0 %v591
      %v875 = vpop.f32.mrb[0].mxu0
      %v876 = vadd.f32 0.0, %v875
      %v877 = vpop.f32.mrb[0].mxu0
      %v878 = vpop.f32.mrb[0].mxu0
      %v879 = vadd.f32 0.0, %v878
      %v880 = vpop.f32.mrb[0].mxu0
      %881 = vdwg.mxu0
      %s882 = smul.u32 %s19, 512
      %s883 = smul.u32 %s20, 512
      %s884 = sadd.s32 %s882, %s883
      %s885 = scalar_lea.vmem %s4, %s884
      %886 = vst [vmem:[%s885] sm:$0xff] %v628
      %887 = vst [vmem:[%s885 + $0x8] sm:$0xff] %v631
      %888 = vst [vmem:[%s885 + $0x10] sm:$0xff] %v636
      %889 = vst [vmem:[%s885 + $0x18] sm:$0xff] %v639
      %890 = vst [vmem:[%s885 + $0x20] sm:$0xff] %v644
      %891 = vst [vmem:[%s885 + $0x28] sm:$0xff] %v647
      %892 = vst [vmem:[%s885 + $0x30] sm:$0xff] %v652
      %893 = vst [vmem:[%s885 + $0x38] sm:$0xff] %v655
      %894 = vst [vmem:[%s885 + $0x40] sm:$0xff] %v660
      %895 = vst [vmem:[%s885 + $0x48] sm:$0xff] %v663
      %896 = vst [vmem:[%s885 + $0x50] sm:$0xff] %v668
      %897 = vst [vmem:[%s885 + $0x58] sm:$0xff] %v671
      %898 = vst [vmem:[%s885 + $0x60] sm:$0xff] %v676
      %899 = vst [vmem:[%s885 + $0x68] sm:$0xff] %v679
      %900 = vst [vmem:[%s885 + $0x70] sm:$0xff] %v684
      %901 = vst [vmem:[%s885 + $0x78] sm:$0xff] %v687
      %902 = vst [vmem:[%s885 + $0x80] sm:$0xff] %v692
      %903 = vst [vmem:[%s885 + $0x88] sm:$0xff] %v695
      %904 = vst [vmem:[%s885 + $0x90] sm:$0xff] %v700
      %905 = vst [vmem:[%s885 + $0x98] sm:$0xff] %v703
      %906 = vst [vmem:[%s885 + $0xa0] sm:$0xff] %v708
      %907 = vst [vmem:[%s885 + $0xa8] sm:$0xff] %v711
      %908 = vst [vmem:[%s885 + $0xb0] sm:$0xff] %v716
      %909 = vst [vmem:[%s885 + $0xb8] sm:$0xff] %v719
      %910 = vst [vmem:[%s885 + $0xc0] sm:$0xff] %v724
      %911 = vst [vmem:[%s885 + $0xc8] sm:$0xff] %v727
      %912 = vst [vmem:[%s885 + $0xd0] sm:$0xff] %v732
      %913 = vst [vmem:[%s885 + $0xd8] sm:$0xff] %v735
      %914 = vst [vmem:[%s885 + $0xe0] sm:$0xff] %v740
      %915 = vst [vmem:[%s885 + $0xe8] sm:$0xff] %v743
      %916 = vst [vmem:[%s885 + $0xf0] sm:$0xff] %v748
      %917 = vst [vmem:[%s885 + $0xf8] sm:$0xff] %v751
      %918 = vst [vmem:[%s885 + $0x100] sm:$0xff] %v756
      %919 = vst [vmem:[%s885 + $0x108] sm:$0xff] %v759
      %920 = vst [vmem:[%s885 + $0x110] sm:$0xff] %v764
      %921 = vst [vmem:[%s885 + $0x118] sm:$0xff] %v767
      %922 = vst [vmem:[%s885 + $0x120] sm:$0xff] %v772
      %923 = vst [vmem:[%s885 + $0x128] sm:$0xff] %v775
      %924 = vst [vmem:[%s885 + $0x130] sm:$0xff] %v780
      %925 = vst [vmem:[%s885 + $0x138] sm:$0xff] %v783
      %926 = vst [vmem:[%s885 + $0x140] sm:$0xff] %v788
      %927 = vst [vmem:[%s885 + $0x148] sm:$0xff] %v791
      %928 = vst [vmem:[%s885 + $0x150] sm:$0xff] %v796
      %929 = vst [vmem:[%s885 + $0x158] sm:$0xff] %v799
      %930 = vst [vmem:[%s885 + $0x160] sm:$0xff] %v804
      %931 = vst [vmem:[%s885 + $0x168] sm:$0xff] %v807
      %932 = vst [vmem:[%s885 + $0x170] sm:$0xff] %v812
      %933 = vst [vmem:[%s885 + $0x178] sm:$0xff] %v815
      %934 = vst [vmem:[%s885 + $0x180] sm:$0xff] %v820
      %935 = vst [vmem:[%s885 + $0x188] sm:$0xff] %v823
      %936 = vst [vmem:[%s885 + $0x190] sm:$0xff] %v828
      %937 = vst [vmem:[%s885 + $0x198] sm:$0xff] %v831
      %938 = vst [vmem:[%s885 + $0x1a0] sm:$0xff] %v836
      %939 = vst [vmem:[%s885 + $0x1a8] sm:$0xff] %v839
      %940 = vst [vmem:[%s885 + $0x1b0] sm:$0xff] %v844
      %941 = vst [vmem:[%s885 + $0x1b8] sm:$0xff] %v847
      %942 = vst [vmem:[%s885 + $0x1c0] sm:$0xff] %v852
      %943 = vst [vmem:[%s885 + $0x1c8] sm:$0xff] %v855
      %944 = vst [vmem:[%s885 + $0x1d0] sm:$0xff] %v860
      %945 = vst [vmem:[%s885 + $0x1d8] sm:$0xff] %v863
      %946 = vst [vmem:[%s885 + $0x1e0] sm:$0xff] %v868
      %947 = vst [vmem:[%s885 + $0x1e8] sm:$0xff] %v871
      %948 = vst [vmem:[%s885 + $0x1f0] sm:$0xff] %v876
      %949 = vst [vmem:[%s885 + $0x1f8] sm:$0xff] %v879
      %v950 = vld [vmem:[#allocation2] sm:$0x1]
      %v951 = vadd.f32 %v628, %v631
      %v952 = vadd.f32 %v951, %v636
      %v953 = vadd.f32 %v952, %v639
      %v954 = vadd.f32 %v953, %v644
      %v955 = vadd.f32 %v954, %v647
      %v956 = vadd.f32 %v955, %v652
      %v957 = vadd.f32 %v956, %v655
      %v958 = vadd.f32 %v957, %v660
      %v959 = vadd.f32 %v958, %v663
      %v960 = vadd.f32 %v959, %v668
      %v961 = vadd.f32 %v960, %v671
      %v962 = vadd.f32 %v961, %v676
      %v963 = vadd.f32 %v962, %v679
      %v964 = vadd.f32 %v963, %v684
      %v965 = vadd.f32 %v964, %v687
      %v966 = vadd.f32 %v965, %v692
      %v967 = vadd.f32 %v966, %v695
      %v968 = vadd.f32 %v967, %v700
      %v969 = vadd.f32 %v968, %v703
      %v970 = vadd.f32 %v969, %v708
      %v971 = vadd.f32 %v970, %v711
      %v972 = vadd.f32 %v971, %v716
      %v973 = vadd.f32 %v972, %v719
      %v974 = vadd.f32 %v973, %v724
      %v975 = vadd.f32 %v974, %v727
      %v976 = vadd.f32 %v975, %v732
      %v977 = vadd.f32 %v976, %v735
      %v978 = vadd.f32 %v977, %v740
      %v979 = vadd.f32 %v978, %v743
      %v980 = vadd.f32 %v979, %v748
      %v981 = vadd.f32 %v980, %v751
      %v982 = vadd.f32 %v981, %v756
      %v983 = vadd.f32 %v982, %v759
      %v984 = vadd.f32 %v983, %v764
      %v985 = vadd.f32 %v984, %v767
      %v986 = vadd.f32 %v985, %v772
      %v987 = vadd.f32 %v986, %v775
      %v988 = vadd.f32 %v987, %v780
      %v989 = vadd.f32 %v988, %v783
      %v990 = vadd.f32 %v989, %v788
      %v991 = vadd.f32 %v990, %v791
      %v992 = vadd.f32 %v991, %v796
      %v993 = vadd.f32 %v992, %v799
      %v994 = vadd.f32 %v993, %v804
      %v995 = vadd.f32 %v994, %v807
      %v996 = vadd.f32 %v995, %v812
      %v997 = vadd.f32 %v996, %v815
      %v998 = vadd.f32 %v997, %v820
      %v999 = vadd.f32 %v998, %v823
      %v1000 = vadd.f32 %v999, %v828
      %v1001 = vadd.f32 %v1000, %v831
      %v1002 = vadd.f32 %v1001, %v836
      %v1003 = vadd.f32 %v1002, %v839
      %v1004 = vadd.f32 %v1003, %v844
      %v1005 = vadd.f32 %v1004, %v847
      %v1006 = vadd.f32 %v1005, %v852
      %v1007 = vadd.f32 %v1006, %v855
      %v1008 = vadd.f32 %v1007, %v860
      %v1009 = vadd.f32 %v1008, %v863
      %v1010 = vadd.f32 %v1009, %v868
      %v1011 = vadd.f32 %v1010, %v871
      %v1012 = vadd.f32 %v1011, %v876
      %v1013 = vadd.f32 %v1012, %v879
      %v1014 = vrot.slane %v1013, 4
      %v1015 = vadd.f32 %v1013, %v1014
      %v1016 = vrot.slane %v1015, 2
      %v1017 = vadd.f32 %v1015, %v1016
      %v1018 = vrot.slane %v1017, 1
      %v1019 = vadd.f32 %v1017, %v1018
      %v1020 = vadd.f32 %v950, %v1019
      %1021 = vst [vmem:[#allocation2] sm:$0x1] %v1020
      %v1022 = vld [vmem:[#allocation3] sm:$0x1]
      %v1023 = vmul.f32 %v628, %v628
      %v1024 = vmul.f32 %v631, %v631
      %v1025 = vmul.f32 %v636, %v636
      %v1026 = vmul.f32 %v639, %v639
      %v1027 = vmul.f32 %v644, %v644
      %v1028 = vmul.f32 %v647, %v647
      %v1029 = vmul.f32 %v652, %v652
      %v1030 = vmul.f32 %v655, %v655
      %v1031 = vmul.f32 %v660, %v660
      %v1032 = vmul.f32 %v663, %v663
      %v1033 = vmul.f32 %v668, %v668
      %v1034 = vmul.f32 %v671, %v671
      %v1035 = vmul.f32 %v676, %v676
      %v1036 = vmul.f32 %v679, %v679
      %v1037 = vmul.f32 %v684, %v684
      %v1038 = vmul.f32 %v687, %v687
      %v1039 = vmul.f32 %v692, %v692
      %v1040 = vmul.f32 %v695, %v695
      %v1041 = vmul.f32 %v700, %v700
      %v1042 = vmul.f32 %v703, %v703
      %v1043 = vmul.f32 %v708, %v708
      %v1044 = vmul.f32 %v711, %v711
      %v1045 = vmul.f32 %v716, %v716
      %v1046 = vmul.f32 %v719, %v719
      %v1047 = vmul.f32 %v724, %v724
      %v1048 = vmul.f32 %v727, %v727
      %v1049 = vmul.f32 %v732, %v732
      %v1050 = vmul.f32 %v735, %v735
      %v1051 = vmul.f32 %v740, %v740
      %v1052 = vmul.f32 %v743, %v743
      %v1053 = vmul.f32 %v748, %v748
      %v1054 = vmul.f32 %v751, %v751
      %v1055 = vmul.f32 %v756, %v756
      %v1056 = vmul.f32 %v759, %v759
      %v1057 = vmul.f32 %v764, %v764
      %v1058 = vmul.f32 %v767, %v767
      %v1059 = vmul.f32 %v772, %v772
      %v1060 = vmul.f32 %v775, %v775
      %v1061 = vmul.f32 %v780, %v780
      %v1062 = vmul.f32 %v783, %v783
      %v1063 = vmul.f32 %v788, %v788
      %v1064 = vmul.f32 %v791, %v791
      %v1065 = vmul.f32 %v796, %v796
      %v1066 = vmul.f32 %v799, %v799
      %v1067 = vmul.f32 %v804, %v804
      %v1068 = vmul.f32 %v807, %v807
      %v1069 = vmul.f32 %v812, %v812
      %v1070 = vmul.f32 %v815, %v815
      %v1071 = vmul.f32 %v820, %v820
      %v1072 = vmul.f32 %v823, %v823
      %v1073 = vmul.f32 %v828, %v828
      %v1074 = vmul.f32 %v831, %v831
      %v1075 = vmul.f32 %v836, %v836
      %v1076 = vmul.f32 %v839, %v839
      %v1077 = vmul.f32 %v844, %v844
      %v1078 = vmul.f32 %v847, %v847
      %v1079 = vmul.f32 %v852, %v852
      %v1080 = vmul.f32 %v855, %v855
      %v1081 = vmul.f32 %v860, %v860
      %v1082 = vmul.f32 %v863, %v863
      %v1083 = vmul.f32 %v868, %v868
      %v1084 = vmul.f32 %v871, %v871
      %v1085 = vmul.f32 %v876, %v876
      %v1086 = vmul.f32 %v879, %v879
      %v1087 = vadd.f32 %v1023, %v1024
      %v1088 = vadd.f32 %v1087, %v1025
      %v1089 = vadd.f32 %v1088, %v1026
      %v1090 = vadd.f32 %v1089, %v1027
      %v1091 = vadd.f32 %v1090, %v1028
      %v1092 = vadd.f32 %v1091, %v1029
      %v1093 = vadd.f32 %v1092, %v1030
      %v1094 = vadd.f32 %v1093, %v1031
      %v1095 = vadd.f32 %v1094, %v1032
      %v1096 = vadd.f32 %v1095, %v1033
      %v1097 = vadd.f32 %v1096, %v1034
      %v1098 = vadd.f32 %v1097, %v1035
      %v1099 = vadd.f32 %v1098, %v1036
      %v1100 = vadd.f32 %v1099, %v1037
      %v1101 = vadd.f32 %v1100, %v1038
      %v1102 = vadd.f32 %v1101, %v1039
      %v1103 = vadd.f32 %v1102, %v1040
      %v1104 = vadd.f32 %v1103, %v1041
      %v1105 = vadd.f32 %v1104, %v1042
      %v1106 = vadd.f32 %v1105, %v1043
      %v1107 = vadd.f32 %v1106, %v1044
      %v1108 = vadd.f32 %v1107, %v1045
      %v1109 = vadd.f32 %v1108, %v1046
      %v1110 = vadd.f32 %v1109, %v1047
      %v1111 = vadd.f32 %v1110, %v1048
      %v1112 = vadd.f32 %v1111, %v1049
      %v1113 = vadd.f32 %v1112, %v1050
      %v1114 = vadd.f32 %v1113, %v1051
      %v1115 = vadd.f32 %v1114, %v1052
      %v1116 = vadd.f32 %v1115, %v1053
      %v1117 = vadd.f32 %v1116, %v1054
      %v1118 = vadd.f32 %v1117, %v1055
      %v1119 = vadd.f32 %v1118, %v1056
      %v1120 = vadd.f32 %v1119, %v1057
      %v1121 = vadd.f32 %v1120, %v1058
      %v1122 = vadd.f32 %v1121, %v1059
      %v1123 = vadd.f32 %v1122, %v1060
      %v1124 = vadd.f32 %v1123, %v1061
      %v1125 = vadd.f32 %v1124, %v1062
      %v1126 = vadd.f32 %v1125, %v1063
      %v1127 = vadd.f32 %v1126, %v1064
      %v1128 = vadd.f32 %v1127, %v1065
      %v1129 = vadd.f32 %v1128, %v1066
      %v1130 = vadd.f32 %v1129, %v1067
      %v1131 = vadd.f32 %v1130, %v1068
      %v1132 = vadd.f32 %v1131, %v1069
      %v1133 = vadd.f32 %v1132, %v1070
      %v1134 = vadd.f32 %v1133, %v1071
      %v1135 = vadd.f32 %v1134, %v1072
      %v1136 = vadd.f32 %v1135, %v1073
      %v1137 = vadd.f32 %v1136, %v1074
      %v1138 = vadd.f32 %v1137, %v1075
      %v1139 = vadd.f32 %v1138, %v1076
      %v1140 = vadd.f32 %v1139, %v1077
      %v1141 = vadd.f32 %v1140, %v1078
      %v1142 = vadd.f32 %v1141, %v1079
      %v1143 = vadd.f32 %v1142, %v1080
      %v1144 = vadd.f32 %v1143, %v1081
      %v1145 = vadd.f32 %v1144, %v1082
      %v1146 = vadd.f32 %v1145, %v1083
      %v1147 = vadd.f32 %v1146, %v1084
      %v1148 = vadd.f32 %v1147, %v1085
      %v1149 = vadd.f32 %v1148, %v1086
      %v1150 = vrot.slane %v1149, 4
      %v1151 = vadd.f32 %v1149, %v1150
      %v1152 = vrot.slane %v1151, 2
      %v1153 = vadd.f32 %v1151, %v1152
      %v1154 = vrot.slane %v1153, 1
      %v1155 = vadd.f32 %v1153, %v1154
      %v1156 = vadd.f32 %v1022, %v1155
      %1157 = vst [vmem:[#allocation3] sm:$0x1] %v1156
      %p1158 = scmp.eq.s32.totalorder %s19, 3
      %p1159 = pnand %p1158, %p233
      %p1160 = pneg %p1159
      // Predicated region
      $region41: #{generator_forward.8} parent=35 // pred_check
        _
      $region42: #{generator_forward.8} parent=35 // pred_check_branch
        %1162 = sbr.rel (%p1159) target = $region44
      $region43: #{generator_forward.8} parent=35 // pred_region
        %v1163 = vld [vmem:[#allocation2] sm:$0x1]
        %v1164 = vmul.f32 %v1163, 0.00048828125
        %v1165 = vld [vmem:[#allocation3] sm:$0x1]
        %v1166 = vmul.f32 %v1165, 0.00048828125
        %v1167 = vmul.f32 %v1164, %v1164
        %v1168 = vsub.f32 %v1166, %v1167
        %v1169 = vmax.f32 %v1168, 0.0
        %v1170 = vld [vmem:[%s2] sm:$0x1]
        %v1171 = vadd.f32 %v1169, 1e-05
        %v1172 = vrsqrt.pop %v1171
        %v1173 = vmul.f32 %v1170, %v1172
        %v1174 = vld [vmem:[%s3] sm:$0x1]
        %v1175 = vmul.f32 %v1164, %v1173
        %v1176 = vsub.f32 %v1174, %v1175
        %v1177 = vld [vmem:[%s4] sm:$0xff]
        %v1178 = vld [vmem:[%s4 + $0x8] sm:$0xff]
        %v1179 = vld [vmem:[%s4 + $0x10] sm:$0xff]
        %v1180 = vld [vmem:[%s4 + $0x18] sm:$0xff]
        %v1181 = vld [vmem:[%s4 + $0x20] sm:$0xff]
        %v1182 = vld [vmem:[%s4 + $0x28] sm:$0xff]
        %v1183 = vld [vmem:[%s4 + $0x30] sm:$0xff]
        %v1184 = vld [vmem:[%s4 + $0x38] sm:$0xff]
        %v1185 = vld [vmem:[%s4 + $0x40] sm:$0xff]
        %v1186 = vld [vmem:[%s4 + $0x48] sm:$0xff]
        %v1187 = vld [vmem:[%s4 + $0x50] sm:$0xff]
        %v1188 = vld [vmem:[%s4 + $0x58] sm:$0xff]
        %v1189 = vld [vmem:[%s4 + $0x60] sm:$0xff]
        %v1190 = vld [vmem:[%s4 + $0x68] sm:$0xff]
        %v1191 = vld [vmem:[%s4 + $0x70] sm:$0xff]
        %v1192 = vld [vmem:[%s4 + $0x78] sm:$0xff]
        %v1194 = vlaneseq
        %v1195 = vshrl.u32 %v1194, 7
        %v1196 = vsub.s32 0, %v1195
        %v1197 = vrot.slane %v1173, %v1196
        %v1199 = vmul.f32 %v1177, %v1197
        %v1200 = vmul.f32 %v1178, %v1197
        %v1201 = vmul.f32 %v1179, %v1197
        %v1202 = vmul.f32 %v1180, %v1197
        %v1203 = vmul.f32 %v1181, %v1197
        %v1204 = vmul.f32 %v1182, %v1197
        %v1205 = vmul.f32 %v1183, %v1197
        %v1206 = vmul.f32 %v1184, %v1197
        %v1207 = vmul.f32 %v1185, %v1197
        %v1208 = vmul.f32 %v1186, %v1197
        %v1209 = vmul.f32 %v1187, %v1197
        %v1210 = vmul.f32 %v1188, %v1197
        %v1211 = vmul.f32 %v1189, %v1197
        %v1212 = vmul.f32 %v1190, %v1197
        %v1213 = vmul.f32 %v1191, %v1197
        %v1214 = vmul.f32 %v1192, %v1197
        %v1216 = vlaneseq
        %v1217 = vshrl.u32 %v1216, 7
        %v1218 = vsub.s32 0, %v1217
        %v1219 = vrot.slane %v1176, %v1218
        %v1221 = vadd.f32 %v1199, %v1219
        %v1222 = vadd.f32 %v1200, %v1219
        %v1223 = vadd.f32 %v1201, %v1219
        %v1224 = vadd.f32 %v1202, %v1219
        %v1225 = vadd.f32 %v1203, %v1219
        %v1226 = vadd.f32 %v1204, %v1219
        %v1227 = vadd.f32 %v1205, %v1219
        %v1228 = vadd.f32 %v1206, %v1219
        %v1229 = vadd.f32 %v1207, %v1219
        %v1230 = vadd.f32 %v1208, %v1219
        %v1231 = vadd.f32 %v1209, %v1219
        %v1232 = vadd.f32 %v1210, %v1219
        %v1233 = vadd.f32 %v1211, %v1219
        %v1234 = vadd.f32 %v1212, %v1219
        %v1235 = vadd.f32 %v1213, %v1219
        %v1236 = vadd.f32 %v1214, %v1219
        %vm1237 = vcmp.ge.f32.partialorder %v1221, 0.0
        %vm1238 = vcmp.ge.f32.partialorder %v1222, 0.0
        %vm1239 = vcmp.ge.f32.partialorder %v1223, 0.0
        %vm1240 = vcmp.ge.f32.partialorder %v1224, 0.0
        %vm1241 = vcmp.ge.f32.partialorder %v1225, 0.0
        %vm1242 = vcmp.ge.f32.partialorder %v1226, 0.0
        %vm1243 = vcmp.ge.f32.partialorder %v1227, 0.0
        %vm1244 = vcmp.ge.f32.partialorder %v1228, 0.0
        %vm1245 = vcmp.ge.f32.partialorder %v1229, 0.0
        %vm1246 = vcmp.ge.f32.partialorder %v1230, 0.0
        %vm1247 = vcmp.ge.f32.partialorder %v1231, 0.0
        %vm1248 = vcmp.ge.f32.partialorder %v1232, 0.0
        %vm1249 = vcmp.ge.f32.partialorder %v1233, 0.0
        %vm1250 = vcmp.ge.f32.partialorder %v1234, 0.0
        %vm1251 = vcmp.ge.f32.partialorder %v1235, 0.0
        %vm1252 = vcmp.ge.f32.partialorder %v1236, 0.0
        %v1253 = vmul.f32 %v1221, 0.2
        %v1254 = vmul.f32 %v1222, 0.2
        %v1255 = vmul.f32 %v1223, 0.2
        %v1256 = vmul.f32 %v1224, 0.2
        %v1257 = vmul.f32 %v1225, 0.2
        %v1258 = vmul.f32 %v1226, 0.2
        %v1259 = vmul.f32 %v1227, 0.2
        %v1260 = vmul.f32 %v1228, 0.2
        %v1261 = vmul.f32 %v1229, 0.2
        %v1262 = vmul.f32 %v1230, 0.2
        %v1263 = vmul.f32 %v1231, 0.2
        %v1264 = vmul.f32 %v1232, 0.2
        %v1265 = vmul.f32 %v1233, 0.2
        %v1266 = vmul.f32 %v1234, 0.2
        %v1267 = vmul.f32 %v1235, 0.2
        %v1268 = vmul.f32 %v1236, 0.2
        %v1269 = vsel %vm1237, %v1221, %v1253
        %v1270 = vsel %vm1238, %v1222, %v1254
        %v1271 = vsel %vm1239, %v1223, %v1255
        %v1272 = vsel %vm1240, %v1224, %v1256
        %v1273 = vsel %vm1241, %v1225, %v1257
        %v1274 = vsel %vm1242, %v1226, %v1258
        %v1275 = vsel %vm1243, %v1227, %v1259
        %v1276 = vsel %vm1244, %v1228, %v1260
        %v1277 = vsel %vm1245, %v1229, %v1261
        %v1278 = vsel %vm1246, %v1230, %v1262
        %v1279 = vsel %vm1247, %v1231, %v1263
        %v1280 = vsel %vm1248, %v1232, %v1264
        %v1281 = vsel %vm1249, %v1233, %v1265
        %v1282 = vsel %vm1250, %v1234, %v1266
        %v1283 = vsel %vm1251, %v1235, %v1267
        %v1284 = vsel %vm1252, %v1236, %v1268
        %1285 = vst [vmem:[%s4] sm:$0xff] %v1269
        %1286 = vst [vmem:[%s4 + $0x8] sm:$0xff] %v1270
        %1287 = vst [vmem:[%s4 + $0x10] sm:$0xff] %v1271
        %1288 = vst [vmem:[%s4 + $0x18] sm:$0xff] %v1272
        %1289 = vst [vmem:[%s4 + $0x20] sm:$0xff] %v1273
        %1290 = vst [vmem:[%s4 + $0x28] sm:$0xff] %v1274
        %1291 = vst [vmem:[%s4 + $0x30] sm:$0xff] %v1275
        %1292 = vst [vmem:[%s4 + $0x38] sm:$0xff] %v1276
        %1293 = vst [vmem:[%s4 + $0x40] sm:$0xff] %v1277
        %1294 = vst [vmem:[%s4 + $0x48] sm:$0xff] %v1278
        %1295 = vst [vmem:[%s4 + $0x50] sm:$0xff] %v1279
        %1296 = vst [vmem:[%s4 + $0x58] sm:$0xff] %v1280
        %1297 = vst [vmem:[%s4 + $0x60] sm:$0xff] %v1281
        %1298 = vst [vmem:[%s4 + $0x68] sm:$0xff] %v1282
        %1299 = vst [vmem:[%s4 + $0x70] sm:$0xff] %v1283
        %1300 = vst [vmem:[%s4 + $0x78] sm:$0xff] %v1284
        %v1301 = vld [vmem:[%s4 + $0x80] sm:$0xff]
        %v1302 = vld [vmem:[%s4 + $0x88] sm:$0xff]
        %v1303 = vld [vmem:[%s4 + $0x90] sm:$0xff]
        %v1304 = vld [vmem:[%s4 + $0x98] sm:$0xff]
        %v1305 = vld [vmem:[%s4 + $0xa0] sm:$0xff]
        %v1306 = vld [vmem:[%s4 + $0xa8] sm:$0xff]
        %v1307 = vld [vmem:[%s4 + $0xb0] sm:$0xff]
        %v1308 = vld [vmem:[%s4 + $0xb8] sm:$0xff]
        %v1309 = vld [vmem:[%s4 + $0xc0] sm:$0xff]
        %v1310 = vld [vmem:[%s4 + $0xc8] sm:$0xff]
        %v1311 = vld [vmem:[%s4 + $0xd0] sm:$0xff]
        %v1312 = vld [vmem:[%s4 + $0xd8] sm:$0xff]
        %v1313 = vld [vmem:[%s4 + $0xe0] sm:$0xff]
        %v1314 = vld [vmem:[%s4 + $0xe8] sm:$0xff]
        %v1315 = vld [vmem:[%s4 + $0xf0] sm:$0xff]
        %v1316 = vld [vmem:[%s4 + $0xf8] sm:$0xff]
        %v1317 = vmul.f32 %v1301, %v1197
        %v1318 = vmul.f32 %v1302, %v1197
        %v1319 = vmul.f32 %v1303, %v1197
        %v1320 = vmul.f32 %v1304, %v1197
        %v1321 = vmul.f32 %v1305, %v1197
        %v1322 = vmul.f32 %v1306, %v1197
        %v1323 = vmul.f32 %v1307, %v1197
        %v1324 = vmul.f32 %v1308, %v1197
        %v1325 = vmul.f32 %v1309, %v1197
        %v1326 = vmul.f32 %v1310, %v1197
        %v1327 = vmul.f32 %v1311, %v1197
        %v1328 = vmul.f32 %v1312, %v1197
        %v1329 = vmul.f32 %v1313, %v1197
        %v1330 = vmul.f32 %v1314, %v1197
        %v1331 = vmul.f32 %v1315, %v1197
        %v1332 = vmul.f32 %v1316, %v1197
        %v1333 = vadd.f32 %v1317, %v1219
        %v1334 = vadd.f32 %v1318, %v1219
        %v1335 = vadd.f32 %v1319, %v1219
        %v1336 = vadd.f32 %v1320, %v1219
        %v1337 = vadd.f32 %v1321, %v1219
        %v1338 = vadd.f32 %v1322, %v1219
        %v1339 = vadd.f32 %v1323, %v1219
        %v1340 = vadd.f32 %v1324, %v1219
        %v1341 = vadd.f32 %v1325, %v1219
        %v1342 = vadd.f32 %v1326, %v1219
        %v1343 = vadd.f32 %v1327, %v1219
        %v1344 = vadd.f32 %v1328, %v1219
        %v1345 = vadd.f32 %v1329, %v1219
        %v1346 = vadd.f32 %v1330, %v1219
        %v1347 = vadd.f32 %v1331, %v1219
        %v1348 = vadd.f32 %v1332, %v1219
        %vm1349 = vcmp.ge.f32.partialorder %v1333, 0.0
        %vm1350 = vcmp.ge.f32.partialorder %v1334, 0.0
        %vm1351 = vcmp.ge.f32.partialorder %v1335, 0.0
        %vm1352 = vcmp.ge.f32.partialorder %v1336, 0.0
        %vm1353 = vcmp.ge.f32.partialorder %v1337, 0.0
        %vm1354 = vcmp.ge.f32.partialorder %v1338, 0.0
        %vm1355 = vcmp.ge.f32.partialorder %v1339, 0.0
        %vm1356 = vcmp.ge.f32.partialorder %v1340, 0.0
        %vm1357 = vcmp.ge.f32.partialorder %v1341, 0.0
        %vm1358 = vcmp.ge.f32.partialorder %v1342, 0.0
        %vm1359 = vcmp.ge.f32.partialorder %v1343, 0.0
        %vm1360 = vcmp.ge.f32.partialorder %v1344, 0.0
        %vm1361 = vcmp.ge.f32.partialorder %v1345, 0.0
        %vm1362 = vcmp.ge.f32.partialorder %v1346, 0.0
        %vm1363 = vcmp.ge.f32.partialorder %v1347, 0.0
        %vm1364 = vcmp.ge.f32.partialorder %v1348, 0.0
        %v1365 = vmul.f32 %v1333, 0.2
        %v1366 = vmul.f32 %v1334, 0.2
        %v1367 = vmul.f32 %v1335, 0.2
        %v1368 = vmul.f32 %v1336, 0.2
        %v1369 = vmul.f32 %v1337, 0.2
        %v1370 = vmul.f32 %v1338, 0.2
        %v1371 = vmul.f32 %v1339, 0.2
        %v1372 = vmul.f32 %v1340, 0.2
        %v1373 = vmul.f32 %v1341, 0.2
        %v1374 = vmul.f32 %v1342, 0.2
        %v1375 = vmul.f32 %v1343, 0.2
        %v1376 = vmul.f32 %v1344, 0.2
        %v1377 = vmul.f32 %v1345, 0.2
        %v1378 = vmul.f32 %v1346, 0.2
        %v1379 = vmul.f32 %v1347, 0.2
        %v1380 = vmul.f32 %v1348, 0.2
        %v1381 = vsel %vm1349, %v1333, %v1365
        %v1382 = vsel %vm1350, %v1334, %v1366
        %v1383 = vsel %vm1351, %v1335, %v1367
        %v1384 = vsel %vm1352, %v1336, %v1368
        %v1385 = vsel %vm1353, %v1337, %v1369
        %v1386 = vsel %vm1354, %v1338, %v1370
        %v1387 = vsel %vm1355, %v1339, %v1371
        %v1388 = vsel %vm1356, %v1340, %v1372
        %v1389 = vsel %vm1357, %v1341, %v1373
        %v1390 = vsel %vm1358, %v1342, %v1374
        %v1391 = vsel %vm1359, %v1343, %v1375
        %v1392 = vsel %vm1360, %v1344, %v1376
        %v1393 = vsel %vm1361, %v1345, %v1377
        %v1394 = vsel %vm1362, %v1346, %v1378
        %v1395 = vsel %vm1363, %v1347, %v1379
        %v1396 = vsel %vm1364, %v1348, %v1380
        %1397 = vst [vmem:[%s4 + $0x80] sm:$0xff] %v1381
        %1398 = vst [vmem:[%s4 + $0x88] sm:$0xff] %v1382
        %1399 = vst [vmem:[%s4 + $0x90] sm:$0xff] %v1383
        %1400 = vst [vmem:[%s4 + $0x98] sm:$0xff] %v1384
        %1401 = vst [vmem:[%s4 + $0xa0] sm:$0xff] %v1385
        %1402 = vst [vmem:[%s4 + $0xa8] sm:$0xff] %v1386
        %1403 = vst [vmem:[%s4 + $0xb0] sm:$0xff] %v1387
        %1404 = vst [vmem:[%s4 + $0xb8] sm:$0xff] %v1388
        %1405 = vst [vmem:[%s4 + $0xc0] sm:$0xff] %v1389
        %1406 = vst [vmem:[%s4 + $0xc8] sm:$0xff] %v1390
        %1407 = vst [vmem:[%s4 + $0xd0] sm:$0xff] %v1391
        %1408 = vst [vmem:[%s4 + $0xd8] sm:$0xff] %v1392
        %1409 = vst [vmem:[%s4 + $0xe0] sm:$0xff] %v1393
        %1410 = vst [vmem:[%s4 + $0xe8] sm:$0xff] %v1394
        %1411 = vst [vmem:[%s4 + $0xf0] sm:$0xff] %v1395
        %1412 = vst [vmem:[%s4 + $0xf8] sm:$0xff] %v1396
        %v1413 = vld [vmem:[%s4 + $0x100] sm:$0xff]
        %v1414 = vld [vmem:[%s4 + $0x108] sm:$0xff]
        %v1415 = vld [vmem:[%s4 + $0x110] sm:$0xff]
        %v1416 = vld [vmem:[%s4 + $0x118] sm:$0xff]
        %v1417 = vld [vmem:[%s4 + $0x120] sm:$0xff]
        %v1418 = vld [vmem:[%s4 + $0x128] sm:$0xff]
        %v1419 = vld [vmem:[%s4 + $0x130] sm:$0xff]
        %v1420 = vld [vmem:[%s4 + $0x138] sm:$0xff]
        %v1421 = vld [vmem:[%s4 + $0x140] sm:$0xff]
        %v1422 = vld [vmem:[%s4 + $0x148] sm:$0xff]
        %v1423 = vld [vmem:[%s4 + $0x150] sm:$0xff]
        %v1424 = vld [vmem:[%s4 + $0x158] sm:$0xff]
        %v1425 = vld [vmem:[%s4 + $0x160] sm:$0xff]
        %v1426 = vld [vmem:[%s4 + $0x168] sm:$0xff]
        %v1427 = vld [vmem:[%s4 + $0x170] sm:$0xff]
        %v1428 = vld [vmem:[%s4 + $0x178] sm:$0xff]
        %v1429 = vmul.f32 %v1413, %v1197
        %v1430 = vmul.f32 %v1414, %v1197
        %v1431 = vmul.f32 %v1415, %v1197
        %v1432 = vmul.f32 %v1416, %v1197
        %v1433 = vmul.f32 %v1417, %v1197
        %v1434 = vmul.f32 %v1418, %v1197
        %v1435 = vmul.f32 %v1419, %v1197
        %v1436 = vmul.f32 %v1420, %v1197
        %v1437 = vmul.f32 %v1421, %v1197
        %v1438 = vmul.f32 %v1422, %v1197
        %v1439 = vmul.f32 %v1423, %v1197
        %v1440 = vmul.f32 %v1424, %v1197
        %v1441 = vmul.f32 %v1425, %v1197
        %v1442 = vmul.f32 %v1426, %v1197
        %v1443 = vmul.f32 %v1427, %v1197
        %v1444 = vmul.f32 %v1428, %v1197
        %v1445 = vadd.f32 %v1429, %v1219
        %v1446 = vadd.f32 %v1430, %v1219
        %v1447 = vadd.f32 %v1431, %v1219
        %v1448 = vadd.f32 %v1432, %v1219
        %v1449 = vadd.f32 %v1433, %v1219
        %v1450 = vadd.f32 %v1434, %v1219
        %v1451 = vadd.f32 %v1435, %v1219
        %v1452 = vadd.f32 %v1436, %v1219
        %v1453 = vadd.f32 %v1437, %v1219
        %v1454 = vadd.f32 %v1438, %v1219
        %v1455 = vadd.f32 %v1439, %v1219
        %v1456 = vadd.f32 %v1440, %v1219
        %v1457 = vadd.f32 %v1441, %v1219
        %v1458 = vadd.f32 %v1442, %v1219
        %v1459 = vadd.f32 %v1443, %v1219
        %v1460 = vadd.f32 %v1444, %v1219
        %vm1461 = vcmp.ge.f32.partialorder %v1445, 0.0
        %vm1462 = vcmp.ge.f32.partialorder %v1446, 0.0
        %vm1463 = vcmp.ge.f32.partialorder %v1447, 0.0
        %vm1464 = vcmp.ge.f32.partialorder %v1448, 0.0
        %vm1465 = vcmp.ge.f32.partialorder %v1449, 0.0
        %vm1466 = vcmp.ge.f32.partialorder %v1450, 0.0
        %vm1467 = vcmp.ge.f32.partialorder %v1451, 0.0
        %vm1468 = vcmp.ge.f32.partialorder %v1452, 0.0
        %vm1469 = vcmp.ge.f32.partialorder %v1453, 0.0
        %vm1470 = vcmp.ge.f32.partialorder %v1454, 0.0
        %vm1471 = vcmp.ge.f32.partialorder %v1455, 0.0
        %vm1472 = vcmp.ge.f32.partialorder %v1456, 0.0
        %vm1473 = vcmp.ge.f32.partialorder %v1457, 0.0
        %vm1474 = vcmp.ge.f32.partialorder %v1458, 0.0
        %vm1475 = vcmp.ge.f32.partialorder %v1459, 0.0
        %vm1476 = vcmp.ge.f32.partialorder %v1460, 0.0
        %v1477 = vmul.f32 %v1445, 0.2
        %v1478 = vmul.f32 %v1446, 0.2
        %v1479 = vmul.f32 %v1447, 0.2
        %v1480 = vmul.f32 %v1448, 0.2
        %v1481 = vmul.f32 %v1449, 0.2
        %v1482 = vmul.f32 %v1450, 0.2
        %v1483 = vmul.f32 %v1451, 0.2
        %v1484 = vmul.f32 %v1452, 0.2
        %v1485 = vmul.f32 %v1453, 0.2
        %v1486 = vmul.f32 %v1454, 0.2
        %v1487 = vmul.f32 %v1455, 0.2
        %v1488 = vmul.f32 %v1456, 0.2
        %v1489 = vmul.f32 %v1457, 0.2
        %v1490 = vmul.f32 %v1458, 0.2
        %v1491 = vmul.f32 %v1459, 0.2
        %v1492 = vmul.f32 %v1460, 0.2
        %v1493 = vsel %vm1461, %v1445, %v1477
        %v1494 = vsel %vm1462, %v1446, %v1478
        %v1495 = vsel %vm1463, %v1447, %v1479
        %v1496 = vsel %vm1464, %v1448, %v1480
        %v1497 = vsel %vm1465, %v1449, %v1481
        %v1498 = vsel %vm1466, %v1450, %v1482
        %v1499 = vsel %vm1467, %v1451, %v1483
        %v1500 = vsel %vm1468, %v1452, %v1484
        %v1501 = vsel %vm1469, %v1453, %v1485
        %v1502 = vsel %vm1470, %v1454, %v1486
        %v1503 = vsel %vm1471, %v1455, %v1487
        %v1504 = vsel %vm1472, %v1456, %v1488
        %v1505 = vsel %vm1473, %v1457, %v1489
        %v1506 = vsel %vm1474, %v1458, %v1490
        %v1507 = vsel %vm1475, %v1459, %v1491
        %v1508 = vsel %vm1476, %v1460, %v1492
        %1509 = vst [vmem:[%s4 + $0x100] sm:$0xff] %v1493
        %1510 = vst [vmem:[%s4 + $0x108] sm:$0xff] %v1494
        %1511 = vst [vmem:[%s4 + $0x110] sm:$0xff] %v1495
        %1512 = vst [vmem:[%s4 + $0x118] sm:$0xff] %v1496
        %1513 = vst [vmem:[%s4 + $0x120] sm:$0xff] %v1497
        %1514 = vst [vmem:[%s4 + $0x128] sm:$0xff] %v1498
        %1515 = vst [vmem:[%s4 + $0x130] sm:$0xff] %v1499
        %1516 = vst [vmem:[%s4 + $0x138] sm:$0xff] %v1500
        %1517 = vst [vmem:[%s4 + $0x140] sm:$0xff] %v1501
        %1518 = vst [vmem:[%s4 + $0x148] sm:$0xff] %v1502
        %1519 = vst [vmem:[%s4 + $0x150] sm:$0xff] %v1503
        %1520 = vst [vmem:[%s4 + $0x158] sm:$0xff] %v1504
        %1521 = vst [vmem:[%s4 + $0x160] sm:$0xff] %v1505
        %1522 = vst [vmem:[%s4 + $0x168] sm:$0xff] %v1506
        %1523 = vst [vmem:[%s4 + $0x170] sm:$0xff] %v1507
        %1524 = vst [vmem:[%s4 + $0x178] sm:$0xff] %v1508
        %v1525 = vld [vmem:[%s4 + $0x180] sm:$0xff]
        %v1526 = vld [vmem:[%s4 + $0x188] sm:$0xff]
        %v1527 = vld [vmem:[%s4 + $0x190] sm:$0xff]
        %v1528 = vld [vmem:[%s4 + $0x198] sm:$0xff]
        %v1529 = vld [vmem:[%s4 + $0x1a0] sm:$0xff]
        %v1530 = vld [vmem:[%s4 + $0x1a8] sm:$0xff]
        %v1531 = vld [vmem:[%s4 + $0x1b0] sm:$0xff]
        %v1532 = vld [vmem:[%s4 + $0x1b8] sm:$0xff]
        %v1533 = vld [vmem:[%s4 + $0x1c0] sm:$0xff]
        %v1534 = vld [vmem:[%s4 + $0x1c8] sm:$0xff]
        %v1535 = vld [vmem:[%s4 + $0x1d0] sm:$0xff]
        %v1536 = vld [vmem:[%s4 + $0x1d8] sm:$0xff]
        %v1537 = vld [vmem:[%s4 + $0x1e0] sm:$0xff]
        %v1538 = vld [vmem:[%s4 + $0x1e8] sm:$0xff]
        %v1539 = vld [vmem:[%s4 + $0x1f0] sm:$0xff]
        %v1540 = vld [vmem:[%s4 + $0x1f8] sm:$0xff]
        %v1541 = vmul.f32 %v1525, %v1197
        %v1542 = vmul.f32 %v1526, %v1197
        %v1543 = vmul.f32 %v1527, %v1197
        %v1544 = vmul.f32 %v1528, %v1197
        %v1545 = vmul.f32 %v1529, %v1197
        %v1546 = vmul.f32 %v1530, %v1197
        %v1547 = vmul.f32 %v1531, %v1197
        %v1548 = vmul.f32 %v1532, %v1197
        %v1549 = vmul.f32 %v1533, %v1197
        %v1550 = vmul.f32 %v1534, %v1197
        %v1551 = vmul.f32 %v1535, %v1197
        %v1552 = vmul.f32 %v1536, %v1197
        %v1553 = vmul.f32 %v1537, %v1197
        %v1554 = vmul.f32 %v1538, %v1197
        %v1555 = vmul.f32 %v1539, %v1197
        %v1556 = vmul.f32 %v1540, %v1197
        %v1557 = vadd.f32 %v1541, %v1219
        %v1558 = vadd.f32 %v1542, %v1219
        %v1559 = vadd.f32 %v1543, %v1219
        %v1560 = vadd.f32 %v1544, %v1219
        %v1561 = vadd.f32 %v1545, %v1219
        %v1562 = vadd.f32 %v1546, %v1219
        %v1563 = vadd.f32 %v1547, %v1219
        %v1564 = vadd.f32 %v1548, %v1219
        %v1565 = vadd.f32 %v1549, %v1219
        %v1566 = vadd.f32 %v1550, %v1219
        %v1567 = vadd.f32 %v1551, %v1219
        %v1568 = vadd.f32 %v1552, %v1219
        %v1569 = vadd.f32 %v1553, %v1219
        %v1570 = vadd.f32 %v1554, %v1219
        %v1571 = vadd.f32 %v1555, %v1219
        %v1572 = vadd.f32 %v1556, %v1219
        %vm1573 = vcmp.ge.f32.partialorder %v1557, 0.0
        %vm1574 = vcmp.ge.f32.partialorder %v1558, 0.0
        %vm1575 = vcmp.ge.f32.partialorder %v1559, 0.0
        %vm1576 = vcmp.ge.f32.partialorder %v1560, 0.0
        %vm1577 = vcmp.ge.f32.partialorder %v1561, 0.0
        %vm1578 = vcmp.ge.f32.partialorder %v1562, 0.0
        %vm1579 = vcmp.ge.f32.partialorder %v1563, 0.0
        %vm1580 = vcmp.ge.f32.partialorder %v1564, 0.0
        %vm1581 = vcmp.ge.f32.partialorder %v1565, 0.0
        %vm1582 = vcmp.ge.f32.partialorder %v1566, 0.0
        %vm1583 = vcmp.ge.f32.partialorder %v1567, 0.0
        %vm1584 = vcmp.ge.f32.partialorder %v1568, 0.0
        %vm1585 = vcmp.ge.f32.partialorder %v1569, 0.0
        %vm1586 = vcmp.ge.f32.partialorder %v1570, 0.0
        %vm1587 = vcmp.ge.f32.partialorder %v1571, 0.0
        %vm1588 = vcmp.ge.f32.partialorder %v1572, 0.0
        %v1589 = vmul.f32 %v1557, 0.2
        %v1590 = vmul.f32 %v1558, 0.2
        %v1591 = vmul.f32 %v1559, 0.2
        %v1592 = vmul.f32 %v1560, 0.2
        %v1593 = vmul.f32 %v1561, 0.2
        %v1594 = vmul.f32 %v1562, 0.2
        %v1595 = vmul.f32 %v1563, 0.2
        %v1596 = vmul.f32 %v1564, 0.2
        %v1597 = vmul.f32 %v1565, 0.2
        %v1598 = vmul.f32 %v1566, 0.2
        %v1599 = vmul.f32 %v1567, 0.2
        %v1600 = vmul.f32 %v1568, 0.2
        %v1601 = vmul.f32 %v1569, 0.2
        %v1602 = vmul.f32 %v1570, 0.2
        %v1603 = vmul.f32 %v1571, 0.2
        %v1604 = vmul.f32 %v1572, 0.2
        %v1605 = vsel %vm1573, %v1557, %v1589
        %v1606 = vsel %vm1574, %v1558, %v1590
        %v1607 = vsel %vm1575, %v1559, %v1591
        %v1608 = vsel %vm1576, %v1560, %v1592
        %v1609 = vsel %vm1577, %v1561, %v1593
        %v1610 = vsel %vm1578, %v1562, %v1594
        %v1611 = vsel %vm1579, %v1563, %v1595
        %v1612 = vsel %vm1580, %v1564, %v1596
        %v1613 = vsel %vm1581, %v1565, %v1597
        %v1614 = vsel %vm1582, %v1566, %v1598
        %v1615 = vsel %vm1583, %v1567, %v1599
        %v1616 = vsel %vm1584, %v1568, %v1600
        %v1617 = vsel %vm1585, %v1569, %v1601
        %v1618 = vsel %vm1586, %v1570, %v1602
        %v1619 = vsel %vm1587, %v1571, %v1603
        %v1620 = vsel %vm1588, %v1572, %v1604
        %1621 = vst [vmem:[%s4 + $0x180] sm:$0xff] %v1605
        %1622 = vst [vmem:[%s4 + $0x188] sm:$0xff] %v1606
        %1623 = vst [vmem:[%s4 + $0x190] sm:$0xff] %v1607
        %1624 = vst [vmem:[%s4 + $0x198] sm:$0xff] %v1608
        %1625 = vst [vmem:[%s4 + $0x1a0] sm:$0xff] %v1609
        %1626 = vst [vmem:[%s4 + $0x1a8] sm:$0xff] %v1610
        %1627 = vst [vmem:[%s4 + $0x1b0] sm:$0xff] %v1611
        %1628 = vst [vmem:[%s4 + $0x1b8] sm:$0xff] %v1612
        %1629 = vst [vmem:[%s4 + $0x1c0] sm:$0xff] %v1613
        %1630 = vst [vmem:[%s4 + $0x1c8] sm:$0xff] %v1614
        %1631 = vst [vmem:[%s4 + $0x1d0] sm:$0xff] %v1615
        %1632 = vst [vmem:[%s4 + $0x1d8] sm:$0xff] %v1616
        %1633 = vst [vmem:[%s4 + $0x1e0] sm:$0xff] %v1617
        %1634 = vst [vmem:[%s4 + $0x1e8] sm:$0xff] %v1618
        %1635 = vst [vmem:[%s4 + $0x1f0] sm:$0xff] %v1619
        %1636 = vst [vmem:[%s4 + $0x1f8] sm:$0xff] %v1620
        %v1637 = vld [vmem:[%s4 + $0x200] sm:$0xff]
        %v1638 = vld [vmem:[%s4 + $0x208] sm:$0xff]
        %v1639 = vld [vmem:[%s4 + $0x210] sm:$0xff]
        %v1640 = vld [vmem:[%s4 + $0x218] sm:$0xff]
        %v1641 = vld [vmem:[%s4 + $0x220] sm:$0xff]
        %v1642 = vld [vmem:[%s4 + $0x228] sm:$0xff]
        %v1643 = vld [vmem:[%s4 + $0x230] sm:$0xff]
        %v1644 = vld [vmem:[%s4 + $0x238] sm:$0xff]
        %v1645 = vld [vmem:[%s4 + $0x240] sm:$0xff]
        %v1646 = vld [vmem:[%s4 + $0x248] sm:$0xff]
        %v1647 = vld [vmem:[%s4 + $0x250] sm:$0xff]
        %v1648 = vld [vmem:[%s4 + $0x258] sm:$0xff]
        %v1649 = vld [vmem:[%s4 + $0x260] sm:$0xff]
        %v1650 = vld [vmem:[%s4 + $0x268] sm:$0xff]
        %v1651 = vld [vmem:[%s4 + $0x270] sm:$0xff]
        %v1652 = vld [vmem:[%s4 + $0x278] sm:$0xff]
        %v1653 = vmul.f32 %v1637, %v1197
        %v1654 = vmul.f32 %v1638, %v1197
        %v1655 = vmul.f32 %v1639, %v1197
        %v1656 = vmul.f32 %v1640, %v1197
        %v1657 = vmul.f32 %v1641, %v1197
        %v1658 = vmul.f32 %v1642, %v1197
        %v1659 = vmul.f32 %v1643, %v1197
        %v1660 = vmul.f32 %v1644, %v1197
        %v1661 = vmul.f32 %v1645, %v1197
        %v1662 = vmul.f32 %v1646, %v1197
        %v1663 = vmul.f32 %v1647, %v1197
        %v1664 = vmul.f32 %v1648, %v1197
        %v1665 = vmul.f32 %v1649, %v1197
        %v1666 = vmul.f32 %v1650, %v1197
        %v1667 = vmul.f32 %v1651, %v1197
        %v1668 = vmul.f32 %v1652, %v1197
        %v1669 = vadd.f32 %v1653, %v1219
        %v1670 = vadd.f32 %v1654, %v1219
        %v1671 = vadd.f32 %v1655, %v1219
        %v1672 = vadd.f32 %v1656, %v1219
        %v1673 = vadd.f32 %v1657, %v1219
        %v1674 = vadd.f32 %v1658, %v1219
        %v1675 = vadd.f32 %v1659, %v1219
        %v1676 = vadd.f32 %v1660, %v1219
        %v1677 = vadd.f32 %v1661, %v1219
        %v1678 = vadd.f32 %v1662, %v1219
        %v1679 = vadd.f32 %v1663, %v1219
        %v1680 = vadd.f32 %v1664, %v1219
        %v1681 = vadd.f32 %v1665, %v1219
        %v1682 = vadd.f32 %v1666, %v1219
        %v1683 = vadd.f32 %v1667, %v1219
        %v1684 = vadd.f32 %v1668, %v1219
        %vm1685 = vcmp.ge.f32.partialorder %v1669, 0.0
        %vm1686 = vcmp.ge.f32.partialorder %v1670, 0.0
        %vm1687 = vcmp.ge.f32.partialorder %v1671, 0.0
        %vm1688 = vcmp.ge.f32.partialorder %v1672, 0.0
        %vm1689 = vcmp.ge.f32.partialorder %v1673, 0.0
        %vm1690 = vcmp.ge.f32.partialorder %v1674, 0.0
        %vm1691 = vcmp.ge.f32.partialorder %v1675, 0.0
        %vm1692 = vcmp.ge.f32.partialorder %v1676, 0.0
        %vm1693 = vcmp.ge.f32.partialorder %v1677, 0.0
        %vm1694 = vcmp.ge.f32.partialorder %v1678, 0.0
        %vm1695 = vcmp.ge.f32.partialorder %v1679, 0.0
        %vm1696 = vcmp.ge.f32.partialorder %v1680, 0.0
        %vm1697 = vcmp.ge.f32.partialorder %v1681, 0.0
        %vm1698 = vcmp.ge.f32.partialorder %v1682, 0.0
        %vm1699 = vcmp.ge.f32.partialorder %v1683, 0.0
        %vm1700 = vcmp.ge.f32.partialorder %v1684, 0.0
        %v1701 = vmul.f32 %v1669, 0.2
        %v1702 = vmul.f32 %v1670, 0.2
        %v1703 = vmul.f32 %v1671, 0.2
        %v1704 = vmul.f32 %v1672, 0.2
        %v1705 = vmul.f32 %v1673, 0.2
        %v1706 = vmul.f32 %v1674, 0.2
        %v1707 = vmul.f32 %v1675, 0.2
        %v1708 = vmul.f32 %v1676, 0.2
        %v1709 = vmul.f32 %v1677, 0.2
        %v1710 = vmul.f32 %v1678, 0.2
        %v1711 = vmul.f32 %v1679, 0.2
        %v1712 = vmul.f32 %v1680, 0.2
        %v1713 = vmul.f32 %v1681, 0.2
        %v1714 = vmul.f32 %v1682, 0.2
        %v1715 = vmul.f32 %v1683, 0.2
        %v1716 = vmul.f32 %v1684, 0.2
        %v1717 = vsel %vm1685, %v1669, %v1701
        %v1718 = vsel %vm1686, %v1670, %v1702
        %v1719 = vsel %vm1687, %v1671, %v1703
        %v1720 = vsel %vm1688, %v1672, %v1704
        %v1721 = vsel %vm1689, %v1673, %v1705
        %v1722 = vsel %vm1690, %v1674, %v1706
        %v1723 = vsel %vm1691, %v1675, %v1707
        %v1724 = vsel %vm1692, %v1676, %v1708
        %v1725 = vsel %vm1693, %v1677, %v1709
        %v1726 = vsel %vm1694, %v1678, %v1710
        %v1727 = vsel %vm1695, %v1679, %v1711
        %v1728 = vsel %vm1696, %v1680, %v1712
        %v1729 = vsel %vm1697, %v1681, %v1713
        %v1730 = vsel %vm1698, %v1682, %v1714
        %v1731 = vsel %vm1699, %v1683, %v1715
        %v1732 = vsel %vm1700, %v1684, %v1716
        %1733 = vst [vmem:[%s4 + $0x200] sm:$0xff] %v1717
        %1734 = vst [vmem:[%s4 + $0x208] sm:$0xff] %v1718
        %1735 = vst [vmem:[%s4 + $0x210] sm:$0xff] %v1719
        %1736 = vst [vmem:[%s4 + $0x218] sm:$0xff] %v1720
        %1737 = vst [vmem:[%s4 + $0x220] sm:$0xff] %v1721
        %1738 = vst [vmem:[%s4 + $0x228] sm:$0xff] %v1722
        %1739 = vst [vmem:[%s4 + $0x230] sm:$0xff] %v1723
        %1740 = vst [vmem:[%s4 + $0x238] sm:$0xff] %v1724
        %1741 = vst [vmem:[%s4 + $0x240] sm:$0xff] %v1725
        %1742 = vst [vmem:[%s4 + $0x248] sm:$0xff] %v1726
        %1743 = vst [vmem:[%s4 + $0x250] sm:$0xff] %v1727
        %1744 = vst [vmem:[%s4 + $0x258] sm:$0xff] %v1728
        %1745 = vst [vmem:[%s4 + $0x260] sm:$0xff] %v1729
        %1746 = vst [vmem:[%s4 + $0x268] sm:$0xff] %v1730
        %1747 = vst [vmem:[%s4 + $0x270] sm:$0xff] %v1731
        %1748 = vst [vmem:[%s4 + $0x278] sm:$0xff] %v1732
        %v1749 = vld [vmem:[%s4 + $0x280] sm:$0xff]
        %v1750 = vld [vmem:[%s4 + $0x288] sm:$0xff]
        %v1751 = vld [vmem:[%s4 + $0x290] sm:$0xff]
        %v1752 = vld [vmem:[%s4 + $0x298] sm:$0xff]
        %v1753 = vld [vmem:[%s4 + $0x2a0] sm:$0xff]
        %v1754 = vld [vmem:[%s4 + $0x2a8] sm:$0xff]
        %v1755 = vld [vmem:[%s4 + $0x2b0] sm:$0xff]
        %v1756 = vld [vmem:[%s4 + $0x2b8] sm:$0xff]
        %v1757 = vld [vmem:[%s4 + $0x2c0] sm:$0xff]
        %v1758 = vld [vmem:[%s4 + $0x2c8] sm:$0xff]
        %v1759 = vld [vmem:[%s4 + $0x2d0] sm:$0xff]
        %v1760 = vld [vmem:[%s4 + $0x2d8] sm:$0xff]
        %v1761 = vld [vmem:[%s4 + $0x2e0] sm:$0xff]
        %v1762 = vld [vmem:[%s4 + $0x2e8] sm:$0xff]
        %v1763 = vld [vmem:[%s4 + $0x2f0] sm:$0xff]
        %v1764 = vld [vmem:[%s4 + $0x2f8] sm:$0xff]
        %v1765 = vmul.f32 %v1749, %v1197
        %v1766 = vmul.f32 %v1750, %v1197
        %v1767 = vmul.f32 %v1751, %v1197
        %v1768 = vmul.f32 %v1752, %v1197
        %v1769 = vmul.f32 %v1753, %v1197
        %v1770 = vmul.f32 %v1754, %v1197
        %v1771 = vmul.f32 %v1755, %v1197
        %v1772 = vmul.f32 %v1756, %v1197
        %v1773 = vmul.f32 %v1757, %v1197
        %v1774 = vmul.f32 %v1758, %v1197
        %v1775 = vmul.f32 %v1759, %v1197
        %v1776 = vmul.f32 %v1760, %v1197
        %v1777 = vmul.f32 %v1761, %v1197
        %v1778 = vmul.f32 %v1762, %v1197
        %v1779 = vmul.f32 %v1763, %v1197
        %v1780 = vmul.f32 %v1764, %v1197
        %v1781 = vadd.f32 %v1765, %v1219
        %v1782 = vadd.f32 %v1766, %v1219
        %v1783 = vadd.f32 %v1767, %v1219
        %v1784 = vadd.f32 %v1768, %v1219
        %v1785 = vadd.f32 %v1769, %v1219
        %v1786 = vadd.f32 %v1770, %v1219
        %v1787 = vadd.f32 %v1771, %v1219
        %v1788 = vadd.f32 %v1772, %v1219
        %v1789 = vadd.f32 %v1773, %v1219
        %v1790 = vadd.f32 %v1774, %v1219
        %v1791 = vadd.f32 %v1775, %v1219
        %v1792 = vadd.f32 %v1776, %v1219
        %v1793 = vadd.f32 %v1777, %v1219
        %v1794 = vadd.f32 %v1778, %v1219
        %v1795 = vadd.f32 %v1779, %v1219
        %v1796 = vadd.f32 %v1780, %v1219
        %vm1797 = vcmp.ge.f32.partialorder %v1781, 0.0
        %vm1798 = vcmp.ge.f32.partialorder %v1782, 0.0
        %vm1799 = vcmp.ge.f32.partialorder %v1783, 0.0
        %vm1800 = vcmp.ge.f32.partialorder %v1784, 0.0
        %vm1801 = vcmp.ge.f32.partialorder %v1785, 0.0
        %vm1802 = vcmp.ge.f32.partialorder %v1786, 0.0
        %vm1803 = vcmp.ge.f32.partialorder %v1787, 0.0
        %vm1804 = vcmp.ge.f32.partialorder %v1788, 0.0
        %vm1805 = vcmp.ge.f32.partialorder %v1789, 0.0
        %vm1806 = vcmp.ge.f32.partialorder %v1790, 0.0
        %vm1807 = vcmp.ge.f32.partialorder %v1791, 0.0
        %vm1808 = vcmp.ge.f32.partialorder %v1792, 0.0
        %vm1809 = vcmp.ge.f32.partialorder %v1793, 0.0
        %vm1810 = vcmp.ge.f32.partialorder %v1794, 0.0
        %vm1811 = vcmp.ge.f32.partialorder %v1795, 0.0
        %vm1812 = vcmp.ge.f32.partialorder %v1796, 0.0
        %v1813 = vmul.f32 %v1781, 0.2
        %v1814 = vmul.f32 %v1782, 0.2
        %v1815 = vmul.f32 %v1783, 0.2
        %v1816 = vmul.f32 %v1784, 0.2
        %v1817 = vmul.f32 %v1785, 0.2
        %v1818 = vmul.f32 %v1786, 0.2
        %v1819 = vmul.f32 %v1787, 0.2
        %v1820 = vmul.f32 %v1788, 0.2
        %v1821 = vmul.f32 %v1789, 0.2
        %v1822 = vmul.f32 %v1790, 0.2
        %v1823 = vmul.f32 %v1791, 0.2
        %v1824 = vmul.f32 %v1792, 0.2
        %v1825 = vmul.f32 %v1793, 0.2
        %v1826 = vmul.f32 %v1794, 0.2
        %v1827 = vmul.f32 %v1795, 0.2
        %v1828 = vmul.f32 %v1796, 0.2
        %v1829 = vsel %vm1797, %v1781, %v1813
        %v1830 = vsel %vm1798, %v1782, %v1814
        %v1831 = vsel %vm1799, %v1783, %v1815
        %v1832 = vsel %vm1800, %v1784, %v1816
        %v1833 = vsel %vm1801, %v1785, %v1817
        %v1834 = vsel %vm1802, %v1786, %v1818
        %v1835 = vsel %vm1803, %v1787, %v1819
        %v1836 = vsel %vm1804, %v1788, %v1820
        %v1837 = vsel %vm1805, %v1789, %v1821
        %v1838 = vsel %vm1806, %v1790, %v1822
        %v1839 = vsel %vm1807, %v1791, %v1823
        %v1840 = vsel %vm1808, %v1792, %v1824
        %v1841 = vsel %vm1809, %v1793, %v1825
        %v1842 = vsel %vm1810, %v1794, %v1826
        %v1843 = vsel %vm1811, %v1795, %v1827
        %v1844 = vsel %vm1812, %v1796, %v1828
        %1845 = vst [vmem:[%s4 + $0x280] sm:$0xff] %v1829
        %1846 = vst [vmem:[%s4 + $0x288] sm:$0xff] %v1830
        %1847 = vst [vmem:[%s4 + $0x290] sm:$0xff] %v1831
        %1848 = vst [vmem:[%s4 + $0x298] sm:$0xff] %v1832
        %1849 = vst [vmem:[%s4 + $0x2a0] sm:$0xff] %v1833
        %1850 = vst [vmem:[%s4 + $0x2a8] sm:$0xff] %v1834
        %1851 = vst [vmem:[%s4 + $0x2b0] sm:$0xff] %v1835
        %1852 = vst [vmem:[%s4 + $0x2b8] sm:$0xff] %v1836
        %1853 = vst [vmem:[%s4 + $0x2c0] sm:$0xff] %v1837
        %1854 = vst [vmem:[%s4 + $0x2c8] sm:$0xff] %v1838
        %1855 = vst [vmem:[%s4 + $0x2d0] sm:$0xff] %v1839
        %1856 = vst [vmem:[%s4 + $0x2d8] sm:$0xff] %v1840
        %1857 = vst [vmem:[%s4 + $0x2e0] sm:$0xff] %v1841
        %1858 = vst [vmem:[%s4 + $0x2e8] sm:$0xff] %v1842
        %1859 = vst [vmem:[%s4 + $0x2f0] sm:$0xff] %v1843
        %1860 = vst [vmem:[%s4 + $0x2f8] sm:$0xff] %v1844
        %v1861 = vld [vmem:[%s4 + $0x300] sm:$0xff]
        %v1862 = vld [vmem:[%s4 + $0x308] sm:$0xff]
        %v1863 = vld [vmem:[%s4 + $0x310] sm:$0xff]
        %v1864 = vld [vmem:[%s4 + $0x318] sm:$0xff]
        %v1865 = vld [vmem:[%s4 + $0x320] sm:$0xff]
        %v1866 = vld [vmem:[%s4 + $0x328] sm:$0xff]
        %v1867 = vld [vmem:[%s4 + $0x330] sm:$0xff]
        %v1868 = vld [vmem:[%s4 + $0x338] sm:$0xff]
        %v1869 = vld [vmem:[%s4 + $0x340] sm:$0xff]
        %v1870 = vld [vmem:[%s4 + $0x348] sm:$0xff]
        %v1871 = vld [vmem:[%s4 + $0x350] sm:$0xff]
        %v1872 = vld [vmem:[%s4 + $0x358] sm:$0xff]
        %v1873 = vld [vmem:[%s4 + $0x360] sm:$0xff]
        %v1874 = vld [vmem:[%s4 + $0x368] sm:$0xff]
        %v1875 = vld [vmem:[%s4 + $0x370] sm:$0xff]
        %v1876 = vld [vmem:[%s4 + $0x378] sm:$0xff]
        %v1877 = vmul.f32 %v1861, %v1197
        %v1878 = vmul.f32 %v1862, %v1197
        %v1879 = vmul.f32 %v1863, %v1197
        %v1880 = vmul.f32 %v1864, %v1197
        %v1881 = vmul.f32 %v1865, %v1197
        %v1882 = vmul.f32 %v1866, %v1197
        %v1883 = vmul.f32 %v1867, %v1197
        %v1884 = vmul.f32 %v1868, %v1197
        %v1885 = vmul.f32 %v1869, %v1197
        %v1886 = vmul.f32 %v1870, %v1197
        %v1887 = vmul.f32 %v1871, %v1197
        %v1888 = vmul.f32 %v1872, %v1197
        %v1889 = vmul.f32 %v1873, %v1197
        %v1890 = vmul.f32 %v1874, %v1197
        %v1891 = vmul.f32 %v1875, %v1197
        %v1892 = vmul.f32 %v1876, %v1197
        %v1893 = vadd.f32 %v1877, %v1219
        %v1894 = vadd.f32 %v1878, %v1219
        %v1895 = vadd.f32 %v1879, %v1219
        %v1896 = vadd.f32 %v1880, %v1219
        %v1897 = vadd.f32 %v1881, %v1219
        %v1898 = vadd.f32 %v1882, %v1219
        %v1899 = vadd.f32 %v1883, %v1219
        %v1900 = vadd.f32 %v1884, %v1219
        %v1901 = vadd.f32 %v1885, %v1219
        %v1902 = vadd.f32 %v1886, %v1219
        %v1903 = vadd.f32 %v1887, %v1219
        %v1904 = vadd.f32 %v1888, %v1219
        %v1905 = vadd.f32 %v1889, %v1219
        %v1906 = vadd.f32 %v1890, %v1219
        %v1907 = vadd.f32 %v1891, %v1219
        %v1908 = vadd.f32 %v1892, %v1219
        %vm1909 = vcmp.ge.f32.partialorder %v1893, 0.0
        %vm1910 = vcmp.ge.f32.partialorder %v1894, 0.0
        %vm1911 = vcmp.ge.f32.partialorder %v1895, 0.0
        %vm1912 = vcmp.ge.f32.partialorder %v1896, 0.0
        %vm1913 = vcmp.ge.f32.partialorder %v1897, 0.0
        %vm1914 = vcmp.ge.f32.partialorder %v1898, 0.0
        %vm1915 = vcmp.ge.f32.partialorder %v1899, 0.0
        %vm1916 = vcmp.ge.f32.partialorder %v1900, 0.0
        %vm1917 = vcmp.ge.f32.partialorder %v1901, 0.0
        %vm1918 = vcmp.ge.f32.partialorder %v1902, 0.0
        %vm1919 = vcmp.ge.f32.partialorder %v1903, 0.0
        %vm1920 = vcmp.ge.f32.partialorder %v1904, 0.0
        %vm1921 = vcmp.ge.f32.partialorder %v1905, 0.0
        %vm1922 = vcmp.ge.f32.partialorder %v1906, 0.0
        %vm1923 = vcmp.ge.f32.partialorder %v1907, 0.0
        %vm1924 = vcmp.ge.f32.partialorder %v1908, 0.0
        %v1925 = vmul.f32 %v1893, 0.2
        %v1926 = vmul.f32 %v1894, 0.2
        %v1927 = vmul.f32 %v1895, 0.2
        %v1928 = vmul.f32 %v1896, 0.2
        %v1929 = vmul.f32 %v1897, 0.2
        %v1930 = vmul.f32 %v1898, 0.2
        %v1931 = vmul.f32 %v1899, 0.2
        %v1932 = vmul.f32 %v1900, 0.2
        %v1933 = vmul.f32 %v1901, 0.2
        %v1934 = vmul.f32 %v1902, 0.2
        %v1935 = vmul.f32 %v1903, 0.2
        %v1936 = vmul.f32 %v1904, 0.2
        %v1937 = vmul.f32 %v1905, 0.2
        %v1938 = vmul.f32 %v1906, 0.2
        %v1939 = vmul.f32 %v1907, 0.2
        %v1940 = vmul.f32 %v1908, 0.2
        %v1941 = vsel %vm1909, %v1893, %v1925
        %v1942 = vsel %vm1910, %v1894, %v1926
        %v1943 = vsel %vm1911, %v1895, %v1927
        %v1944 = vsel %vm1912, %v1896, %v1928
        %v1945 = vsel %vm1913, %v1897, %v1929
        %v1946 = vsel %vm1914, %v1898, %v1930
        %v1947 = vsel %vm1915, %v1899, %v1931
        %v1948 = vsel %vm1916, %v1900, %v1932
        %v1949 = vsel %vm1917, %v1901, %v1933
        %v1950 = vsel %vm1918, %v1902, %v1934
        %v1951 = vsel %vm1919, %v1903, %v1935
        %v1952 = vsel %vm1920, %v1904, %v1936
        %v1953 = vsel %vm1921, %v1905, %v1937
        %v1954 = vsel %vm1922, %v1906, %v1938
        %v1955 = vsel %vm1923, %v1907, %v1939
        %v1956 = vsel %vm1924, %v1908, %v1940
        %1957 = vst [vmem:[%s4 + $0x300] sm:$0xff] %v1941
        %1958 = vst [vmem:[%s4 + $0x308] sm:$0xff] %v1942
        %1959 = vst [vmem:[%s4 + $0x310] sm:$0xff] %v1943
        %1960 = vst [vmem:[%s4 + $0x318] sm:$0xff] %v1944
        %1961 = vst [vmem:[%s4 + $0x320] sm:$0xff] %v1945
        %1962 = vst [vmem:[%s4 + $0x328] sm:$0xff] %v1946
        %1963 = vst [vmem:[%s4 + $0x330] sm:$0xff] %v1947
        %1964 = vst [vmem:[%s4 + $0x338] sm:$0xff] %v1948
        %1965 = vst [vmem:[%s4 + $0x340] sm:$0xff] %v1949
        %1966 = vst [vmem:[%s4 + $0x348] sm:$0xff] %v1950
        %1967 = vst [vmem:[%s4 + $0x350] sm:$0xff] %v1951
        %1968 = vst [vmem:[%s4 + $0x358] sm:$0xff] %v1952
        %1969 = vst [vmem:[%s4 + $0x360] sm:$0xff] %v1953
        %1970 = vst [vmem:[%s4 + $0x368] sm:$0xff] %v1954
        %1971 = vst [vmem:[%s4 + $0x370] sm:$0xff] %v1955
        %1972 = vst [vmem:[%s4 + $0x378] sm:$0xff] %v1956
        %v1973 = vld [vmem:[%s4 + $0x380] sm:$0xff]
        %v1974 = vld [vmem:[%s4 + $0x388] sm:$0xff]
        %v1975 = vld [vmem:[%s4 + $0x390] sm:$0xff]
        %v1976 = vld [vmem:[%s4 + $0x398] sm:$0xff]
        %v1977 = vld [vmem:[%s4 + $0x3a0] sm:$0xff]
        %v1978 = vld [vmem:[%s4 + $0x3a8] sm:$0xff]
        %v1979 = vld [vmem:[%s4 + $0x3b0] sm:$0xff]
        %v1980 = vld [vmem:[%s4 + $0x3b8] sm:$0xff]
        %v1981 = vld [vmem:[%s4 + $0x3c0] sm:$0xff]
        %v1982 = vld [vmem:[%s4 + $0x3c8] sm:$0xff]
        %v1983 = vld [vmem:[%s4 + $0x3d0] sm:$0xff]
        %v1984 = vld [vmem:[%s4 + $0x3d8] sm:$0xff]
        %v1985 = vld [vmem:[%s4 + $0x3e0] sm:$0xff]
        %v1986 = vld [vmem:[%s4 + $0x3e8] sm:$0xff]
        %v1987 = vld [vmem:[%s4 + $0x3f0] sm:$0xff]
        %v1988 = vld [vmem:[%s4 + $0x3f8] sm:$0xff]
        %v1989 = vmul.f32 %v1973, %v1197
        %v1990 = vmul.f32 %v1974, %v1197
        %v1991 = vmul.f32 %v1975, %v1197
        %v1992 = vmul.f32 %v1976, %v1197
        %v1993 = vmul.f32 %v1977, %v1197
        %v1994 = vmul.f32 %v1978, %v1197
        %v1995 = vmul.f32 %v1979, %v1197
        %v1996 = vmul.f32 %v1980, %v1197
        %v1997 = vmul.f32 %v1981, %v1197
        %v1998 = vmul.f32 %v1982, %v1197
        %v1999 = vmul.f32 %v1983, %v1197
        %v2000 = vmul.f32 %v1984, %v1197
        %v2001 = vmul.f32 %v1985, %v1197
        %v2002 = vmul.f32 %v1986, %v1197
        %v2003 = vmul.f32 %v1987, %v1197
        %v2004 = vmul.f32 %v1988, %v1197
        %v2005 = vadd.f32 %v1989, %v1219
        %v2006 = vadd.f32 %v1990, %v1219
        %v2007 = vadd.f32 %v1991, %v1219
        %v2008 = vadd.f32 %v1992, %v1219
        %v2009 = vadd.f32 %v1993, %v1219
        %v2010 = vadd.f32 %v1994, %v1219
        %v2011 = vadd.f32 %v1995, %v1219
        %v2012 = vadd.f32 %v1996, %v1219
        %v2013 = vadd.f32 %v1997, %v1219
        %v2014 = vadd.f32 %v1998, %v1219
        %v2015 = vadd.f32 %v1999, %v1219
        %v2016 = vadd.f32 %v2000, %v1219
        %v2017 = vadd.f32 %v2001, %v1219
        %v2018 = vadd.f32 %v2002, %v1219
        %v2019 = vadd.f32 %v2003, %v1219
        %v2020 = vadd.f32 %v2004, %v1219
        %vm2021 = vcmp.ge.f32.partialorder %v2005, 0.0
        %vm2022 = vcmp.ge.f32.partialorder %v2006, 0.0
        %vm2023 = vcmp.ge.f32.partialorder %v2007, 0.0
        %vm2024 = vcmp.ge.f32.partialorder %v2008, 0.0
        %vm2025 = vcmp.ge.f32.partialorder %v2009, 0.0
        %vm2026 = vcmp.ge.f32.partialorder %v2010, 0.0
        %vm2027 = vcmp.ge.f32.partialorder %v2011, 0.0
        %vm2028 = vcmp.ge.f32.partialorder %v2012, 0.0
        %vm2029 = vcmp.ge.f32.partialorder %v2013, 0.0
        %vm2030 = vcmp.ge.f32.partialorder %v2014, 0.0
        %vm2031 = vcmp.ge.f32.partialorder %v2015, 0.0
        %vm2032 = vcmp.ge.f32.partialorder %v2016, 0.0
        %vm2033 = vcmp.ge.f32.partialorder %v2017, 0.0
        %vm2034 = vcmp.ge.f32.partialorder %v2018, 0.0
        %vm2035 = vcmp.ge.f32.partialorder %v2019, 0.0
        %vm2036 = vcmp.ge.f32.partialorder %v2020, 0.0
        %v2037 = vmul.f32 %v2005, 0.2
        %v2038 = vmul.f32 %v2006, 0.2
        %v2039 = vmul.f32 %v2007, 0.2
        %v2040 = vmul.f32 %v2008, 0.2
        %v2041 = vmul.f32 %v2009, 0.2
        %v2042 = vmul.f32 %v2010, 0.2
        %v2043 = vmul.f32 %v2011, 0.2
        %v2044 = vmul.f32 %v2012, 0.2
        %v2045 = vmul.f32 %v2013, 0.2
        %v2046 = vmul.f32 %v2014, 0.2
        %v2047 = vmul.f32 %v2015, 0.2
        %v2048 = vmul.f32 %v2016, 0.2
        %v2049 = vmul.f32 %v2017, 0.2
        %v2050 = vmul.f32 %v2018, 0.2
        %v2051 = vmul.f32 %v2019, 0.2
        %v2052 = vmul.f32 %v2020, 0.2
        %v2053 = vsel %vm2021, %v2005, %v2037
        %v2054 = vsel %vm2022, %v2006, %v2038
        %v2055 = vsel %vm2023, %v2007, %v2039
        %v2056 = vsel %vm2024, %v2008, %v2040
        %v2057 = vsel %vm2025, %v2009, %v2041
        %v2058 = vsel %vm2026, %v2010, %v2042
        %v2059 = vsel %vm2027, %v2011, %v2043
        %v2060 = vsel %vm2028, %v2012, %v2044
        %v2061 = vsel %vm2029, %v2013, %v2045
        %v2062 = vsel %vm2030, %v2014, %v2046
        %v2063 = vsel %vm2031, %v2015, %v2047
        %v2064 = vsel %vm2032, %v2016, %v2048
        %v2065 = vsel %vm2033, %v2017, %v2049
        %v2066 = vsel %vm2034, %v2018, %v2050
        %v2067 = vsel %vm2035, %v2019, %v2051
        %v2068 = vsel %vm2036, %v2020, %v2052
        %2069 = vst [vmem:[%s4 + $0x380] sm:$0xff] %v2053
        %2070 = vst [vmem:[%s4 + $0x388] sm:$0xff] %v2054
        %2071 = vst [vmem:[%s4 + $0x390] sm:$0xff] %v2055
        %2072 = vst [vmem:[%s4 + $0x398] sm:$0xff] %v2056
        %2073 = vst [vmem:[%s4 + $0x3a0] sm:$0xff] %v2057
        %2074 = vst [vmem:[%s4 + $0x3a8] sm:$0xff] %v2058
        %2075 = vst [vmem:[%s4 + $0x3b0] sm:$0xff] %v2059
        %2076 = vst [vmem:[%s4 + $0x3b8] sm:$0xff] %v2060
        %2077 = vst [vmem:[%s4 + $0x3c0] sm:$0xff] %v2061
        %2078 = vst [vmem:[%s4 + $0x3c8] sm:$0xff] %v2062
        %2079 = vst [vmem:[%s4 + $0x3d0] sm:$0xff] %v2063
        %2080 = vst [vmem:[%s4 + $0x3d8] sm:$0xff] %v2064
        %2081 = vst [vmem:[%s4 + $0x3e0] sm:$0xff] %v2065
        %2082 = vst [vmem:[%s4 + $0x3e8] sm:$0xff] %v2066
        %2083 = vst [vmem:[%s4 + $0x3f0] sm:$0xff] %v2067
        %2084 = vst [vmem:[%s4 + $0x3f8] sm:$0xff] %v2068
        %v2085 = vld [vmem:[%s4 + $0x400] sm:$0xff]
        %v2086 = vld [vmem:[%s4 + $0x408] sm:$0xff]
        %v2087 = vld [vmem:[%s4 + $0x410] sm:$0xff]
        %v2088 = vld [vmem:[%s4 + $0x418] sm:$0xff]
        %v2089 = vld [vmem:[%s4 + $0x420] sm:$0xff]
        %v2090 = vld [vmem:[%s4 + $0x428] sm:$0xff]
        %v2091 = vld [vmem:[%s4 + $0x430] sm:$0xff]
        %v2092 = vld [vmem:[%s4 + $0x438] sm:$0xff]
        %v2093 = vld [vmem:[%s4 + $0x440] sm:$0xff]
        %v2094 = vld [vmem:[%s4 + $0x448] sm:$0xff]
        %v2095 = vld [vmem:[%s4 + $0x450] sm:$0xff]
        %v2096 = vld [vmem:[%s4 + $0x458] sm:$0xff]
        %v2097 = vld [vmem:[%s4 + $0x460] sm:$0xff]
        %v2098 = vld [vmem:[%s4 + $0x468] sm:$0xff]
        %v2099 = vld [vmem:[%s4 + $0x470] sm:$0xff]
        %v2100 = vld [vmem:[%s4 + $0x478] sm:$0xff]
        %v2101 = vmul.f32 %v2085, %v1197
        %v2102 = vmul.f32 %v2086, %v1197
        %v2103 = vmul.f32 %v2087, %v1197
        %v2104 = vmul.f32 %v2088, %v1197
        %v2105 = vmul.f32 %v2089, %v1197
        %v2106 = vmul.f32 %v2090, %v1197
        %v2107 = vmul.f32 %v2091, %v1197
        %v2108 = vmul.f32 %v2092, %v1197
        %v2109 = vmul.f32 %v2093, %v1197
        %v2110 = vmul.f32 %v2094, %v1197
        %v2111 = vmul.f32 %v2095, %v1197
        %v2112 = vmul.f32 %v2096, %v1197
        %v2113 = vmul.f32 %v2097, %v1197
        %v2114 = vmul.f32 %v2098, %v1197
        %v2115 = vmul.f32 %v2099, %v1197
        %v2116 = vmul.f32 %v2100, %v1197
        %v2117 = vadd.f32 %v2101, %v1219
        %v2118 = vadd.f32 %v2102, %v1219
        %v2119 = vadd.f32 %v2103, %v1219
        %v2120 = vadd.f32 %v2104, %v1219
        %v2121 = vadd.f32 %v2105, %v1219
        %v2122 = vadd.f32 %v2106, %v1219
        %v2123 = vadd.f32 %v2107, %v1219
        %v2124 = vadd.f32 %v2108, %v1219
        %v2125 = vadd.f32 %v2109, %v1219
        %v2126 = vadd.f32 %v2110, %v1219
        %v2127 = vadd.f32 %v2111, %v1219
        %v2128 = vadd.f32 %v2112, %v1219
        %v2129 = vadd.f32 %v2113, %v1219
        %v2130 = vadd.f32 %v2114, %v1219
        %v2131 = vadd.f32 %v2115, %v1219
        %v2132 = vadd.f32 %v2116, %v1219
        %vm2133 = vcmp.ge.f32.partialorder %v2117, 0.0
        %vm2134 = vcmp.ge.f32.partialorder %v2118, 0.0
        %vm2135 = vcmp.ge.f32.partialorder %v2119, 0.0
        %vm2136 = vcmp.ge.f32.partialorder %v2120, 0.0
        %vm2137 = vcmp.ge.f32.partialorder %v2121, 0.0
        %vm2138 = vcmp.ge.f32.partialorder %v2122, 0.0
        %vm2139 = vcmp.ge.f32.partialorder %v2123, 0.0
        %vm2140 = vcmp.ge.f32.partialorder %v2124, 0.0
        %vm2141 = vcmp.ge.f32.partialorder %v2125, 0.0
        %vm2142 = vcmp.ge.f32.partialorder %v2126, 0.0
        %vm2143 = vcmp.ge.f32.partialorder %v2127, 0.0
        %vm2144 = vcmp.ge.f32.partialorder %v2128, 0.0
        %vm2145 = vcmp.ge.f32.partialorder %v2129, 0.0
        %vm2146 = vcmp.ge.f32.partialorder %v2130, 0.0
        %vm2147 = vcmp.ge.f32.partialorder %v2131, 0.0
        %vm2148 = vcmp.ge.f32.partialorder %v2132, 0.0
        %v2149 = vmul.f32 %v2117, 0.2
        %v2150 = vmul.f32 %v2118, 0.2
        %v2151 = vmul.f32 %v2119, 0.2
        %v2152 = vmul.f32 %v2120, 0.2
        %v2153 = vmul.f32 %v2121, 0.2
        %v2154 = vmul.f32 %v2122, 0.2
        %v2155 = vmul.f32 %v2123, 0.2
        %v2156 = vmul.f32 %v2124, 0.2
        %v2157 = vmul.f32 %v2125, 0.2
        %v2158 = vmul.f32 %v2126, 0.2
        %v2159 = vmul.f32 %v2127, 0.2
        %v2160 = vmul.f32 %v2128, 0.2
        %v2161 = vmul.f32 %v2129, 0.2
        %v2162 = vmul.f32 %v2130, 0.2
        %v2163 = vmul.f32 %v2131, 0.2
        %v2164 = vmul.f32 %v2132, 0.2
        %v2165 = vsel %vm2133, %v2117, %v2149
        %v2166 = vsel %vm2134, %v2118, %v2150
        %v2167 = vsel %vm2135, %v2119, %v2151
        %v2168 = vsel %vm2136, %v2120, %v2152
        %v2169 = vsel %vm2137, %v2121, %v2153
        %v2170 = vsel %vm2138, %v2122, %v2154
        %v2171 = vsel %vm2139, %v2123, %v2155
        %v2172 = vsel %vm2140, %v2124, %v2156
        %v2173 = vsel %vm2141, %v2125, %v2157
        %v2174 = vsel %vm2142, %v2126, %v2158
        %v2175 = vsel %vm2143, %v2127, %v2159
        %v2176 = vsel %vm2144, %v2128, %v2160
        %v2177 = vsel %vm2145, %v2129, %v2161
        %v2178 = vsel %vm2146, %v2130, %v2162
        %v2179 = vsel %vm2147, %v2131, %v2163
        %v2180 = vsel %vm2148, %v2132, %v2164
        %2181 = vst [vmem:[%s4 + $0x400] sm:$0xff] %v2165
        %2182 = vst [vmem:[%s4 + $0x408] sm:$0xff] %v2166
        %2183 = vst [vmem:[%s4 + $0x410] sm:$0xff] %v2167
        %2184 = vst [vmem:[%s4 + $0x418] sm:$0xff] %v2168
        %2185 = vst [vmem:[%s4 + $0x420] sm:$0xff] %v2169
        %2186 = vst [vmem:[%s4 + $0x428] sm:$0xff] %v2170
        %2187 = vst [vmem:[%s4 + $0x430] sm:$0xff] %v2171
        %2188 = vst [vmem:[%s4 + $0x438] sm:$0xff] %v2172
        %2189 = vst [vmem:[%s4 + $0x440] sm:$0xff] %v2173
        %2190 = vst [vmem:[%s4 + $0x448] sm:$0xff] %v2174
        %2191 = vst [vmem:[%s4 + $0x450] sm:$0xff] %v2175
        %2192 = vst [vmem:[%s4 + $0x458] sm:$0xff] %v2176
        %2193 = vst [vmem:[%s4 + $0x460] sm:$0xff] %v2177
        %2194 = vst [vmem:[%s4 + $0x468] sm:$0xff] %v2178
        %2195 = vst [vmem:[%s4 + $0x470] sm:$0xff] %v2179
        %2196 = vst [vmem:[%s4 + $0x478] sm:$0xff] %v2180
        %v2197 = vld [vmem:[%s4 + $0x480] sm:$0xff]
        %v2198 = vld [vmem:[%s4 + $0x488] sm:$0xff]
        %v2199 = vld [vmem:[%s4 + $0x490] sm:$0xff]
        %v2200 = vld [vmem:[%s4 + $0x498] sm:$0xff]
        %v2201 = vld [vmem:[%s4 + $0x4a0] sm:$0xff]
        %v2202 = vld [vmem:[%s4 + $0x4a8] sm:$0xff]
        %v2203 = vld [vmem:[%s4 + $0x4b0] sm:$0xff]
        %v2204 = vld [vmem:[%s4 + $0x4b8] sm:$0xff]
        %v2205 = vld [vmem:[%s4 + $0x4c0] sm:$0xff]
        %v2206 = vld [vmem:[%s4 + $0x4c8] sm:$0xff]
        %v2207 = vld [vmem:[%s4 + $0x4d0] sm:$0xff]
        %v2208 = vld [vmem:[%s4 + $0x4d8] sm:$0xff]
        %v2209 = vld [vmem:[%s4 + $0x4e0] sm:$0xff]
        %v2210 = vld [vmem:[%s4 + $0x4e8] sm:$0xff]
        %v2211 = vld [vmem:[%s4 + $0x4f0] sm:$0xff]
        %v2212 = vld [vmem:[%s4 + $0x4f8] sm:$0xff]
        %v2213 = vmul.f32 %v2197, %v1197
        %v2214 = vmul.f32 %v2198, %v1197
        %v2215 = vmul.f32 %v2199, %v1197
        %v2216 = vmul.f32 %v2200, %v1197
        %v2217 = vmul.f32 %v2201, %v1197
        %v2218 = vmul.f32 %v2202, %v1197
        %v2219 = vmul.f32 %v2203, %v1197
        %v2220 = vmul.f32 %v2204, %v1197
        %v2221 = vmul.f32 %v2205, %v1197
        %v2222 = vmul.f32 %v2206, %v1197
        %v2223 = vmul.f32 %v2207, %v1197
        %v2224 = vmul.f32 %v2208, %v1197
        %v2225 = vmul.f32 %v2209, %v1197
        %v2226 = vmul.f32 %v2210, %v1197
        %v2227 = vmul.f32 %v2211, %v1197
        %v2228 = vmul.f32 %v2212, %v1197
        %v2229 = vadd.f32 %v2213, %v1219
        %v2230 = vadd.f32 %v2214, %v1219
        %v2231 = vadd.f32 %v2215, %v1219
        %v2232 = vadd.f32 %v2216, %v1219
        %v2233 = vadd.f32 %v2217, %v1219
        %v2234 = vadd.f32 %v2218, %v1219
        %v2235 = vadd.f32 %v2219, %v1219
        %v2236 = vadd.f32 %v2220, %v1219
        %v2237 = vadd.f32 %v2221, %v1219
        %v2238 = vadd.f32 %v2222, %v1219
        %v2239 = vadd.f32 %v2223, %v1219
        %v2240 = vadd.f32 %v2224, %v1219
        %v2241 = vadd.f32 %v2225, %v1219
        %v2242 = vadd.f32 %v2226, %v1219
        %v2243 = vadd.f32 %v2227, %v1219
        %v2244 = vadd.f32 %v2228, %v1219
        %vm2245 = vcmp.ge.f32.partialorder %v2229, 0.0
        %vm2246 = vcmp.ge.f32.partialorder %v2230, 0.0
        %vm2247 = vcmp.ge.f32.partialorder %v2231, 0.0
        %vm2248 = vcmp.ge.f32.partialorder %v2232, 0.0
        %vm2249 = vcmp.ge.f32.partialorder %v2233, 0.0
        %vm2250 = vcmp.ge.f32.partialorder %v2234, 0.0
        %vm2251 = vcmp.ge.f32.partialorder %v2235, 0.0
        %vm2252 = vcmp.ge.f32.partialorder %v2236, 0.0
        %vm2253 = vcmp.ge.f32.partialorder %v2237, 0.0
        %vm2254 = vcmp.ge.f32.partialorder %v2238, 0.0
        %vm2255 = vcmp.ge.f32.partialorder %v2239, 0.0
        %vm2256 = vcmp.ge.f32.partialorder %v2240, 0.0
        %vm2257 = vcmp.ge.f32.partialorder %v2241, 0.0
        %vm2258 = vcmp.ge.f32.partialorder %v2242, 0.0
        %vm2259 = vcmp.ge.f32.partialorder %v2243, 0.0
        %vm2260 = vcmp.ge.f32.partialorder %v2244, 0.0
        %v2261 = vmul.f32 %v2229, 0.2
        %v2262 = vmul.f32 %v2230, 0.2
        %v2263 = vmul.f32 %v2231, 0.2
        %v2264 = vmul.f32 %v2232, 0.2
        %v2265 = vmul.f32 %v2233, 0.2
        %v2266 = vmul.f32 %v2234, 0.2
        %v2267 = vmul.f32 %v2235, 0.2
        %v2268 = vmul.f32 %v2236, 0.2
        %v2269 = vmul.f32 %v2237, 0.2
        %v2270 = vmul.f32 %v2238, 0.2
        %v2271 = vmul.f32 %v2239, 0.2
        %v2272 = vmul.f32 %v2240, 0.2
        %v2273 = vmul.f32 %v2241, 0.2
        %v2274 = vmul.f32 %v2242, 0.2
        %v2275 = vmul.f32 %v2243, 0.2
        %v2276 = vmul.f32 %v2244, 0.2
        %v2277 = vsel %vm2245, %v2229, %v2261
        %v2278 = vsel %vm2246, %v2230, %v2262
        %v2279 = vsel %vm2247, %v2231, %v2263
        %v2280 = vsel %vm2248, %v2232, %v2264
        %v2281 = vsel %vm2249, %v2233, %v2265
        %v2282 = vsel %vm2250, %v2234, %v2266
        %v2283 = vsel %vm2251, %v2235, %v2267
        %v2284 = vsel %vm2252, %v2236, %v2268
        %v2285 = vsel %vm2253, %v2237, %v2269
        %v2286 = vsel %vm2254, %v2238, %v2270
        %v2287 = vsel %vm2255, %v2239, %v2271
        %v2288 = vsel %vm2256, %v2240, %v2272
        %v2289 = vsel %vm2257, %v2241, %v2273
        %v2290 = vsel %vm2258, %v2242, %v2274
        %v2291 = vsel %vm2259, %v2243, %v2275
        %v2292 = vsel %vm2260, %v2244, %v2276
        %2293 = vst [vmem:[%s4 + $0x480] sm:$0xff] %v2277
        %2294 = vst [vmem:[%s4 + $0x488] sm:$0xff] %v2278
        %2295 = vst [vmem:[%s4 + $0x490] sm:$0xff] %v2279
        %2296 = vst [vmem:[%s4 + $0x498] sm:$0xff] %v2280
        %2297 = vst [vmem:[%s4 + $0x4a0] sm:$0xff] %v2281
        %2298 = vst [vmem:[%s4 + $0x4a8] sm:$0xff] %v2282
        %2299 = vst [vmem:[%s4 + $0x4b0] sm:$0xff] %v2283
        %2300 = vst [vmem:[%s4 + $0x4b8] sm:$0xff] %v2284
        %2301 = vst [vmem:[%s4 + $0x4c0] sm:$0xff] %v2285
        %2302 = vst [vmem:[%s4 + $0x4c8] sm:$0xff] %v2286
        %2303 = vst [vmem:[%s4 + $0x4d0] sm:$0xff] %v2287
        %2304 = vst [vmem:[%s4 + $0x4d8] sm:$0xff] %v2288
        %2305 = vst [vmem:[%s4 + $0x4e0] sm:$0xff] %v2289
        %2306 = vst [vmem:[%s4 + $0x4e8] sm:$0xff] %v2290
        %2307 = vst [vmem:[%s4 + $0x4f0] sm:$0xff] %v2291
        %2308 = vst [vmem:[%s4 + $0x4f8] sm:$0xff] %v2292
        %v2309 = vld [vmem:[%s4 + $0x500] sm:$0xff]
        %v2310 = vld [vmem:[%s4 + $0x508] sm:$0xff]
        %v2311 = vld [vmem:[%s4 + $0x510] sm:$0xff]
        %v2312 = vld [vmem:[%s4 + $0x518] sm:$0xff]
        %v2313 = vld [vmem:[%s4 + $0x520] sm:$0xff]
        %v2314 = vld [vmem:[%s4 + $0x528] sm:$0xff]
        %v2315 = vld [vmem:[%s4 + $0x530] sm:$0xff]
        %v2316 = vld [vmem:[%s4 + $0x538] sm:$0xff]
        %v2317 = vld [vmem:[%s4 + $0x540] sm:$0xff]
        %v2318 = vld [vmem:[%s4 + $0x548] sm:$0xff]
        %v2319 = vld [vmem:[%s4 + $0x550] sm:$0xff]
        %v2320 = vld [vmem:[%s4 + $0x558] sm:$0xff]
        %v2321 = vld [vmem:[%s4 + $0x560] sm:$0xff]
        %v2322 = vld [vmem:[%s4 + $0x568] sm:$0xff]
        %v2323 = vld [vmem:[%s4 + $0x570] sm:$0xff]
        %v2324 = vld [vmem:[%s4 + $0x578] sm:$0xff]
        %v2325 = vmul.f32 %v2309, %v1197
        %v2326 = vmul.f32 %v2310, %v1197
        %v2327 = vmul.f32 %v2311, %v1197
        %v2328 = vmul.f32 %v2312, %v1197
        %v2329 = vmul.f32 %v2313, %v1197
        %v2330 = vmul.f32 %v2314, %v1197
        %v2331 = vmul.f32 %v2315, %v1197
        %v2332 = vmul.f32 %v2316, %v1197
        %v2333 = vmul.f32 %v2317, %v1197
        %v2334 = vmul.f32 %v2318, %v1197
        %v2335 = vmul.f32 %v2319, %v1197
        %v2336 = vmul.f32 %v2320, %v1197
        %v2337 = vmul.f32 %v2321, %v1197
        %v2338 = vmul.f32 %v2322, %v1197
        %v2339 = vmul.f32 %v2323, %v1197
        %v2340 = vmul.f32 %v2324, %v1197
        %v2341 = vadd.f32 %v2325, %v1219
        %v2342 = vadd.f32 %v2326, %v1219
        %v2343 = vadd.f32 %v2327, %v1219
        %v2344 = vadd.f32 %v2328, %v1219
        %v2345 = vadd.f32 %v2329, %v1219
        %v2346 = vadd.f32 %v2330, %v1219
        %v2347 = vadd.f32 %v2331, %v1219
        %v2348 = vadd.f32 %v2332, %v1219
        %v2349 = vadd.f32 %v2333, %v1219
        %v2350 = vadd.f32 %v2334, %v1219
        %v2351 = vadd.f32 %v2335, %v1219
        %v2352 = vadd.f32 %v2336, %v1219
        %v2353 = vadd.f32 %v2337, %v1219
        %v2354 = vadd.f32 %v2338, %v1219
        %v2355 = vadd.f32 %v2339, %v1219
        %v2356 = vadd.f32 %v2340, %v1219
        %vm2357 = vcmp.ge.f32.partialorder %v2341, 0.0
        %vm2358 = vcmp.ge.f32.partialorder %v2342, 0.0
        %vm2359 = vcmp.ge.f32.partialorder %v2343, 0.0
        %vm2360 = vcmp.ge.f32.partialorder %v2344, 0.0
        %vm2361 = vcmp.ge.f32.partialorder %v2345, 0.0
        %vm2362 = vcmp.ge.f32.partialorder %v2346, 0.0
        %vm2363 = vcmp.ge.f32.partialorder %v2347, 0.0
        %vm2364 = vcmp.ge.f32.partialorder %v2348, 0.0
        %vm2365 = vcmp.ge.f32.partialorder %v2349, 0.0
        %vm2366 = vcmp.ge.f32.partialorder %v2350, 0.0
        %vm2367 = vcmp.ge.f32.partialorder %v2351, 0.0
        %vm2368 = vcmp.ge.f32.partialorder %v2352, 0.0
        %vm2369 = vcmp.ge.f32.partialorder %v2353, 0.0
        %vm2370 = vcmp.ge.f32.partialorder %v2354, 0.0
        %vm2371 = vcmp.ge.f32.partialorder %v2355, 0.0
        %vm2372 = vcmp.ge.f32.partialorder %v2356, 0.0
        %v2373 = vmul.f32 %v2341, 0.2
        %v2374 = vmul.f32 %v2342, 0.2
        %v2375 = vmul.f32 %v2343, 0.2
        %v2376 = vmul.f32 %v2344, 0.2
        %v2377 = vmul.f32 %v2345, 0.2
        %v2378 = vmul.f32 %v2346, 0.2
        %v2379 = vmul.f32 %v2347, 0.2
        %v2380 = vmul.f32 %v2348, 0.2
        %v2381 = vmul.f32 %v2349, 0.2
        %v2382 = vmul.f32 %v2350, 0.2
        %v2383 = vmul.f32 %v2351, 0.2
        %v2384 = vmul.f32 %v2352, 0.2
        %v2385 = vmul.f32 %v2353, 0.2
        %v2386 = vmul.f32 %v2354, 0.2
        %v2387 = vmul.f32 %v2355, 0.2
        %v2388 = vmul.f32 %v2356, 0.2
        %v2389 = vsel %vm2357, %v2341, %v2373
        %v2390 = vsel %vm2358, %v2342, %v2374
        %v2391 = vsel %vm2359, %v2343, %v2375
        %v2392 = vsel %vm2360, %v2344, %v2376
        %v2393 = vsel %vm2361, %v2345, %v2377
        %v2394 = vsel %vm2362, %v2346, %v2378
        %v2395 = vsel %vm2363, %v2347, %v2379
        %v2396 = vsel %vm2364, %v2348, %v2380
        %v2397 = vsel %vm2365, %v2349, %v2381
        %v2398 = vsel %vm2366, %v2350, %v2382
        %v2399 = vsel %vm2367, %v2351, %v2383
        %v2400 = vsel %vm2368, %v2352, %v2384
        %v2401 = vsel %vm2369, %v2353, %v2385
        %v2402 = vsel %vm2370, %v2354, %v2386
        %v2403 = vsel %vm2371, %v2355, %v2387
        %v2404 = vsel %vm2372, %v2356, %v2388
        %2405 = vst [vmem:[%s4 + $0x500] sm:$0xff] %v2389
        %2406 = vst [vmem:[%s4 + $0x508] sm:$0xff] %v2390
        %2407 = vst [vmem:[%s4 + $0x510] sm:$0xff] %v2391
        %2408 = vst [vmem:[%s4 + $0x518] sm:$0xff] %v2392
        %2409 = vst [vmem:[%s4 + $0x520] sm:$0xff] %v2393
        %2410 = vst [vmem:[%s4 + $0x528] sm:$0xff] %v2394
        %2411 = vst [vmem:[%s4 + $0x530] sm:$0xff] %v2395
        %2412 = vst [vmem:[%s4 + $0x538] sm:$0xff] %v2396
        %2413 = vst [vmem:[%s4 + $0x540] sm:$0xff] %v2397
        %2414 = vst [vmem:[%s4 + $0x548] sm:$0xff] %v2398
        %2415 = vst [vmem:[%s4 + $0x550] sm:$0xff] %v2399
        %2416 = vst [vmem:[%s4 + $0x558] sm:$0xff] %v2400
        %2417 = vst [vmem:[%s4 + $0x560] sm:$0xff] %v2401
        %2418 = vst [vmem:[%s4 + $0x568] sm:$0xff] %v2402
        %2419 = vst [vmem:[%s4 + $0x570] sm:$0xff] %v2403
        %2420 = vst [vmem:[%s4 + $0x578] sm:$0xff] %v2404
        %v2421 = vld [vmem:[%s4 + $0x580] sm:$0xff]
        %v2422 = vld [vmem:[%s4 + $0x588] sm:$0xff]
        %v2423 = vld [vmem:[%s4 + $0x590] sm:$0xff]
        %v2424 = vld [vmem:[%s4 + $0x598] sm:$0xff]
        %v2425 = vld [vmem:[%s4 + $0x5a0] sm:$0xff]
        %v2426 = vld [vmem:[%s4 + $0x5a8] sm:$0xff]
        %v2427 = vld [vmem:[%s4 + $0x5b0] sm:$0xff]
        %v2428 = vld [vmem:[%s4 + $0x5b8] sm:$0xff]
        %v2429 = vld [vmem:[%s4 + $0x5c0] sm:$0xff]
        %v2430 = vld [vmem:[%s4 + $0x5c8] sm:$0xff]
        %v2431 = vld [vmem:[%s4 + $0x5d0] sm:$0xff]
        %v2432 = vld [vmem:[%s4 + $0x5d8] sm:$0xff]
        %v2433 = vld [vmem:[%s4 + $0x5e0] sm:$0xff]
        %v2434 = vld [vmem:[%s4 + $0x5e8] sm:$0xff]
        %v2435 = vld [vmem:[%s4 + $0x5f0] sm:$0xff]
        %v2436 = vld [vmem:[%s4 + $0x5f8] sm:$0xff]
        %v2437 = vmul.f32 %v2421, %v1197
        %v2438 = vmul.f32 %v2422, %v1197
        %v2439 = vmul.f32 %v2423, %v1197
        %v2440 = vmul.f32 %v2424, %v1197
        %v2441 = vmul.f32 %v2425, %v1197
        %v2442 = vmul.f32 %v2426, %v1197
        %v2443 = vmul.f32 %v2427, %v1197
        %v2444 = vmul.f32 %v2428, %v1197
        %v2445 = vmul.f32 %v2429, %v1197
        %v2446 = vmul.f32 %v2430, %v1197
        %v2447 = vmul.f32 %v2431, %v1197
        %v2448 = vmul.f32 %v2432, %v1197
        %v2449 = vmul.f32 %v2433, %v1197
        %v2450 = vmul.f32 %v2434, %v1197
        %v2451 = vmul.f32 %v2435, %v1197
        %v2452 = vmul.f32 %v2436, %v1197
        %v2453 = vadd.f32 %v2437, %v1219
        %v2454 = vadd.f32 %v2438, %v1219
        %v2455 = vadd.f32 %v2439, %v1219
        %v2456 = vadd.f32 %v2440, %v1219
        %v2457 = vadd.f32 %v2441, %v1219
        %v2458 = vadd.f32 %v2442, %v1219
        %v2459 = vadd.f32 %v2443, %v1219
        %v2460 = vadd.f32 %v2444, %v1219
        %v2461 = vadd.f32 %v2445, %v1219
        %v2462 = vadd.f32 %v2446, %v1219
        %v2463 = vadd.f32 %v2447, %v1219
        %v2464 = vadd.f32 %v2448, %v1219
        %v2465 = vadd.f32 %v2449, %v1219
        %v2466 = vadd.f32 %v2450, %v1219
        %v2467 = vadd.f32 %v2451, %v1219
        %v2468 = vadd.f32 %v2452, %v1219
        %vm2469 = vcmp.ge.f32.partialorder %v2453, 0.0
        %vm2470 = vcmp.ge.f32.partialorder %v2454, 0.0
        %vm2471 = vcmp.ge.f32.partialorder %v2455, 0.0
        %vm2472 = vcmp.ge.f32.partialorder %v2456, 0.0
        %vm2473 = vcmp.ge.f32.partialorder %v2457, 0.0
        %vm2474 = vcmp.ge.f32.partialorder %v2458, 0.0
        %vm2475 = vcmp.ge.f32.partialorder %v2459, 0.0
        %vm2476 = vcmp.ge.f32.partialorder %v2460, 0.0
        %vm2477 = vcmp.ge.f32.partialorder %v2461, 0.0
        %vm2478 = vcmp.ge.f32.partialorder %v2462, 0.0
        %vm2479 = vcmp.ge.f32.partialorder %v2463, 0.0
        %vm2480 = vcmp.ge.f32.partialorder %v2464, 0.0
        %vm2481 = vcmp.ge.f32.partialorder %v2465, 0.0
        %vm2482 = vcmp.ge.f32.partialorder %v2466, 0.0
        %vm2483 = vcmp.ge.f32.partialorder %v2467, 0.0
        %vm2484 = vcmp.ge.f32.partialorder %v2468, 0.0
        %v2485 = vmul.f32 %v2453, 0.2
        %v2486 = vmul.f32 %v2454, 0.2
        %v2487 = vmul.f32 %v2455, 0.2
        %v2488 = vmul.f32 %v2456, 0.2
        %v2489 = vmul.f32 %v2457, 0.2
        %v2490 = vmul.f32 %v2458, 0.2
        %v2491 = vmul.f32 %v2459, 0.2
        %v2492 = vmul.f32 %v2460, 0.2
        %v2493 = vmul.f32 %v2461, 0.2
        %v2494 = vmul.f32 %v2462, 0.2
        %v2495 = vmul.f32 %v2463, 0.2
        %v2496 = vmul.f32 %v2464, 0.2
        %v2497 = vmul.f32 %v2465, 0.2
        %v2498 = vmul.f32 %v2466, 0.2
        %v2499 = vmul.f32 %v2467, 0.2
        %v2500 = vmul.f32 %v2468, 0.2
        %v2501 = vsel %vm2469, %v2453, %v2485
        %v2502 = vsel %vm2470, %v2454, %v2486
        %v2503 = vsel %vm2471, %v2455, %v2487
        %v2504 = vsel %vm2472, %v2456, %v2488
        %v2505 = vsel %vm2473, %v2457, %v2489
        %v2506 = vsel %vm2474, %v2458, %v2490
        %v2507 = vsel %vm2475, %v2459, %v2491
        %v2508 = vsel %vm2476, %v2460, %v2492
        %v2509 = vsel %vm2477, %v2461, %v2493
        %v2510 = vsel %vm2478, %v2462, %v2494
        %v2511 = vsel %vm2479, %v2463, %v2495
        %v2512 = vsel %vm2480, %v2464, %v2496
        %v2513 = vsel %vm2481, %v2465, %v2497
        %v2514 = vsel %vm2482, %v2466, %v2498
        %v2515 = vsel %vm2483, %v2467, %v2499
        %v2516 = vsel %vm2484, %v2468, %v2500
        %2517 = vst [vmem:[%s4 + $0x580] sm:$0xff] %v2501
        %2518 = vst [vmem:[%s4 + $0x588] sm:$0xff] %v2502
        %2519 = vst [vmem:[%s4 + $0x590] sm:$0xff] %v2503
        %2520 = vst [vmem:[%s4 + $0x598] sm:$0xff] %v2504
        %2521 = vst [vmem:[%s4 + $0x5a0] sm:$0xff] %v2505
        %2522 = vst [vmem:[%s4 + $0x5a8] sm:$0xff] %v2506
        %2523 = vst [vmem:[%s4 + $0x5b0] sm:$0xff] %v2507
        %2524 = vst [vmem:[%s4 + $0x5b8] sm:$0xff] %v2508
        %2525 = vst [vmem:[%s4 + $0x5c0] sm:$0xff] %v2509
        %2526 = vst [vmem:[%s4 + $0x5c8] sm:$0xff] %v2510
        %2527 = vst [vmem:[%s4 + $0x5d0] sm:$0xff] %v2511
        %2528 = vst [vmem:[%s4 + $0x5d8] sm:$0xff] %v2512
        %2529 = vst [vmem:[%s4 + $0x5e0] sm:$0xff] %v2513
        %2530 = vst [vmem:[%s4 + $0x5e8] sm:$0xff] %v2514
        %2531 = vst [vmem:[%s4 + $0x5f0] sm:$0xff] %v2515
        %2532 = vst [vmem:[%s4 + $0x5f8] sm:$0xff] %v2516
        %v2533 = vld [vmem:[%s4 + $0x600] sm:$0xff]
        %v2534 = vld [vmem:[%s4 + $0x608] sm:$0xff]
        %v2535 = vld [vmem:[%s4 + $0x610] sm:$0xff]
        %v2536 = vld [vmem:[%s4 + $0x618] sm:$0xff]
        %v2537 = vld [vmem:[%s4 + $0x620] sm:$0xff]
        %v2538 = vld [vmem:[%s4 + $0x628] sm:$0xff]
        %v2539 = vld [vmem:[%s4 + $0x630] sm:$0xff]
        %v2540 = vld [vmem:[%s4 + $0x638] sm:$0xff]
        %v2541 = vld [vmem:[%s4 + $0x640] sm:$0xff]
        %v2542 = vld [vmem:[%s4 + $0x648] sm:$0xff]
        %v2543 = vld [vmem:[%s4 + $0x650] sm:$0xff]
        %v2544 = vld [vmem:[%s4 + $0x658] sm:$0xff]
        %v2545 = vld [vmem:[%s4 + $0x660] sm:$0xff]
        %v2546 = vld [vmem:[%s4 + $0x668] sm:$0xff]
        %v2547 = vld [vmem:[%s4 + $0x670] sm:$0xff]
        %v2548 = vld [vmem:[%s4 + $0x678] sm:$0xff]
        %v2549 = vmul.f32 %v2533, %v1197
        %v2550 = vmul.f32 %v2534, %v1197
        %v2551 = vmul.f32 %v2535, %v1197
        %v2552 = vmul.f32 %v2536, %v1197
        %v2553 = vmul.f32 %v2537, %v1197
        %v2554 = vmul.f32 %v2538, %v1197
        %v2555 = vmul.f32 %v2539, %v1197
        %v2556 = vmul.f32 %v2540, %v1197
        %v2557 = vmul.f32 %v2541, %v1197
        %v2558 = vmul.f32 %v2542, %v1197
        %v2559 = vmul.f32 %v2543, %v1197
        %v2560 = vmul.f32 %v2544, %v1197
        %v2561 = vmul.f32 %v2545, %v1197
        %v2562 = vmul.f32 %v2546, %v1197
        %v2563 = vmul.f32 %v2547, %v1197
        %v2564 = vmul.f32 %v2548, %v1197
        %v2565 = vadd.f32 %v2549, %v1219
        %v2566 = vadd.f32 %v2550, %v1219
        %v2567 = vadd.f32 %v2551, %v1219
        %v2568 = vadd.f32 %v2552, %v1219
        %v2569 = vadd.f32 %v2553, %v1219
        %v2570 = vadd.f32 %v2554, %v1219
        %v2571 = vadd.f32 %v2555, %v1219
        %v2572 = vadd.f32 %v2556, %v1219
        %v2573 = vadd.f32 %v2557, %v1219
        %v2574 = vadd.f32 %v2558, %v1219
        %v2575 = vadd.f32 %v2559, %v1219
        %v2576 = vadd.f32 %v2560, %v1219
        %v2577 = vadd.f32 %v2561, %v1219
        %v2578 = vadd.f32 %v2562, %v1219
        %v2579 = vadd.f32 %v2563, %v1219
        %v2580 = vadd.f32 %v2564, %v1219
        %vm2581 = vcmp.ge.f32.partialorder %v2565, 0.0
        %vm2582 = vcmp.ge.f32.partialorder %v2566, 0.0
        %vm2583 = vcmp.ge.f32.partialorder %v2567, 0.0
        %vm2584 = vcmp.ge.f32.partialorder %v2568, 0.0
        %vm2585 = vcmp.ge.f32.partialorder %v2569, 0.0
        %vm2586 = vcmp.ge.f32.partialorder %v2570, 0.0
        %vm2587 = vcmp.ge.f32.partialorder %v2571, 0.0
        %vm2588 = vcmp.ge.f32.partialorder %v2572, 0.0
        %vm2589 = vcmp.ge.f32.partialorder %v2573, 0.0
        %vm2590 = vcmp.ge.f32.partialorder %v2574, 0.0
        %vm2591 = vcmp.ge.f32.partialorder %v2575, 0.0
        %vm2592 = vcmp.ge.f32.partialorder %v2576, 0.0
        %vm2593 = vcmp.ge.f32.partialorder %v2577, 0.0
        %vm2594 = vcmp.ge.f32.partialorder %v2578, 0.0
        %vm2595 = vcmp.ge.f32.partialorder %v2579, 0.0
        %vm2596 = vcmp.ge.f32.partialorder %v2580, 0.0
        %v2597 = vmul.f32 %v2565, 0.2
        %v2598 = vmul.f32 %v2566, 0.2
        %v2599 = vmul.f32 %v2567, 0.2
        %v2600 = vmul.f32 %v2568, 0.2
        %v2601 = vmul.f32 %v2569, 0.2
        %v2602 = vmul.f32 %v2570, 0.2
        %v2603 = vmul.f32 %v2571, 0.2
        %v2604 = vmul.f32 %v2572, 0.2
        %v2605 = vmul.f32 %v2573, 0.2
        %v2606 = vmul.f32 %v2574, 0.2
        %v2607 = vmul.f32 %v2575, 0.2
        %v2608 = vmul.f32 %v2576, 0.2
        %v2609 = vmul.f32 %v2577, 0.2
        %v2610 = vmul.f32 %v2578, 0.2
        %v2611 = vmul.f32 %v2579, 0.2
        %v2612 = vmul.f32 %v2580, 0.2
        %v2613 = vsel %vm2581, %v2565, %v2597
        %v2614 = vsel %vm2582, %v2566, %v2598
        %v2615 = vsel %vm2583, %v2567, %v2599
        %v2616 = vsel %vm2584, %v2568, %v2600
        %v2617 = vsel %vm2585, %v2569, %v2601
        %v2618 = vsel %vm2586, %v2570, %v2602
        %v2619 = vsel %vm2587, %v2571, %v2603
        %v2620 = vsel %vm2588, %v2572, %v2604
        %v2621 = vsel %vm2589, %v2573, %v2605
        %v2622 = vsel %vm2590, %v2574, %v2606
        %v2623 = vsel %vm2591, %v2575, %v2607
        %v2624 = vsel %vm2592, %v2576, %v2608
        %v2625 = vsel %vm2593, %v2577, %v2609
        %v2626 = vsel %vm2594, %v2578, %v2610
        %v2627 = vsel %vm2595, %v2579, %v2611
        %v2628 = vsel %vm2596, %v2580, %v2612
        %2629 = vst [vmem:[%s4 + $0x600] sm:$0xff] %v2613
        %2630 = vst [vmem:[%s4 + $0x608] sm:$0xff] %v2614
        %2631 = vst [vmem:[%s4 + $0x610] sm:$0xff] %v2615
        %2632 = vst [vmem:[%s4 + $0x618] sm:$0xff] %v2616
        %2633 = vst [vmem:[%s4 + $0x620] sm:$0xff] %v2617
        %2634 = vst [vmem:[%s4 + $0x628] sm:$0xff] %v2618
        %2635 = vst [vmem:[%s4 + $0x630] sm:$0xff] %v2619
        %2636 = vst [vmem:[%s4 + $0x638] sm:$0xff] %v2620
        %2637 = vst [vmem:[%s4 + $0x640] sm:$0xff] %v2621
        %2638 = vst [vmem:[%s4 + $0x648] sm:$0xff] %v2622
        %2639 = vst [vmem:[%s4 + $0x650] sm:$0xff] %v2623
        %2640 = vst [vmem:[%s4 + $0x658] sm:$0xff] %v2624
        %2641 = vst [vmem:[%s4 + $0x660] sm:$0xff] %v2625
        %2642 = vst [vmem:[%s4 + $0x668] sm:$0xff] %v2626
        %2643 = vst [vmem:[%s4 + $0x670] sm:$0xff] %v2627
        %2644 = vst [vmem:[%s4 + $0x678] sm:$0xff] %v2628
        %v2645 = vld [vmem:[%s4 + $0x680] sm:$0xff]
        %v2646 = vld [vmem:[%s4 + $0x688] sm:$0xff]
        %v2647 = vld [vmem:[%s4 + $0x690] sm:$0xff]
        %v2648 = vld [vmem:[%s4 + $0x698] sm:$0xff]
        %v2649 = vld [vmem:[%s4 + $0x6a0] sm:$0xff]
        %v2650 = vld [vmem:[%s4 + $0x6a8] sm:$0xff]
        %v2651 = vld [vmem:[%s4 + $0x6b0] sm:$0xff]
        %v2652 = vld [vmem:[%s4 + $0x6b8] sm:$0xff]
        %v2653 = vld [vmem:[%s4 + $0x6c0] sm:$0xff]
        %v2654 = vld [vmem:[%s4 + $0x6c8] sm:$0xff]
        %v2655 = vld [vmem:[%s4 + $0x6d0] sm:$0xff]
        %v2656 = vld [vmem:[%s4 + $0x6d8] sm:$0xff]
        %v2657 = vld [vmem:[%s4 + $0x6e0] sm:$0xff]
        %v2658 = vld [vmem:[%s4 + $0x6e8] sm:$0xff]
        %v2659 = vld [vmem:[%s4 + $0x6f0] sm:$0xff]
        %v2660 = vld [vmem:[%s4 + $0x6f8] sm:$0xff]
        %v2661 = vmul.f32 %v2645, %v1197
        %v2662 = vmul.f32 %v2646, %v1197
        %v2663 = vmul.f32 %v2647, %v1197
        %v2664 = vmul.f32 %v2648, %v1197
        %v2665 = vmul.f32 %v2649, %v1197
        %v2666 = vmul.f32 %v2650, %v1197
        %v2667 = vmul.f32 %v2651, %v1197
        %v2668 = vmul.f32 %v2652, %v1197
        %v2669 = vmul.f32 %v2653, %v1197
        %v2670 = vmul.f32 %v2654, %v1197
        %v2671 = vmul.f32 %v2655, %v1197
        %v2672 = vmul.f32 %v2656, %v1197
        %v2673 = vmul.f32 %v2657, %v1197
        %v2674 = vmul.f32 %v2658, %v1197
        %v2675 = vmul.f32 %v2659, %v1197
        %v2676 = vmul.f32 %v2660, %v1197
        %v2677 = vadd.f32 %v2661, %v1219
        %v2678 = vadd.f32 %v2662, %v1219
        %v2679 = vadd.f32 %v2663, %v1219
        %v2680 = vadd.f32 %v2664, %v1219
        %v2681 = vadd.f32 %v2665, %v1219
        %v2682 = vadd.f32 %v2666, %v1219
        %v2683 = vadd.f32 %v2667, %v1219
        %v2684 = vadd.f32 %v2668, %v1219
        %v2685 = vadd.f32 %v2669, %v1219
        %v2686 = vadd.f32 %v2670, %v1219
        %v2687 = vadd.f32 %v2671, %v1219
        %v2688 = vadd.f32 %v2672, %v1219
        %v2689 = vadd.f32 %v2673, %v1219
        %v2690 = vadd.f32 %v2674, %v1219
        %v2691 = vadd.f32 %v2675, %v1219
        %v2692 = vadd.f32 %v2676, %v1219
        %vm2693 = vcmp.ge.f32.partialorder %v2677, 0.0
        %vm2694 = vcmp.ge.f32.partialorder %v2678, 0.0
        %vm2695 = vcmp.ge.f32.partialorder %v2679, 0.0
        %vm2696 = vcmp.ge.f32.partialorder %v2680, 0.0
        %vm2697 = vcmp.ge.f32.partialorder %v2681, 0.0
        %vm2698 = vcmp.ge.f32.partialorder %v2682, 0.0
        %vm2699 = vcmp.ge.f32.partialorder %v2683, 0.0
        %vm2700 = vcmp.ge.f32.partialorder %v2684, 0.0
        %vm2701 = vcmp.ge.f32.partialorder %v2685, 0.0
        %vm2702 = vcmp.ge.f32.partialorder %v2686, 0.0
        %vm2703 = vcmp.ge.f32.partialorder %v2687, 0.0
        %vm2704 = vcmp.ge.f32.partialorder %v2688, 0.0
        %vm2705 = vcmp.ge.f32.partialorder %v2689, 0.0
        %vm2706 = vcmp.ge.f32.partialorder %v2690, 0.0
        %vm2707 = vcmp.ge.f32.partialorder %v2691, 0.0
        %vm2708 = vcmp.ge.f32.partialorder %v2692, 0.0
        %v2709 = vmul.f32 %v2677, 0.2
        %v2710 = vmul.f32 %v2678, 0.2
        %v2711 = vmul.f32 %v2679, 0.2
        %v2712 = vmul.f32 %v2680, 0.2
        %v2713 = vmul.f32 %v2681, 0.2
        %v2714 = vmul.f32 %v2682, 0.2
        %v2715 = vmul.f32 %v2683, 0.2
        %v2716 = vmul.f32 %v2684, 0.2
        %v2717 = vmul.f32 %v2685, 0.2
        %v2718 = vmul.f32 %v2686, 0.2
        %v2719 = vmul.f32 %v2687, 0.2
        %v2720 = vmul.f32 %v2688, 0.2
        %v2721 = vmul.f32 %v2689, 0.2
        %v2722 = vmul.f32 %v2690, 0.2
        %v2723 = vmul.f32 %v2691, 0.2
        %v2724 = vmul.f32 %v2692, 0.2
        %v2725 = vsel %vm2693, %v2677, %v2709
        %v2726 = vsel %vm2694, %v2678, %v2710
        %v2727 = vsel %vm2695, %v2679, %v2711
        %v2728 = vsel %vm2696, %v2680, %v2712
        %v2729 = vsel %vm2697, %v2681, %v2713
        %v2730 = vsel %vm2698, %v2682, %v2714
        %v2731 = vsel %vm2699, %v2683, %v2715
        %v2732 = vsel %vm2700, %v2684, %v2716
        %v2733 = vsel %vm2701, %v2685, %v2717
        %v2734 = vsel %vm2702, %v2686, %v2718
        %v2735 = vsel %vm2703, %v2687, %v2719
        %v2736 = vsel %vm2704, %v2688, %v2720
        %v2737 = vsel %vm2705, %v2689, %v2721
        %v2738 = vsel %vm2706, %v2690, %v2722
        %v2739 = vsel %vm2707, %v2691, %v2723
        %v2740 = vsel %vm2708, %v2692, %v2724
        %2741 = vst [vmem:[%s4 + $0x680] sm:$0xff] %v2725
        %2742 = vst [vmem:[%s4 + $0x688] sm:$0xff] %v2726
        %2743 = vst [vmem:[%s4 + $0x690] sm:$0xff] %v2727
        %2744 = vst [vmem:[%s4 + $0x698] sm:$0xff] %v2728
        %2745 = vst [vmem:[%s4 + $0x6a0] sm:$0xff] %v2729
        %2746 = vst [vmem:[%s4 + $0x6a8] sm:$0xff] %v2730
        %2747 = vst [vmem:[%s4 + $0x6b0] sm:$0xff] %v2731
        %2748 = vst [vmem:[%s4 + $0x6b8] sm:$0xff] %v2732
        %2749 = vst [vmem:[%s4 + $0x6c0] sm:$0xff] %v2733
        %2750 = vst [vmem:[%s4 + $0x6c8] sm:$0xff] %v2734
        %2751 = vst [vmem:[%s4 + $0x6d0] sm:$0xff] %v2735
        %2752 = vst [vmem:[%s4 + $0x6d8] sm:$0xff] %v2736
        %2753 = vst [vmem:[%s4 + $0x6e0] sm:$0xff] %v2737
        %2754 = vst [vmem:[%s4 + $0x6e8] sm:$0xff] %v2738
        %2755 = vst [vmem:[%s4 + $0x6f0] sm:$0xff] %v2739
        %2756 = vst [vmem:[%s4 + $0x6f8] sm:$0xff] %v2740
        %v2757 = vld [vmem:[%s4 + $0x700] sm:$0xff]
        %v2758 = vld [vmem:[%s4 + $0x708] sm:$0xff]
        %v2759 = vld [vmem:[%s4 + $0x710] sm:$0xff]
        %v2760 = vld [vmem:[%s4 + $0x718] sm:$0xff]
        %v2761 = vld [vmem:[%s4 + $0x720] sm:$0xff]
        %v2762 = vld [vmem:[%s4 + $0x728] sm:$0xff]
        %v2763 = vld [vmem:[%s4 + $0x730] sm:$0xff]
        %v2764 = vld [vmem:[%s4 + $0x738] sm:$0xff]
        %v2765 = vld [vmem:[%s4 + $0x740] sm:$0xff]
        %v2766 = vld [vmem:[%s4 + $0x748] sm:$0xff]
        %v2767 = vld [vmem:[%s4 + $0x750] sm:$0xff]
        %v2768 = vld [vmem:[%s4 + $0x758] sm:$0xff]
        %v2769 = vld [vmem:[%s4 + $0x760] sm:$0xff]
        %v2770 = vld [vmem:[%s4 + $0x768] sm:$0xff]
        %v2771 = vld [vmem:[%s4 + $0x770] sm:$0xff]
        %v2772 = vld [vmem:[%s4 + $0x778] sm:$0xff]
        %v2773 = vmul.f32 %v2757, %v1197
        %v2774 = vmul.f32 %v2758, %v1197
        %v2775 = vmul.f32 %v2759, %v1197
        %v2776 = vmul.f32 %v2760, %v1197
        %v2777 = vmul.f32 %v2761, %v1197
        %v2778 = vmul.f32 %v2762, %v1197
        %v2779 = vmul.f32 %v2763, %v1197
        %v2780 = vmul.f32 %v2764, %v1197
        %v2781 = vmul.f32 %v2765, %v1197
        %v2782 = vmul.f32 %v2766, %v1197
        %v2783 = vmul.f32 %v2767, %v1197
        %v2784 = vmul.f32 %v2768, %v1197
        %v2785 = vmul.f32 %v2769, %v1197
        %v2786 = vmul.f32 %v2770, %v1197
        %v2787 = vmul.f32 %v2771, %v1197
        %v2788 = vmul.f32 %v2772, %v1197
        %v2789 = vadd.f32 %v2773, %v1219
        %v2790 = vadd.f32 %v2774, %v1219
        %v2791 = vadd.f32 %v2775, %v1219
        %v2792 = vadd.f32 %v2776, %v1219
        %v2793 = vadd.f32 %v2777, %v1219
        %v2794 = vadd.f32 %v2778, %v1219
        %v2795 = vadd.f32 %v2779, %v1219
        %v2796 = vadd.f32 %v2780, %v1219
        %v2797 = vadd.f32 %v2781, %v1219
        %v2798 = vadd.f32 %v2782, %v1219
        %v2799 = vadd.f32 %v2783, %v1219
        %v2800 = vadd.f32 %v2784, %v1219
        %v2801 = vadd.f32 %v2785, %v1219
        %v2802 = vadd.f32 %v2786, %v1219
        %v2803 = vadd.f32 %v2787, %v1219
        %v2804 = vadd.f32 %v2788, %v1219
        %vm2805 = vcmp.ge.f32.partialorder %v2789, 0.0
        %vm2806 = vcmp.ge.f32.partialorder %v2790, 0.0
        %vm2807 = vcmp.ge.f32.partialorder %v2791, 0.0
        %vm2808 = vcmp.ge.f32.partialorder %v2792, 0.0
        %vm2809 = vcmp.ge.f32.partialorder %v2793, 0.0
        %vm2810 = vcmp.ge.f32.partialorder %v2794, 0.0
        %vm2811 = vcmp.ge.f32.partialorder %v2795, 0.0
        %vm2812 = vcmp.ge.f32.partialorder %v2796, 0.0
        %vm2813 = vcmp.ge.f32.partialorder %v2797, 0.0
        %vm2814 = vcmp.ge.f32.partialorder %v2798, 0.0
        %vm2815 = vcmp.ge.f32.partialorder %v2799, 0.0
        %vm2816 = vcmp.ge.f32.partialorder %v2800, 0.0
        %vm2817 = vcmp.ge.f32.partialorder %v2801, 0.0
        %vm2818 = vcmp.ge.f32.partialorder %v2802, 0.0
        %vm2819 = vcmp.ge.f32.partialorder %v2803, 0.0
        %vm2820 = vcmp.ge.f32.partialorder %v2804, 0.0
        %v2821 = vmul.f32 %v2789, 0.2
        %v2822 = vmul.f32 %v2790, 0.2
        %v2823 = vmul.f32 %v2791, 0.2
        %v2824 = vmul.f32 %v2792, 0.2
        %v2825 = vmul.f32 %v2793, 0.2
        %v2826 = vmul.f32 %v2794, 0.2
        %v2827 = vmul.f32 %v2795, 0.2
        %v2828 = vmul.f32 %v2796, 0.2
        %v2829 = vmul.f32 %v2797, 0.2
        %v2830 = vmul.f32 %v2798, 0.2
        %v2831 = vmul.f32 %v2799, 0.2
        %v2832 = vmul.f32 %v2800, 0.2
        %v2833 = vmul.f32 %v2801, 0.2
        %v2834 = vmul.f32 %v2802, 0.2
        %v2835 = vmul.f32 %v2803, 0.2
        %v2836 = vmul.f32 %v2804, 0.2
        %v2837 = vsel %vm2805, %v2789, %v2821
        %v2838 = vsel %vm2806, %v2790, %v2822
        %v2839 = vsel %vm2807, %v2791, %v2823
        %v2840 = vsel %vm2808, %v2792, %v2824
        %v2841 = vsel %vm2809, %v2793, %v2825
        %v2842 = vsel %vm2810, %v2794, %v2826
        %v2843 = vsel %vm2811, %v2795, %v2827
        %v2844 = vsel %vm2812, %v2796, %v2828
        %v2845 = vsel %vm2813, %v2797, %v2829
        %v2846 = vsel %vm2814, %v2798, %v2830
        %v2847 = vsel %vm2815, %v2799, %v2831
        %v2848 = vsel %vm2816, %v2800, %v2832
        %v2849 = vsel %vm2817, %v2801, %v2833
        %v2850 = vsel %vm2818, %v2802, %v2834
        %v2851 = vsel %vm2819, %v2803, %v2835
        %v2852 = vsel %vm2820, %v2804, %v2836
        %2853 = vst [vmem:[%s4 + $0x700] sm:$0xff] %v2837
        %2854 = vst [vmem:[%s4 + $0x708] sm:$0xff] %v2838
        %2855 = vst [vmem:[%s4 + $0x710] sm:$0xff] %v2839
        %2856 = vst [vmem:[%s4 + $0x718] sm:$0xff] %v2840
        %2857 = vst [vmem:[%s4 + $0x720] sm:$0xff] %v2841
        %2858 = vst [vmem:[%s4 + $0x728] sm:$0xff] %v2842
        %2859 = vst [vmem:[%s4 + $0x730] sm:$0xff] %v2843
        %2860 = vst [vmem:[%s4 + $0x738] sm:$0xff] %v2844
        %2861 = vst [vmem:[%s4 + $0x740] sm:$0xff] %v2845
        %2862 = vst [vmem:[%s4 + $0x748] sm:$0xff] %v2846
        %2863 = vst [vmem:[%s4 + $0x750] sm:$0xff] %v2847
        %2864 = vst [vmem:[%s4 + $0x758] sm:$0xff] %v2848
        %2865 = vst [vmem:[%s4 + $0x760] sm:$0xff] %v2849
        %2866 = vst [vmem:[%s4 + $0x768] sm:$0xff] %v2850
        %2867 = vst [vmem:[%s4 + $0x770] sm:$0xff] %v2851
        %2868 = vst [vmem:[%s4 + $0x778] sm:$0xff] %v2852
        %v2869 = vld [vmem:[%s4 + $0x780] sm:$0xff]
        %v2870 = vld [vmem:[%s4 + $0x788] sm:$0xff]
        %v2871 = vld [vmem:[%s4 + $0x790] sm:$0xff]
        %v2872 = vld [vmem:[%s4 + $0x798] sm:$0xff]
        %v2873 = vld [vmem:[%s4 + $0x7a0] sm:$0xff]
        %v2874 = vld [vmem:[%s4 + $0x7a8] sm:$0xff]
        %v2875 = vld [vmem:[%s4 + $0x7b0] sm:$0xff]
        %v2876 = vld [vmem:[%s4 + $0x7b8] sm:$0xff]
        %v2877 = vld [vmem:[%s4 + $0x7c0] sm:$0xff]
        %v2878 = vld [vmem:[%s4 + $0x7c8] sm:$0xff]
        %v2879 = vld [vmem:[%s4 + $0x7d0] sm:$0xff]
        %v2880 = vld [vmem:[%s4 + $0x7d8] sm:$0xff]
        %v2881 = vld [vmem:[%s4 + $0x7e0] sm:$0xff]
        %v2882 = vld [vmem:[%s4 + $0x7e8] sm:$0xff]
        %v2883 = vld [vmem:[%s4 + $0x7f0] sm:$0xff]
        %v2884 = vld [vmem:[%s4 + $0x7f8] sm:$0xff]
        %v2885 = vmul.f32 %v2869, %v1197
        %v2886 = vmul.f32 %v2870, %v1197
        %v2887 = vmul.f32 %v2871, %v1197
        %v2888 = vmul.f32 %v2872, %v1197
        %v2889 = vmul.f32 %v2873, %v1197
        %v2890 = vmul.f32 %v2874, %v1197
        %v2891 = vmul.f32 %v2875, %v1197
        %v2892 = vmul.f32 %v2876, %v1197
        %v2893 = vmul.f32 %v2877, %v1197
        %v2894 = vmul.f32 %v2878, %v1197
        %v2895 = vmul.f32 %v2879, %v1197
        %v2896 = vmul.f32 %v2880, %v1197
        %v2897 = vmul.f32 %v2881, %v1197
        %v2898 = vmul.f32 %v2882, %v1197
        %v2899 = vmul.f32 %v2883, %v1197
        %v2900 = vmul.f32 %v2884, %v1197
        %v2901 = vadd.f32 %v2885, %v1219
        %v2902 = vadd.f32 %v2886, %v1219
        %v2903 = vadd.f32 %v2887, %v1219
        %v2904 = vadd.f32 %v2888, %v1219
        %v2905 = vadd.f32 %v2889, %v1219
        %v2906 = vadd.f32 %v2890, %v1219
        %v2907 = vadd.f32 %v2891, %v1219
        %v2908 = vadd.f32 %v2892, %v1219
        %v2909 = vadd.f32 %v2893, %v1219
        %v2910 = vadd.f32 %v2894, %v1219
        %v2911 = vadd.f32 %v2895, %v1219
        %v2912 = vadd.f32 %v2896, %v1219
        %v2913 = vadd.f32 %v2897, %v1219
        %v2914 = vadd.f32 %v2898, %v1219
        %v2915 = vadd.f32 %v2899, %v1219
        %v2916 = vadd.f32 %v2900, %v1219
        %vm2917 = vcmp.ge.f32.partialorder %v2901, 0.0
        %vm2918 = vcmp.ge.f32.partialorder %v2902, 0.0
        %vm2919 = vcmp.ge.f32.partialorder %v2903, 0.0
        %vm2920 = vcmp.ge.f32.partialorder %v2904, 0.0
        %vm2921 = vcmp.ge.f32.partialorder %v2905, 0.0
        %vm2922 = vcmp.ge.f32.partialorder %v2906, 0.0
        %vm2923 = vcmp.ge.f32.partialorder %v2907, 0.0
        %vm2924 = vcmp.ge.f32.partialorder %v2908, 0.0
        %vm2925 = vcmp.ge.f32.partialorder %v2909, 0.0
        %vm2926 = vcmp.ge.f32.partialorder %v2910, 0.0
        %vm2927 = vcmp.ge.f32.partialorder %v2911, 0.0
        %vm2928 = vcmp.ge.f32.partialorder %v2912, 0.0
        %vm2929 = vcmp.ge.f32.partialorder %v2913, 0.0
        %vm2930 = vcmp.ge.f32.partialorder %v2914, 0.0
        %vm2931 = vcmp.ge.f32.partialorder %v2915, 0.0
        %vm2932 = vcmp.ge.f32.partialorder %v2916, 0.0
        %v2933 = vmul.f32 %v2901, 0.2
        %v2934 = vmul.f32 %v2902, 0.2
        %v2935 = vmul.f32 %v2903, 0.2
        %v2936 = vmul.f32 %v2904, 0.2
        %v2937 = vmul.f32 %v2905, 0.2
        %v2938 = vmul.f32 %v2906, 0.2
        %v2939 = vmul.f32 %v2907, 0.2
        %v2940 = vmul.f32 %v2908, 0.2
        %v2941 = vmul.f32 %v2909, 0.2
        %v2942 = vmul.f32 %v2910, 0.2
        %v2943 = vmul.f32 %v2911, 0.2
        %v2944 = vmul.f32 %v2912, 0.2
        %v2945 = vmul.f32 %v2913, 0.2
        %v2946 = vmul.f32 %v2914, 0.2
        %v2947 = vmul.f32 %v2915, 0.2
        %v2948 = vmul.f32 %v2916, 0.2
        %v2949 = vsel %vm2917, %v2901, %v2933
        %v2950 = vsel %vm2918, %v2902, %v2934
        %v2951 = vsel %vm2919, %v2903, %v2935
        %v2952 = vsel %vm2920, %v2904, %v2936
        %v2953 = vsel %vm2921, %v2905, %v2937
        %v2954 = vsel %vm2922, %v2906, %v2938
        %v2955 = vsel %vm2923, %v2907, %v2939
        %v2956 = vsel %vm2924, %v2908, %v2940
        %v2957 = vsel %vm2925, %v2909, %v2941
        %v2958 = vsel %vm2926, %v2910, %v2942
        %v2959 = vsel %vm2927, %v2911, %v2943
        %v2960 = vsel %vm2928, %v2912, %v2944
        %v2961 = vsel %vm2929, %v2913, %v2945
        %v2962 = vsel %vm2930, %v2914, %v2946
        %v2963 = vsel %vm2931, %v2915, %v2947
        %v2964 = vsel %vm2932, %v2916, %v2948
        %2965 = vst [vmem:[%s4 + $0x780] sm:$0xff] %v2949
        %2966 = vst [vmem:[%s4 + $0x788] sm:$0xff] %v2950
        %2967 = vst [vmem:[%s4 + $0x790] sm:$0xff] %v2951
        %2968 = vst [vmem:[%s4 + $0x798] sm:$0xff] %v2952
        %2969 = vst [vmem:[%s4 + $0x7a0] sm:$0xff] %v2953
        %2970 = vst [vmem:[%s4 + $0x7a8] sm:$0xff] %v2954
        %2971 = vst [vmem:[%s4 + $0x7b0] sm:$0xff] %v2955
        %2972 = vst [vmem:[%s4 + $0x7b8] sm:$0xff] %v2956
        %2973 = vst [vmem:[%s4 + $0x7c0] sm:$0xff] %v2957
        %2974 = vst [vmem:[%s4 + $0x7c8] sm:$0xff] %v2958
        %2975 = vst [vmem:[%s4 + $0x7d0] sm:$0xff] %v2959
        %2976 = vst [vmem:[%s4 + $0x7d8] sm:$0xff] %v2960
        %2977 = vst [vmem:[%s4 + $0x7e0] sm:$0xff] %v2961
        %2978 = vst [vmem:[%s4 + $0x7e8] sm:$0xff] %v2962
        %2979 = vst [vmem:[%s4 + $0x7f0] sm:$0xff] %v2963
        %2980 = vst [vmem:[%s4 + $0x7f8] sm:$0xff] %v2964
      $region44: #{generator_forward.8} parent=35 // pred_fallthru
        _
      // Predicated region
      $region45: #{generator_forward.8} parent=35 // pred_check
        %p2981 = pneg %p136
      $region46: #{generator_forward.8} parent=35 // pred_check_branch
        %2983 = sbr.rel (%p2981) target = $region48
      $region47: #{generator_forward.8} parent=35 // pred_region
        _
      $region48: #{generator_forward.8} parent=35 // pred_fallthru
        _
      // Predicated region
      $region49: #{generator_forward.8} parent=35 // pred_check
        %p2984 = pneg %p136
      $region50: #{generator_forward.8} parent=35 // pred_check_branch
        %2986 = sbr.rel (%p2984) target = $region52
      $region51: #{generator_forward.8} parent=35 // pred_region
        _
      $region52: #{generator_forward.8} parent=35 // pred_fallthru
        _
    $region36: #{generator_forward.8} parent=5 // pred_fallthru
      _
    %p2987 = scmp.le.s32.totalorder 2, %s10
    // Predicated region
    $region53: #{generator_forward.8} parent=5 // pred_check
      %p2988 = pneg %p2987
    $region54: #{generator_forward.8} parent=5 // pred_check_branch
      %2990 = sbr.rel (%p2988) target = $region56
    $region55: #{generator_forward.8} parent=5 // pred_region
      %s2991 = ssub.s32 %s10, 2
    $region56: #{generator_forward.8} parent=5 // pred_fallthru
      _
  $region6: #{generator_forward.8} parent=0 // loop_footer
    %s14 = sadd.s32 1, %s10
  $region7: #{generator_forward.8} parent=0 // loop_footer_branch
    %9 = sbr.rel target = $region3
  $region8: #{generator_forward.8} parent=0 // loop_exit
    _

// kernel: generator_forward.9
$region0: #{generator_forward.9}
  #allocation0 [shape = 'u32[]', space=smem, size = 0x4, offset = 0x4, fixed_abs, tag = 'smem constant byte address 0x4 - core index']
  #allocation1 [shape = 'u32[144,128]{1,0:T(1,128)}', space=vmem, size = 0x12000, scoped, tag = 'internal scratch']
  %s0 = inlined_call_operand.vmem [shape: bf16[4,2048,128], index: 0, kind: input, shape index: {}]
  %s1 = inlined_call_operand.vmem [shape: bf16[4,128,128], index: 1, kind: input, shape index: {}]
  %s2 = inlined_call_operand.vmem [shape: f32[1,128], index: 2, kind: input, shape index: {}]
  %s3 = inlined_call_operand.vmem [shape: f32[8192,128], index: 3, kind: output, shape index: {}]
  %s4 = sld [smem:[#allocation0]]
  $region45: #{generator_forward.9} parent=0
    _
  %s6 = ssub.s32 1, %s4
  %s7 = scalar_select 0, %s6, %s4
  loop: start=0, step=1, limit=6
  $region2: #{generator_forward.9} parent=0 // loop_pre_header
    _
  $region3: #{generator_forward.9} parent=0 // loop_header
    %s9 = sphi 0, %s13
    %p10 = scmp.ge.s32.totalorder %s9, 6
    %s16 = sphi 0, %s28
    %s17 = sphi 0, %s24
    %s18 = sphi 0, %s16
    %s19 = sphi 0, %s17
    %s20 = sphi 0, %s18
    %s21 = sphi 0, %s19
    %s33 = sphi 0, %s35
    %s36 = sphi 0, %s33
    %s37 = sphi 0, %s36
    %s53 = sphi 0, %s37
    %s59 = sphi 0, %s61
    %s62 = sphi 0, %s59
    %s63 = sphi 0, %s62
    %s79 = sphi 0, %s63
    %s83 = sphi 0, %s83
    %s85 = sphi 0, %s83
    %s86 = sphi 0, %s85
    %s100 = sphi 0, %s86
    %s108 = sphi 0, %s110
    %s111 = sphi 0, %s108
    %s112 = sphi 0, %s111
    %s128 = sphi 0, %s112
  $region4: #{generator_forward.9} parent=0 // loop_header_branch
    %12 = sbr.rel (%p10) target = $region8
  $region5: #{generator_forward.9} parent=0 // loop_body
    %s14 = ssub.s32 %s9, 1
    %s15 = ssub.s32 %s9, 2
    %s22 = sadd.s32 1, %s17
    %p23 = scmp.ge.s32.totalorder %s22, 1
    %s24 = scalar_select %p23, 0, %s22
    %s25 = sadd.s32 1, %s16
    %s26 = scalar_select %p23, %s25, %s16
    %p27 = scmp.ge.s32.totalorder %s26, 4
    %s28 = scalar_select %p27, 0, %s26
    %s29 = ssub.s32 %s16, %s28
    %s30 = ssub.s32 %s17, %s24
    %s31 = sor.u32 %s29, %s30
    %p32 = scmp.eq.s32.totalorder %s31, 0
    %s34 = sadd.s32 %s33, 1
    %s35 = scalar_select %p32, %s33, %s34
    %p38 = pneg %p32
    %p39 = scmp.eq.s32.totalorder %s9, 3
    %p40 = por %p38, %p39
    %p41 = scmp.ne.s32.totalorder %s33, %s36
    %p42 = scmp.eq.s32.totalorder %s9, 0
    %p43 = por %p41, %p42
    %p44 = scmp.ne.s32.totalorder %s33, %s36
    %p45 = scmp.eq.s32.totalorder %s14, 3
    %p46 = por %p44, %p45
    %p47 = scmp.ne.s32.totalorder %s36, %s37
    %p48 = scmp.eq.s32.totalorder %s14, 0
    %p49 = por %p47, %p48
    %p50 = scmp.ne.s32.totalorder %s36, %s37
    %p51 = scmp.eq.s32.totalorder %s15, 3
    %p52 = por %p50, %p51
    %p54 = scmp.ne.s32.totalorder %s37, %s53
    %p55 = scmp.eq.s32.totalorder %s15, 0
    %p56 = por %p54, %p55
    %s57 = ssub.s32 %s16, %s28
    %p58 = scmp.eq.s32.totalorder %s57, 0
    %s60 = sadd.s32 %s59, 1
    %s61 = scalar_select %p58, %s59, %s60
    %p64 = pneg %p58
    %p65 = scmp.eq.s32.totalorder %s9, 3
    %p66 = por %p64, %p65
    %p67 = scmp.ne.s32.totalorder %s59, %s62
    %p68 = scmp.eq.s32.totalorder %s9, 0
    %p69 = por %p67, %p68
    %p70 = scmp.ne.s32.totalorder %s59, %s62
    %p71 = scmp.eq.s32.totalorder %s14, 3
    %p72 = por %p70, %p71
    %p73 = scmp.ne.s32.totalorder %s62, %s63
    %p74 = scmp.eq.s32.totalorder %s14, 0
    %p75 = por %p73, %p74
    %p76 = scmp.ne.s32.totalorder %s62, %s63
    %p77 = scmp.eq.s32.totalorder %s15, 3
    %p78 = por %p76, %p77
    %p80 = scmp.ne.s32.totalorder %s63, %s79
    %p81 = scmp.eq.s32.totalorder %s15, 0
    %p82 = por %p80, %p81
    %s84 = sadd.s32 %s83, 1
    %p87 = scmp.eq.s32.totalorder %s9, 3
    %p88 = scmp.ne.s32.totalorder %s83, %s85
    %p89 = scmp.eq.s32.totalorder %s9, 0
    %p90 = por %p88, %p89
    %p91 = scmp.ne.s32.totalorder %s83, %s85
    %p92 = scmp.eq.s32.totalorder %s14, 3
    %p93 = por %p91, %p92
    %p94 = scmp.ne.s32.totalorder %s85, %s86
    %p95 = scmp.eq.s32.totalorder %s14, 0
    %p96 = por %p94, %p95
    %p97 = scmp.ne.s32.totalorder %s85, %s86
    %p98 = scmp.eq.s32.totalorder %s15, 3
    %p99 = por %p97, %p98
    %p101 = scmp.ne.s32.totalorder %s86, %s100
    %p102 = scmp.eq.s32.totalorder %s15, 0
    %p103 = por %p101, %p102
    %s104 = sadd.s32 %s16, %s17
    %s105 = sadd.s32 %s28, %s24
    %s106 = ssub.s32 %s104, %s105
    %p107 = scmp.eq.s32.totalorder %s106, 0
    %s109 = sadd.s32 %s108, 1
    %s110 = scalar_select %p107, %s108, %s109
    %p113 = pneg %p107
    %p114 = scmp.eq.s32.totalorder %s9, 3
    %p115 = por %p113, %p114
    %p116 = scmp.ne.s32.totalorder %s108, %s111
    %p117 = scmp.eq.s32.totalorder %s9, 0
    %p118 = por %p116, %p117
    %p119 = scmp.ne.s32.totalorder %s108, %s111
    %p120 = scmp.eq.s32.totalorder %s14, 3
    %p121 = por %p119, %p120
    %p122 = scmp.ne.s32.totalorder %s111, %s112
    %p123 = scmp.eq.s32.totalorder %s14, 0
    %p124 = por %p122, %p123
    %p125 = scmp.ne.s32.totalorder %s111, %s112
    %p126 = scmp.eq.s32.totalorder %s15, 3
    %p127 = por %p125, %p126
    %p129 = scmp.ne.s32.totalorder %s112, %s128
    %p130 = scmp.eq.s32.totalorder %s15, 0
    %p131 = por %p129, %p130
    %p132 = scmp.le.s32.totalorder 1, %s9
    %p133 = scmp.lt.s32.totalorder %s9, 5
    %p134 = pnand %p132, %p133
    %p135 = pneg %p134
    // Predicated region
    $region9: #{generator_forward.9} parent=5 // pred_check
      _
    $region10: #{generator_forward.9} parent=5 // pred_check_branch
      %137 = sbr.rel (%p134) target = $region12
    $region11: #{generator_forward.9} parent=5 // pred_region
      %s138 = ssub.s32 %s9, 1
      // Predicated region
      $region13: #{generator_forward.9} parent=11 // pred_check
        %p139 = pneg %p96
      $region14: #{generator_forward.9} parent=11 // pred_check_branch
        %141 = sbr.rel (%p139) target = $region16
      $region15: #{generator_forward.9} parent=11 // pred_region
        _
      $region16: #{generator_forward.9} parent=11 // pred_fallthru
        _
    $region12: #{generator_forward.9} parent=5 // pred_fallthru
      _
    %p142 = scmp.lt.s32.totalorder %s9, 4
    // Predicated region
    $region17: #{generator_forward.9} parent=5 // pred_check
      %p143 = pneg %p142
    $region18: #{generator_forward.9} parent=5 // pred_check_branch
      %145 = sbr.rel (%p143) target = $region20
    $region19: #{generator_forward.9} parent=5 // pred_region
      // Predicated region
      $region21: #{generator_forward.9} parent=19 // pred_check
        %p146 = pneg %p43
      $region22: #{generator_forward.9} parent=19 // pred_check_branch
        %148 = sbr.rel (%p146) target = $region24
      $region23: #{generator_forward.9} parent=19 // pred_region
        %s149 = smul.u32 256, %s17
        %p150 = scmp.lt.s32.totalorder %s16, 3
        %s151 = scalar_select %p150, %s16, 3
        %p152 = scmp.lt.s32.totalorder %s149, 255
        %s153 = scalar_select %p152, %s149, 255
        %s154 = smul.addr %s151, 256
        %s155 = sadd.s32 %s153, %s154
        %s156 = smul.addr %s155, 4
        %s157 = scalar_lea.vmem %s0, %s156
        %s158 = smul.u32 256, %s17
      $region24: #{generator_forward.9} parent=19 // pred_fallthru
        _
      // Predicated region
      $region25: #{generator_forward.9} parent=19 // pred_check
        %p159 = pneg %p69
      $region26: #{generator_forward.9} parent=19 // pred_check_branch
        %161 = sbr.rel (%p159) target = $region28
      $region27: #{generator_forward.9} parent=19 // pred_region
        %p162 = scmp.lt.s32.totalorder %s16, 3
        %s163 = scalar_select %p162, %s16, 3
        %s164 = smul.addr %s163, 16
        %s165 = smul.addr %s164, 4
        %s166 = scalar_lea.vmem %s1, %s165
      $region28: #{generator_forward.9} parent=19 // pred_fallthru
        _
    $region20: #{generator_forward.9} parent=5 // pred_fallthru
      _
    %p167 = scmp.le.s32.totalorder 1, %s9
    %p168 = scmp.lt.s32.totalorder %s9, 5
    %p169 = pnand %p167, %p168
    %p170 = pneg %p169
    // Predicated region
    $region29: #{generator_forward.9} parent=5 // pred_check
      _
    $region30: #{generator_forward.9} parent=5 // pred_check_branch
      %172 = sbr.rel (%p169) target = $region32
    $region31: #{generator_forward.9} parent=5 // pred_region
      %s173 = ssub.s32 %s9, 1
      %s174 = smul.u32 256, %s19
      %p175 = scmp.lt.s32.totalorder %s18, 3
      %s176 = scalar_select %p175, %s18, 3
      %p177 = scmp.lt.s32.totalorder %s174, 255
      %s178 = scalar_select %p177, %s174, 255
      %s179 = smul.addr %s176, 256
      %s180 = sadd.s32 %s178, %s179
      %s181 = smul.addr %s180, 4
      %s182 = scalar_lea.vmem %s0, %s181
      %p183 = pneg %p49
      %p184 = pneg %p46
      %p185 = scmp.lt.s32.totalorder %s18, 3
      %s186 = scalar_select %p185, %s18, 3
      %s187 = smul.addr %s186, 16
      %s188 = smul.addr %s187, 4
      %s189 = scalar_lea.vmem %s1, %s188
      %p190 = pneg %p75
      %p191 = pneg %p72
      %p192 = pneg %p96
      %p193 = pneg %p93
      %p194 = pneg %p124
      %p195 = pneg %p121
      %s196 = sadd.s32 %s18, %s19
      %s197 = smul.u32 256, %s196
      %p198 = scmp.lt.s32.totalorder %s197, 1023
      %s199 = scalar_select %p198, %s197, 1023
      %s200 = smul.addr %s199, 8
      %s201 = scalar_lea.vmem %s3, %s200
      %s202 = smul.u32 256, %s19
      %p203 = scmp.lt.s32.totalorder %s18, 3
      %s204 = scalar_select %p203, %s18, 3
      %p205 = scmp.lt.s32.totalorder %s202, 255
      %s206 = scalar_select %p205, %s202, 255
      %s207 = smul.addr %s204, 256
      %s208 = sadd.s32 %s206, %s207
      %s209 = smul.addr %s208, 4
      %s210 = scalar_lea.vmem %s0, %s209
      %s211 = smul.u32 256, %s19
      %p212 = scmp.lt.s32.totalorder %s18, 3
      %s213 = scalar_select %p212, %s18, 3
      %s214 = smul.addr %s213, 16
      %s215 = smul.addr %s214, 4
      %s216 = scalar_lea.vmem %s1, %s215
      %s217 = sadd.s32 %s18, %s19
      %s218 = smul.u32 256, %s217
      %p219 = scmp.lt.s32.totalorder %s218, 1023
      %s220 = scalar_select %p219, %s218, 1023
      %s221 = smul.addr %s220, 8
      %s222 = scalar_lea.vmem %s3, %s221
      %s223 = sadd.s32 %s18, %s19
      %s224 = smul.u32 256, %s223
      %v226 = vld [vmem:[%s210] sm:$0xf]
      %v227 = vld [vmem:[%s210 + $0x4] sm:$0xf]
      %v228 = vld [vmem:[%s210 + $0x8] sm:$0xf]
      %v229 = vld [vmem:[%s210 + $0xc] sm:$0xf]
      %v230 = vld [vmem:[%s210 + $0x10] sm:$0xf]
      %v231 = vld [vmem:[%s210 + $0x14] sm:$0xf]
      %v232 = vld [vmem:[%s210 + $0x18] sm:$0xf]
      %v233 = vld [vmem:[%s210 + $0x1c] sm:$0xf]
      %v234 = vld [vmem:[%s210 + $0x20] sm:$0xf]
      %v235 = vld [vmem:[%s210 + $0x24] sm:$0xf]
      %v236 = vld [vmem:[%s210 + $0x28] sm:$0xf]
      %v237 = vld [vmem:[%s210 + $0x2c] sm:$0xf]
      %v238 = vld [vmem:[%s210 + $0x30] sm:$0xf]
      %v239 = vld [vmem:[%s210 + $0x34] sm:$0xf]
      %v240 = vld [vmem:[%s210 + $0x38] sm:$0xf]
      %v241 = vld [vmem:[%s210 + $0x3c] sm:$0xf]
      %v242 = vld [vmem:[%s210 + $0x40] sm:$0xf]
      %v243 = vld [vmem:[%s210 + $0x44] sm:$0xf]
      %v244 = vld [vmem:[%s210 + $0x48] sm:$0xf]
      %v245 = vld [vmem:[%s210 + $0x4c] sm:$0xf]
      %v246 = vld [vmem:[%s210 + $0x50] sm:$0xf]
      %v247 = vld [vmem:[%s210 + $0x54] sm:$0xf]
      %v248 = vld [vmem:[%s210 + $0x58] sm:$0xf]
      %v249 = vld [vmem:[%s210 + $0x5c] sm:$0xf]
      %v250 = vld [vmem:[%s210 + $0x60] sm:$0xf]
      %v251 = vld [vmem:[%s210 + $0x64] sm:$0xf]
      %v252 = vld [vmem:[%s210 + $0x68] sm:$0xf]
      %v253 = vld [vmem:[%s210 + $0x6c] sm:$0xf]
      %v254 = vld [vmem:[%s210 + $0x70] sm:$0xf]
      %v255 = vld [vmem:[%s210 + $0x74] sm:$0xf]
      %v256 = vld [vmem:[%s210 + $0x78] sm:$0xf]
      %v257 = vld [vmem:[%s210 + $0x7c] sm:$0xf]
      %v258 = vld [vmem:[%s210 + $0x80] sm:$0xf]
      %v259 = vld [vmem:[%s210 + $0x84] sm:$0xf]
      %v260 = vld [vmem:[%s210 + $0x88] sm:$0xf]
      %v261 = vld [vmem:[%s210 + $0x8c] sm:$0xf]
      %v262 = vld [vmem:[%s210 + $0x90] sm:$0xf]
      %v263 = vld [vmem:[%s210 + $0x94] sm:$0xf]
      %v264 = vld [vmem:[%s210 + $0x98] sm:$0xf]
      %v265 = vld [vmem:[%s210 + $0x9c] sm:$0xf]
      %v266 = vld [vmem:[%s210 + $0xa0] sm:$0xf]
      %v267 = vld [vmem:[%s210 + $0xa4] sm:$0xf]
      %v268 = vld [vmem:[%s210 + $0xa8] sm:$0xf]
      %v269 = vld [vmem:[%s210 + $0xac] sm:$0xf]
      %v270 = vld [vmem:[%s210 + $0xb0] sm:$0xf]
      %v271 = vld [vmem:[%s210 + $0xb4] sm:$0xf]
      %v272 = vld [vmem:[%s210 + $0xb8] sm:$0xf]
      %v273 = vld [vmem:[%s210 + $0xbc] sm:$0xf]
      %v274 = vld [vmem:[%s210 + $0xc0] sm:$0xf]
      %v275 = vld [vmem:[%s210 + $0xc4] sm:$0xf]
      %v276 = vld [vmem:[%s210 + $0xc8] sm:$0xf]
      %v277 = vld [vmem:[%s210 + $0xcc] sm:$0xf]
      %v278 = vld [vmem:[%s210 + $0xd0] sm:$0xf]
      %v279 = vld [vmem:[%s210 + $0xd4] sm:$0xf]
      %v280 = vld [vmem:[%s210 + $0xd8] sm:$0xf]
      %v281 = vld [vmem:[%s210 + $0xdc] sm:$0xf]
      %v282 = vld [vmem:[%s210 + $0xe0] sm:$0xf]
      %v283 = vld [vmem:[%s210 + $0xe4] sm:$0xf]
      %v284 = vld [vmem:[%s210 + $0xe8] sm:$0xf]
      %v285 = vld [vmem:[%s210 + $0xec] sm:$0xf]
      %v286 = vld [vmem:[%s210 + $0xf0] sm:$0xf]
      %v287 = vld [vmem:[%s210 + $0xf4] sm:$0xf]
      %v288 = vld [vmem:[%s210 + $0xf8] sm:$0xf]
      %v289 = vld [vmem:[%s210 + $0xfc] sm:$0xf]
      %v290 = vld [vmem:[%s210 + $0x100] sm:$0xf]
      %v291 = vld [vmem:[%s210 + $0x104] sm:$0xf]
      %v292 = vld [vmem:[%s210 + $0x108] sm:$0xf]
      %v293 = vld [vmem:[%s210 + $0x10c] sm:$0xf]
      %v294 = vld [vmem:[%s210 + $0x110] sm:$0xf]
      %v295 = vld [vmem:[%s210 + $0x114] sm:$0xf]
      %v296 = vld [vmem:[%s210 + $0x118] sm:$0xf]
      %v297 = vld [vmem:[%s210 + $0x11c] sm:$0xf]
      %v298 = vld [vmem:[%s210 + $0x120] sm:$0xf]
      %v299 = vld [vmem:[%s210 + $0x124] sm:$0xf]
      %v300 = vld [vmem:[%s210 + $0x128] sm:$0xf]
      %v301 = vld [vmem:[%s210 + $0x12c] sm:$0xf]
      %v302 = vld [vmem:[%s210 + $0x130] sm:$0xf]
      %v303 = vld [vmem:[%s210 + $0x134] sm:$0xf]
      %v304 = vld [vmem:[%s210 + $0x138] sm:$0xf]
      %v305 = vld [vmem:[%s210 + $0x13c] sm:$0xf]
      %v306 = vld [vmem:[%s210 + $0x140] sm:$0xf]
      %v307 = vld [vmem:[%s210 + $0x144] sm:$0xf]
      %v308 = vld [vmem:[%s210 + $0x148] sm:$0xf]
      %v309 = vld [vmem:[%s210 + $0x14c] sm:$0xf]
      %v310 = vld [vmem:[%s210 + $0x150] sm:$0xf]
      %v311 = vld [vmem:[%s210 + $0x154] sm:$0xf]
      %v312 = vld [vmem:[%s210 + $0x158] sm:$0xf]
      %v313 = vld [vmem:[%s210 + $0x15c] sm:$0xf]
      %v314 = vld [vmem:[%s210 + $0x160] sm:$0xf]
      %v315 = vld [vmem:[%s210 + $0x164] sm:$0xf]
      %v316 = vld [vmem:[%s210 + $0x168] sm:$0xf]
      %v317 = vld [vmem:[%s210 + $0x16c] sm:$0xf]
      %v318 = vld [vmem:[%s210 + $0x170] sm:$0xf]
      %v319 = vld [vmem:[%s210 + $0x174] sm:$0xf]
      %v320 = vld [vmem:[%s210 + $0x178] sm:$0xf]
      %v321 = vld [vmem:[%s210 + $0x17c] sm:$0xf]
      %v322 = vld [vmem:[%s210 + $0x180] sm:$0xf]
      %v323 = vld [vmem:[%s210 + $0x184] sm:$0xf]
      %v324 = vld [vmem:[%s210 + $0x188] sm:$0xf]
      %v325 = vld [vmem:[%s210 + $0x18c] sm:$0xf]
      %v326 = vld [vmem:[%s210 + $0x190] sm:$0xf]
      %v327 = vld [vmem:[%s210 + $0x194] sm:$0xf]
      %v328 = vld [vmem:[%s210 + $0x198] sm:$0xf]
      %v329 = vld [vmem:[%s210 + $0x19c] sm:$0xf]
      %v330 = vld [vmem:[%s210 + $0x1a0] sm:$0xf]
      %v331 = vld [vmem:[%s210 + $0x1a4] sm:$0xf]
      %v332 = vld [vmem:[%s210 + $0x1a8] sm:$0xf]
      %v333 = vld [vmem:[%s210 + $0x1ac] sm:$0xf]
      %v334 = vld [vmem:[%s210 + $0x1b0] sm:$0xf]
      %v335 = vld [vmem:[%s210 + $0x1b4] sm:$0xf]
      %v336 = vld [vmem:[%s210 + $0x1b8] sm:$0xf]
      %v337 = vld [vmem:[%s210 + $0x1bc] sm:$0xf]
      %v338 = vld [vmem:[%s210 + $0x1c0] sm:$0xf]
      %v339 = vld [vmem:[%s210 + $0x1c4] sm:$0xf]
      %v340 = vld [vmem:[%s210 + $0x1c8] sm:$0xf]
      %v341 = vld [vmem:[%s210 + $0x1cc] sm:$0xf]
      %v342 = vld [vmem:[%s210 + $0x1d0] sm:$0xf]
      %v343 = vld [vmem:[%s210 + $0x1d4] sm:$0xf]
      %v344 = vld [vmem:[%s210 + $0x1d8] sm:$0xf]
      %v345 = vld [vmem:[%s210 + $0x1dc] sm:$0xf]
      %v346 = vld [vmem:[%s210 + $0x1e0] sm:$0xf]
      %v347 = vld [vmem:[%s210 + $0x1e4] sm:$0xf]
      %v348 = vld [vmem:[%s210 + $0x1e8] sm:$0xf]
      %v349 = vld [vmem:[%s210 + $0x1ec] sm:$0xf]
      %v350 = vld [vmem:[%s210 + $0x1f0] sm:$0xf]
      %v351 = vld [vmem:[%s210 + $0x1f4] sm:$0xf]
      %v352 = vld [vmem:[%s210 + $0x1f8] sm:$0xf]
      %v353 = vld [vmem:[%s210 + $0x1fc] sm:$0xf]
      %v354 = vld [vmem:[%s210 + $0x200] sm:$0xf]
      %v355 = vld [vmem:[%s210 + $0x204] sm:$0xf]
      %v356 = vld [vmem:[%s210 + $0x208] sm:$0xf]
      %v357 = vld [vmem:[%s210 + $0x20c] sm:$0xf]
      %v358 = vld [vmem:[%s210 + $0x210] sm:$0xf]
      %v359 = vld [vmem:[%s210 + $0x214] sm:$0xf]
      %v360 = vld [vmem:[%s210 + $0x218] sm:$0xf]
      %v361 = vld [vmem:[%s210 + $0x21c] sm:$0xf]
      %v362 = vld [vmem:[%s210 + $0x220] sm:$0xf]
      %v363 = vld [vmem:[%s210 + $0x224] sm:$0xf]
      %v364 = vld [vmem:[%s210 + $0x228] sm:$0xf]
      %v365 = vld [vmem:[%s210 + $0x22c] sm:$0xf]
      %v366 = vld [vmem:[%s210 + $0x230] sm:$0xf]
      %v367 = vld [vmem:[%s210 + $0x234] sm:$0xf]
      %v368 = vld [vmem:[%s210 + $0x238] sm:$0xf]
      %v369 = vld [vmem:[%s210 + $0x23c] sm:$0xf]
      %v370 = vld [vmem:[%s210 + $0x240] sm:$0xf]
      %v371 = vld [vmem:[%s210 + $0x244] sm:$0xf]
      %v372 = vld [vmem:[%s210 + $0x248] sm:$0xf]
      %v373 = vld [vmem:[%s210 + $0x24c] sm:$0xf]
      %v374 = vld [vmem:[%s210 + $0x250] sm:$0xf]
      %v375 = vld [vmem:[%s210 + $0x254] sm:$0xf]
      %v376 = vld [vmem:[%s210 + $0x258] sm:$0xf]
      %v377 = vld [vmem:[%s210 + $0x25c] sm:$0xf]
      %v378 = vld [vmem:[%s210 + $0x260] sm:$0xf]
      %v379 = vld [vmem:[%s210 + $0x264] sm:$0xf]
      %v380 = vld [vmem:[%s210 + $0x268] sm:$0xf]
      %v381 = vld [vmem:[%s210 + $0x26c] sm:$0xf]
      %v382 = vld [vmem:[%s210 + $0x270] sm:$0xf]
      %v383 = vld [vmem:[%s210 + $0x274] sm:$0xf]
      %v384 = vld [vmem:[%s210 + $0x278] sm:$0xf]
      %v385 = vld [vmem:[%s210 + $0x27c] sm:$0xf]
      %v386 = vld [vmem:[%s210 + $0x280] sm:$0xf]
      %v387 = vld [vmem:[%s210 + $0x284] sm:$0xf]
      %v388 = vld [vmem:[%s210 + $0x288] sm:$0xf]
      %v389 = vld [vmem:[%s210 + $0x28c] sm:$0xf]
      %v390 = vld [vmem:[%s210 + $0x290] sm:$0xf]
      %v391 = vld [vmem:[%s210 + $0x294] sm:$0xf]
      %v392 = vld [vmem:[%s210 + $0x298] sm:$0xf]
      %v393 = vld [vmem:[%s210 + $0x29c] sm:$0xf]
      %v394 = vld [vmem:[%s210 + $0x2a0] sm:$0xf]
      %v395 = vld [vmem:[%s210 + $0x2a4] sm:$0xf]
      %v396 = vld [vmem:[%s210 + $0x2a8] sm:$0xf]
      %v397 = vld [vmem:[%s210 + $0x2ac] sm:$0xf]
      %v398 = vld [vmem:[%s210 + $0x2b0] sm:$0xf]
      %v399 = vld [vmem:[%s210 + $0x2b4] sm:$0xf]
      %v400 = vld [vmem:[%s210 + $0x2b8] sm:$0xf]
      %v401 = vld [vmem:[%s210 + $0x2bc] sm:$0xf]
      %v402 = vld [vmem:[%s210 + $0x2c0] sm:$0xf]
      %v403 = vld [vmem:[%s210 + $0x2c4] sm:$0xf]
      %v404 = vld [vmem:[%s210 + $0x2c8] sm:$0xf]
      %v405 = vld [vmem:[%s210 + $0x2cc] sm:$0xf]
      %v406 = vld [vmem:[%s210 + $0x2d0] sm:$0xf]
      %v407 = vld [vmem:[%s210 + $0x2d4] sm:$0xf]
      %v408 = vld [vmem:[%s210 + $0x2d8] sm:$0xf]
      %v409 = vld [vmem:[%s210 + $0x2dc] sm:$0xf]
      %v410 = vld [vmem:[%s210 + $0x2e0] sm:$0xf]
      %v411 = vld [vmem:[%s210 + $0x2e4] sm:$0xf]
      %v412 = vld [vmem:[%s210 + $0x2e8] sm:$0xf]
      %v413 = vld [vmem:[%s210 + $0x2ec] sm:$0xf]
      %v414 = vld [vmem:[%s210 + $0x2f0] sm:$0xf]
      %v415 = vld [vmem:[%s210 + $0x2f4] sm:$0xf]
      %v416 = vld [vmem:[%s210 + $0x2f8] sm:$0xf]
      %v417 = vld [vmem:[%s210 + $0x2fc] sm:$0xf]
      %v418 = vld [vmem:[%s210 + $0x300] sm:$0xf]
      %v419 = vld [vmem:[%s210 + $0x304] sm:$0xf]
      %v420 = vld [vmem:[%s210 + $0x308] sm:$0xf]
      %v421 = vld [vmem:[%s210 + $0x30c] sm:$0xf]
      %v422 = vld [vmem:[%s210 + $0x310] sm:$0xf]
      %v423 = vld [vmem:[%s210 + $0x314] sm:$0xf]
      %v424 = vld [vmem:[%s210 + $0x318] sm:$0xf]
      %v425 = vld [vmem:[%s210 + $0x31c] sm:$0xf]
      %v426 = vld [vmem:[%s210 + $0x320] sm:$0xf]
      %v427 = vld [vmem:[%s210 + $0x324] sm:$0xf]
      %v428 = vld [vmem:[%s210 + $0x328] sm:$0xf]
      %v429 = vld [vmem:[%s210 + $0x32c] sm:$0xf]
      %v430 = vld [vmem:[%s210 + $0x330] sm:$0xf]
      %v431 = vld [vmem:[%s210 + $0x334] sm:$0xf]
      %v432 = vld [vmem:[%s210 + $0x338] sm:$0xf]
      %v433 = vld [vmem:[%s210 + $0x33c] sm:$0xf]
      %v434 = vld [vmem:[%s210 + $0x340] sm:$0xf]
      %v435 = vld [vmem:[%s210 + $0x344] sm:$0xf]
      %v436 = vld [vmem:[%s210 + $0x348] sm:$0xf]
      %v437 = vld [vmem:[%s210 + $0x34c] sm:$0xf]
      %v438 = vld [vmem:[%s210 + $0x350] sm:$0xf]
      %v439 = vld [vmem:[%s210 + $0x354] sm:$0xf]
      %v440 = vld [vmem:[%s210 + $0x358] sm:$0xf]
      %v441 = vld [vmem:[%s210 + $0x35c] sm:$0xf]
      %v442 = vld [vmem:[%s210 + $0x360] sm:$0xf]
      %v443 = vld [vmem:[%s210 + $0x364] sm:$0xf]
      %v444 = vld [vmem:[%s210 + $0x368] sm:$0xf]
      %v445 = vld [vmem:[%s210 + $0x36c] sm:$0xf]
      %v446 = vld [vmem:[%s210 + $0x370] sm:$0xf]
      %v447 = vld [vmem:[%s210 + $0x374] sm:$0xf]
      %v448 = vld [vmem:[%s210 + $0x378] sm:$0xf]
      %v449 = vld [vmem:[%s210 + $0x37c] sm:$0xf]
      %v450 = vld [vmem:[%s210 + $0x380] sm:$0xf]
      %v451 = vld [vmem:[%s210 + $0x384] sm:$0xf]
      %v452 = vld [vmem:[%s210 + $0x388] sm:$0xf]
      %v453 = vld [vmem:[%s210 + $0x38c] sm:$0xf]
      %v454 = vld [vmem:[%s210 + $0x390] sm:$0xf]
      %v455 = vld [vmem:[%s210 + $0x394] sm:$0xf]
      %v456 = vld [vmem:[%s210 + $0x398] sm:$0xf]
      %v457 = vld [vmem:[%s210 + $0x39c] sm:$0xf]
      %v458 = vld [vmem:[%s210 + $0x3a0] sm:$0xf]
      %v459 = vld [vmem:[%s210 + $0x3a4] sm:$0xf]
      %v460 = vld [vmem:[%s210 + $0x3a8] sm:$0xf]
      %v461 = vld [vmem:[%s210 + $0x3ac] sm:$0xf]
      %v462 = vld [vmem:[%s210 + $0x3b0] sm:$0xf]
      %v463 = vld [vmem:[%s210 + $0x3b4] sm:$0xf]
      %v464 = vld [vmem:[%s210 + $0x3b8] sm:$0xf]
      %v465 = vld [vmem:[%s210 + $0x3bc] sm:$0xf]
      %v466 = vld [vmem:[%s210 + $0x3c0] sm:$0xf]
      %v467 = vld [vmem:[%s210 + $0x3c4] sm:$0xf]
      %v468 = vld [vmem:[%s210 + $0x3c8] sm:$0xf]
      %v469 = vld [vmem:[%s210 + $0x3cc] sm:$0xf]
      %v470 = vld [vmem:[%s210 + $0x3d0] sm:$0xf]
      %v471 = vld [vmem:[%s210 + $0x3d4] sm:$0xf]
      %v472 = vld [vmem:[%s210 + $0x3d8] sm:$0xf]
      %v473 = vld [vmem:[%s210 + $0x3dc] sm:$0xf]
      %v474 = vld [vmem:[%s210 + $0x3e0] sm:$0xf]
      %v475 = vld [vmem:[%s210 + $0x3e4] sm:$0xf]
      %v476 = vld [vmem:[%s210 + $0x3e8] sm:$0xf]
      %v477 = vld [vmem:[%s210 + $0x3ec] sm:$0xf]
      %v478 = vld [vmem:[%s210 + $0x3f0] sm:$0xf]
      %v479 = vld [vmem:[%s210 + $0x3f4] sm:$0xf]
      %v480 = vld [vmem:[%s210 + $0x3f8] sm:$0xf]
      %v481 = vld [vmem:[%s210 + $0x3fc] sm:$0xf]
      %v482 = vld [vmem:[%s216] sm:$0xf]
      %v483 = vld [vmem:[%s216 + $0x4] sm:$0xf]
      %v484 = vld [vmem:[%s216 + $0x8] sm:$0xf]
      %v485 = vld [vmem:[%s216 + $0xc] sm:$0xf]
      %v486 = vld [vmem:[%s216 + $0x10] sm:$0xf]
      %v487 = vld [vmem:[%s216 + $0x14] sm:$0xf]
      %v488 = vld [vmem:[%s216 + $0x18] sm:$0xf]
      %v489 = vld [vmem:[%s216 + $0x1c] sm:$0xf]
      %v490 = vld [vmem:[%s216 + $0x20] sm:$0xf]
      %v491 = vld [vmem:[%s216 + $0x24] sm:$0xf]
      %v492 = vld [vmem:[%s216 + $0x28] sm:$0xf]
      %v493 = vld [vmem:[%s216 + $0x2c] sm:$0xf]
      %v494 = vld [vmem:[%s216 + $0x30] sm:$0xf]
      %v495 = vld [vmem:[%s216 + $0x34] sm:$0xf]
      %v496 = vld [vmem:[%s216 + $0x38] sm:$0xf]
      %v497 = vld [vmem:[%s216 + $0x3c] sm:$0xf]
      %v498 = vld [vmem:[%s2] sm:$0x1]
      %v500 = vlaneseq
      %v501 = vshrl.u32 %v500, 7
      %v502 = vsub.s32 0, %v501
      %v503 = vrot.slane %v498, %v502
      %v761 = vunpack.c.l.b16 %v226
      %v762 = vunpack.c.l.b16 %v227
      %v763 = vunpack.c.l.b16 %v228
      %v764 = vunpack.c.l.b16 %v229
      %v765 = vunpack.c.l.b16 %v230
      %v766 = vunpack.c.l.b16 %v231
      %v767 = vunpack.c.l.b16 %v232
      %v768 = vunpack.c.l.b16 %v233
      %v769 = vunpack.c.l.b16 %v234
      %v770 = vunpack.c.l.b16 %v235
      %v771 = vunpack.c.l.b16 %v236
      %v772 = vunpack.c.l.b16 %v237
      %v773 = vunpack.c.l.b16 %v238
      %v774 = vunpack.c.l.b16 %v239
      %v775 = vunpack.c.l.b16 %v240
      %v776 = vunpack.c.l.b16 %v241
      %v777 = vunpack.c.l.b16 %v242
      %v778 = vunpack.c.l.b16 %v243
      %v779 = vunpack.c.l.b16 %v244
      %v780 = vunpack.c.l.b16 %v245
      %v781 = vunpack.c.l.b16 %v246
      %v782 = vunpack.c.l.b16 %v247
      %v783 = vunpack.c.l.b16 %v248
      %v784 = vunpack.c.l.b16 %v249
      %v785 = vunpack.c.l.b16 %v250
      %v786 = vunpack.c.l.b16 %v251
      %v787 = vunpack.c.l.b16 %v252
      %v788 = vunpack.c.l.b16 %v253
      %v789 = vunpack.c.l.b16 %v254
      %v790 = vunpack.c.l.b16 %v255
      %v791 = vunpack.c.l.b16 %v256
      %v792 = vunpack.c.l.b16 %v257
      %v793 = vunpack.c.l.b16 %v258
      %v794 = vunpack.c.l.b16 %v259
      %v795 = vunpack.c.l.b16 %v260
      %v796 = vunpack.c.l.b16 %v261
      %v797 = vunpack.c.l.b16 %v262
      %v798 = vunpack.c.l.b16 %v263
      %v799 = vunpack.c.l.b16 %v264
      %v800 = vunpack.c.l.b16 %v265
      %v801 = vunpack.c.l.b16 %v266
      %v802 = vunpack.c.l.b16 %v267
      %v803 = vunpack.c.l.b16 %v268
      %v804 = vunpack.c.l.b16 %v269
      %v805 = vunpack.c.l.b16 %v270
      %v806 = vunpack.c.l.b16 %v271
      %v807 = vunpack.c.l.b16 %v272
      %v808 = vunpack.c.l.b16 %v273
      %v809 = vunpack.c.l.b16 %v274
      %v810 = vunpack.c.l.b16 %v275
      %v811 = vunpack.c.l.b16 %v276
      %v812 = vunpack.c.l.b16 %v277
      %v813 = vunpack.c.l.b16 %v278
      %v814 = vunpack.c.l.b16 %v279
      %v815 = vunpack.c.l.b16 %v280
      %v816 = vunpack.c.l.b16 %v281
      %v817 = vunpack.c.l.b16 %v282
      %v818 = vunpack.c.l.b16 %v283
      %v819 = vunpack.c.l.b16 %v284
      %v820 = vunpack.c.l.b16 %v285
      %v821 = vunpack.c.l.b16 %v286
      %v822 = vunpack.c.l.b16 %v287
      %v823 = vunpack.c.l.b16 %v288
      %v824 = vunpack.c.l.b16 %v289
      %v825 = vunpack.c.l.b16 %v290
      %v826 = vunpack.c.l.b16 %v291
      %v827 = vunpack.c.l.b16 %v292
      %v828 = vunpack.c.l.b16 %v293
      %v829 = vunpack.c.l.b16 %v294
      %v830 = vunpack.c.l.b16 %v295
      %v831 = vunpack.c.l.b16 %v296
      %v832 = vunpack.c.l.b16 %v297
      %v833 = vunpack.c.l.b16 %v298
      %v834 = vunpack.c.l.b16 %v299
      %v835 = vunpack.c.l.b16 %v300
      %v836 = vunpack.c.l.b16 %v301
      %v837 = vunpack.c.l.b16 %v302
      %v838 = vunpack.c.l.b16 %v303
      %v839 = vunpack.c.l.b16 %v304
      %v840 = vunpack.c.l.b16 %v305
      %v841 = vunpack.c.l.b16 %v306
      %v842 = vunpack.c.l.b16 %v307
      %v843 = vunpack.c.l.b16 %v308
      %v844 = vunpack.c.l.b16 %v309
      %v845 = vunpack.c.l.b16 %v310
      %v846 = vunpack.c.l.b16 %v311
      %v847 = vunpack.c.l.b16 %v312
      %v848 = vunpack.c.l.b16 %v313
      %v849 = vunpack.c.l.b16 %v314
      %v850 = vunpack.c.l.b16 %v315
      %v851 = vunpack.c.l.b16 %v316
      %v852 = vunpack.c.l.b16 %v317
      %v853 = vunpack.c.l.b16 %v318
      %v854 = vunpack.c.l.b16 %v319
      %v855 = vunpack.c.l.b16 %v320
      %v856 = vunpack.c.l.b16 %v321
      %v857 = vunpack.c.l.b16 %v322
      %v858 = vunpack.c.l.b16 %v323
      %v859 = vunpack.c.l.b16 %v324
      %v860 = vunpack.c.l.b16 %v325
      %v861 = vunpack.c.l.b16 %v326
      %v862 = vunpack.c.l.b16 %v327
      %v863 = vunpack.c.l.b16 %v328
      %v864 = vunpack.c.l.b16 %v329
      %v865 = vunpack.c.l.b16 %v330
      %v866 = vunpack.c.l.b16 %v331
      %v867 = vunpack.c.l.b16 %v332
      %v868 = vunpack.c.l.b16 %v333
      %v869 = vunpack.c.l.b16 %v334
      %v870 = vunpack.c.l.b16 %v335
      %v871 = vunpack.c.l.b16 %v336
      %v872 = vunpack.c.l.b16 %v337
      %v873 = vunpack.c.l.b16 %v338
      %v874 = vunpack.c.l.b16 %v339
      %v875 = vunpack.c.l.b16 %v340
      %v876 = vunpack.c.l.b16 %v341
      %v877 = vunpack.c.l.b16 %v342
      %v878 = vunpack.c.l.b16 %v343
      %v879 = vunpack.c.l.b16 %v344
      %v880 = vunpack.c.l.b16 %v345
      %v881 = vunpack.c.l.b16 %v346
      %v882 = vunpack.c.l.b16 %v347
      %v883 = vunpack.c.l.b16 %v348
      %v884 = vunpack.c.l.b16 %v349
      %v885 = vunpack.c.l.b16 %v350
      %v886 = vunpack.c.l.b16 %v351
      %v887 = vunpack.c.l.b16 %v352
      %v888 = vunpack.c.l.b16 %v353
      %v889 = vunpack.c.l.b16 %v354
      %v890 = vunpack.c.l.b16 %v355
      %v891 = vunpack.c.l.b16 %v356
      %v892 = vunpack.c.l.b16 %v357
      %v893 = vunpack.c.l.b16 %v358
      %v894 = vunpack.c.l.b16 %v359
      %v895 = vunpack.c.l.b16 %v360
      %v896 = vunpack.c.l.b16 %v361
      %v897 = vunpack.c.l.b16 %v362
      %v898 = vunpack.c.l.b16 %v363
      %v899 = vunpack.c.l.b16 %v364
      %v900 = vunpack.c.l.b16 %v365
      %v901 = vunpack.c.l.b16 %v366
      %v902 = vunpack.c.l.b16 %v367
      %v903 = vunpack.c.l.b16 %v368
      %v904 = vunpack.c.l.b16 %v369
      %v905 = vunpack.c.l.b16 %v370
      %v906 = vunpack.c.l.b16 %v371
      %v907 = vunpack.c.l.b16 %v372
      %v908 = vunpack.c.l.b16 %v373
      %v909 = vunpack.c.l.b16 %v374
      %v910 = vunpack.c.l.b16 %v375
      %v911 = vunpack.c.l.b16 %v376
      %v912 = vunpack.c.l.b16 %v377
      %v913 = vunpack.c.l.b16 %v378
      %v914 = vunpack.c.l.b16 %v379
      %v915 = vunpack.c.l.b16 %v380
      %v916 = vunpack.c.l.b16 %v381
      %v917 = vunpack.c.l.b16 %v382
      %v918 = vunpack.c.l.b16 %v383
      %v919 = vunpack.c.l.b16 %v384
      %v920 = vunpack.c.l.b16 %v385
      %v921 = vunpack.c.l.b16 %v386
      %v922 = vunpack.c.l.b16 %v387
      %v923 = vunpack.c.l.b16 %v388
      %v924 = vunpack.c.l.b16 %v389
      %v925 = vunpack.c.l.b16 %v390
      %v926 = vunpack.c.l.b16 %v391
      %v927 = vunpack.c.l.b16 %v392
      %v928 = vunpack.c.l.b16 %v393
      %v929 = vunpack.c.l.b16 %v394
      %v930 = vunpack.c.l.b16 %v395
      %v931 = vunpack.c.l.b16 %v396
      %v932 = vunpack.c.l.b16 %v397
      %v933 = vunpack.c.l.b16 %v398
      %v934 = vunpack.c.l.b16 %v399
      %v935 = vunpack.c.l.b16 %v400
      %v936 = vunpack.c.l.b16 %v401
      %v937 = vunpack.c.l.b16 %v402
      %v938 = vunpack.c.l.b16 %v403
      %v939 = vunpack.c.l.b16 %v404
      %v940 = vunpack.c.l.b16 %v405
      %v941 = vunpack.c.l.b16 %v406
      %v942 = vunpack.c.l.b16 %v407
      %v943 = vunpack.c.l.b16 %v408
      %v944 = vunpack.c.l.b16 %v409
      %v945 = vunpack.c.l.b16 %v410
      %v946 = vunpack.c.l.b16 %v411
      %v947 = vunpack.c.l.b16 %v412
      %v948 = vunpack.c.l.b16 %v413
      %v949 = vunpack.c.l.b16 %v414
      %v950 = vunpack.c.l.b16 %v415
      %v951 = vunpack.c.l.b16 %v416
      %v952 = vunpack.c.l.b16 %v417
      %v953 = vunpack.c.l.b16 %v418
      %v954 = vunpack.c.l.b16 %v419
      %v955 = vunpack.c.l.b16 %v420
      %v956 = vunpack.c.l.b16 %v421
      %v957 = vunpack.c.l.b16 %v422
      %v958 = vunpack.c.l.b16 %v423
      %v959 = vunpack.c.l.b16 %v424
      %v960 = vunpack.c.l.b16 %v425
      %v961 = vunpack.c.l.b16 %v426
      %v962 = vunpack.c.l.b16 %v427
      %v963 = vunpack.c.l.b16 %v428
      %v964 = vunpack.c.l.b16 %v429
      %v965 = vunpack.c.l.b16 %v430
      %v966 = vunpack.c.l.b16 %v431
      %v967 = vunpack.c.l.b16 %v432
      %v968 = vunpack.c.l.b16 %v433
      %v969 = vunpack.c.l.b16 %v434
      %v970 = vunpack.c.l.b16 %v435
      %v971 = vunpack.c.l.b16 %v436
      %v972 = vunpack.c.l.b16 %v437
      %v973 = vunpack.c.l.b16 %v438
      %v974 = vunpack.c.l.b16 %v439
      %v975 = vunpack.c.l.b16 %v440
      %v976 = vunpack.c.l.b16 %v441
      %v977 = vunpack.c.l.b16 %v442
      %v978 = vunpack.c.l.b16 %v443
      %v979 = vunpack.c.l.b16 %v444
      %v980 = vunpack.c.l.b16 %v445
      %v981 = vunpack.c.l.b16 %v446
      %v982 = vunpack.c.l.b16 %v447
      %v983 = vunpack.c.l.b16 %v448
      %v984 = vunpack.c.l.b16 %v449
      %v985 = vunpack.c.l.b16 %v450
      %v986 = vunpack.c.l.b16 %v451
      %v987 = vunpack.c.l.b16 %v452
      %v988 = vunpack.c.l.b16 %v453
      %v989 = vunpack.c.l.b16 %v454
      %v990 = vunpack.c.l.b16 %v455
      %v991 = vunpack.c.l.b16 %v456
      %v992 = vunpack.c.l.b16 %v457
      %v993 = vunpack.c.l.b16 %v458
      %v994 = vunpack.c.l.b16 %v459
      %v995 = vunpack.c.l.b16 %v460
      %v996 = vunpack.c.l.b16 %v461
      %v997 = vunpack.c.l.b16 %v462
      %v998 = vunpack.c.l.b16 %v463
      %v999 = vunpack.c.l.b16 %v464
      %v1000 = vunpack.c.l.b16 %v465
      %v1001 = vunpack.c.l.b16 %v466
      %v1002 = vunpack.c.l.b16 %v467
      %v1003 = vunpack.c.l.b16 %v468
      %v1004 = vunpack.c.l.b16 %v469
      %v1005 = vunpack.c.l.b16 %v470
      %v1006 = vunpack.c.l.b16 %v471
      %v1007 = vunpack.c.l.b16 %v472
      %v1008 = vunpack.c.l.b16 %v473
      %v1009 = vunpack.c.l.b16 %v474
      %v1010 = vunpack.c.l.b16 %v475
      %v1011 = vunpack.c.l.b16 %v476
      %v1012 = vunpack.c.l.b16 %v477
      %v1013 = vunpack.c.l.b16 %v478
      %v1014 = vunpack.c.l.b16 %v479
      %v1015 = vunpack.c.l.b16 %v480
      %v1016 = vunpack.c.l.b16 %v481
      %v1017 = vpack.c.b16 %v762, %v761
      %v1018 = vpack.c.b16 %v764, %v763
      %v1019 = vpack.c.b16 %v766, %v765
      %v1020 = vpack.c.b16 %v768, %v767
      %v1021 = vpack.c.b16 %v770, %v769
      %v1022 = vpack.c.b16 %v772, %v771
      %v1023 = vpack.c.b16 %v774, %v773
      %v1024 = vpack.c.b16 %v776, %v775
      %v1025 = vpack.c.b16 %v778, %v777
      %v1026 = vpack.c.b16 %v780, %v779
      %v1027 = vpack.c.b16 %v782, %v781
      %v1028 = vpack.c.b16 %v784, %v783
      %v1029 = vpack.c.b16 %v786, %v785
      %v1030 = vpack.c.b16 %v788, %v787
      %v1031 = vpack.c.b16 %v790, %v789
      %v1032 = vpack.c.b16 %v792, %v791
      %v1033 = vpack.c.b16 %v794, %v793
      %v1034 = vpack.c.b16 %v796, %v795
      %v1035 = vpack.c.b16 %v798, %v797
      %v1036 = vpack.c.b16 %v800, %v799
      %v1037 = vpack.c.b16 %v802, %v801
      %v1038 = vpack.c.b16 %v804, %v803
      %v1039 = vpack.c.b16 %v806, %v805
      %v1040 = vpack.c.b16 %v808, %v807
      %v1041 = vpack.c.b16 %v810, %v809
      %v1042 = vpack.c.b16 %v812, %v811
      %v1043 = vpack.c.b16 %v814, %v813
      %v1044 = vpack.c.b16 %v816, %v815
      %v1045 = vpack.c.b16 %v818, %v817
      %v1046 = vpack.c.b16 %v820, %v819
      %v1047 = vpack.c.b16 %v822, %v821
      %v1048 = vpack.c.b16 %v824, %v823
      %v1049 = vpack.c.b16 %v826, %v825
      %v1050 = vpack.c.b16 %v828, %v827
      %v1051 = vpack.c.b16 %v830, %v829
      %v1052 = vpack.c.b16 %v832, %v831
      %v1053 = vpack.c.b16 %v834, %v833
      %v1054 = vpack.c.b16 %v836, %v835
      %v1055 = vpack.c.b16 %v838, %v837
      %v1056 = vpack.c.b16 %v840, %v839
      %v1057 = vpack.c.b16 %v842, %v841
      %v1058 = vpack.c.b16 %v844, %v843
      %v1059 = vpack.c.b16 %v846, %v845
      %v1060 = vpack.c.b16 %v848, %v847
      %v1061 = vpack.c.b16 %v850, %v849
      %v1062 = vpack.c.b16 %v852, %v851
      %v1063 = vpack.c.b16 %v854, %v853
      %v1064 = vpack.c.b16 %v856, %v855
      %v1065 = vpack.c.b16 %v858, %v857
      %v1066 = vpack.c.b16 %v860, %v859
      %v1067 = vpack.c.b16 %v862, %v861
      %v1068 = vpack.c.b16 %v864, %v863
      %v1069 = vpack.c.b16 %v866, %v865
      %v1070 = vpack.c.b16 %v868, %v867
      %v1071 = vpack.c.b16 %v870, %v869
      %v1072 = vpack.c.b16 %v872, %v871
      %v1073 = vpack.c.b16 %v874, %v873
      %v1074 = vpack.c.b16 %v876, %v875
      %v1075 = vpack.c.b16 %v878, %v877
      %v1076 = vpack.c.b16 %v880, %v879
      %v1077 = vpack.c.b16 %v882, %v881
      %v1078 = vpack.c.b16 %v884, %v883
      %v1079 = vpack.c.b16 %v886, %v885
      %v1080 = vpack.c.b16 %v888, %v887
      %v1081 = vpack.c.b16 %v890, %v889
      %v1082 = vpack.c.b16 %v892, %v891
      %v1083 = vpack.c.b16 %v894, %v893
      %v1084 = vpack.c.b16 %v896, %v895
      %v1085 = vpack.c.b16 %v898, %v897
      %v1086 = vpack.c.b16 %v900, %v899
      %v1087 = vpack.c.b16 %v902, %v901
      %v1088 = vpack.c.b16 %v904, %v903
      %v1089 = vpack.c.b16 %v906, %v905
      %v1090 = vpack.c.b16 %v908, %v907
      %v1091 = vpack.c.b16 %v910, %v909
      %v1092 = vpack.c.b16 %v912, %v911
      %v1093 = vpack.c.b16 %v914, %v913
      %v1094 = vpack.c.b16 %v916, %v915
      %v1095 = vpack.c.b16 %v918, %v917
      %v1096 = vpack.c.b16 %v920, %v919
      %v1097 = vpack.c.b16 %v922, %v921
      %v1098 = vpack.c.b16 %v924, %v923
      %v1099 = vpack.c.b16 %v926, %v925
      %v1100 = vpack.c.b16 %v928, %v927
      %v1101 = vpack.c.b16 %v930, %v929
      %v1102 = vpack.c.b16 %v932, %v931
      %v1103 = vpack.c.b16 %v934, %v933
      %v1104 = vpack.c.b16 %v936, %v935
      %v1105 = vpack.c.b16 %v938, %v937
      %v1106 = vpack.c.b16 %v940, %v939
      %v1107 = vpack.c.b16 %v942, %v941
      %v1108 = vpack.c.b16 %v944, %v943
      %v1109 = vpack.c.b16 %v946, %v945
      %v1110 = vpack.c.b16 %v948, %v947
      %v1111 = vpack.c.b16 %v950, %v949
      %v1112 = vpack.c.b16 %v952, %v951
      %v1113 = vpack.c.b16 %v954, %v953
      %v1114 = vpack.c.b16 %v956, %v955
      %v1115 = vpack.c.b16 %v958, %v957
      %v1116 = vpack.c.b16 %v960, %v959
      %v1117 = vpack.c.b16 %v962, %v961
      %v1118 = vpack.c.b16 %v964, %v963
      %v1119 = vpack.c.b16 %v966, %v965
      %v1120 = vpack.c.b16 %v968, %v967
      %v1121 = vpack.c.b16 %v970, %v969
      %v1122 = vpack.c.b16 %v972, %v971
      %v1123 = vpack.c.b16 %v974, %v973
      %v1124 = vpack.c.b16 %v976, %v975
      %v1125 = vpack.c.b16 %v978, %v977
      %v1126 = vpack.c.b16 %v980, %v979
      %v1127 = vpack.c.b16 %v982, %v981
      %v1128 = vpack.c.b16 %v984, %v983
      %v1129 = vpack.c.b16 %v986, %v985
      %v1130 = vpack.c.b16 %v988, %v987
      %v1131 = vpack.c.b16 %v990, %v989
      %v1132 = vpack.c.b16 %v992, %v991
      %v1133 = vpack.c.b16 %v994, %v993
      %v1134 = vpack.c.b16 %v996, %v995
      %v1135 = vpack.c.b16 %v998, %v997
      %v1136 = vpack.c.b16 %v1000, %v999
      %v1137 = vpack.c.b16 %v1002, %v1001
      %v1138 = vpack.c.b16 %v1004, %v1003
      %v1139 = vpack.c.b16 %v1006, %v1005
      %v1140 = vpack.c.b16 %v1008, %v1007
      %v1141 = vpack.c.b16 %v1010, %v1009
      %v1142 = vpack.c.b16 %v1012, %v1011
      %v1143 = vpack.c.b16 %v1014, %v1013
      %v1144 = vpack.c.b16 %v1016, %v1015
      %v1289 = vunpack.c.l.b16 %v482
      %v1290 = vunpack.c.l.b16 %v483
      %v1291 = vunpack.c.l.b16 %v484
      %v1292 = vunpack.c.l.b16 %v485
      %v1293 = vunpack.c.l.b16 %v486
      %v1294 = vunpack.c.l.b16 %v487
      %v1295 = vunpack.c.l.b16 %v488
      %v1296 = vunpack.c.l.b16 %v489
      %v1297 = vunpack.c.l.b16 %v490
      %v1298 = vunpack.c.l.b16 %v491
      %v1299 = vunpack.c.l.b16 %v492
      %v1300 = vunpack.c.l.b16 %v493
      %v1301 = vunpack.c.l.b16 %v494
      %v1302 = vunpack.c.l.b16 %v495
      %v1303 = vunpack.c.l.b16 %v496
      %v1304 = vunpack.c.l.b16 %v497
      %v1305 = vpack.c.b16 %v1290, %v1289
      %v1306 = vpack.c.b16 %v1292, %v1291
      %v1307 = vpack.c.b16 %v1294, %v1293
      %v1308 = vpack.c.b16 %v1296, %v1295
      %v1309 = vpack.c.b16 %v1298, %v1297
      %v1310 = vpack.c.b16 %v1300, %v1299
      %v1311 = vpack.c.b16 %v1302, %v1301
      %v1312 = vpack.c.b16 %v1304, %v1303
      %1321 = vmatprep.subr.bf16.mxu0 0
      %1322 = vmatpush1.bf16.msra.mxu0 %v1305
      %1323 = vmatprep.subr.bf16.mxu0 0
      %1324 = vmatpush1.bf16.msra.mxu0 %v1306
      %1325 = vmatprep.subr.bf16.mxu0 0
      %1326 = vmatpush1.bf16.msra.mxu0 %v1307
      %1327 = vmatprep.subr.bf16.mxu0 0
      %1328 = vmatpush1.bf16.msra.mxu0 %v1308
      %1329 = vmatprep.subr.bf16.mxu0 0
      %1330 = vmatpush1.bf16.msra.mxu0 %v1309
      %1331 = vmatprep.subr.bf16.mxu0 0
      %1332 = vmatpush1.bf16.msra.mxu0 %v1310
      %1333 = vmatprep.subr.bf16.mxu0 0
      %1334 = vmatpush1.bf16.msra.mxu0 %v1311
      %1335 = vmatprep.subr.bf16.mxu0 0
      %1336 = vmatpush1.bf16.msra.mxu0 %v1312
      %1337 = vmatprep.subr.bf16.mxu0 0
      %1338 = vmatpush1.bf16.msra.mxu0 0
      %1339 = vmatprep.subr.bf16.mxu0 0
      %1340 = vmatpush1.bf16.msra.mxu0 0
      %1341 = vmatprep.subr.bf16.mxu0 0
      %1342 = vmatpush1.bf16.msra.mxu0 0
      %1343 = vmatprep.subr.bf16.mxu0 0
      %1344 = vmatpush1.bf16.msra.mxu0 0
      %1345 = vmatprep.subr.bf16.mxu0 0
      %1346 = vmatpush1.bf16.msra.mxu0 0
      %1347 = vmatprep.subr.bf16.mxu0 0
      %1348 = vmatpush1.bf16.msra.mxu0 0
      %1349 = vmatprep.subr.bf16.mxu0 0
      %1350 = vmatpush1.bf16.msra.mxu0 0
      %1351 = vmatprep.subr.bf16.mxu0 0
      %1352 = vmatpush1.bf16.msra.mxu0 0
      %1353 = vmatprep.mubr.bf16.mxu0 0
      %1354 = vmatmul.mubr.bf16.gmra.mrb[0].mxu0 %v1017
      %v1355 = vpop.f32.mrb[0].mxu0
      %v1356 = vadd.f32 %v503, %v1355
      %v1357 = vpop.f32.mrb[0].mxu0
      %v1358 = vpop.f32.mrb[0].mxu0
      %v1359 = vadd.f32 %v503, %v1358
      %v1360 = vpop.f32.mrb[0].mxu0
      %1361 = vmatprep.mubr.bf16.mxu0 0
      %1362 = vmatmul.mubr.bf16.gmra.mrb[0].mxu0 %v1018
      %v1363 = vpop.f32.mrb[0].mxu0
      %v1364 = vadd.f32 %v503, %v1363
      %v1365 = vpop.f32.mrb[0].mxu0
      %v1366 = vpop.f32.mrb[0].mxu0
      %v1367 = vadd.f32 %v503, %v1366
      %v1368 = vpop.f32.mrb[0].mxu0
      %1369 = vmatprep.mubr.bf16.mxu0 0
      %1370 = vmatmul.mubr.bf16.gmra.mrb[0].mxu0 %v1019
      %v1371 = vpop.f32.mrb[0].mxu0
      %v1372 = vadd.f32 %v503, %v1371
      %v1373 = vpop.f32.mrb[0].mxu0
      %v1374 = vpop.f32.mrb[0].mxu0
      %v1375 = vadd.f32 %v503, %v1374
      %v1376 = vpop.f32.mrb[0].mxu0
      %1377 = vmatprep.mubr.bf16.mxu0 0
      %1378 = vmatmul.mubr.bf16.gmra.mrb[0].mxu0 %v1020
      %v1379 = vpop.f32.mrb[0].mxu0
      %v1380 = vadd.f32 %v503, %v1379
      %v1381 = vpop.f32.mrb[0].mxu0
      %v1382 = vpop.f32.mrb[0].mxu0
      %v1383 = vadd.f32 %v503, %v1382
      %v1384 = vpop.f32.mrb[0].mxu0
      %1385 = vmatprep.mubr.bf16.mxu0 0
      %1386 = vmatmul.mubr.bf16.gmra.mrb[0].mxu0 %v1021
      %v1387 = vpop.f32.mrb[0].mxu0
      %v1388 = vadd.f32 %v503, %v1387
      %v1389 = vpop.f32.mrb[0].mxu0
      %v1390 = vpop.f32.mrb[0].mxu0
      %v1391 = vadd.f32 %v503, %v1390
      %v1392 = vpop.f32.mrb[0].mxu0
      %1393 = vmatprep.mubr.bf16.mxu0 0
      %1394 = vmatmul.mubr.bf16.gmra.mrb[0].mxu0 %v1022
      %v1395 = vpop.f32.mrb[0].mxu0
      %v1396 = vadd.f32 %v503, %v1395
      %v1397 = vpop.f32.mrb[0].mxu0
      %v1398 = vpop.f32.mrb[0].mxu0
      %v1399 = vadd.f32 %v503, %v1398
      %v1400 = vpop.f32.mrb[0].mxu0
      %1401 = vmatprep.mubr.bf16.mxu0 0
      %1402 = vmatmul.mubr.bf16.gmra.mrb[0].mxu0 %v1023
      %v1403 = vpop.f32.mrb[0].mxu0
      %v1404 = vadd.f32 %v503, %v1403
      %v1405 = vpop.f32.mrb[0].mxu0
      %v1406 = vpop.f32.mrb[0].mxu0
      %v1407 = vadd.f32 %v503, %v1406
      %v1408 = vpop.f32.mrb[0].mxu0
      %1409 = vmatprep.mubr.bf16.mxu0 0
      %1410 = vmatmul.mubr.bf16.gmra.mrb[0].mxu0 %v1024
      %v1411 = vpop.f32.mrb[0].mxu0
      %v1412 = vadd.f32 %v503, %v1411
      %v1413 = vpop.f32.mrb[0].mxu0
      %v1414 = vpop.f32.mrb[0].mxu0
      %v1415 = vadd.f32 %v503, %v1414
      %v1416 = vpop.f32.mrb[0].mxu0
      %1417 = vmatprep.mubr.bf16.mxu0 0
      %1418 = vmatmul.mubr.bf16.gmra.mrb[0].mxu0 %v1025
      %v1419 = vpop.f32.mrb[0].mxu0
      %v1420 = vadd.f32 %v503, %v1419
      %v1421 = vpop.f32.mrb[0].mxu0
      %v1422 = vpop.f32.mrb[0].mxu0
      %v1423 = vadd.f32 %v503, %v1422
      %v1424 = vpop.f32.mrb[0].mxu0
      %1425 = vmatprep.mubr.bf16.mxu0 0
      %1426 = vmatmul.mubr.bf16.gmra.mrb[0].mxu0 %v1026
      %v1427 = vpop.f32.mrb[0].mxu0
      %v1428 = vadd.f32 %v503, %v1427
      %v1429 = vpop.f32.mrb[0].mxu0
      %v1430 = vpop.f32.mrb[0].mxu0
      %v1431 = vadd.f32 %v503, %v1430
      %v1432 = vpop.f32.mrb[0].mxu0
      %1433 = vmatprep.mubr.bf16.mxu0 0
      %1434 = vmatmul.mubr.bf16.gmra.mrb[0].mxu0 %v1027
      %v1435 = vpop.f32.mrb[0].mxu0
      %v1436 = vadd.f32 %v503, %v1435
      %v1437 = vpop.f32.mrb[0].mxu0
      %v1438 = vpop.f32.mrb[0].mxu0
      %v1439 = vadd.f32 %v503, %v1438
      %v1440 = vpop.f32.mrb[0].mxu0
      %1441 = vmatprep.mubr.bf16.mxu0 0
      %1442 = vmatmul.mubr.bf16.gmra.mrb[0].mxu0 %v1028
      %v1443 = vpop.f32.mrb[0].mxu0
      %v1444 = vadd.f32 %v503, %v1443
      %v1445 = vpop.f32.mrb[0].mxu0
      %v1446 = vpop.f32.mrb[0].mxu0
      %v1447 = vadd.f32 %v503, %v1446
      %v1448 = vpop.f32.mrb[0].mxu0
      %1449 = vmatprep.mubr.bf16.mxu0 0
      %1450 = vmatmul.mubr.bf16.gmra.mrb[0].mxu0 %v1029
      %v1451 = vpop.f32.mrb[0].mxu0
      %v1452 = vadd.f32 %v503, %v1451
      %v1453 = vpop.f32.mrb[0].mxu0
      %v1454 = vpop.f32.mrb[0].mxu0
      %v1455 = vadd.f32 %v503, %v1454
      %v1456 = vpop.f32.mrb[0].mxu0
      %1457 = vmatprep.mubr.bf16.mxu0 0
      %1458 = vmatmul.mubr.bf16.gmra.mrb[0].mxu0 %v1030
      %v1459 = vpop.f32.mrb[0].mxu0
      %v1460 = vadd.f32 %v503, %v1459
      %v1461 = vpop.f32.mrb[0].mxu0
      %v1462 = vpop.f32.mrb[0].mxu0
      %v1463 = vadd.f32 %v503, %v1462
      %v1464 = vpop.f32.mrb[0].mxu0
      %1465 = vmatprep.mubr.bf16.mxu0 0
      %1466 = vmatmul.mubr.bf16.gmra.mrb[0].mxu0 %v1031
      %v1467 = vpop.f32.mrb[0].mxu0
      %v1468 = vadd.f32 %v503, %v1467
      %v1469 = vpop.f32.mrb[0].mxu0
      %v1470 = vpop.f32.mrb[0].mxu0
      %v1471 = vadd.f32 %v503, %v1470
      %v1472 = vpop.f32.mrb[0].mxu0
      %1473 = vmatprep.mubr.bf16.mxu0 0
      %1474 = vmatmul.mubr.bf16.gmra.mrb[0].mxu0 %v1032
      %v1475 = vpop.f32.mrb[0].mxu0
      %v1476 = vadd.f32 %v503, %v1475
      %v1477 = vpop.f32.mrb[0].mxu0
      %v1478 = vpop.f32.mrb[0].mxu0
      %v1479 = vadd.f32 %v503, %v1478
      %v1480 = vpop.f32.mrb[0].mxu0
      %1481 = vmatprep.mubr.bf16.mxu0 0
      %1482 = vmatmul.mubr.bf16.gmra.mrb[0].mxu0 %v1033
      %v1483 = vpop.f32.mrb[0].mxu0
      %v1484 = vadd.f32 %v503, %v1483
      %v1485 = vpop.f32.mrb[0].mxu0
      %v1486 = vpop.f32.mrb[0].mxu0
      %v1487 = vadd.f32 %v503, %v1486
      %v1488 = vpop.f32.mrb[0].mxu0
      %1489 = vmatprep.mubr.bf16.mxu0 0
      %1490 = vmatmul.mubr.bf16.gmra.mrb[0].mxu0 %v1034
      %v1491 = vpop.f32.mrb[0].mxu0
      %v1492 = vadd.f32 %v503, %v1491
      %v1493 = vpop.f32.mrb[0].mxu0
      %v1494 = vpop.f32.mrb[0].mxu0
      %v1495 = vadd.f32 %v503, %v1494
      %v1496 = vpop.f32.mrb[0].mxu0
      %1497 = vmatprep.mubr.bf16.mxu0 0
      %1498 = vmatmul.mubr.bf16.gmra.mrb[0].mxu0 %v1035
      %v1499 = vpop.f32.mrb[0].mxu0
      %v1500 = vadd.f32 %v503, %v1499
      %v1501 = vpop.f32.mrb[0].mxu0
      %v1502 = vpop.f32.mrb[0].mxu0
      %v1503 = vadd.f32 %v503, %v1502
      %v1504 = vpop.f32.mrb[0].mxu0
      %1505 = vmatprep.mubr.bf16.mxu0 0
      %1506 = vmatmul.mubr.bf16.gmra.mrb[0].mxu0 %v1036
      %v1507 = vpop.f32.mrb[0].mxu0
      %v1508 = vadd.f32 %v503, %v1507
      %v1509 = vpop.f32.mrb[0].mxu0
      %v1510 = vpop.f32.mrb[0].mxu0
      %v1511 = vadd.f32 %v503, %v1510
      %v1512 = vpop.f32.mrb[0].mxu0
      %1513 = vmatprep.mubr.bf16.mxu0 0
      %1514 = vmatmul.mubr.bf16.gmra.mrb[0].mxu0 %v1037
      %v1515 = vpop.f32.mrb[0].mxu0
      %v1516 = vadd.f32 %v503, %v1515
      %v1517 = vpop.f32.mrb[0].mxu0
      %v1518 = vpop.f32.mrb[0].mxu0
      %v1519 = vadd.f32 %v503, %v1518
      %v1520 = vpop.f32.mrb[0].mxu0
      %1521 = vmatprep.mubr.bf16.mxu0 0
      %1522 = vmatmul.mubr.bf16.gmra.mrb[0].mxu0 %v1038
      %v1523 = vpop.f32.mrb[0].mxu0
      %v1524 = vadd.f32 %v503, %v1523
      %v1525 = vpop.f32.mrb[0].mxu0
      %v1526 = vpop.f32.mrb[0].mxu0
      %v1527 = vadd.f32 %v503, %v1526
      %v1528 = vpop.f32.mrb[0].mxu0
      %1529 = vmatprep.mubr.bf16.mxu0 0
      %1530 = vmatmul.mubr.bf16.gmra.mrb[0].mxu0 %v1039
      %v1531 = vpop.f32.mrb[0].mxu0
      %v1532 = vadd.f32 %v503, %v1531
      %v1533 = vpop.f32.mrb[0].mxu0
      %v1534 = vpop.f32.mrb[0].mxu0
      %v1535 = vadd.f32 %v503, %v1534
      %v1536 = vpop.f32.mrb[0].mxu0
      %1537 = vmatprep.mubr.bf16.mxu0 0
      %1538 = vmatmul.mubr.bf16.gmra.mrb[0].mxu0 %v1040
      %v1539 = vpop.f32.mrb[0].mxu0
      %v1540 = vadd.f32 %v503, %v1539
      %v1541 = vpop.f32.mrb[0].mxu0
      %v1542 = vpop.f32.mrb[0].mxu0
      %v1543 = vadd.f32 %v503, %v1542
      %v1544 = vpop.f32.mrb[0].mxu0
      %1545 = vmatprep.mubr.bf16.mxu0 0
      %1546 = vmatmul.mubr.bf16.gmra.mrb[0].mxu0 %v1041
      %v1547 = vpop.f32.mrb[0].mxu0
      %v1548 = vadd.f32 %v503, %v1547
      %v1549 = vpop.f32.mrb[0].mxu0
      %v1550 = vpop.f32.mrb[0].mxu0
      %v1551 = vadd.f32 %v503, %v1550
      %v1552 = vpop.f32.mrb[0].mxu0
      %1553 = vmatprep.mubr.bf16.mxu0 0
      %1554 = vmatmul.mubr.bf16.gmra.mrb[0].mxu0 %v1042
      %v1555 = vpop.f32.mrb[0].mxu0
      %v1556 = vadd.f32 %v503, %v1555
      %v1557 = vpop.f32.mrb[0].mxu0
      %v1558 = vpop.f32.mrb[0].mxu0
      %v1559 = vadd.f32 %v503, %v1558
      %v1560 = vpop.f32.mrb[0].mxu0
      %1561 = vmatprep.mubr.bf16.mxu0 0
      %1562 = vmatmul.mubr.bf16.gmra.mrb[0].mxu0 %v1043
      %v1563 = vpop.f32.mrb[0].mxu0
      %v1564 = vadd.f32 %v503, %v1563
      %v1565 = vpop.f32.mrb[0].mxu0
      %v1566 = vpop.f32.mrb[0].mxu0
      %v1567 = vadd.f32 %v503, %v1566
      %v1568 = vpop.f32.mrb[0].mxu0
      %1569 = vmatprep.mubr.bf16.mxu0 0
      %1570 = vmatmul.mubr.bf16.gmra.mrb[0].mxu0 %v1044
      %v1571 = vpop.f32.mrb[0].mxu0
      %v1572 = vadd.f32 %v503, %v1571
      %v1573 = vpop.f32.mrb[0].mxu0
      %v1574 = vpop.f32.mrb[0].mxu0
      %v1575 = vadd.f32 %v503, %v1574
      %v1576 = vpop.f32.mrb[0].mxu0
      %1577 = vmatprep.mubr.bf16.mxu0 0
      %1578 = vmatmul.mubr.bf16.gmra.mrb[0].mxu0 %v1045
      %v1579 = vpop.f32.mrb[0].mxu0
      %v1580 = vadd.f32 %v503, %v1579
      %v1581 = vpop.f32.mrb[0].mxu0
      %v1582 = vpop.f32.mrb[0].mxu0
      %v1583 = vadd.f32 %v503, %v1582
      %v1584 = vpop.f32.mrb[0].mxu0
      %1585 = vmatprep.mubr.bf16.mxu0 0
      %1586 = vmatmul.mubr.bf16.gmra.mrb[0].mxu0 %v1046
      %v1587 = vpop.f32.mrb[0].mxu0
      %v1588 = vadd.f32 %v503, %v1587
      %v1589 = vpop.f32.mrb[0].mxu0
      %v1590 = vpop.f32.mrb[0].mxu0
      %v1591 = vadd.f32 %v503, %v1590
      %v1592 = vpop.f32.mrb[0].mxu0
      %1593 = vmatprep.mubr.bf16.mxu0 0
      %1594 = vmatmul.mubr.bf16.gmra.mrb[0].mxu0 %v1047
      %v1595 = vpop.f32.mrb[0].mxu0
      %v1596 = vadd.f32 %v503, %v1595
      %v1597 = vpop.f32.mrb[0].mxu0
      %v1598 = vpop.f32.mrb[0].mxu0
      %v1599 = vadd.f32 %v503, %v1598
      %v1600 = vpop.f32.mrb[0].mxu0
      %1601 = vmatprep.mubr.bf16.mxu0 0
      %1602 = vmatmul.mubr.bf16.gmra.mrb[0].mxu0 %v1048
      %v1603 = vpop.f32.mrb[0].mxu0
      %v1604 = vadd.f32 %v503, %v1603
      %v1605 = vpop.f32.mrb[0].mxu0
      %v1606 = vpop.f32.mrb[0].mxu0
      %v1607 = vadd.f32 %v503, %v1606
      %v1608 = vpop.f32.mrb[0].mxu0
      %1609 = vmatprep.mubr.bf16.mxu0 0
      %1610 = vmatmul.mubr.bf16.gmra.mrb[0].mxu0 %v1049
      %v1611 = vpop.f32.mrb[0].mxu0
      %v1612 = vadd.f32 %v503, %v1611
      %v1613 = vpop.f32.mrb[0].mxu0
      %v1614 = vpop.f32.mrb[0].mxu0
      %v1615 = vadd.f32 %v503, %v1614
      %v1616 = vpop.f32.mrb[0].mxu0
      %1617 = vmatprep.mubr.bf16.mxu0 0
      %1618 = vmatmul.mubr.bf16.gmra.mrb[0].mxu0 %v1050
      %v1619 = vpop.f32.mrb[0].mxu0
      %v1620 = vadd.f32 %v503, %v1619
      %v1621 = vpop.f32.mrb[0].mxu0
      %v1622 = vpop.f32.mrb[0].mxu0
      %v1623 = vadd.f32 %v503, %v1622
      %v1624 = vpop.f32.mrb[0].mxu0
      %1625 = vmatprep.mubr.bf16.mxu0 0
      %1626 = vmatmul.mubr.bf16.gmra.mrb[0].mxu0 %v1051
      %v1627 = vpop.f32.mrb[0].mxu0
      %v1628 = vadd.f32 %v503, %v1627
      %v1629 = vpop.f32.mrb[0].mxu0
      %v1630 = vpop.f32.mrb[0].mxu0
      %v1631 = vadd.f32 %v503, %v1630
      %v1632 = vpop.f32.mrb[0].mxu0
      %1633 = vmatprep.mubr.bf16.mxu0 0
      %1634 = vmatmul.mubr.bf16.gmra.mrb[0].mxu0 %v1052
      %v1635 = vpop.f32.mrb[0].mxu0
      %v1636 = vadd.f32 %v503, %v1635
      %v1637 = vpop.f32.mrb[0].mxu0
      %v1638 = vpop.f32.mrb[0].mxu0
      %v1639 = vadd.f32 %v503, %v1638
      %v1640 = vpop.f32.mrb[0].mxu0
      %1641 = vmatprep.mubr.bf16.mxu0 0
      %1642 = vmatmul.mubr.bf16.gmra.mrb[0].mxu0 %v1053
      %v1643 = vpop.f32.mrb[0].mxu0
      %v1644 = vadd.f32 %v503, %v1643
      %v1645 = vpop.f32.mrb[0].mxu0
      %v1646 = vpop.f32.mrb[0].mxu0
      %v1647 = vadd.f32 %v503, %v1646
      %v1648 = vpop.f32.mrb[0].mxu0
      %1649 = vmatprep.mubr.bf16.mxu0 0
      %1650 = vmatmul.mubr.bf16.gmra.mrb[0].mxu0 %v1054
      %v1651 = vpop.f32.mrb[0].mxu0
      %v1652 = vadd.f32 %v503, %v1651
      %v1653 = vpop.f32.mrb[0].mxu0
      %v1654 = vpop.f32.mrb[0].mxu0
      %v1655 = vadd.f32 %v503, %v1654
      %v1656 = vpop.f32.mrb[0].mxu0
      %1657 = vmatprep.mubr.bf16.mxu0 0
      %1658 = vmatmul.mubr.bf16.gmra.mrb[0].mxu0 %v1055
      %v1659 = vpop.f32.mrb[0].mxu0
      %v1660 = vadd.f32 %v503, %v1659
      %v1661 = vpop.f32.mrb[0].mxu0
      %v1662 = vpop.f32.mrb[0].mxu0
      %v1663 = vadd.f32 %v503, %v1662
      %v1664 = vpop.f32.mrb[0].mxu0
      %1665 = vmatprep.mubr.bf16.mxu0 0
      %1666 = vmatmul.mubr.bf16.gmra.mrb[0].mxu0 %v1056
      %v1667 = vpop.f32.mrb[0].mxu0
      %v1668 = vadd.f32 %v503, %v1667
      %v1669 = vpop.f32.mrb[0].mxu0
      %v1670 = vpop.f32.mrb[0].mxu0
      %v1671 = vadd.f32 %v503, %v1670
      %v1672 = vpop.f32.mrb[0].mxu0
      %1673 = vmatprep.mubr.bf16.mxu0 0
      %1674 = vmatmul.mubr.bf16.gmra.mrb[0].mxu0 %v1057
      %v1675 = vpop.f32.mrb[0].mxu0
      %v1676 = vadd.f32 %v503, %v1675
      %v1677 = vpop.f32.mrb[0].mxu0
      %v1678 = vpop.f32.mrb[0].mxu0
      %v1679 = vadd.f32 %v503, %v1678
      %v1680 = vpop.f32.mrb[0].mxu0
      %1681 = vmatprep.mubr.bf16.mxu0 0
      %1682 = vmatmul.mubr.bf16.gmra.mrb[0].mxu0 %v1058
      %v1683 = vpop.f32.mrb[0].mxu0
      %v1684 = vadd.f32 %v503, %v1683
      %v1685 = vpop.f32.mrb[0].mxu0
      %v1686 = vpop.f32.mrb[0].mxu0
      %v1687 = vadd.f32 %v503, %v1686
      %v1688 = vpop.f32.mrb[0].mxu0
      %1689 = vmatprep.mubr.bf16.mxu0 0
      %1690 = vmatmul.mubr.bf16.gmra.mrb[0].mxu0 %v1059
      %v1691 = vpop.f32.mrb[0].mxu0
      %v1692 = vadd.f32 %v503, %v1691
      %v1693 = vpop.f32.mrb[0].mxu0
      %v1694 = vpop.f32.mrb[0].mxu0
      %v1695 = vadd.f32 %v503, %v1694
      %v1696 = vpop.f32.mrb[0].mxu0
      %1697 = vmatprep.mubr.bf16.mxu0 0
      %1698 = vmatmul.mubr.bf16.gmra.mrb[0].mxu0 %v1060
      %v1699 = vpop.f32.mrb[0].mxu0
      %v1700 = vadd.f32 %v503, %v1699
      %v1701 = vpop.f32.mrb[0].mxu0
      %v1702 = vpop.f32.mrb[0].mxu0
      %v1703 = vadd.f32 %v503, %v1702
      %v1704 = vpop.f32.mrb[0].mxu0
      %1705 = vmatprep.mubr.bf16.mxu0 0
      %1706 = vmatmul.mubr.bf16.gmra.mrb[0].mxu0 %v1061
      %v1707 = vpop.f32.mrb[0].mxu0
      %v1708 = vadd.f32 %v503, %v1707
      %v1709 = vpop.f32.mrb[0].mxu0
      %v1710 = vpop.f32.mrb[0].mxu0
      %v1711 = vadd.f32 %v503, %v1710
      %v1712 = vpop.f32.mrb[0].mxu0
      %1713 = vmatprep.mubr.bf16.mxu0 0
      %1714 = vmatmul.mubr.bf16.gmra.mrb[0].mxu0 %v1062
      %v1715 = vpop.f32.mrb[0].mxu0
      %v1716 = vadd.f32 %v503, %v1715
      %v1717 = vpop.f32.mrb[0].mxu0
      %v1718 = vpop.f32.mrb[0].mxu0
      %v1719 = vadd.f32 %v503, %v1718
      %v1720 = vpop.f32.mrb[0].mxu0
      %1721 = vmatprep.mubr.bf16.mxu0 0
      %1722 = vmatmul.mubr.bf16.gmra.mrb[0].mxu0 %v1063
      %v1723 = vpop.f32.mrb[0].mxu0
      %v1724 = vadd.f32 %v503, %v1723
      %v1725 = vpop.f32.mrb[0].mxu0
      %v1726 = vpop.f32.mrb[0].mxu0
      %v1727 = vadd.f32 %v503, %v1726
      %v1728 = vpop.f32.mrb[0].mxu0
      %1729 = vmatprep.mubr.bf16.mxu0 0
      %1730 = vmatmul.mubr.bf16.gmra.mrb[0].mxu0 %v1064
      %v1731 = vpop.f32.mrb[0].mxu0
      %v1732 = vadd.f32 %v503, %v1731
      %v1733 = vpop.f32.mrb[0].mxu0
      %v1734 = vpop.f32.mrb[0].mxu0
      %v1735 = vadd.f32 %v503, %v1734
      %v1736 = vpop.f32.mrb[0].mxu0
      %1737 = vmatprep.mubr.bf16.mxu0 0
      %1738 = vmatmul.mubr.bf16.gmra.mrb[0].mxu0 %v1065
      %v1739 = vpop.f32.mrb[0].mxu0
      %v1740 = vadd.f32 %v503, %v1739
      %v1741 = vpop.f32.mrb[0].mxu0
      %v1742 = vpop.f32.mrb[0].mxu0
      %v1743 = vadd.f32 %v503, %v1742
      %v1744 = vpop.f32.mrb[0].mxu0
      %1745 = vmatprep.mubr.bf16.mxu0 0
      %1746 = vmatmul.mubr.bf16.gmra.mrb[0].mxu0 %v1066
      %v1747 = vpop.f32.mrb[0].mxu0
      %v1748 = vadd.f32 %v503, %v1747
      %v1749 = vpop.f32.mrb[0].mxu0
      %v1750 = vpop.f32.mrb[0].mxu0
      %v1751 = vadd.f32 %v503, %v1750
      %v1752 = vpop.f32.mrb[0].mxu0
      %1753 = vmatprep.mubr.bf16.mxu0 0
      %1754 = vmatmul.mubr.bf16.gmra.mrb[0].mxu0 %v1067
      %v1755 = vpop.f32.mrb[0].mxu0
      %v1756 = vadd.f32 %v503, %v1755
      %v1757 = vpop.f32.mrb[0].mxu0
      %v1758 = vpop.f32.mrb[0].mxu0
      %v1759 = vadd.f32 %v503, %v1758
      %v1760 = vpop.f32.mrb[0].mxu0
      %1761 = vmatprep.mubr.bf16.mxu0 0
      %1762 = vmatmul.mubr.bf16.gmra.mrb[0].mxu0 %v1068
      %v1763 = vpop.f32.mrb[0].mxu0
      %v1764 = vadd.f32 %v503, %v1763
      %v1765 = vpop.f32.mrb[0].mxu0
      %v1766 = vpop.f32.mrb[0].mxu0
      %v1767 = vadd.f32 %v503, %v1766
      %v1768 = vpop.f32.mrb[0].mxu0
      %1769 = vmatprep.mubr.bf16.mxu0 0
      %1770 = vmatmul.mubr.bf16.gmra.mrb[0].mxu0 %v1069
      %v1771 = vpop.f32.mrb[0].mxu0
      %v1772 = vadd.f32 %v503, %v1771
      %v1773 = vpop.f32.mrb[0].mxu0
      %v1774 = vpop.f32.mrb[0].mxu0
      %v1775 = vadd.f32 %v503, %v1774
      %v1776 = vpop.f32.mrb[0].mxu0
      %1777 = vmatprep.mubr.bf16.mxu0 0
      %1778 = vmatmul.mubr.bf16.gmra.mrb[0].mxu0 %v1070
      %v1779 = vpop.f32.mrb[0].mxu0
      %v1780 = vadd.f32 %v503, %v1779
      %v1781 = vpop.f32.mrb[0].mxu0
      %v1782 = vpop.f32.mrb[0].mxu0
      %v1783 = vadd.f32 %v503, %v1782
      %v1784 = vpop.f32.mrb[0].mxu0
      %1785 = vmatprep.mubr.bf16.mxu0 0
      %1786 = vmatmul.mubr.bf16.gmra.mrb[0].mxu0 %v1071
      %v1787 = vpop.f32.mrb[0].mxu0
      %v1788 = vadd.f32 %v503, %v1787
      %v1789 = vpop.f32.mrb[0].mxu0
      %v1790 = vpop.f32.mrb[0].mxu0
      %v1791 = vadd.f32 %v503, %v1790
      %v1792 = vpop.f32.mrb[0].mxu0
      %1793 = vmatprep.mubr.bf16.mxu0 0
      %1794 = vmatmul.mubr.bf16.gmra.mrb[0].mxu0 %v1072
      %v1795 = vpop.f32.mrb[0].mxu0
      %v1796 = vadd.f32 %v503, %v1795
      %v1797 = vpop.f32.mrb[0].mxu0
      %v1798 = vpop.f32.mrb[0].mxu0
      %v1799 = vadd.f32 %v503, %v1798
      %v1800 = vpop.f32.mrb[0].mxu0
      %1801 = vmatprep.mubr.bf16.mxu0 0
      %1802 = vmatmul.mubr.bf16.gmra.mrb[0].mxu0 %v1073
      %v1803 = vpop.f32.mrb[0].mxu0
      %v1804 = vadd.f32 %v503, %v1803
      %v1805 = vpop.f32.mrb[0].mxu0
      %v1806 = vpop.f32.mrb[0].mxu0
      %v1807 = vadd.f32 %v503, %v1806
      %v1808 = vpop.f32.mrb[0].mxu0
      %1809 = vmatprep.mubr.bf16.mxu0 0
      %1810 = vmatmul.mubr.bf16.gmra.mrb[0].mxu0 %v1074
      %v1811 = vpop.f32.mrb[0].mxu0
      %v1812 = vadd.f32 %v503, %v1811
      %v1813 = vpop.f32.mrb[0].mxu0
      %v1814 = vpop.f32.mrb[0].mxu0
      %v1815 = vadd.f32 %v503, %v1814
      %v1816 = vpop.f32.mrb[0].mxu0
      %1817 = vmatprep.mubr.bf16.mxu0 0
      %1818 = vmatmul.mubr.bf16.gmra.mrb[0].mxu0 %v1075
      %v1819 = vpop.f32.mrb[0].mxu0
      %v1820 = vadd.f32 %v503, %v1819
      %v1821 = vpop.f32.mrb[0].mxu0
      %v1822 = vpop.f32.mrb[0].mxu0
      %v1823 = vadd.f32 %v503, %v1822
      %v1824 = vpop.f32.mrb[0].mxu0
      %1825 = vmatprep.mubr.bf16.mxu0 0
      %1826 = vmatmul.mubr.bf16.gmra.mrb[0].mxu0 %v1076
      %v1827 = vpop.f32.mrb[0].mxu0
      %v1828 = vadd.f32 %v503, %v1827
      %v1829 = vpop.f32.mrb[0].mxu0
      %v1830 = vpop.f32.mrb[0].mxu0
      %v1831 = vadd.f32 %v503, %v1830
      %v1832 = vpop.f32.mrb[0].mxu0
      %1833 = vmatprep.mubr.bf16.mxu0 0
      %1834 = vmatmul.mubr.bf16.gmra.mrb[0].mxu0 %v1077
      %v1835 = vpop.f32.mrb[0].mxu0
      %v1836 = vadd.f32 %v503, %v1835
      %v1837 = vpop.f32.mrb[0].mxu0
      %v1838 = vpop.f32.mrb[0].mxu0
      %v1839 = vadd.f32 %v503, %v1838
      %v1840 = vpop.f32.mrb[0].mxu0
      %1841 = vmatprep.mubr.bf16.mxu0 0
      %1842 = vmatmul.mubr.bf16.gmra.mrb[0].mxu0 %v1078
      %v1843 = vpop.f32.mrb[0].mxu0
      %v1844 = vadd.f32 %v503, %v1843
      %v1845 = vpop.f32.mrb[0].mxu0
      %v1846 = vpop.f32.mrb[0].mxu0
      %v1847 = vadd.f32 %v503, %v1846
      %v1848 = vpop.f32.mrb[0].mxu0
      %1849 = vmatprep.mubr.bf16.mxu0 0
      %1850 = vmatmul.mubr.bf16.gmra.mrb[0].mxu0 %v1079
      %v1851 = vpop.f32.mrb[0].mxu0
      %v1852 = vadd.f32 %v503, %v1851
      %v1853 = vpop.f32.mrb[0].mxu0
      %v1854 = vpop.f32.mrb[0].mxu0
      %v1855 = vadd.f32 %v503, %v1854
      %v1856 = vpop.f32.mrb[0].mxu0
      %1857 = vmatprep.mubr.bf16.mxu0 0
      %1858 = vmatmul.mubr.bf16.gmra.mrb[0].mxu0 %v1080
      %v1859 = vpop.f32.mrb[0].mxu0
      %v1860 = vadd.f32 %v503, %v1859
      %v1861 = vpop.f32.mrb[0].mxu0
      %v1862 = vpop.f32.mrb[0].mxu0
      %v1863 = vadd.f32 %v503, %v1862
      %v1864 = vpop.f32.mrb[0].mxu0
      %1865 = vmatprep.mubr.bf16.mxu0 0
      %1866 = vmatmul.mubr.bf16.gmra.mrb[0].mxu0 %v1081
      %v1867 = vpop.f32.mrb[0].mxu0
      %v1868 = vadd.f32 %v503, %v1867
      %v1869 = vpop.f32.mrb[0].mxu0
      %v1870 = vpop.f32.mrb[0].mxu0
      %v1871 = vadd.f32 %v503, %v1870
      %v1872 = vpop.f32.mrb[0].mxu0
      %1873 = vmatprep.mubr.bf16.mxu0 0
      %1874 = vmatmul.mubr.bf16.gmra.mrb[0].mxu0 %v1082
      %v1875 = vpop.f32.mrb[0].mxu0
      %v1876 = vadd.f32 %v503, %v1875
      %v1877 = vpop.f32.mrb[0].mxu0
      %v1878 = vpop.f32.mrb[0].mxu0
      %v1879 = vadd.f32 %v503, %v1878
      %v1880 = vpop.f32.mrb[0].mxu0
      %1881 = vmatprep.mubr.bf16.mxu0 0
      %1882 = vmatmul.mubr.bf16.gmra.mrb[0].mxu0 %v1083
      %v1883 = vpop.f32.mrb[0].mxu0
      %v1884 = vadd.f32 %v503, %v1883
      %v1885 = vpop.f32.mrb[0].mxu0
      %v1886 = vpop.f32.mrb[0].mxu0
      %v1887 = vadd.f32 %v503, %v1886
      %v1888 = vpop.f32.mrb[0].mxu0
      %1889 = vmatprep.mubr.bf16.mxu0 0
      %1890 = vmatmul.mubr.bf16.gmra.mrb[0].mxu0 %v1084
      %v1891 = vpop.f32.mrb[0].mxu0
      %v1892 = vadd.f32 %v503, %v1891
      %v1893 = vpop.f32.mrb[0].mxu0
      %v1894 = vpop.f32.mrb[0].mxu0
      %v1895 = vadd.f32 %v503, %v1894
      %v1896 = vpop.f32.mrb[0].mxu0
      %1897 = vmatprep.mubr.bf16.mxu0 0
      %1898 = vmatmul.mubr.bf16.gmra.mrb[0].mxu0 %v1085
      %v1899 = vpop.f32.mrb[0].mxu0
      %v1900 = vadd.f32 %v503, %v1899
      %v1901 = vpop.f32.mrb[0].mxu0
      %v1902 = vpop.f32.mrb[0].mxu0
      %v1903 = vadd.f32 %v503, %v1902
      %v1904 = vpop.f32.mrb[0].mxu0
      %1905 = vmatprep.mubr.bf16.mxu0 0
      %1906 = vmatmul.mubr.bf16.gmra.mrb[0].mxu0 %v1086
      %v1907 = vpop.f32.mrb[0].mxu0
      %v1908 = vadd.f32 %v503, %v1907
      %v1909 = vpop.f32.mrb[0].mxu0
      %v1910 = vpop.f32.mrb[0].mxu0
      %v1911 = vadd.f32 %v503, %v1910
      %v1912 = vpop.f32.mrb[0].mxu0
      %1913 = vmatprep.mubr.bf16.mxu0 0
      %1914 = vmatmul.mubr.bf16.gmra.mrb[0].mxu0 %v1087
      %v1915 = vpop.f32.mrb[0].mxu0
      %v1916 = vadd.f32 %v503, %v1915
      %v1917 = vpop.f32.mrb[0].mxu0
      %v1918 = vpop.f32.mrb[0].mxu0
      %v1919 = vadd.f32 %v503, %v1918
      %v1920 = vpop.f32.mrb[0].mxu0
      %1921 = vmatprep.mubr.bf16.mxu0 0
      %1922 = vmatmul.mubr.bf16.gmra.mrb[0].mxu0 %v1088
      %v1923 = vpop.f32.mrb[0].mxu0
      %v1924 = vadd.f32 %v503, %v1923
      %v1925 = vpop.f32.mrb[0].mxu0
      %v1926 = vpop.f32.mrb[0].mxu0
      %v1927 = vadd.f32 %v503, %v1926
      %v1928 = vpop.f32.mrb[0].mxu0
      %1929 = vmatprep.mubr.bf16.mxu0 0
      %1930 = vmatmul.mubr.bf16.gmra.mrb[0].mxu0 %v1089
      %v1931 = vpop.f32.mrb[0].mxu0
      %v1932 = vadd.f32 %v503, %v1931
      %v1933 = vpop.f32.mrb[0].mxu0
      %v1934 = vpop.f32.mrb[0].mxu0
      %v1935 = vadd.f32 %v503, %v1934
      %v1936 = vpop.f32.mrb[0].mxu0
      %1937 = vmatprep.mubr.bf16.mxu0 0
      %1938 = vmatmul.mubr.bf16.gmra.mrb[0].mxu0 %v1090
      %v1939 = vpop.f32.mrb[0].mxu0
      %v1940 = vadd.f32 %v503, %v1939
      %v1941 = vpop.f32.mrb[0].mxu0
      %v1942 = vpop.f32.mrb[0].mxu0
      %v1943 = vadd.f32 %v503, %v1942
      %v1944 = vpop.f32.mrb[0].mxu0
      %1945 = vmatprep.mubr.bf16.mxu0 0
      %1946 = vmatmul.mubr.bf16.gmra.mrb[0].mxu0 %v1091
      %v1947 = vpop.f32.mrb[0].mxu0
      %v1948 = vadd.f32 %v503, %v1947
      %v1949 = vpop.f32.mrb[0].mxu0
      %v1950 = vpop.f32.mrb[0].mxu0
      %v1951 = vadd.f32 %v503, %v1950
      %v1952 = vpop.f32.mrb[0].mxu0
      %1953 = vmatprep.mubr.bf16.mxu0 0
      %1954 = vmatmul.mubr.bf16.gmra.mrb[0].mxu0 %v1092
      %v1955 = vpop.f32.mrb[0].mxu0
      %v1956 = vadd.f32 %v503, %v1955
      %v1957 = vpop.f32.mrb[0].mxu0
      %v1958 = vpop.f32.mrb[0].mxu0
      %v1959 = vadd.f32 %v503, %v1958
      %v1960 = vpop.f32.mrb[0].mxu0
      %1961 = vmatprep.mubr.bf16.mxu0 0
      %1962 = vmatmul.mubr.bf16.gmra.mrb[0].mxu0 %v1093
      %v1963 = vpop.f32.mrb[0].mxu0
      %v1964 = vadd.f32 %v503, %v1963
      %v1965 = vpop.f32.mrb[0].mxu0
      %v1966 = vpop.f32.mrb[0].mxu0
      %v1967 = vadd.f32 %v503, %v1966
      %v1968 = vpop.f32.mrb[0].mxu0
      %1969 = vmatprep.mubr.bf16.mxu0 0
      %1970 = vmatmul.mubr.bf16.gmra.mrb[0].mxu0 %v1094
      %v1971 = vpop.f32.mrb[0].mxu0
      %v1972 = vadd.f32 %v503, %v1971
      %v1973 = vpop.f32.mrb[0].mxu0
      %v1974 = vpop.f32.mrb[0].mxu0
      %v1975 = vadd.f32 %v503, %v1974
      %v1976 = vpop.f32.mrb[0].mxu0
      %1977 = vmatprep.mubr.bf16.mxu0 0
      %1978 = vmatmul.mubr.bf16.gmra.mrb[0].mxu0 %v1095
      %v1979 = vpop.f32.mrb[0].mxu0
      %v1980 = vadd.f32 %v503, %v1979
      %v1981 = vpop.f32.mrb[0].mxu0
      %v1982 = vpop.f32.mrb[0].mxu0
      %v1983 = vadd.f32 %v503, %v1982
      %v1984 = vpop.f32.mrb[0].mxu0
      %1985 = vmatprep.mubr.bf16.mxu0 0
      %1986 = vmatmul.mubr.bf16.gmra.mrb[0].mxu0 %v1096
      %v1987 = vpop.f32.mrb[0].mxu0
      %v1988 = vadd.f32 %v503, %v1987
      %v1989 = vpop.f32.mrb[0].mxu0
      %v1990 = vpop.f32.mrb[0].mxu0
      %v1991 = vadd.f32 %v503, %v1990
      %v1992 = vpop.f32.mrb[0].mxu0
      %1993 = vmatprep.mubr.bf16.mxu0 0
      %1994 = vmatmul.mubr.bf16.gmra.mrb[0].mxu0 %v1097
      %v1995 = vpop.f32.mrb[0].mxu0
      %v1996 = vadd.f32 %v503, %v1995
      %v1997 = vpop.f32.mrb[0].mxu0
      %v1998 = vpop.f32.mrb[0].mxu0
      %v1999 = vadd.f32 %v503, %v1998
      %v2000 = vpop.f32.mrb[0].mxu0
      %2001 = vmatprep.mubr.bf16.mxu0 0
      %2002 = vmatmul.mubr.bf16.gmra.mrb[0].mxu0 %v1098
      %v2003 = vpop.f32.mrb[0].mxu0
      %v2004 = vadd.f32 %v503, %v2003
      %v2005 = vpop.f32.mrb[0].mxu0
      %v2006 = vpop.f32.mrb[0].mxu0
      %v2007 = vadd.f32 %v503, %v2006
      %v2008 = vpop.f32.mrb[0].mxu0
      %2009 = vmatprep.mubr.bf16.mxu0 0
      %2010 = vmatmul.mubr.bf16.gmra.mrb[0].mxu0 %v1099
      %v2011 = vpop.f32.mrb[0].mxu0
      %v2012 = vadd.f32 %v503, %v2011
      %v2013 = vpop.f32.mrb[0].mxu0
      %v2014 = vpop.f32.mrb[0].mxu0
      %v2015 = vadd.f32 %v503, %v2014
      %v2016 = vpop.f32.mrb[0].mxu0
      %2017 = vmatprep.mubr.bf16.mxu0 0
      %2018 = vmatmul.mubr.bf16.gmra.mrb[0].mxu0 %v1100
      %v2019 = vpop.f32.mrb[0].mxu0
      %v2020 = vadd.f32 %v503, %v2019
      %v2021 = vpop.f32.mrb[0].mxu0
      %v2022 = vpop.f32.mrb[0].mxu0
      %v2023 = vadd.f32 %v503, %v2022
      %v2024 = vpop.f32.mrb[0].mxu0
      %2025 = vmatprep.mubr.bf16.mxu0 0
      %2026 = vmatmul.mubr.bf16.gmra.mrb[0].mxu0 %v1101
      %v2027 = vpop.f32.mrb[0].mxu0
      %v2028 = vadd.f32 %v503, %v2027
      %v2029 = vpop.f32.mrb[0].mxu0
      %v2030 = vpop.f32.mrb[0].mxu0
      %v2031 = vadd.f32 %v503, %v2030
      %v2032 = vpop.f32.mrb[0].mxu0
      %2033 = vmatprep.mubr.bf16.mxu0 0
      %2034 = vmatmul.mubr.bf16.gmra.mrb[0].mxu0 %v1102
      %v2035 = vpop.f32.mrb[0].mxu0
      %v2036 = vadd.f32 %v503, %v2035
      %v2037 = vpop.f32.mrb[0].mxu0
      %v2038 = vpop.f32.mrb[0].mxu0
      %v2039 = vadd.f32 %v503, %v2038
      %v2040 = vpop.f32.mrb[0].mxu0
      %2041 = vmatprep.mubr.bf16.mxu0 0
      %2042 = vmatmul.mubr.bf16.gmra.mrb[0].mxu0 %v1103
      %v2043 = vpop.f32.mrb[0].mxu0
      %v2044 = vadd.f32 %v503, %v2043
      %v2045 = vpop.f32.mrb[0].mxu0
      %v2046 = vpop.f32.mrb[0].mxu0
      %v2047 = vadd.f32 %v503, %v2046
      %v2048 = vpop.f32.mrb[0].mxu0
      %2049 = vmatprep.mubr.bf16.mxu0 0
      %2050 = vmatmul.mubr.bf16.gmra.mrb[0].mxu0 %v1104
      %v2051 = vpop.f32.mrb[0].mxu0
      %v2052 = vadd.f32 %v503, %v2051
      %v2053 = vpop.f32.mrb[0].mxu0
      %v2054 = vpop.f32.mrb[0].mxu0
      %v2055 = vadd.f32 %v503, %v2054
      %v2056 = vpop.f32.mrb[0].mxu0
      %2057 = vmatprep.mubr.bf16.mxu0 0
      %2058 = vmatmul.mubr.bf16.gmra.mrb[0].mxu0 %v1105
      %v2059 = vpop.f32.mrb[0].mxu0
      %v2060 = vadd.f32 %v503, %v2059
      %v2061 = vpop.f32.mrb[0].mxu0
      %v2062 = vpop.f32.mrb[0].mxu0
      %v2063 = vadd.f32 %v503, %v2062
      %v2064 = vpop.f32.mrb[0].mxu0
      %2065 = vmatprep.mubr.bf16.mxu0 0
      %2066 = vmatmul.mubr.bf16.gmra.mrb[0].mxu0 %v1106
      %v2067 = vpop.f32.mrb[0].mxu0
      %v2068 = vadd.f32 %v503, %v2067
      %v2069 = vpop.f32.mrb[0].mxu0
      %v2070 = vpop.f32.mrb[0].mxu0
      %v2071 = vadd.f32 %v503, %v2070
      %v2072 = vpop.f32.mrb[0].mxu0
      %2073 = vmatprep.mubr.bf16.mxu0 0
      %2074 = vmatmul.mubr.bf16.gmra.mrb[0].mxu0 %v1107
      %v2075 = vpop.f32.mrb[0].mxu0
      %v2076 = vadd.f32 %v503, %v2075
      %v2077 = vpop.f32.mrb[0].mxu0
      %v2078 = vpop.f32.mrb[0].mxu0
      %v2079 = vadd.f32 %v503, %v2078
      %v2080 = vpop.f32.mrb[0].mxu0
      %2081 = vmatprep.mubr.bf16.mxu0 0
      %2082 = vmatmul.mubr.bf16.gmra.mrb[0].mxu0 %v1108
      %v2083 = vpop.f32.mrb[0].mxu0
      %v2084 = vadd.f32 %v503, %v2083
      %v2085 = vpop.f32.mrb[0].mxu0
      %v2086 = vpop.f32.mrb[0].mxu0
      %v2087 = vadd.f32 %v503, %v2086
      %v2088 = vpop.f32.mrb[0].mxu0
      %2089 = vmatprep.mubr.bf16.mxu0 0
      %2090 = vmatmul.mubr.bf16.gmra.mrb[0].mxu0 %v1109
      %v2091 = vpop.f32.mrb[0].mxu0
      %v2092 = vadd.f32 %v503, %v2091
      %v2093 = vpop.f32.mrb[0].mxu0
      %v2094 = vpop.f32.mrb[0].mxu0
      %v2095 = vadd.f32 %v503, %v2094
      %v2096 = vpop.f32.mrb[0].mxu0
      %2097 = vmatprep.mubr.bf16.mxu0 0
      %2098 = vmatmul.mubr.bf16.gmra.mrb[0].mxu0 %v1110
      %v2099 = vpop.f32.mrb[0].mxu0
      %v2100 = vadd.f32 %v503, %v2099
      %v2101 = vpop.f32.mrb[0].mxu0
      %v2102 = vpop.f32.mrb[0].mxu0
      %v2103 = vadd.f32 %v503, %v2102
      %v2104 = vpop.f32.mrb[0].mxu0
      %2105 = vmatprep.mubr.bf16.mxu0 0
      %2106 = vmatmul.mubr.bf16.gmra.mrb[0].mxu0 %v1111
      %v2107 = vpop.f32.mrb[0].mxu0
      %v2108 = vadd.f32 %v503, %v2107
      %v2109 = vpop.f32.mrb[0].mxu0
      %v2110 = vpop.f32.mrb[0].mxu0
      %v2111 = vadd.f32 %v503, %v2110
      %v2112 = vpop.f32.mrb[0].mxu0
      %2113 = vmatprep.mubr.bf16.mxu0 0
      %2114 = vmatmul.mubr.bf16.gmra.mrb[0].mxu0 %v1112
      %v2115 = vpop.f32.mrb[0].mxu0
      %v2116 = vadd.f32 %v503, %v2115
      %v2117 = vpop.f32.mrb[0].mxu0
      %v2118 = vpop.f32.mrb[0].mxu0
      %v2119 = vadd.f32 %v503, %v2118
      %v2120 = vpop.f32.mrb[0].mxu0
      %2121 = vmatprep.mubr.bf16.mxu0 0
      %2122 = vmatmul.mubr.bf16.gmra.mrb[0].mxu0 %v1113
      %v2123 = vpop.f32.mrb[0].mxu0
      %v2124 = vadd.f32 %v503, %v2123
      %v2125 = vpop.f32.mrb[0].mxu0
      %v2126 = vpop.f32.mrb[0].mxu0
      %v2127 = vadd.f32 %v503, %v2126
      %v2128 = vpop.f32.mrb[0].mxu0
      %2129 = vmatprep.mubr.bf16.mxu0 0
      %2130 = vmatmul.mubr.bf16.gmra.mrb[0].mxu0 %v1114
      %v2131 = vpop.f32.mrb[0].mxu0
      %v2132 = vadd.f32 %v503, %v2131
      %v2133 = vpop.f32.mrb[0].mxu0
      %v2134 = vpop.f32.mrb[0].mxu0
      %v2135 = vadd.f32 %v503, %v2134
      %v2136 = vpop.f32.mrb[0].mxu0
      %2137 = vmatprep.mubr.bf16.mxu0 0
      %2138 = vmatmul.mubr.bf16.gmra.mrb[0].mxu0 %v1115
      %v2139 = vpop.f32.mrb[0].mxu0
      %v2140 = vadd.f32 %v503, %v2139
      %v2141 = vpop.f32.mrb[0].mxu0
      %v2142 = vpop.f32.mrb[0].mxu0
      %v2143 = vadd.f32 %v503, %v2142
      %v2144 = vpop.f32.mrb[0].mxu0
      %2145 = vmatprep.mubr.bf16.mxu0 0
      %2146 = vmatmul.mubr.bf16.gmra.mrb[0].mxu0 %v1116
      %v2147 = vpop.f32.mrb[0].mxu0
      %v2148 = vadd.f32 %v503, %v2147
      %v2149 = vpop.f32.mrb[0].mxu0
      %v2150 = vpop.f32.mrb[0].mxu0
      %v2151 = vadd.f32 %v503, %v2150
      %v2152 = vpop.f32.mrb[0].mxu0
      %2153 = vmatprep.mubr.bf16.mxu0 0
      %2154 = vmatmul.mubr.bf16.gmra.mrb[0].mxu0 %v1117
      %v2155 = vpop.f32.mrb[0].mxu0
      %v2156 = vadd.f32 %v503, %v2155
      %v2157 = vpop.f32.mrb[0].mxu0
      %v2158 = vpop.f32.mrb[0].mxu0
      %v2159 = vadd.f32 %v503, %v2158
      %v2160 = vpop.f32.mrb[0].mxu0
      %2161 = vmatprep.mubr.bf16.mxu0 0
      %2162 = vmatmul.mubr.bf16.gmra.mrb[0].mxu0 %v1118
      %v2163 = vpop.f32.mrb[0].mxu0
      %v2164 = vadd.f32 %v503, %v2163
      %v2165 = vpop.f32.mrb[0].mxu0
      %v2166 = vpop.f32.mrb[0].mxu0
      %v2167 = vadd.f32 %v503, %v2166
      %v2168 = vpop.f32.mrb[0].mxu0
      %2169 = vmatprep.mubr.bf16.mxu0 0
      %2170 = vmatmul.mubr.bf16.gmra.mrb[0].mxu0 %v1119
      %v2171 = vpop.f32.mrb[0].mxu0
      %v2172 = vadd.f32 %v503, %v2171
      %v2173 = vpop.f32.mrb[0].mxu0
      %v2174 = vpop.f32.mrb[0].mxu0
      %v2175 = vadd.f32 %v503, %v2174
      %v2176 = vpop.f32.mrb[0].mxu0
      %2177 = vmatprep.mubr.bf16.mxu0 0
      %2178 = vmatmul.mubr.bf16.gmra.mrb[0].mxu0 %v1120
      %v2179 = vpop.f32.mrb[0].mxu0
      %v2180 = vadd.f32 %v503, %v2179
      %v2181 = vpop.f32.mrb[0].mxu0
      %v2182 = vpop.f32.mrb[0].mxu0
      %v2183 = vadd.f32 %v503, %v2182
      %v2184 = vpop.f32.mrb[0].mxu0
      %2185 = vmatprep.mubr.bf16.mxu0 0
      %2186 = vmatmul.mubr.bf16.gmra.mrb[0].mxu0 %v1121
      %v2187 = vpop.f32.mrb[0].mxu0
      %v2188 = vadd.f32 %v503, %v2187
      %v2189 = vpop.f32.mrb[0].mxu0
      %v2190 = vpop.f32.mrb[0].mxu0
      %v2191 = vadd.f32 %v503, %v2190
      %v2192 = vpop.f32.mrb[0].mxu0
      %2193 = vmatprep.mubr.bf16.mxu0 0
      %2194 = vmatmul.mubr.bf16.gmra.mrb[0].mxu0 %v1122
      %v2195 = vpop.f32.mrb[0].mxu0
      %v2196 = vadd.f32 %v503, %v2195
      %v2197 = vpop.f32.mrb[0].mxu0
      %v2198 = vpop.f32.mrb[0].mxu0
      %v2199 = vadd.f32 %v503, %v2198
      %v2200 = vpop.f32.mrb[0].mxu0
      %2201 = vmatprep.mubr.bf16.mxu0 0
      %2202 = vmatmul.mubr.bf16.gmra.mrb[0].mxu0 %v1123
      %v2203 = vpop.f32.mrb[0].mxu0
      %v2204 = vadd.f32 %v503, %v2203
      %v2205 = vpop.f32.mrb[0].mxu0
      %v2206 = vpop.f32.mrb[0].mxu0
      %v2207 = vadd.f32 %v503, %v2206
      %v2208 = vpop.f32.mrb[0].mxu0
      %2209 = vmatprep.mubr.bf16.mxu0 0
      %2210 = vmatmul.mubr.bf16.gmra.mrb[0].mxu0 %v1124
      %v2211 = vpop.f32.mrb[0].mxu0
      %v2212 = vadd.f32 %v503, %v2211
      %v2213 = vpop.f32.mrb[0].mxu0
      %v2214 = vpop.f32.mrb[0].mxu0
      %v2215 = vadd.f32 %v503, %v2214
      %v2216 = vpop.f32.mrb[0].mxu0
      %2217 = vmatprep.mubr.bf16.mxu0 0
      %2218 = vmatmul.mubr.bf16.gmra.mrb[0].mxu0 %v1125
      %v2219 = vpop.f32.mrb[0].mxu0
      %v2220 = vadd.f32 %v503, %v2219
      %v2221 = vpop.f32.mrb[0].mxu0
      %v2222 = vpop.f32.mrb[0].mxu0
      %v2223 = vadd.f32 %v503, %v2222
      %v2224 = vpop.f32.mrb[0].mxu0
      %2225 = vmatprep.mubr.bf16.mxu0 0
      %2226 = vmatmul.mubr.bf16.gmra.mrb[0].mxu0 %v1126
      %v2227 = vpop.f32.mrb[0].mxu0
      %v2228 = vadd.f32 %v503, %v2227
      %v2229 = vpop.f32.mrb[0].mxu0
      %v2230 = vpop.f32.mrb[0].mxu0
      %v2231 = vadd.f32 %v503, %v2230
      %v2232 = vpop.f32.mrb[0].mxu0
      %2233 = vmatprep.mubr.bf16.mxu0 0
      %2234 = vmatmul.mubr.bf16.gmra.mrb[0].mxu0 %v1127
      %v2235 = vpop.f32.mrb[0].mxu0
      %v2236 = vadd.f32 %v503, %v2235
      %v2237 = vpop.f32.mrb[0].mxu0
      %v2238 = vpop.f32.mrb[0].mxu0
      %v2239 = vadd.f32 %v503, %v2238
      %v2240 = vpop.f32.mrb[0].mxu0
      %2241 = vmatprep.mubr.bf16.mxu0 0
      %2242 = vmatmul.mubr.bf16.gmra.mrb[0].mxu0 %v1128
      %v2243 = vpop.f32.mrb[0].mxu0
      %v2244 = vadd.f32 %v503, %v2243
      %v2245 = vpop.f32.mrb[0].mxu0
      %v2246 = vpop.f32.mrb[0].mxu0
      %v2247 = vadd.f32 %v503, %v2246
      %v2248 = vpop.f32.mrb[0].mxu0
      %2249 = vmatprep.mubr.bf16.mxu0 0
      %2250 = vmatmul.mubr.bf16.gmra.mrb[0].mxu0 %v1129
      %v2251 = vpop.f32.mrb[0].mxu0
      %v2252 = vadd.f32 %v503, %v2251
      %v2253 = vpop.f32.mrb[0].mxu0
      %v2254 = vpop.f32.mrb[0].mxu0
      %v2255 = vadd.f32 %v503, %v2254
      %v2256 = vpop.f32.mrb[0].mxu0
      %2257 = vmatprep.mubr.bf16.mxu0 0
      %2258 = vmatmul.mubr.bf16.gmra.mrb[0].mxu0 %v1130
      %v2259 = vpop.f32.mrb[0].mxu0
      %v2260 = vadd.f32 %v503, %v2259
      %v2261 = vpop.f32.mrb[0].mxu0
      %v2262 = vpop.f32.mrb[0].mxu0
      %v2263 = vadd.f32 %v503, %v2262
      %v2264 = vpop.f32.mrb[0].mxu0
      %2265 = vmatprep.mubr.bf16.mxu0 0
      %2266 = vmatmul.mubr.bf16.gmra.mrb[0].mxu0 %v1131
      %v2267 = vpop.f32.mrb[0].mxu0
      %v2268 = vadd.f32 %v503, %v2267
      %v2269 = vpop.f32.mrb[0].mxu0
      %v2270 = vpop.f32.mrb[0].mxu0
      %v2271 = vadd.f32 %v503, %v2270
      %v2272 = vpop.f32.mrb[0].mxu0
      %2273 = vmatprep.mubr.bf16.mxu0 0
      %2274 = vmatmul.mubr.bf16.gmra.mrb[0].mxu0 %v1132
      %v2275 = vpop.f32.mrb[0].mxu0
      %v2276 = vadd.f32 %v503, %v2275
      %v2277 = vpop.f32.mrb[0].mxu0
      %v2278 = vpop.f32.mrb[0].mxu0
      %v2279 = vadd.f32 %v503, %v2278
      %v2280 = vpop.f32.mrb[0].mxu0
      %2281 = vmatprep.mubr.bf16.mxu0 0
      %2282 = vmatmul.mubr.bf16.gmra.mrb[0].mxu0 %v1133
      %v2283 = vpop.f32.mrb[0].mxu0
      %v2284 = vadd.f32 %v503, %v2283
      %v2285 = vpop.f32.mrb[0].mxu0
      %v2286 = vpop.f32.mrb[0].mxu0
      %v2287 = vadd.f32 %v503, %v2286
      %v2288 = vpop.f32.mrb[0].mxu0
      %2289 = vmatprep.mubr.bf16.mxu0 0
      %2290 = vmatmul.mubr.bf16.gmra.mrb[0].mxu0 %v1134
      %v2291 = vpop.f32.mrb[0].mxu0
      %v2292 = vadd.f32 %v503, %v2291
      %v2293 = vpop.f32.mrb[0].mxu0
      %v2294 = vpop.f32.mrb[0].mxu0
      %v2295 = vadd.f32 %v503, %v2294
      %v2296 = vpop.f32.mrb[0].mxu0
      %2297 = vmatprep.mubr.bf16.mxu0 0
      %2298 = vmatmul.mubr.bf16.gmra.mrb[0].mxu0 %v1135
      %v2299 = vpop.f32.mrb[0].mxu0
      %v2300 = vadd.f32 %v503, %v2299
      %v2301 = vpop.f32.mrb[0].mxu0
      %v2302 = vpop.f32.mrb[0].mxu0
      %v2303 = vadd.f32 %v503, %v2302
      %v2304 = vpop.f32.mrb[0].mxu0
      %2305 = vmatprep.mubr.bf16.mxu0 0
      %2306 = vmatmul.mubr.bf16.gmra.mrb[0].mxu0 %v1136
      %v2307 = vpop.f32.mrb[0].mxu0
      %v2308 = vadd.f32 %v503, %v2307
      %v2309 = vpop.f32.mrb[0].mxu0
      %v2310 = vpop.f32.mrb[0].mxu0
      %v2311 = vadd.f32 %v503, %v2310
      %v2312 = vpop.f32.mrb[0].mxu0
      %2313 = vmatprep.mubr.bf16.mxu0 0
      %2314 = vmatmul.mubr.bf16.gmra.mrb[0].mxu0 %v1137
      %v2315 = vpop.f32.mrb[0].mxu0
      %v2316 = vadd.f32 %v503, %v2315
      %v2317 = vpop.f32.mrb[0].mxu0
      %v2318 = vpop.f32.mrb[0].mxu0
      %v2319 = vadd.f32 %v503, %v2318
      %v2320 = vpop.f32.mrb[0].mxu0
      %2321 = vmatprep.mubr.bf16.mxu0 0
      %2322 = vmatmul.mubr.bf16.gmra.mrb[0].mxu0 %v1138
      %v2323 = vpop.f32.mrb[0].mxu0
      %v2324 = vadd.f32 %v503, %v2323
      %v2325 = vpop.f32.mrb[0].mxu0
      %v2326 = vpop.f32.mrb[0].mxu0
      %v2327 = vadd.f32 %v503, %v2326
      %v2328 = vpop.f32.mrb[0].mxu0
      %2329 = vmatprep.mubr.bf16.mxu0 0
      %2330 = vmatmul.mubr.bf16.gmra.mrb[0].mxu0 %v1139
      %v2331 = vpop.f32.mrb[0].mxu0
      %v2332 = vadd.f32 %v503, %v2331
      %v2333 = vpop.f32.mrb[0].mxu0
      %v2334 = vpop.f32.mrb[0].mxu0
      %v2335 = vadd.f32 %v503, %v2334
      %v2336 = vpop.f32.mrb[0].mxu0
      %2337 = vmatprep.mubr.bf16.mxu0 0
      %2338 = vmatmul.mubr.bf16.gmra.mrb[0].mxu0 %v1140
      %v2339 = vpop.f32.mrb[0].mxu0
      %v2340 = vadd.f32 %v503, %v2339
      %v2341 = vpop.f32.mrb[0].mxu0
      %v2342 = vpop.f32.mrb[0].mxu0
      %v2343 = vadd.f32 %v503, %v2342
      %v2344 = vpop.f32.mrb[0].mxu0
      %2345 = vmatprep.mubr.bf16.mxu0 0
      %2346 = vmatmul.mubr.bf16.gmra.mrb[0].mxu0 %v1141
      %v2347 = vpop.f32.mrb[0].mxu0
      %v2348 = vadd.f32 %v503, %v2347
      %v2349 = vpop.f32.mrb[0].mxu0
      %v2350 = vpop.f32.mrb[0].mxu0
      %v2351 = vadd.f32 %v503, %v2350
      %v2352 = vpop.f32.mrb[0].mxu0
      %2353 = vmatprep.mubr.bf16.mxu0 0
      %2354 = vmatmul.mubr.bf16.gmra.mrb[0].mxu0 %v1142
      %v2355 = vpop.f32.mrb[0].mxu0
      %v2356 = vadd.f32 %v503, %v2355
      %v2357 = vpop.f32.mrb[0].mxu0
      %v2358 = vpop.f32.mrb[0].mxu0
      %v2359 = vadd.f32 %v503, %v2358
      %v2360 = vpop.f32.mrb[0].mxu0
      %2361 = vmatprep.mubr.bf16.mxu0 0
      %2362 = vmatmul.mubr.bf16.gmra.mrb[0].mxu0 %v1143
      %v2363 = vpop.f32.mrb[0].mxu0
      %v2364 = vadd.f32 %v503, %v2363
      %v2365 = vpop.f32.mrb[0].mxu0
      %v2366 = vpop.f32.mrb[0].mxu0
      %v2367 = vadd.f32 %v503, %v2366
      %v2368 = vpop.f32.mrb[0].mxu0
      %2369 = vmatprep.mubr.bf16.mxu0 0
      %2370 = vmatmul.mubr.bf16.gmra.mrb[0].mxu0 %v1144
      %v2371 = vpop.f32.mrb[0].mxu0
      %v2372 = vadd.f32 %v503, %v2371
      %v2373 = vpop.f32.mrb[0].mxu0
      %v2374 = vpop.f32.mrb[0].mxu0
      %v2375 = vadd.f32 %v503, %v2374
      %v2376 = vpop.f32.mrb[0].mxu0
      %2377 = vdwg.mxu0
      %v2378 = vtanh.pop %v1356
      %v2379 = vtanh.pop %v1359
      %v2380 = vtanh.pop %v1364
      %v2381 = vtanh.pop %v1367
      %v2382 = vtanh.pop %v1372
      %v2383 = vtanh.pop %v1375
      %v2384 = vtanh.pop %v1380
      %v2385 = vtanh.pop %v1383
      %v2386 = vtanh.pop %v1388
      %v2387 = vtanh.pop %v1391
      %v2388 = vtanh.pop %v1396
      %v2389 = vtanh.pop %v1399
      %v2390 = vtanh.pop %v1404
      %v2391 = vtanh.pop %v1407
      %v2392 = vtanh.pop %v1412
      %v2393 = vtanh.pop %v1415
      %v2394 = vtanh.pop %v1420
      %v2395 = vtanh.pop %v1423
      %v2396 = vtanh.pop %v1428
      %v2397 = vtanh.pop %v1431
      %v2398 = vtanh.pop %v1436
      %v2399 = vtanh.pop %v1439
      %v2400 = vtanh.pop %v1444
      %v2401 = vtanh.pop %v1447
      %v2402 = vtanh.pop %v1452
      %v2403 = vtanh.pop %v1455
      %v2404 = vtanh.pop %v1460
      %v2405 = vtanh.pop %v1463
      %v2406 = vtanh.pop %v1468
      %v2407 = vtanh.pop %v1471
      %v2408 = vtanh.pop %v1476
      %v2409 = vtanh.pop %v1479
      %v2410 = vtanh.pop %v1484
      %v2411 = vtanh.pop %v1487
      %v2412 = vtanh.pop %v1492
      %v2413 = vtanh.pop %v1495
      %v2414 = vtanh.pop %v1500
      %v2415 = vtanh.pop %v1503
      %v2416 = vtanh.pop %v1508
      %v2417 = vtanh.pop %v1511
      %v2418 = vtanh.pop %v1516
      %v2419 = vtanh.pop %v1519
      %v2420 = vtanh.pop %v1524
      %v2421 = vtanh.pop %v1527
      %v2422 = vtanh.pop %v1532
      %v2423 = vtanh.pop %v1535
      %v2424 = vtanh.pop %v1540
      %v2425 = vtanh.pop %v1543
      %v2426 = vtanh.pop %v1548
      %v2427 = vtanh.pop %v1551
      %v2428 = vtanh.pop %v1556
      %v2429 = vtanh.pop %v1559
      %v2430 = vtanh.pop %v1564
      %v2431 = vtanh.pop %v1567
      %v2432 = vtanh.pop %v1572
      %v2433 = vtanh.pop %v1575
      %v2434 = vtanh.pop %v1580
      %v2435 = vtanh.pop %v1583
      %v2436 = vtanh.pop %v1588
      %v2437 = vtanh.pop %v1591
      %v2438 = vtanh.pop %v1596
      %v2439 = vtanh.pop %v1599
      %v2440 = vtanh.pop %v1604
      %v2441 = vtanh.pop %v1607
      %v2442 = vtanh.pop %v1612
      %v2443 = vtanh.pop %v1615
      %v2444 = vtanh.pop %v1620
      %v2445 = vtanh.pop %v1623
      %v2446 = vtanh.pop %v1628
      %v2447 = vtanh.pop %v1631
      %v2448 = vtanh.pop %v1636
      %v2449 = vtanh.pop %v1639
      %v2450 = vtanh.pop %v1644
      %v2451 = vtanh.pop %v1647
      %v2452 = vtanh.pop %v1652
      %v2453 = vtanh.pop %v1655
      %v2454 = vtanh.pop %v1660
      %v2455 = vtanh.pop %v1663
      %v2456 = vtanh.pop %v1668
      %v2457 = vtanh.pop %v1671
      %v2458 = vtanh.pop %v1676
      %v2459 = vtanh.pop %v1679
      %v2460 = vtanh.pop %v1684
      %v2461 = vtanh.pop %v1687
      %v2462 = vtanh.pop %v1692
      %v2463 = vtanh.pop %v1695
      %v2464 = vtanh.pop %v1700
      %v2465 = vtanh.pop %v1703
      %v2466 = vtanh.pop %v1708
      %v2467 = vtanh.pop %v1711
      %v2468 = vtanh.pop %v1716
      %v2469 = vtanh.pop %v1719
      %v2470 = vtanh.pop %v1724
      %v2471 = vtanh.pop %v1727
      %v2472 = vtanh.pop %v1732
      %v2473 = vtanh.pop %v1735
      %v2474 = vtanh.pop %v1740
      %v2475 = vtanh.pop %v1743
      %v2476 = vtanh.pop %v1748
      %v2477 = vtanh.pop %v1751
      %v2478 = vtanh.pop %v1756
      %v2479 = vtanh.pop %v1759
      %v2480 = vtanh.pop %v1764
      %v2481 = vtanh.pop %v1767
      %v2482 = vtanh.pop %v1772
      %v2483 = vtanh.pop %v1775
      %v2484 = vtanh.pop %v1780
      %v2485 = vtanh.pop %v1783
      %v2486 = vtanh.pop %v1788
      %v2487 = vtanh.pop %v1791
      %v2488 = vtanh.pop %v1796
      %v2489 = vtanh.pop %v1799
      %v2490 = vtanh.pop %v1804
      %v2491 = vtanh.pop %v1807
      %v2492 = vtanh.pop %v1812
      %v2493 = vtanh.pop %v1815
      %v2494 = vtanh.pop %v1820
      %v2495 = vtanh.pop %v1823
      %v2496 = vtanh.pop %v1828
      %v2497 = vtanh.pop %v1831
      %v2498 = vtanh.pop %v1836
      %v2499 = vtanh.pop %v1839
      %v2500 = vtanh.pop %v1844
      %v2501 = vtanh.pop %v1847
      %v2502 = vtanh.pop %v1852
      %v2503 = vtanh.pop %v1855
      %v2504 = vtanh.pop %v1860
      %v2505 = vtanh.pop %v1863
      %v2506 = vtanh.pop %v1868
      %v2507 = vtanh.pop %v1871
      %v2508 = vtanh.pop %v1876
      %v2509 = vtanh.pop %v1879
      %v2510 = vtanh.pop %v1884
      %v2511 = vtanh.pop %v1887
      %v2512 = vtanh.pop %v1892
      %v2513 = vtanh.pop %v1895
      %v2514 = vtanh.pop %v1900
      %v2515 = vtanh.pop %v1903
      %v2516 = vtanh.pop %v1908
      %v2517 = vtanh.pop %v1911
      %v2518 = vtanh.pop %v1916
      %v2519 = vtanh.pop %v1919
      %v2520 = vtanh.pop %v1924
      %v2521 = vtanh.pop %v1927
      %v2522 = vtanh.pop %v1932
      %v2523 = vtanh.pop %v1935
      %v2524 = vtanh.pop %v1940
      %v2525 = vtanh.pop %v1943
      %v2526 = vtanh.pop %v1948
      %v2527 = vtanh.pop %v1951
      %v2528 = vtanh.pop %v1956
      %v2529 = vtanh.pop %v1959
      %v2530 = vtanh.pop %v1964
      %v2531 = vtanh.pop %v1967
      %v2532 = vtanh.pop %v1972
      %v2533 = vtanh.pop %v1975
      %v2534 = vtanh.pop %v1980
      %v2535 = vtanh.pop %v1983
      %v2536 = vtanh.pop %v1988
      %v2537 = vtanh.pop %v1991
      %v2538 = vtanh.pop %v1996
      %v2539 = vtanh.pop %v1999
      %v2540 = vtanh.pop %v2004
      %v2541 = vtanh.pop %v2007
      %v2542 = vtanh.pop %v2012
      %v2543 = vtanh.pop %v2015
      %v2544 = vtanh.pop %v2020
      %v2545 = vtanh.pop %v2023
      %v2546 = vtanh.pop %v2028
      %v2547 = vtanh.pop %v2031
      %v2548 = vtanh.pop %v2036
      %v2549 = vtanh.pop %v2039
      %v2550 = vtanh.pop %v2044
      %v2551 = vtanh.pop %v2047
      %v2552 = vtanh.pop %v2052
      %v2553 = vtanh.pop %v2055
      %v2554 = vtanh.pop %v2060
      %v2555 = vtanh.pop %v2063
      %v2556 = vtanh.pop %v2068
      %v2557 = vtanh.pop %v2071
      %v2558 = vtanh.pop %v2076
      %v2559 = vtanh.pop %v2079
      %v2560 = vtanh.pop %v2084
      %v2561 = vtanh.pop %v2087
      %v2562 = vtanh.pop %v2092
      %v2563 = vtanh.pop %v2095
      %v2564 = vtanh.pop %v2100
      %v2565 = vtanh.pop %v2103
      %v2566 = vtanh.pop %v2108
      %v2567 = vtanh.pop %v2111
      %v2568 = vtanh.pop %v2116
      %v2569 = vtanh.pop %v2119
      %v2570 = vtanh.pop %v2124
      %v2571 = vtanh.pop %v2127
      %v2572 = vtanh.pop %v2132
      %v2573 = vtanh.pop %v2135
      %v2574 = vtanh.pop %v2140
      %v2575 = vtanh.pop %v2143
      %v2576 = vtanh.pop %v2148
      %v2577 = vtanh.pop %v2151
      %v2578 = vtanh.pop %v2156
      %v2579 = vtanh.pop %v2159
      %v2580 = vtanh.pop %v2164
      %v2581 = vtanh.pop %v2167
      %v2582 = vtanh.pop %v2172
      %v2583 = vtanh.pop %v2175
      %v2584 = vtanh.pop %v2180
      %v2585 = vtanh.pop %v2183
      %v2586 = vtanh.pop %v2188
      %v2587 = vtanh.pop %v2191
      %v2588 = vtanh.pop %v2196
      %v2589 = vtanh.pop %v2199
      %v2590 = vtanh.pop %v2204
      %v2591 = vtanh.pop %v2207
      %v2592 = vtanh.pop %v2212
      %v2593 = vtanh.pop %v2215
      %v2594 = vtanh.pop %v2220
      %v2595 = vtanh.pop %v2223
      %v2596 = vtanh.pop %v2228
      %v2597 = vtanh.pop %v2231
      %v2598 = vtanh.pop %v2236
      %v2599 = vtanh.pop %v2239
      %v2600 = vtanh.pop %v2244
      %v2601 = vtanh.pop %v2247
      %v2602 = vtanh.pop %v2252
      %v2603 = vtanh.pop %v2255
      %v2604 = vtanh.pop %v2260
      %v2605 = vtanh.pop %v2263
      %v2606 = vtanh.pop %v2268
      %v2607 = vtanh.pop %v2271
      %v2608 = vtanh.pop %v2276
      %v2609 = vtanh.pop %v2279
      %v2610 = vtanh.pop %v2284
      %v2611 = vtanh.pop %v2287
      %v2612 = vtanh.pop %v2292
      %v2613 = vtanh.pop %v2295
      %v2614 = vtanh.pop %v2300
      %v2615 = vtanh.pop %v2303
      %v2616 = vtanh.pop %v2308
      %v2617 = vtanh.pop %v2311
      %v2618 = vtanh.pop %v2316
      %v2619 = vtanh.pop %v2319
      %v2620 = vtanh.pop %v2324
      %v2621 = vtanh.pop %v2327
      %v2622 = vtanh.pop %v2332
      %v2623 = vtanh.pop %v2335
      %v2624 = vtanh.pop %v2340
      %v2625 = vtanh.pop %v2343
      %v2626 = vtanh.pop %v2348
      %v2627 = vtanh.pop %v2351
      %v2628 = vtanh.pop %v2356
      %v2629 = vtanh.pop %v2359
      %v2630 = vtanh.pop %v2364
      %v2631 = vtanh.pop %v2367
      %v2632 = vtanh.pop %v2372
      %v2633 = vtanh.pop %v2375
      %2634 = vst [vmem:[%s222] sm:$0xff] %v2378
      %2635 = vst [vmem:[%s222 + $0x8] sm:$0xff] %v2379
      %2636 = vst [vmem:[%s222 + $0x10] sm:$0xff] %v2380
      %2637 = vst [vmem:[%s222 + $0x18] sm:$0xff] %v2381
      %2638 = vst [vmem:[%s222 + $0x20] sm:$0xff] %v2382
      %2639 = vst [vmem:[%s222 + $0x28] sm:$0xff] %v2383
      %2640 = vst [vmem:[%s222 + $0x30] sm:$0xff] %v2384
      %2641 = vst [vmem:[%s222 + $0x38] sm:$0xff] %v2385
      %2642 = vst [vmem:[%s222 + $0x40] sm:$0xff] %v2386
      %2643 = vst [vmem:[%s222 + $0x48] sm:$0xff] %v2387
      %2644 = vst [vmem:[%s222 + $0x50] sm:$0xff] %v2388
      %2645 = vst [vmem:[%s222 + $0x58] sm:$0xff] %v2389
      %2646 = vst [vmem:[%s222 + $0x60] sm:$0xff] %v2390
      %2647 = vst [vmem:[%s222 + $0x68] sm:$0xff] %v2391
      %2648 = vst [vmem:[%s222 + $0x70] sm:$0xff] %v2392
      %2649 = vst [vmem:[%s222 + $0x78] sm:$0xff] %v2393
      %2650 = vst [vmem:[%s222 + $0x80] sm:$0xff] %v2394
      %2651 = vst [vmem:[%s222 + $0x88] sm:$0xff] %v2395
      %2652 = vst [vmem:[%s222 + $0x90] sm:$0xff] %v2396
      %2653 = vst [vmem:[%s222 + $0x98] sm:$0xff] %v2397
      %2654 = vst [vmem:[%s222 + $0xa0] sm:$0xff] %v2398
      %2655 = vst [vmem:[%s222 + $0xa8] sm:$0xff] %v2399
      %2656 = vst [vmem:[%s222 + $0xb0] sm:$0xff] %v2400
      %2657 = vst [vmem:[%s222 + $0xb8] sm:$0xff] %v2401
      %2658 = vst [vmem:[%s222 + $0xc0] sm:$0xff] %v2402
      %2659 = vst [vmem:[%s222 + $0xc8] sm:$0xff] %v2403
      %2660 = vst [vmem:[%s222 + $0xd0] sm:$0xff] %v2404
      %2661 = vst [vmem:[%s222 + $0xd8] sm:$0xff] %v2405
      %2662 = vst [vmem:[%s222 + $0xe0] sm:$0xff] %v2406
      %2663 = vst [vmem:[%s222 + $0xe8] sm:$0xff] %v2407
      %2664 = vst [vmem:[%s222 + $0xf0] sm:$0xff] %v2408
      %2665 = vst [vmem:[%s222 + $0xf8] sm:$0xff] %v2409
      %2666 = vst [vmem:[%s222 + $0x100] sm:$0xff] %v2410
      %2667 = vst [vmem:[%s222 + $0x108] sm:$0xff] %v2411
      %2668 = vst [vmem:[%s222 + $0x110] sm:$0xff] %v2412
      %2669 = vst [vmem:[%s222 + $0x118] sm:$0xff] %v2413
      %2670 = vst [vmem:[%s222 + $0x120] sm:$0xff] %v2414
      %2671 = vst [vmem:[%s222 + $0x128] sm:$0xff] %v2415
      %2672 = vst [vmem:[%s222 + $0x130] sm:$0xff] %v2416
      %2673 = vst [vmem:[%s222 + $0x138] sm:$0xff] %v2417
      %2674 = vst [vmem:[%s222 + $0x140] sm:$0xff] %v2418
      %2675 = vst [vmem:[%s222 + $0x148] sm:$0xff] %v2419
      %2676 = vst [vmem:[%s222 + $0x150] sm:$0xff] %v2420
      %2677 = vst [vmem:[%s222 + $0x158] sm:$0xff] %v2421
      %2678 = vst [vmem:[%s222 + $0x160] sm:$0xff] %v2422
      %2679 = vst [vmem:[%s222 + $0x168] sm:$0xff] %v2423
      %2680 = vst [vmem:[%s222 + $0x170] sm:$0xff] %v2424
      %2681 = vst [vmem:[%s222 + $0x178] sm:$0xff] %v2425
      %2682 = vst [vmem:[%s222 + $0x180] sm:$0xff] %v2426
      %2683 = vst [vmem:[%s222 + $0x188] sm:$0xff] %v2427
      %2684 = vst [vmem:[%s222 + $0x190] sm:$0xff] %v2428
      %2685 = vst [vmem:[%s222 + $0x198] sm:$0xff] %v2429
      %2686 = vst [vmem:[%s222 + $0x1a0] sm:$0xff] %v2430
      %2687 = vst [vmem:[%s222 + $0x1a8] sm:$0xff] %v2431
      %2688 = vst [vmem:[%s222 + $0x1b0] sm:$0xff] %v2432
      %2689 = vst [vmem:[%s222 + $0x1b8] sm:$0xff] %v2433
      %2690 = vst [vmem:[%s222 + $0x1c0] sm:$0xff] %v2434
      %2691 = vst [vmem:[%s222 + $0x1c8] sm:$0xff] %v2435
      %2692 = vst [vmem:[%s222 + $0x1d0] sm:$0xff] %v2436
      %2693 = vst [vmem:[%s222 + $0x1d8] sm:$0xff] %v2437
      %2694 = vst [vmem:[%s222 + $0x1e0] sm:$0xff] %v2438
      %2695 = vst [vmem:[%s222 + $0x1e8] sm:$0xff] %v2439
      %2696 = vst [vmem:[%s222 + $0x1f0] sm:$0xff] %v2440
      %2697 = vst [vmem:[%s222 + $0x1f8] sm:$0xff] %v2441
      %2698 = vst [vmem:[%s222 + $0x200] sm:$0xff] %v2442
      %2699 = vst [vmem:[%s222 + $0x208] sm:$0xff] %v2443
      %2700 = vst [vmem:[%s222 + $0x210] sm:$0xff] %v2444
      %2701 = vst [vmem:[%s222 + $0x218] sm:$0xff] %v2445
      %2702 = vst [vmem:[%s222 + $0x220] sm:$0xff] %v2446
      %2703 = vst [vmem:[%s222 + $0x228] sm:$0xff] %v2447
      %2704 = vst [vmem:[%s222 + $0x230] sm:$0xff] %v2448
      %2705 = vst [vmem:[%s222 + $0x238] sm:$0xff] %v2449
      %2706 = vst [vmem:[%s222 + $0x240] sm:$0xff] %v2450
      %2707 = vst [vmem:[%s222 + $0x248] sm:$0xff] %v2451
      %2708 = vst [vmem:[%s222 + $0x250] sm:$0xff] %v2452
      %2709 = vst [vmem:[%s222 + $0x258] sm:$0xff] %v2453
      %2710 = vst [vmem:[%s222 + $0x260] sm:$0xff] %v2454
      %2711 = vst [vmem:[%s222 + $0x268] sm:$0xff] %v2455
      %2712 = vst [vmem:[%s222 + $0x270] sm:$0xff] %v2456
      %2713 = vst [vmem:[%s222 + $0x278] sm:$0xff] %v2457
      %2714 = vst [vmem:[%s222 + $0x280] sm:$0xff] %v2458
      %2715 = vst [vmem:[%s222 + $0x288] sm:$0xff] %v2459
      %2716 = vst [vmem:[%s222 + $0x290] sm:$0xff] %v2460
      %2717 = vst [vmem:[%s222 + $0x298] sm:$0xff] %v2461
      %2718 = vst [vmem:[%s222 + $0x2a0] sm:$0xff] %v2462
      %2719 = vst [vmem:[%s222 + $0x2a8] sm:$0xff] %v2463
      %2720 = vst [vmem:[%s222 + $0x2b0] sm:$0xff] %v2464
      %2721 = vst [vmem:[%s222 + $0x2b8] sm:$0xff] %v2465
      %2722 = vst [vmem:[%s222 + $0x2c0] sm:$0xff] %v2466
      %2723 = vst [vmem:[%s222 + $0x2c8] sm:$0xff] %v2467
      %2724 = vst [vmem:[%s222 + $0x2d0] sm:$0xff] %v2468
      %2725 = vst [vmem:[%s222 + $0x2d8] sm:$0xff] %v2469
      %2726 = vst [vmem:[%s222 + $0x2e0] sm:$0xff] %v2470
      %2727 = vst [vmem:[%s222 + $0x2e8] sm:$0xff] %v2471
      %2728 = vst [vmem:[%s222 + $0x2f0] sm:$0xff] %v2472
      %2729 = vst [vmem:[%s222 + $0x2f8] sm:$0xff] %v2473
      %2730 = vst [vmem:[%s222 + $0x300] sm:$0xff] %v2474
      %2731 = vst [vmem:[%s222 + $0x308] sm:$0xff] %v2475
      %2732 = vst [vmem:[%s222 + $0x310] sm:$0xff] %v2476
      %2733 = vst [vmem:[%s222 + $0x318] sm:$0xff] %v2477
      %2734 = vst [vmem:[%s222 + $0x320] sm:$0xff] %v2478
      %2735 = vst [vmem:[%s222 + $0x328] sm:$0xff] %v2479
      %2736 = vst [vmem:[%s222 + $0x330] sm:$0xff] %v2480
      %2737 = vst [vmem:[%s222 + $0x338] sm:$0xff] %v2481
      %2738 = vst [vmem:[%s222 + $0x340] sm:$0xff] %v2482
      %2739 = vst [vmem:[%s222 + $0x348] sm:$0xff] %v2483
      %2740 = vst [vmem:[%s222 + $0x350] sm:$0xff] %v2484
      %2741 = vst [vmem:[%s222 + $0x358] sm:$0xff] %v2485
      %2742 = vst [vmem:[%s222 + $0x360] sm:$0xff] %v2486
      %2743 = vst [vmem:[%s222 + $0x368] sm:$0xff] %v2487
      %2744 = vst [vmem:[%s222 + $0x370] sm:$0xff] %v2488
      %2745 = vst [vmem:[%s222 + $0x378] sm:$0xff] %v2489
      %2746 = vst [vmem:[%s222 + $0x380] sm:$0xff] %v2490
      %2747 = vst [vmem:[%s222 + $0x388] sm:$0xff] %v2491
      %2748 = vst [vmem:[%s222 + $0x390] sm:$0xff] %v2492
      %2749 = vst [vmem:[%s222 + $0x398] sm:$0xff] %v2493
      %2750 = vst [vmem:[%s222 + $0x3a0] sm:$0xff] %v2494
      %2751 = vst [vmem:[%s222 + $0x3a8] sm:$0xff] %v2495
      %2752 = vst [vmem:[%s222 + $0x3b0] sm:$0xff] %v2496
      %2753 = vst [vmem:[%s222 + $0x3b8] sm:$0xff] %v2497
      %2754 = vst [vmem:[%s222 + $0x3c0] sm:$0xff] %v2498
      %2755 = vst [vmem:[%s222 + $0x3c8] sm:$0xff] %v2499
      %2756 = vst [vmem:[%s222 + $0x3d0] sm:$0xff] %v2500
      %2757 = vst [vmem:[%s222 + $0x3d8] sm:$0xff] %v2501
      %2758 = vst [vmem:[%s222 + $0x3e0] sm:$0xff] %v2502
      %2759 = vst [vmem:[%s222 + $0x3e8] sm:$0xff] %v2503
      %2760 = vst [vmem:[%s222 + $0x3f0] sm:$0xff] %v2504
      %2761 = vst [vmem:[%s222 + $0x3f8] sm:$0xff] %v2505
      %2762 = vst [vmem:[%s222 + $0x400] sm:$0xff] %v2506
      %2763 = vst [vmem:[%s222 + $0x408] sm:$0xff] %v2507
      %2764 = vst [vmem:[%s222 + $0x410] sm:$0xff] %v2508
      %2765 = vst [vmem:[%s222 + $0x418] sm:$0xff] %v2509
      %2766 = vst [vmem:[%s222 + $0x420] sm:$0xff] %v2510
      %2767 = vst [vmem:[%s222 + $0x428] sm:$0xff] %v2511
      %2768 = vst [vmem:[%s222 + $0x430] sm:$0xff] %v2512
      %2769 = vst [vmem:[%s222 + $0x438] sm:$0xff] %v2513
      %2770 = vst [vmem:[%s222 + $0x440] sm:$0xff] %v2514
      %2771 = vst [vmem:[%s222 + $0x448] sm:$0xff] %v2515
      %2772 = vst [vmem:[%s222 + $0x450] sm:$0xff] %v2516
      %2773 = vst [vmem:[%s222 + $0x458] sm:$0xff] %v2517
      %2774 = vst [vmem:[%s222 + $0x460] sm:$0xff] %v2518
      %2775 = vst [vmem:[%s222 + $0x468] sm:$0xff] %v2519
      %2776 = vst [vmem:[%s222 + $0x470] sm:$0xff] %v2520
      %2777 = vst [vmem:[%s222 + $0x478] sm:$0xff] %v2521
      %2778 = vst [vmem:[%s222 + $0x480] sm:$0xff] %v2522
      %2779 = vst [vmem:[%s222 + $0x488] sm:$0xff] %v2523
      %2780 = vst [vmem:[%s222 + $0x490] sm:$0xff] %v2524
      %2781 = vst [vmem:[%s222 + $0x498] sm:$0xff] %v2525
      %2782 = vst [vmem:[%s222 + $0x4a0] sm:$0xff] %v2526
      %2783 = vst [vmem:[%s222 + $0x4a8] sm:$0xff] %v2527
      %2784 = vst [vmem:[%s222 + $0x4b0] sm:$0xff] %v2528
      %2785 = vst [vmem:[%s222 + $0x4b8] sm:$0xff] %v2529
      %2786 = vst [vmem:[%s222 + $0x4c0] sm:$0xff] %v2530
      %2787 = vst [vmem:[%s222 + $0x4c8] sm:$0xff] %v2531
      %2788 = vst [vmem:[%s222 + $0x4d0] sm:$0xff] %v2532
      %2789 = vst [vmem:[%s222 + $0x4d8] sm:$0xff] %v2533
      %2790 = vst [vmem:[%s222 + $0x4e0] sm:$0xff] %v2534
      %2791 = vst [vmem:[%s222 + $0x4e8] sm:$0xff] %v2535
      %2792 = vst [vmem:[%s222 + $0x4f0] sm:$0xff] %v2536
      %2793 = vst [vmem:[%s222 + $0x4f8] sm:$0xff] %v2537
      %2794 = vst [vmem:[%s222 + $0x500] sm:$0xff] %v2538
      %2795 = vst [vmem:[%s222 + $0x508] sm:$0xff] %v2539
      %2796 = vst [vmem:[%s222 + $0x510] sm:$0xff] %v2540
      %2797 = vst [vmem:[%s222 + $0x518] sm:$0xff] %v2541
      %2798 = vst [vmem:[%s222 + $0x520] sm:$0xff] %v2542
      %2799 = vst [vmem:[%s222 + $0x528] sm:$0xff] %v2543
      %2800 = vst [vmem:[%s222 + $0x530] sm:$0xff] %v2544
      %2801 = vst [vmem:[%s222 + $0x538] sm:$0xff] %v2545
      %2802 = vst [vmem:[%s222 + $0x540] sm:$0xff] %v2546
      %2803 = vst [vmem:[%s222 + $0x548] sm:$0xff] %v2547
      %2804 = vst [vmem:[%s222 + $0x550] sm:$0xff] %v2548
      %2805 = vst [vmem:[%s222 + $0x558] sm:$0xff] %v2549
      %2806 = vst [vmem:[%s222 + $0x560] sm:$0xff] %v2550
      %2807 = vst [vmem:[%s222 + $0x568] sm:$0xff] %v2551
      %2808 = vst [vmem:[%s222 + $0x570] sm:$0xff] %v2552
      %2809 = vst [vmem:[%s222 + $0x578] sm:$0xff] %v2553
      %2810 = vst [vmem:[%s222 + $0x580] sm:$0xff] %v2554
      %2811 = vst [vmem:[%s222 + $0x588] sm:$0xff] %v2555
      %2812 = vst [vmem:[%s222 + $0x590] sm:$0xff] %v2556
      %2813 = vst [vmem:[%s222 + $0x598] sm:$0xff] %v2557
      %2814 = vst [vmem:[%s222 + $0x5a0] sm:$0xff] %v2558
      %2815 = vst [vmem:[%s222 + $0x5a8] sm:$0xff] %v2559
      %2816 = vst [vmem:[%s222 + $0x5b0] sm:$0xff] %v2560
      %2817 = vst [vmem:[%s222 + $0x5b8] sm:$0xff] %v2561
      %2818 = vst [vmem:[%s222 + $0x5c0] sm:$0xff] %v2562
      %2819 = vst [vmem:[%s222 + $0x5c8] sm:$0xff] %v2563
      %2820 = vst [vmem:[%s222 + $0x5d0] sm:$0xff] %v2564
      %2821 = vst [vmem:[%s222 + $0x5d8] sm:$0xff] %v2565
      %2822 = vst [vmem:[%s222 + $0x5e0] sm:$0xff] %v2566
      %2823 = vst [vmem:[%s222 + $0x5e8] sm:$0xff] %v2567
      %2824 = vst [vmem:[%s222 + $0x5f0] sm:$0xff] %v2568
      %2825 = vst [vmem:[%s222 + $0x5f8] sm:$0xff] %v2569
      %2826 = vst [vmem:[%s222 + $0x600] sm:$0xff] %v2570
      %2827 = vst [vmem:[%s222 + $0x608] sm:$0xff] %v2571
      %2828 = vst [vmem:[%s222 + $0x610] sm:$0xff] %v2572
      %2829 = vst [vmem:[%s222 + $0x618] sm:$0xff] %v2573
      %2830 = vst [vmem:[%s222 + $0x620] sm:$0xff] %v2574
      %2831 = vst [vmem:[%s222 + $0x628] sm:$0xff] %v2575
      %2832 = vst [vmem:[%s222 + $0x630] sm:$0xff] %v2576
      %2833 = vst [vmem:[%s222 + $0x638] sm:$0xff] %v2577
      %2834 = vst [vmem:[%s222 + $0x640] sm:$0xff] %v2578
      %2835 = vst [vmem:[%s222 + $0x648] sm:$0xff] %v2579
      %2836 = vst [vmem:[%s222 + $0x650] sm:$0xff] %v2580
      %2837 = vst [vmem:[%s222 + $0x658] sm:$0xff] %v2581
      %2838 = vst [vmem:[%s222 + $0x660] sm:$0xff] %v2582
      %2839 = vst [vmem:[%s222 + $0x668] sm:$0xff] %v2583
      %2840 = vst [vmem:[%s222 + $0x670] sm:$0xff] %v2584
      %2841 = vst [vmem:[%s222 + $0x678] sm:$0xff] %v2585
      %2842 = vst [vmem:[%s222 + $0x680] sm:$0xff] %v2586
      %2843 = vst [vmem:[%s222 + $0x688] sm:$0xff] %v2587
      %2844 = vst [vmem:[%s222 + $0x690] sm:$0xff] %v2588
      %2845 = vst [vmem:[%s222 + $0x698] sm:$0xff] %v2589
      %2846 = vst [vmem:[%s222 + $0x6a0] sm:$0xff] %v2590
      %2847 = vst [vmem:[%s222 + $0x6a8] sm:$0xff] %v2591
      %2848 = vst [vmem:[%s222 + $0x6b0] sm:$0xff] %v2592
      %2849 = vst [vmem:[%s222 + $0x6b8] sm:$0xff] %v2593
      %2850 = vst [vmem:[%s222 + $0x6c0] sm:$0xff] %v2594
      %2851 = vst [vmem:[%s222 + $0x6c8] sm:$0xff] %v2595
      %2852 = vst [vmem:[%s222 + $0x6d0] sm:$0xff] %v2596
      %2853 = vst [vmem:[%s222 + $0x6d8] sm:$0xff] %v2597
      %2854 = vst [vmem:[%s222 + $0x6e0] sm:$0xff] %v2598
      %2855 = vst [vmem:[%s222 + $0x6e8] sm:$0xff] %v2599
      %2856 = vst [vmem:[%s222 + $0x6f0] sm:$0xff] %v2600
      %2857 = vst [vmem:[%s222 + $0x6f8] sm:$0xff] %v2601
      %2858 = vst [vmem:[%s222 + $0x700] sm:$0xff] %v2602
      %2859 = vst [vmem:[%s222 + $0x708] sm:$0xff] %v2603
      %2860 = vst [vmem:[%s222 + $0x710] sm:$0xff] %v2604
      %2861 = vst [vmem:[%s222 + $0x718] sm:$0xff] %v2605
      %2862 = vst [vmem:[%s222 + $0x720] sm:$0xff] %v2606
      %2863 = vst [vmem:[%s222 + $0x728] sm:$0xff] %v2607
      %2864 = vst [vmem:[%s222 + $0x730] sm:$0xff] %v2608
      %2865 = vst [vmem:[%s222 + $0x738] sm:$0xff] %v2609
      %2866 = vst [vmem:[%s222 + $0x740] sm:$0xff] %v2610
      %2867 = vst [vmem:[%s222 + $0x748] sm:$0xff] %v2611
      %2868 = vst [vmem:[%s222 + $0x750] sm:$0xff] %v2612
      %2869 = vst [vmem:[%s222 + $0x758] sm:$0xff] %v2613
      %2870 = vst [vmem:[%s222 + $0x760] sm:$0xff] %v2614
      %2871 = vst [vmem:[%s222 + $0x768] sm:$0xff] %v2615
      %2872 = vst [vmem:[%s222 + $0x770] sm:$0xff] %v2616
      %2873 = vst [vmem:[%s222 + $0x778] sm:$0xff] %v2617
      %2874 = vst [vmem:[%s222 + $0x780] sm:$0xff] %v2618
      %2875 = vst [vmem:[%s222 + $0x788] sm:$0xff] %v2619
      %2876 = vst [vmem:[%s222 + $0x790] sm:$0xff] %v2620
      %2877 = vst [vmem:[%s222 + $0x798] sm:$0xff] %v2621
      %2878 = vst [vmem:[%s222 + $0x7a0] sm:$0xff] %v2622
      %2879 = vst [vmem:[%s222 + $0x7a8] sm:$0xff] %v2623
      %2880 = vst [vmem:[%s222 + $0x7b0] sm:$0xff] %v2624
      %2881 = vst [vmem:[%s222 + $0x7b8] sm:$0xff] %v2625
      %2882 = vst [vmem:[%s222 + $0x7c0] sm:$0xff] %v2626
      %2883 = vst [vmem:[%s222 + $0x7c8] sm:$0xff] %v2627
      %2884 = vst [vmem:[%s222 + $0x7d0] sm:$0xff] %v2628
      %2885 = vst [vmem:[%s222 + $0x7d8] sm:$0xff] %v2629
      %2886 = vst [vmem:[%s222 + $0x7e0] sm:$0xff] %v2630
      %2887 = vst [vmem:[%s222 + $0x7e8] sm:$0xff] %v2631
      %2888 = vst [vmem:[%s222 + $0x7f0] sm:$0xff] %v2632
      %2889 = vst [vmem:[%s222 + $0x7f8] sm:$0xff] %v2633
      %s2890 = sadd.s32 %s18, %s19
      %s2891 = smul.u32 256, %s2890
      %p2892 = scmp.lt.s32.totalorder %s2891, 1023
      %s2893 = scalar_select %p2892, %s2891, 1023
      %s2894 = smul.addr %s2893, 8
      %s2895 = scalar_lea.vmem %s3, %s2894
      // Predicated region
      $region33: #{generator_forward.9} parent=31 // pred_check
        %p2896 = pneg %p121
      $region34: #{generator_forward.9} parent=31 // pred_check_branch
        %2898 = sbr.rel (%p2896) target = $region36
      $region35: #{generator_forward.9} parent=31 // pred_region
        %s2899 = sadd.s32 %s18, %s19
        %s2900 = smul.u32 256, %s2899
      $region36: #{generator_forward.9} parent=31 // pred_fallthru
        _
    $region32: #{generator_forward.9} parent=5 // pred_fallthru
      _
    %p2901 = scmp.le.s32.totalorder 2, %s9
    // Predicated region
    $region37: #{generator_forward.9} parent=5 // pred_check
      %p2902 = pneg %p2901
    $region38: #{generator_forward.9} parent=5 // pred_check_branch
      %2904 = sbr.rel (%p2902) target = $region40
    $region39: #{generator_forward.9} parent=5 // pred_region
      %s2905 = ssub.s32 %s9, 2
      // Predicated region
      $region41: #{generator_forward.9} parent=39 // pred_check
        %p2906 = pneg %p127
      $region42: #{generator_forward.9} parent=39 // pred_check_branch
        %2908 = sbr.rel (%p2906) target = $region44
      $region43: #{generator_forward.9} parent=39 // pred_region
        %s2909 = sadd.s32 %s20, %s21
        %s2910 = smul.u32 256, %s2909
        %p2911 = scmp.lt.s32.totalorder %s2910, 1023
        %s2912 = scalar_select %p2911, %s2910, 1023
        %s2913 = smul.addr %s2912, 8
        %s2914 = scalar_lea.vmem %s3, %s2913
      $region44: #{generator_forward.9} parent=39 // pred_fallthru
        _
    $region40: #{generator_forward.9} parent=5 // pred_fallthru
      _
  $region6: #{generator_forward.9} parent=0 // loop_footer
    %s13 = sadd.s32 1, %s9
  $region7: #{generator_forward.9} parent=0 // loop_footer_branch
    %8 = sbr.rel target = $region3
  $region8: #{generator_forward.9} parent=0 // loop_exit
    _

</llo_original>
